<compile_context>
chip_gen: v7x
topology: tpu7x:2x2x1
jax: 0.10.0
libtpu: 0.0.40
codegen_flags: <defaults>
</compile_context>

<pallas_src>
import functools

import jax
import jax.numpy as jnp
from jax import lax
from jax.experimental import pallas as pl
from jax.experimental.pallas import tpu as pltpu

VMEM_SPEC = pl.BlockSpec(memory_space=pltpu.MemorySpace.VMEM)


# ----------------------------------------------------------------------------
# Shared LSTM cell math (VPU + EUP).
# ----------------------------------------------------------------------------
def _lstm_cell(gates, c, H):
    i_g = jax.nn.sigmoid(gates[:, 0 * H:1 * H])
    f_g = jax.nn.sigmoid(gates[:, 1 * H:2 * H])
    g_g = jnp.tanh(gates[:, 2 * H:3 * H])
    o_g = jax.nn.sigmoid(gates[:, 3 * H:4 * H])
    c_new = f_g * c + i_g * g_g
    h_new = o_g * jnp.tanh(c_new)
    return h_new, c_new


# ----------------------------------------------------------------------------
# 1. Layer-1 fused bidirectional LSTM kernel (both sentences + both directions)
#    emitting the full hidden sequence (needed by the attention stage).
#    x is time-major [T, 2B, D]; weights: wih [D, 8H] (fwd|bwd), whh [2, H, 4H],
#    b [1, 8H] (= b_ih + b_hh, fwd|bwd).
# ----------------------------------------------------------------------------
def _bilstm_seq_kernel(l_ref, x_ref, wih_ref, whh_ref, b_ref,
                       yf_ref, yb_ref, gin_scr, *, H):
    T, B2, _ = x_ref.shape
    G4 = 4 * H

    # Hoisted input projection for ALL timesteps and both directions: one MXU op.
    gin = lax.dot_general(x_ref[...], wih_ref[...], (((2,), (0,)), ((), ())),
                          preferred_element_type=jnp.float32)        # [T, 2B, 8H]
    gin_scr[...] = gin + b_ref[...].reshape(1, 1, 2 * G4)

    whh_f = whh_ref[0]          # [H, 4H]
    whh_b = whh_ref[1]          # [H, 4H]
    lens = l_ref[...]           # [2B, 1] int32

    def step(t, carry):
        h_f, c_f, h_b, c_b = carry
        tb = T - 1 - t
        row_f = gin_scr[t]                                           # [2B, 8H]
        row_b = gin_scr[tb]                                          # [2B, 8H]
        gates_f = row_f[:, :G4] + jnp.dot(h_f, whh_f,
                                          preferred_element_type=jnp.float32)
        gates_b = row_b[:, G4:] + jnp.dot(h_b, whh_b,
                                          preferred_element_type=jnp.float32)
        hf_new, cf_new = _lstm_cell(gates_f, c_f, H)
        hb_new, cb_new = _lstm_cell(gates_b, c_b, H)
        vf = t < lens                                                # [2B, 1] bool
        vb = tb < lens
        h_f = jnp.where(vf, hf_new, h_f)
        c_f = jnp.where(vf, cf_new, c_f)
        h_b = jnp.where(vb, hb_new, h_b)
        c_b = jnp.where(vb, cb_new, c_b)
        yf_ref[t] = jnp.where(vf, hf_new, 0.0)                       # padded -> 0
        yb_ref[tb] = jnp.where(vb, hb_new, 0.0)
        return h_f, c_f, h_b, c_b

    zeros = jnp.zeros((B2, H), jnp.float32)
    lax.fori_loop(0, T, step, (zeros, zeros, zeros, zeros), unroll=(T <= 16))


def _lstm_cost(T, B2, D, H, extra_flops=0, extra_bytes=0):
    flops = (2 * T * B2 * D * 8 * H            # hoisted input projection
             + 2 * T * B2 * H * 4 * H * 2      # recurrent matmuls (fwd + bwd)
             + 30 * T * B2 * H                 # elementwise cell math
             + extra_flops)
    return pl.CostEstimate(
        flops=int(flops),
        transcendentals=int(10 * T * B2 * H),
        bytes_accessed=int(4 * (T * B2 * D + 2 * T * B2 * H
                                + D * 8 * H + 2 * H * 4 * H + 8 * H) + extra_bytes))


def bilstm_pair(p, x1, l1, x2, l2):
    """Run one bidirectional LSTM layer on both sentences in a single kernel.

    x1: [B, T1, D], x2: [B, T2, D]  ->  ([B, T1, 2H], [B, T2, 2H])
    """
    B, T1, D = x1.shape
    T2 = x2.shape[1]
    T = max(T1, T2)
    H = p["whh"].shape[1]

    if T1 < T:
        x1 = jnp.pad(x1, ((0, 0), (0, T - T1), (0, 0)))
    if T2 < T:
        x2 = jnp.pad(x2, ((0, 0), (0, T - T2), (0, 0)))

    x = jnp.concatenate([x1, x2], axis=0).astype(jnp.float32)        # [2B, T, D]
    x_tm = jnp.transpose(x, (1, 0, 2))                               # [T, 2B, D]
    lens = jnp.concatenate([l1, l2], axis=0).astype(jnp.int32).reshape(-1, 1)
    B2 = 2 * B

    kernel = functools.partial(_bilstm_seq_kernel, H=H)
    yf, yb = pl.pallas_call(
        kernel,
        out_shape=(jax.ShapeDtypeStruct((T, B2, H), jnp.float32),
                   jax.ShapeDtypeStruct((T, B2, H), jnp.float32)),
        in_specs=[VMEM_SPEC] * 5,
        out_specs=(VMEM_SPEC, VMEM_SPEC),
        scratch_shapes=[pltpu.VMEM((T, B2, 8 * H), jnp.float32)],
        cost_estimate=_lstm_cost(T, B2, D, H),
    )(lens, x_tm, p["wih"], p["whh"], p["b"])

    y = jnp.concatenate([yf, yb], axis=-1)                           # [T, 2B, 2H]
    y = jnp.transpose(y, (1, 0, 2))                                  # [2B, T, 2H]
    return y[:B, :T1], y[B:, :T2]


# ----------------------------------------------------------------------------
# 2. Fused biDAF attention + projection + ReLU + concat(layer2 feats) kernel.
#    Grid over batch ("parallel"); lengths via scalar prefetch (SMEM).
# ----------------------------------------------------------------------------
def _bidaf_proj_kernel(l1_ref, l2_ref, s1_ref, s2_ref, y1_ref, y2_ref,
                       w_ref, b_ref, o1_ref, o2_ref):
    bi = pl.program_id(0)
    len1 = l1_ref[bi]
    len2 = l2_ref[bi]

    s1 = s1_ref[0]                                                   # [T1, 2H]
    s2 = s2_ref[0]                                                   # [T2, 2H]
    T1 = s1.shape[0]
    T2 = s2.shape[0]

    # Similarity S[i, j] = <s1[i], s2[j]>
    S = lax.dot_general(s1, s2, (((1,), (1,)), ((), ())),
                        preferred_element_type=jnp.float32)          # [T1, T2]
    row = lax.broadcasted_iota(jnp.int32, (T1, T2), 0)
    col = lax.broadcasted_iota(jnp.int32, (T1, T2), 1)
    valid = (row < len1) & (col < len2)
    NEG = jnp.float32(-1e30)
    Sm = jnp.where(valid, S, NEG)

    # softmax over j (s1 attends over s2); fully-masked rows -> zero weights.
    m1 = jnp.max(Sm, axis=1, keepdims=True)
    e1 = jnp.where(valid, jnp.exp(Sm - m1), 0.0)
    d1 = jnp.sum(e1, axis=1, keepdims=True)
    w1 = e1 * pl.reciprocal(jnp.maximum(d1, 1e-30), approx=True)
    att1 = jnp.dot(w1, s2, preferred_element_type=jnp.float32)       # [T1, 2H]

    # softmax over i (s2 attends over s1)
    m2 = jnp.max(Sm, axis=0, keepdims=True)
    e2 = jnp.where(valid, jnp.exp(Sm - m2), 0.0)
    d2 = jnp.sum(e2, axis=0, keepdims=True)
    w2 = e2 * pl.reciprocal(jnp.maximum(d2, 1e-30), approx=True)
    att2 = lax.dot_general(w2, s1, (((0,), (0,)), ((), ())),
                           preferred_element_type=jnp.float32)       # [T2, 2H]

    w = w_ref[...]                                                   # [8H, P]
    bias = b_ref[...]                                                # [1, P]

    feat1 = jnp.concatenate([s1, att1, s1 - att1, s1 * att1], axis=-1)
    p1 = jnp.maximum(jnp.dot(feat1, w, preferred_element_type=jnp.float32) + bias, 0.0)
    feat2 = jnp.concatenate([s2, att2, s2 - att2, s2 * att2], axis=-1)
    p2 = jnp.maximum(jnp.dot(feat2, w, preferred_element_type=jnp.float32) + bias, 0.0)

    # Fuse the concat with the layer-2 word features (lstm_2 input) here.
    o1_ref[0] = jnp.concatenate([p1, y1_ref[0]], axis=-1)
    o2_ref[0] = jnp.concatenate([p2, y2_ref[0]], axis=-1)


def bidaf_proj(p, s1, l1, s2, l2, y2_1, y2_2):
    """biDAF + projection + ReLU + concat(layer2 features), per-batch tiled."""
    B, T1, D = s1.shape
    T2 = s2.shape[1]
    P = p["w"].shape[1]
    D2 = y2_1.shape[2]

    grid_spec = pltpu.PrefetchScalarGridSpec(
        num_scalar_prefetch=2,
        grid=(B,),
        in_specs=[
            pl.BlockSpec((1, T1, D), lambda i, l1r, l2r: (i, 0, 0)),
            pl.BlockSpec((1, T2, D), lambda i, l1r, l2r: (i, 0, 0)),
            pl.BlockSpec((1, T1, D2), lambda i, l1r, l2r: (i, 0, 0)),
            pl.BlockSpec((1, T2, D2), lambda i, l1r, l2r: (i, 0, 0)),
            pl.BlockSpec((4 * D, P), lambda i, l1r, l2r: (0, 0)),
            pl.BlockSpec((1, P), lambda i, l1r, l2r: (0, 0)),
        ],
        out_specs=(
            pl.BlockSpec((1, T1, P + D2), lambda i, l1r, l2r: (i, 0, 0)),
            pl.BlockSpec((1, T2, P + D2), lambda i, l1r, l2r: (i, 0, 0)),
        ),
    )
    return pl.pallas_call(
        _bidaf_proj_kernel,
        out_shape=(jax.ShapeDtypeStruct((B, T1, P + D2), jnp.float32),
                   jax.ShapeDtypeStruct((B, T2, P + D2), jnp.float32)),
        grid_spec=grid_spec,
        compiler_params=pltpu.CompilerParams(dimension_semantics=("parallel",)),
    )(l1.astype(jnp.int32), l2.astype(jnp.int32),
      s1, s2, y2_1.astype(jnp.float32), y2_2.astype(jnp.float32),
      p["w"], p["b"])


# ----------------------------------------------------------------------------
# 3. Layer-2 fused bidirectional LSTM + masked max-over-time + MLP classifier.
#    The running max over valid timesteps is kept in the fori_loop carry so the
#    full [T, 2B, 2H] sequence never leaves VMEM; the classifier MLP runs in
#    the epilogue of the same kernel.
# ----------------------------------------------------------------------------
def _bilstm_maxout_head_kernel(l_ref, x_ref, wih_ref, whh_ref, b_ref,
                               w1_ref, b1_ref, w2_ref, b2_ref,
                               out_ref, gin_scr, *, H):
    T, B2, _ = x_ref.shape
    B = B2 // 2
    G4 = 4 * H

    gin = lax.dot_general(x_ref[...], wih_ref[...], (((2,), (0,)), ((), ())),
                          preferred_element_type=jnp.float32)        # [T, 2B, 8H]
    gin_scr[...] = gin + b_ref[...].reshape(1, 1, 2 * G4)

    whh_f = whh_ref[0]          # [H, 4H]
    whh_b = whh_ref[1]          # [H, 4H]
    lens = l_ref[...]           # [2B, 1] int32
    NEG = jnp.float32(-1e30)

    def step(t, carry):
        h_f, c_f, h_b, c_b, mx_f, mx_b = carry
        tb = T - 1 - t
        row_f = gin_scr[t]                                           # [2B, 8H]
        row_b = gin_scr[tb]                                          # [2B, 8H]
        gates_f = row_f[:, :G4] + jnp.dot(h_f, whh_f,
                                          preferred_element_type=jnp.float32)
        gates_b = row_b[:, G4:] + jnp.dot(h_b, whh_b,
                                          preferred_element_type=jnp.float32)
        hf_new, cf_new = _lstm_cell(gates_f, c_f, H)
        hb_new, cb_new = _lstm_cell(gates_b, c_b, H)
        vf = t < lens                                                # [2B, 1] bool
        vb = tb < lens
        h_f = jnp.where(vf, hf_new, h_f)
        c_f = jnp.where(vf, cf_new, c_f)
        h_b = jnp.where(vb, hb_new, h_b)
        c_b = jnp.where(vb, cb_new, c_b)
        mx_f = jnp.where(vf, jnp.maximum(mx_f, hf_new), mx_f)
        mx_b = jnp.where(vb, jnp.maximum(mx_b, hb_new), mx_b)
        return h_f, c_f, h_b, c_b, mx_f, mx_b

    zeros = jnp.zeros((B2, H), jnp.float32)
    neg = jnp.full((B2, H), NEG, jnp.float32)
    carry = lax.fori_loop(0, T, step, (zeros, zeros, zeros, zeros, neg, neg),
                          unroll=(T <= 16))

    mx = jnp.concatenate([carry[4], carry[5]], axis=-1)              # [2B, 2H]
    m1 = mx[:B]                                                      # [B, 2H]
    m2 = mx[B:]                                                      # [B, 2H]
    feat = jnp.concatenate([m1, m2, jnp.abs(m1 - m2), m1 * m2], axis=-1)  # [B, 8H]
    hid = jnp.maximum(
        jnp.dot(feat, w1_ref[...], preferred_element_type=jnp.float32) + b1_ref[...],
        0.0)
    out_ref[...] = (jnp.dot(hid, w2_ref[...], preferred_element_type=jnp.float32)
                    + b2_ref[...])


def bilstm_maxout_head(lstm_p, cls_p, x1, l1, x2, l2):
    """Second BiLSTM layer + masked max-over-time + MLP classifier, fused."""
    B, T1, D = x1.shape
    T2 = x2.shape[1]
    T = max(T1, T2)
    H = lstm_p["whh"].shape[1]

    if T1 < T:
        x1 = jnp.pad(x1, ((0, 0), (0, T - T1), (0, 0)))
    if T2 < T:
        x2 = jnp.pad(x2, ((0, 0), (0, T - T2), (0, 0)))

    x = jnp.concatenate([x1, x2], axis=0).astype(jnp.float32)        # [2B, T, D]
    x_tm = jnp.transpose(x, (1, 0, 2))                               # [T, 2B, D]
    lens = jnp.concatenate([l1, l2], axis=0).astype(jnp.int32).reshape(-1, 1)
    B2 = 2 * B

    MLP_D = cls_p["w1"].shape[1]
    C = cls_p["w2"].shape[1]
    head_flops = 2 * B * 8 * H * MLP_D + 2 * B * MLP_D * C
    head_bytes = 4 * (8 * H * MLP_D + MLP_D * C + MLP_D + C + B * C)

    kernel = functools.partial(_bilstm_maxout_head_kernel, H=H)
    return pl.pallas_call(
        kernel,
        out_shape=jax.ShapeDtypeStruct((B, C), jnp.float32),
        in_specs=[VMEM_SPEC] * 9,
        out_specs=VMEM_SPEC,
        scratch_shapes=[pltpu.VMEM((T, B2, 8 * H), jnp.float32)],
        cost_estimate=_lstm_cost(T, B2, D, H,
                                 extra_flops=head_flops, extra_bytes=head_bytes),
    )(lens, x_tm, lstm_p["wih"], lstm_p["whh"], lstm_p["b"],
      cls_p["w1"], cls_p["b1"], cls_p["w2"], cls_p["b2"])


# ----------------------------------------------------------------------------
# ESIM forward
# ----------------------------------------------------------------------------
def esim_forward(params, layer1_s1, layer2_s1, l1, layer1_s2, layer2_s2, l2):
    # dropout_layer == identity (eval mode)
    s1_l1, s2_l1 = bilstm_pair(params["lstm1"],
                               layer1_s1.astype(jnp.float32), l1,
                               layer1_s2.astype(jnp.float32), l2)     # [B, T, 2H]

    # biDAF attention + projection + ReLU + concat(layer2 features), fused.
    f1, f2 = bidaf_proj(params["proj"], s1_l1, l1, s2_l1, l2, layer2_s1, layer2_s2)

    # Second BiLSTM + masked max-over-time + classifier MLP, fused in one kernel.
    return bilstm_maxout_head(params["lstm2"], params["cls"], f1, l1, f2, l2)


# ----------------------------------------------------------------------------
# Deterministic parameter initialization (PyTorch-style uniform bounds),
# packed into the fused-kernel layouts.
# ----------------------------------------------------------------------------
def _uniform(key, shape, bound):
    return jax.random.uniform(key, shape, jnp.float32, -bound, bound)


def init_lstm(key, d_in, h):
    ks = jax.random.split(key, 8)
    bound = 1.0 / float(h) ** 0.5

    def one_dir(k4):
        wih = _uniform(k4[0], (d_in, 4 * h), bound)
        whh = _uniform(k4[1], (h, 4 * h), bound)
        b = _uniform(k4[2], (1, 4 * h), bound) + _uniform(k4[3], (1, 4 * h), bound)
        return wih, whh, b

    wih_f, whh_f, b_f = one_dir(ks[0:4])
    wih_b, whh_b, b_b = one_dir(ks[4:8])
    return dict(wih=jnp.concatenate([wih_f, wih_b], axis=1),   # [D, 8H]
                whh=jnp.stack([whh_f, whh_b], axis=0),         # [2, H, 4H]
                b=jnp.concatenate([b_f, b_b], axis=1))         # [1, 8H]


def init_linear(key, d_in, d_out):
    k1, k2 = jax.random.split(key)
    bound = 1.0 / float(d_in) ** 0.5
    return _uniform(k1, (d_in, d_out), bound), _uniform(k2, (1, d_out), bound)


def init_params(key, d1, d2, h, mlp_d, n_class):
    k = jax.random.split(key, 4)
    proj_w, proj_b = init_linear(k[2], 2 * h * 4, h)
    w1, b1 = init_linear(jax.random.fold_in(k[3], 0), 2 * h * 4, mlp_d)
    w2, b2 = init_linear(jax.random.fold_in(k[3], 1), mlp_d, n_class)
    return dict(
        lstm1=init_lstm(k[0], d1, h),
        lstm2=init_lstm(k[1], d2, h),
        proj=dict(w=proj_w, b=proj_b),
        cls=dict(w1=w1, b1=b1, w2=w2, b2=b2),
    )


if __name__ == "__main__":
    # Small shapes consistent with the module:
    #   rnn_size_in=(48, 48), rnn_size_out=(16, 16), mlp_d=32, num_of_class=3
    B, T, H = 2, 8, 16
    D1 = 48            # layer1 feature dim (= rnn_size_in[0])
    D2L = 32           # layer2 feature dim; H + D2L = rnn_size_in[1] = 48
    MLP_D, C = 32, 3

    key = jax.random.PRNGKey(0)
    kp, k1, k2, k3, k4 = jax.random.split(key, 5)

    params = init_params(kp, D1, H + D2L, H, MLP_D, C)

    layer1_s1 = jax.random.normal(k1, (B, T, D1), jnp.float32)
    layer2_s1 = jax.random.normal(k2, (B, T, D2L), jnp.float32)
    layer1_s2 = jax.random.normal(k3, (B, T, D1), jnp.float32)
    layer2_s2 = jax.random.normal(k4, (B, T, D2L), jnp.float32)
    l1 = jnp.array([8, 5], dtype=jnp.int32)
    l2 = jnp.array([6, 8], dtype=jnp.int32)

    fwd = jax.jit(esim_forward)
    logits = fwd(params, layer1_s1, layer2_s1, l1, layer1_s2, layer2_s2, l2)
    jax.block_until_ready(logits)
    assert logits.shape == (B, C)
    print("KERNEL_OK")
</pallas_src>

<mosaic_0001>
module attributes {stable_mosaic.version = 11 : i64} {
  func.func @_bidaf_proj_kernel(%arg0: i32, %arg1: memref<2xi32, #tpu.memory_space<smem>>, %arg2: memref<2xi32, #tpu.memory_space<smem>>, %arg3: memref<1x8x32xf32, #tpu.memory_space<vmem>>, %arg4: memref<1x8x32xf32, #tpu.memory_space<vmem>>, %arg5: memref<1x8x32xf32, #tpu.memory_space<vmem>>, %arg6: memref<1x8x32xf32, #tpu.memory_space<vmem>>, %arg7: memref<128x16xf32, #tpu.memory_space<vmem>>, %arg8: memref<1x16xf32, #tpu.memory_space<vmem>>, %arg9: memref<1x8x48xf32, #tpu.memory_space<vmem>>, %arg10: memref<1x8x48xf32, #tpu.memory_space<vmem>>) attributes {dimension_semantics = [#tpu.dimension_semantics<parallel>], iteration_bounds = array<i64: 2>, scalar_prefetch = 2 : i64, scratch_operands = 0 : i64, tpu.core_type = #tpu.core_type<tc>, window_params = [{transform_indices = @transform_0, window_bounds = array<i64: 1, 8, 32>}, {transform_indices = @transform_1, window_bounds = array<i64: 1, 8, 32>}, {transform_indices = @transform_2, window_bounds = array<i64: 1, 8, 32>}, {transform_indices = @transform_3, window_bounds = array<i64: 1, 8, 32>}, {pipeline_mode = #tpu.pipeline_mode<synchronous>, transform_indices = @transform_4, window_bounds = array<i64: 128, 16>}, {pipeline_mode = #tpu.pipeline_mode<synchronous>, transform_indices = @transform_5, window_bounds = array<i64: 1, 16>}, {transform_indices = @transform_6, window_bounds = array<i64: 1, 8, 48>}, {transform_indices = @transform_7, window_bounds = array<i64: 1, 8, 48>}]} {
    %0 = arith.index_cast %arg0 : i32 to index
    %1 = memref.load %arg1[%0] : memref<2xi32, #tpu.memory_space<smem>>
    %2 = arith.index_cast %arg0 : i32 to index
    %3 = memref.load %arg2[%2] : memref<2xi32, #tpu.memory_space<smem>>
    %c0 = arith.constant 0 : index
    %c0_0 = arith.constant 0 : index
    %c0_1 = arith.constant 0 : index
    %4 = vector.load %arg3[%c0, %c0_0, %c0_1] : memref<1x8x32xf32, #tpu.memory_space<vmem>>, vector<1x8x32xf32>
    %5 = vector.shape_cast %4 : vector<1x8x32xf32> to vector<8x32xf32>
    %c0_2 = arith.constant 0 : index
    %c0_3 = arith.constant 0 : index
    %c0_4 = arith.constant 0 : index
    %6 = vector.load %arg4[%c0_2, %c0_3, %c0_4] : memref<1x8x32xf32, #tpu.memory_space<vmem>>, vector<1x8x32xf32>
    %7 = vector.shape_cast %6 : vector<1x8x32xf32> to vector<8x32xf32>
    %cst = arith.constant dense<0.000000e+00> : vector<8x8xf32>
    %8 = tpu.matmul %5, %7, %cst {dimension_numbers = #tpu.dot_dimension_numbers<[1], [1], [0], [0], [0, 0, 1, 0], [], []>} : vector<8x32xf32>, vector<8x32xf32>, vector<8x8xf32> -> vector<8x8xf32>
    %9 = tpu.iota {dimensions = array<i32: 0>} : vector<8x8xi32>
    %10 = tpu.iota {dimensions = array<i32: 1>} : vector<8x8xi32>
    %11 = vector.broadcast %1 : i32 to vector<8x8xi32>
    %12 = arith.cmpi slt, %9, %11 : vector<8x8xi32>
    %13 = vector.broadcast %3 : i32 to vector<8x8xi32>
    %14 = arith.cmpi slt, %10, %13 : vector<8x8xi32>
    %15 = arith.andi %12, %14 : vector<8x8xi1>
    %cst_5 = arith.constant -1.000000e+30 : f32
    %16 = vector.broadcast %cst_5 : f32 to vector<8x8xf32>
    %17 = arith.select %15, %8, %16 : vector<8x8xi1>, vector<8x8xf32>
    %cst_6 = arith.constant dense<0xFF800000> : vector<8xf32>
    %18 = vector.multi_reduction <maximumf>, %17, %cst_6 [1] : vector<8x8xf32> to vector<8xf32>
    %19 = vector.shape_cast %18 : vector<8xf32> to vector<8x1xf32>
    %20 = vector.broadcast %19 : vector<8x1xf32> to vector<8x8xf32>
    %21 = arith.subf %17, %20 : vector<8x8xf32>
    %22 = math.exp %21 : vector<8x8xf32>
    %cst_7 = arith.constant 0.000000e+00 : f32
    %23 = vector.broadcast %cst_7 : f32 to vector<8x8xf32>
    %24 = arith.select %15, %22, %23 : vector<8x8xi1>, vector<8x8xf32>
    %cst_8 = arith.constant dense<0.000000e+00> : vector<8xf32>
    %25 = vector.multi_reduction <add>, %24, %cst_8 [1] : vector<8x8xf32> to vector<8xf32>
    %26 = vector.shape_cast %25 : vector<8xf32> to vector<8x1xf32>
    %cst_9 = arith.constant 1.000000e-30 : f32
    %27 = vector.broadcast %cst_9 : f32 to vector<8x1xf32>
    %28 = arith.maximumf %26, %27 : vector<8x1xf32>
    %29 = tpu.reciprocal %28 {approx = true} : vector<8x1xf32> -> vector<8x1xf32>
    %30 = vector.broadcast %29 : vector<8x1xf32> to vector<8x8xf32>
    %31 = arith.mulf %24, %30 : vector<8x8xf32>
    %cst_10 = arith.constant dense<0.000000e+00> : vector<8x32xf32>
    %32 = tpu.matmul %31, %7, %cst_10 {dimension_numbers = #tpu.dot_dimension_numbers<[1], [0], [0], [1], [0, 0, 1, 1], [], []>} : vector<8x8xf32>, vector<8x32xf32>, vector<8x32xf32> -> vector<8x32xf32>
    %cst_11 = arith.constant dense<0xFF800000> : vector<8xf32>
    %33 = vector.multi_reduction <maximumf>, %17, %cst_11 [0] : vector<8x8xf32> to vector<8xf32>
    %34 = vector.shape_cast %33 : vector<8xf32> to vector<1x8xf32>
    %35 = vector.broadcast %34 : vector<1x8xf32> to vector<8x8xf32>
    %36 = arith.subf %17, %35 : vector<8x8xf32>
    %37 = math.exp %36 : vector<8x8xf32>
    %cst_12 = arith.constant 0.000000e+00 : f32
    %38 = vector.broadcast %cst_12 : f32 to vector<8x8xf32>
    %39 = arith.select %15, %37, %38 : vector<8x8xi1>, vector<8x8xf32>
    %cst_13 = arith.constant dense<0.000000e+00> : vector<8xf32>
    %40 = vector.multi_reduction <add>, %39, %cst_13 [0] : vector<8x8xf32> to vector<8xf32>
    %41 = vector.shape_cast %40 : vector<8xf32> to vector<1x8xf32>
    %cst_14 = arith.constant 1.000000e-30 : f32
    %42 = vector.broadcast %cst_14 : f32 to vector<1x8xf32>
    %43 = arith.maximumf %41, %42 : vector<1x8xf32>
    %44 = tpu.reciprocal %43 {approx = true} : vector<1x8xf32> -> vector<1x8xf32>
    %45 = vector.broadcast %44 : vector<1x8xf32> to vector<8x8xf32>
    %46 = arith.mulf %39, %45 : vector<8x8xf32>
    %cst_15 = arith.constant dense<0.000000e+00> : vector<8x32xf32>
    %47 = tpu.matmul %46, %5, %cst_15 {dimension_numbers = #tpu.dot_dimension_numbers<[0], [0], [1], [1], [0, 1, 1, 1], [], []>} : vector<8x8xf32>, vector<8x32xf32>, vector<8x32xf32> -> vector<8x32xf32>
    %c0_16 = arith.constant 0 : index
    %c0_17 = arith.constant 0 : index
    %48 = vector.load %arg7[%c0_16, %c0_17] : memref<128x16xf32, #tpu.memory_space<vmem>>, vector<128x16xf32>
    %c0_18 = arith.constant 0 : index
    %c0_19 = arith.constant 0 : index
    %49 = vector.load %arg8[%c0_18, %c0_19] : memref<1x16xf32, #tpu.memory_space<vmem>>, vector<1x16xf32>
    %50 = arith.subf %5, %32 : vector<8x32xf32>
    %51 = arith.mulf %5, %32 : vector<8x32xf32>
    %52 = tpu.concatenate %5, %32, %50, %51 in 1 : vector<8x32xf32>, vector<8x32xf32>, vector<8x32xf32>, vector<8x32xf32> -> vector<8x128xf32>
    %cst_20 = arith.constant dense<0.000000e+00> : vector<8x16xf32>
    %53 = tpu.matmul %52, %48, %cst_20 {dimension_numbers = #tpu.dot_dimension_numbers<[1], [0], [0], [1], [0, 0, 1, 1], [], []>} : vector<8x128xf32>, vector<128x16xf32>, vector<8x16xf32> -> vector<8x16xf32>
    %54 = vector.broadcast %49 : vector<1x16xf32> to vector<8x16xf32>
    %55 = arith.addf %53, %54 : vector<8x16xf32>
    %cst_21 = arith.constant 0.000000e+00 : f32
    %56 = vector.broadcast %cst_21 : f32 to vector<8x16xf32>
    %57 = arith.maximumf %55, %56 : vector<8x16xf32>
    %58 = arith.subf %7, %47 : vector<8x32xf32>
    %59 = arith.mulf %7, %47 : vector<8x32xf32>
    %60 = tpu.concatenate %7, %47, %58, %59 in 1 : vector<8x32xf32>, vector<8x32xf32>, vector<8x32xf32>, vector<8x32xf32> -> vector<8x128xf32>
    %cst_22 = arith.constant dense<0.000000e+00> : vector<8x16xf32>
    %61 = tpu.matmul %60, %48, %cst_22 {dimension_numbers = #tpu.dot_dimension_numbers<[1], [0], [0], [1], [0, 0, 1, 1], [], []>} : vector<8x128xf32>, vector<128x16xf32>, vector<8x16xf32> -> vector<8x16xf32>
    %62 = vector.broadcast %49 : vector<1x16xf32> to vector<8x16xf32>
    %63 = arith.addf %61, %62 : vector<8x16xf32>
    %cst_23 = arith.constant 0.000000e+00 : f32
    %64 = vector.broadcast %cst_23 : f32 to vector<8x16xf32>
    %65 = arith.maximumf %63, %64 : vector<8x16xf32>
    %c0_24 = arith.constant 0 : index
    %c0_25 = arith.constant 0 : index
    %c0_26 = arith.constant 0 : index
    %66 = vector.load %arg5[%c0_24, %c0_25, %c0_26] : memref<1x8x32xf32, #tpu.memory_space<vmem>>, vector<1x8x32xf32>
    %67 = vector.shape_cast %66 : vector<1x8x32xf32> to vector<8x32xf32>
    %68 = tpu.concatenate %57, %67 in 1 : vector<8x16xf32>, vector<8x32xf32> -> vector<8x48xf32>
    %c0_27 = arith.constant 0 : index
    %c0_28 = arith.constant 0 : index
    %c0_29 = arith.constant 0 : index
    %69 = vector.load %arg9[%c0_27, %c0_28, %c0_29] : memref<1x8x48xf32, #tpu.memory_space<vmem>>, vector<1x8x48xf32>
    %70 = vector.shape_cast %69 : vector<1x8x48xf32> to vector<8x48xf32>
    %71 = vector.shape_cast %68 : vector<8x48xf32> to vector<1x8x48xf32>
    tpu.vector_store %arg9[%c0_27, %c0_28, %c0_29], %71 {strides = array<i32>} : memref<1x8x48xf32, #tpu.memory_space<vmem>>, vector<1x8x48xf32>,
    %c0_30 = arith.constant 0 : index
    %c0_31 = arith.constant 0 : index
    %c0_32 = arith.constant 0 : index
    %72 = vector.load %arg6[%c0_30, %c0_31, %c0_32] : memref<1x8x32xf32, #tpu.memory_space<vmem>>, vector<1x8x32xf32>
    %73 = vector.shape_cast %72 : vector<1x8x32xf32> to vector<8x32xf32>
    %74 = tpu.concatenate %65, %73 in 1 : vector<8x16xf32>, vector<8x32xf32> -> vector<8x48xf32>
    %c0_33 = arith.constant 0 : index
    %c0_34 = arith.constant 0 : index
    %c0_35 = arith.constant 0 : index
    %75 = vector.load %arg10[%c0_33, %c0_34, %c0_35] : memref<1x8x48xf32, #tpu.memory_space<vmem>>, vector<1x8x48xf32>
    %76 = vector.shape_cast %75 : vector<1x8x48xf32> to vector<8x48xf32>
    %77 = vector.shape_cast %74 : vector<8x48xf32> to vector<1x8x48xf32>
    tpu.vector_store %arg10[%c0_33, %c0_34, %c0_35], %77 {strides = array<i32>} : memref<1x8x48xf32, #tpu.memory_space<vmem>>, vector<1x8x48xf32>,
    return
  }
  func.func @transform_0(%arg0: i32, %arg1: memref<2xi32, #tpu.memory_space<smem>>, %arg2: memref<2xi32, #tpu.memory_space<smem>>) -> (i32, i32, i32) {
    %c0_i32 = arith.constant 0 : i32
    %c0_i32_0 = arith.constant 0 : i32
    %c0_i32_1 = arith.constant 0 : i32
    return %arg0, %c0_i32, %c0_i32_0 : i32, i32, i32
  }
  func.func @transform_1(%arg0: i32, %arg1: memref<2xi32, #tpu.memory_space<smem>>, %arg2: memref<2xi32, #tpu.memory_space<smem>>) -> (i32, i32, i32) {
    %c0_i32 = arith.constant 0 : i32
    %c0_i32_0 = arith.constant 0 : i32
    %c0_i32_1 = arith.constant 0 : i32
    return %arg0, %c0_i32, %c0_i32_0 : i32, i32, i32
  }
  func.func @transform_2(%arg0: i32, %arg1: memref<2xi32, #tpu.memory_space<smem>>, %arg2: memref<2xi32, #tpu.memory_space<smem>>) -> (i32, i32, i32) {
    %c0_i32 = arith.constant 0 : i32
    %c0_i32_0 = arith.constant 0 : i32
    %c0_i32_1 = arith.constant 0 : i32
    return %arg0, %c0_i32, %c0_i32_0 : i32, i32, i32
  }
  func.func @transform_3(%arg0: i32, %arg1: memref<2xi32, #tpu.memory_space<smem>>, %arg2: memref<2xi32, #tpu.memory_space<smem>>) -> (i32, i32, i32) {
    %c0_i32 = arith.constant 0 : i32
    %c0_i32_0 = arith.constant 0 : i32
    %c0_i32_1 = arith.constant 0 : i32
    return %arg0, %c0_i32, %c0_i32_0 : i32, i32, i32
  }
  func.func @transform_4(%arg0: i32, %arg1: memref<2xi32, #tpu.memory_space<smem>>, %arg2: memref<2xi32, #tpu.memory_space<smem>>) -> (i32, i32) {
    %c0_i32 = arith.constant 0 : i32
    %c0_i32_0 = arith.constant 0 : i32
    %c0_i32_1 = arith.constant 0 : i32
    return %c0_i32, %c0_i32_0 : i32, i32
  }
  func.func @transform_5(%arg0: i32, %arg1: memref<2xi32, #tpu.memory_space<smem>>, %arg2: memref<2xi32, #tpu.memory_space<smem>>) -> (i32, i32) {
    %c0_i32 = arith.constant 0 : i32
    %c0_i32_0 = arith.constant 0 : i32
    %c0_i32_1 = arith.constant 0 : i32
    return %c0_i32, %c0_i32_0 : i32, i32
  }
  func.func @transform_6(%arg0: i32, %arg1: memref<2xi32, #tpu.memory_space<smem>>, %arg2: memref<2xi32, #tpu.memory_space<smem>>) -> (i32, i32, i32) {
    %c0_i32 = arith.constant 0 : i32
    %c0_i32_0 = arith.constant 0 : i32
    %c0_i32_1 = arith.constant 0 : i32
    return %arg0, %c0_i32, %c0_i32_0 : i32, i32, i32
  }
  func.func @transform_7(%arg0: i32, %arg1: memref<2xi32, #tpu.memory_space<smem>>, %arg2: memref<2xi32, #tpu.memory_space<smem>>) -> (i32, i32, i32) {
    %c0_i32 = arith.constant 0 : i32
    %c0_i32_0 = arith.constant 0 : i32
    %c0_i32_1 = arith.constant 0 : i32
    return %arg0, %c0_i32, %c0_i32_0 : i32, i32, i32
  }
}

module attributes {stable_mosaic.version = 11 : i64} {
  func.func @_bilstm_seq_kernel(%arg0: memref<4x1xi32, #tpu.memory_space<vmem>>, %arg1: memref<8x4x48xf32, #tpu.memory_space<vmem>>, %arg2: memref<48x128xf32, #tpu.memory_space<vmem>>, %arg3: memref<2x16x64xf32, #tpu.memory_space<vmem>>, %arg4: memref<1x128xf32, #tpu.memory_space<vmem>>, %arg5: memref<8x4x16xf32, #tpu.memory_space<vmem>>, %arg6: memref<8x4x16xf32, #tpu.memory_space<vmem>>, %arg7: memref<8x4x128xf32, #tpu.memory_space<vmem>>) attributes {dimension_semantics = [], scalar_prefetch = 0 : i64, scratch_operands = 1 : i64, tpu.core_type = #tpu.core_type<tc>} {
    %c0 = arith.constant 0 : index
    %c0_0 = arith.constant 0 : index
    %c0_1 = arith.constant 0 : index
    %0 = vector.load %arg1[%c0, %c0_0, %c0_1] : memref<8x4x48xf32, #tpu.memory_space<vmem>>, vector<8x4x48xf32>
    %c0_2 = arith.constant 0 : index
    %c0_3 = arith.constant 0 : index
    %1 = vector.load %arg2[%c0_2, %c0_3] : memref<48x128xf32, #tpu.memory_space<vmem>>, vector<48x128xf32>
    %cst = arith.constant dense<0.000000e+00> : vector<8x4x128xf32>
    %2 = tpu.matmul %0, %1, %cst {dimension_numbers = #tpu.dot_dimension_numbers<[2], [0], [0, 1], [1], [0, 0, 0, 1, 1, 1], [], []>} : vector<8x4x48xf32>, vector<48x128xf32>, vector<8x4x128xf32> -> vector<8x4x128xf32>
    %c0_4 = arith.constant 0 : index
    %c0_5 = arith.constant 0 : index
    %3 = vector.load %arg4[%c0_4, %c0_5] : memref<1x128xf32, #tpu.memory_space<vmem>>, vector<1x128xf32>
    %4 = vector.shape_cast %3 : vector<1x128xf32> to vector<1x1x128xf32>
    %5 = vector.broadcast %4 : vector<1x1x128xf32> to vector<8x4x128xf32>
    %6 = arith.addf %2, %5 : vector<8x4x128xf32>
    %c0_6 = arith.constant 0 : index
    %c0_7 = arith.constant 0 : index
    %c0_8 = arith.constant 0 : index
    %7 = vector.load %arg7[%c0_6, %c0_7, %c0_8] : memref<8x4x128xf32, #tpu.memory_space<vmem>>, vector<8x4x128xf32>
    tpu.vector_store %arg7[%c0_6, %c0_7, %c0_8], %6 {strides = array<i32>} : memref<8x4x128xf32, #tpu.memory_space<vmem>>, vector<8x4x128xf32>,
    %c0_9 = arith.constant 0 : index
    %c0_10 = arith.constant 0 : index
    %c0_11 = arith.constant 0 : index
    %8 = vector.load %arg3[%c0_9, %c0_10, %c0_11] : memref<2x16x64xf32, #tpu.memory_space<vmem>>, vector<1x16x64xf32>
    %9 = vector.shape_cast %8 : vector<1x16x64xf32> to vector<16x64xf32>
    %c1 = arith.constant 1 : index
    %c0_12 = arith.constant 0 : index
    %c0_13 = arith.constant 0 : index
    %10 = vector.load %arg3[%c1, %c0_12, %c0_13] : memref<2x16x64xf32, #tpu.memory_space<vmem>>, vector<1x16x64xf32>
    %11 = vector.shape_cast %10 : vector<1x16x64xf32> to vector<16x64xf32>
    %c0_14 = arith.constant 0 : index
    %c0_15 = arith.constant 0 : index
    %12 = vector.load %arg0[%c0_14, %c0_15] : memref<4x1xi32, #tpu.memory_space<vmem>>, vector<4x1xi32>
    %cst_16 = arith.constant 0.000000e+00 : f32
    %13 = vector.broadcast %cst_16 : f32 to vector<4x16xf32>
    %c0_i32 = arith.constant 0 : i32
    %c7_i32 = arith.constant 7 : i32
    %14 = arith.subi %c7_i32, %c0_i32 : i32
    %15 = arith.index_cast %c0_i32 : i32 to index
    %c0_17 = arith.constant 0 : index
    %c0_18 = arith.constant 0 : index
    %16 = vector.load %arg7[%15, %c0_17, %c0_18] : memref<8x4x128xf32, #tpu.memory_space<vmem>>, vector<1x4x128xf32>
    %17 = vector.shape_cast %16 : vector<1x4x128xf32> to vector<4x128xf32>
    %18 = arith.index_cast %14 : i32 to index
    %c0_19 = arith.constant 0 : index
    %c0_20 = arith.constant 0 : index
    %19 = vector.load %arg7[%18, %c0_19, %c0_20] : memref<8x4x128xf32, #tpu.memory_space<vmem>>, vector<1x4x128xf32>
    %20 = vector.shape_cast %19 : vector<1x4x128xf32> to vector<4x128xf32>
    %21 = vector.extract_strided_slice %17 {offsets = [0, 0], sizes = [4, 64], strides = [1, 1]} : vector<4x128xf32> to vector<4x64xf32>
    %cst_21 = arith.constant dense<0.000000e+00> : vector<4x64xf32>
    %22 = tpu.matmul %13, %9, %cst_21 {dimension_numbers = #tpu.dot_dimension_numbers<[1], [0], [0], [1], [0, 0, 1, 1], [], []>} : vector<4x16xf32>, vector<16x64xf32>, vector<4x64xf32> -> vector<4x64xf32>
    %23 = arith.addf %21, %22 : vector<4x64xf32>
    %24 = vector.extract_strided_slice %20 {offsets = [0, 64], sizes = [4, 64], strides = [1, 1]} : vector<4x128xf32> to vector<4x64xf32>
    %cst_22 = arith.constant dense<0.000000e+00> : vector<4x64xf32>
    %25 = tpu.matmul %13, %11, %cst_22 {dimension_numbers = #tpu.dot_dimension_numbers<[1], [0], [0], [1], [0, 0, 1, 1], [], []>} : vector<4x16xf32>, vector<16x64xf32>, vector<4x64xf32> -> vector<4x64xf32>
    %26 = arith.addf %24, %25 : vector<4x64xf32>
    %27 = vector.extract_strided_slice %23 {offsets = [0, 0], sizes = [4, 16], strides = [1, 1]} : vector<4x64xf32> to vector<4x16xf32>
    %28 = arith.negf %27 : vector<4x16xf32>
    %29 = math.exp %28 : vector<4x16xf32>
    %cst_23 = arith.constant 1.000000e+00 : f32
    %30 = vector.broadcast %cst_23 : f32 to vector<4x16xf32>
    %31 = arith.addf %30, %29 : vector<4x16xf32>
    %32 = arith.divf %30, %31 : vector<4x16xf32>
    %33 = vector.extract_strided_slice %23 {offsets = [0, 16], sizes = [4, 16], strides = [1, 1]} : vector<4x64xf32> to vector<4x16xf32>
    %34 = arith.negf %33 : vector<4x16xf32>
    %35 = math.exp %34 : vector<4x16xf32>
    %cst_24 = arith.constant 1.000000e+00 : f32
    %36 = vector.broadcast %cst_24 : f32 to vector<4x16xf32>
    %37 = arith.addf %36, %35 : vector<4x16xf32>
    %38 = arith.divf %36, %37 : vector<4x16xf32>
    %39 = vector.extract_strided_slice %23 {offsets = [0, 32], sizes = [4, 16], strides = [1, 1]} : vector<4x64xf32> to vector<4x16xf32>
    %40 = math.tanh %39 : vector<4x16xf32>
    %41 = vector.extract_strided_slice %23 {offsets = [0, 48], sizes = [4, 16], strides = [1, 1]} : vector<4x64xf32> to vector<4x16xf32>
    %42 = arith.negf %41 : vector<4x16xf32>
    %43 = math.exp %42 : vector<4x16xf32>
    %cst_25 = arith.constant 1.000000e+00 : f32
    %44 = vector.broadcast %cst_25 : f32 to vector<4x16xf32>
    %45 = arith.addf %44, %43 : vector<4x16xf32>
    %46 = arith.divf %44, %45 : vector<4x16xf32>
    %47 = arith.mulf %38, %13 : vector<4x16xf32>
    %48 = arith.mulf %32, %40 : vector<4x16xf32>
    %49 = arith.addf %47, %48 : vector<4x16xf32>
    %50 = math.tanh %49 : vector<4x16xf32>
    %51 = arith.mulf %46, %50 : vector<4x16xf32>
    %52 = vector.extract_strided_slice %26 {offsets = [0, 0], sizes = [4, 16], strides = [1, 1]} : vector<4x64xf32> to vector<4x16xf32>
    %53 = arith.negf %52 : vector<4x16xf32>
    %54 = math.exp %53 : vector<4x16xf32>
    %cst_26 = arith.constant 1.000000e+00 : f32
    %55 = vector.broadcast %cst_26 : f32 to vector<4x16xf32>
    %56 = arith.addf %55, %54 : vector<4x16xf32>
    %57 = arith.divf %55, %56 : vector<4x16xf32>
    %58 = vector.extract_strided_slice %26 {offsets = [0, 16], sizes = [4, 16], strides = [1, 1]} : vector<4x64xf32> to vector<4x16xf32>
    %59 = arith.negf %58 : vector<4x16xf32>
    %60 = math.exp %59 : vector<4x16xf32>
    %cst_27 = arith.constant 1.000000e+00 : f32
    %61 = vector.broadcast %cst_27 : f32 to vector<4x16xf32>
    %62 = arith.addf %61, %60 : vector<4x16xf32>
    %63 = arith.divf %61, %62 : vector<4x16xf32>
    %64 = vector.extract_strided_slice %26 {offsets = [0, 32], sizes = [4, 16], strides = [1, 1]} : vector<4x64xf32> to vector<4x16xf32>
    %65 = math.tanh %64 : vector<4x16xf32>
    %66 = vector.extract_strided_slice %26 {offsets = [0, 48], sizes = [4, 16], strides = [1, 1]} : vector<4x64xf32> to vector<4x16xf32>
    %67 = arith.negf %66 : vector<4x16xf32>
    %68 = math.exp %67 : vector<4x16xf32>
    %cst_28 = arith.constant 1.000000e+00 : f32
    %69 = vector.broadcast %cst_28 : f32 to vector<4x16xf32>
    %70 = arith.addf %69, %68 : vector<4x16xf32>
    %71 = arith.divf %69, %70 : vector<4x16xf32>
    %72 = arith.mulf %63, %13 : vector<4x16xf32>
    %73 = arith.mulf %57, %65 : vector<4x16xf32>
    %74 = arith.addf %72, %73 : vector<4x16xf32>
    %75 = math.tanh %74 : vector<4x16xf32>
    %76 = arith.mulf %71, %75 : vector<4x16xf32>
    %77 = vector.broadcast %c0_i32 : i32 to vector<4x1xi32>
    %78 = arith.cmpi slt, %77, %12 : vector<4x1xi32>
    %79 = vector.broadcast %14 : i32 to vector<4x1xi32>
    %80 = arith.cmpi slt, %79, %12 : vector<4x1xi32>
    %81 = vector.shape_cast %78 : vector<4x1xi1> to vector<4x1xi1>
    %82 = vector.broadcast %81 : vector<4x1xi1> to vector<4x16xi1>
    %83 = arith.select %82, %51, %13 : vector<4x16xi1>, vector<4x16xf32>
    %84 = vector.shape_cast %78 : vector<4x1xi1> to vector<4x1xi1>
    %85 = vector.broadcast %84 : vector<4x1xi1> to vector<4x16xi1>
    %86 = arith.select %85, %49, %13 : vector<4x16xi1>, vector<4x16xf32>
    %87 = vector.shape_cast %80 : vector<4x1xi1> to vector<4x1xi1>
    %88 = vector.broadcast %87 : vector<4x1xi1> to vector<4x16xi1>
    %89 = arith.select %88, %76, %13 : vector<4x16xi1>, vector<4x16xf32>
    %90 = vector.shape_cast %80 : vector<4x1xi1> to vector<4x1xi1>
    %91 = vector.broadcast %90 : vector<4x1xi1> to vector<4x16xi1>
    %92 = arith.select %91, %74, %13 : vector<4x16xi1>, vector<4x16xf32>
    %cst_29 = arith.constant 0.000000e+00 : f32
    %93 = vector.shape_cast %78 : vector<4x1xi1> to vector<4x1xi1>
    %94 = vector.broadcast %93 : vector<4x1xi1> to vector<4x16xi1>
    %95 = vector.broadcast %cst_29 : f32 to vector<4x16xf32>
    %96 = arith.select %94, %51, %95 : vector<4x16xi1>, vector<4x16xf32>
    %97 = arith.index_cast %c0_i32 : i32 to index
    %c0_30 = arith.constant 0 : index
    %c0_31 = arith.constant 0 : index
    %98 = vector.load %arg5[%97, %c0_30, %c0_31] : memref<8x4x16xf32, #tpu.memory_space<vmem>>, vector<1x4x16xf32>
    %99 = vector.shape_cast %98 : vector<1x4x16xf32> to vector<4x16xf32>
    %100 = vector.shape_cast %96 : vector<4x16xf32> to vector<1x4x16xf32>
    tpu.vector_store %arg5[%97, %c0_30, %c0_31], %100 {strides = array<i32>} : memref<8x4x16xf32, #tpu.memory_space<vmem>>, vector<1x4x16xf32>,
    %cst_32 = arith.constant 0.000000e+00 : f32
    %101 = vector.shape_cast %80 : vector<4x1xi1> to vector<4x1xi1>
    %102 = vector.broadcast %101 : vector<4x1xi1> to vector<4x16xi1>
    %103 = vector.broadcast %cst_32 : f32 to vector<4x16xf32>
    %104 = arith.select %102, %76, %103 : vector<4x16xi1>, vector<4x16xf32>
    %105 = arith.index_cast %14 : i32 to index
    %c0_33 = arith.constant 0 : index
    %c0_34 = arith.constant 0 : index
    %106 = vector.load %arg6[%105, %c0_33, %c0_34] : memref<8x4x16xf32, #tpu.memory_space<vmem>>, vector<1x4x16xf32>
    %107 = vector.shape_cast %106 : vector<1x4x16xf32> to vector<4x16xf32>
    %108 = vector.shape_cast %104 : vector<4x16xf32> to vector<1x4x16xf32>
    tpu.vector_store %arg6[%105, %c0_33, %c0_34], %108 {strides = array<i32>} : memref<8x4x16xf32, #tpu.memory_space<vmem>>, vector<1x4x16xf32>,
    %c1_i32 = arith.constant 1 : i32
    %c7_i32_35 = arith.constant 7 : i32
    %109 = arith.subi %c7_i32_35, %c1_i32 : i32
    %110 = arith.index_cast %c1_i32 : i32 to index
    %c0_36 = arith.constant 0 : index
    %c0_37 = arith.constant 0 : index
    %111 = vector.load %arg7[%110, %c0_36, %c0_37] : memref<8x4x128xf32, #tpu.memory_space<vmem>>, vector<1x4x128xf32>
    %112 = vector.shape_cast %111 : vector<1x4x128xf32> to vector<4x128xf32>
    %113 = arith.index_cast %109 : i32 to index
    %c0_38 = arith.constant 0 : index
    %c0_39 = arith.constant 0 : index
    %114 = vector.load %arg7[%113, %c0_38, %c0_39] : memref<8x4x128xf32, #tpu.memory_space<vmem>>, vector<1x4x128xf32>
    %115 = vector.shape_cast %114 : vector<1x4x128xf32> to vector<4x128xf32>
    %116 = vector.extract_strided_slice %112 {offsets = [0, 0], sizes = [4, 64], strides = [1, 1]} : vector<4x128xf32> to vector<4x64xf32>
    %cst_40 = arith.constant dense<0.000000e+00> : vector<4x64xf32>
    %117 = tpu.matmul %83, %9, %cst_40 {dimension_numbers = #tpu.dot_dimension_numbers<[1], [0], [0], [1], [0, 0, 1, 1], [], []>} : vector<4x16xf32>, vector<16x64xf32>, vector<4x64xf32> -> vector<4x64xf32>
    %118 = arith.addf %116, %117 : vector<4x64xf32>
    %119 = vector.extract_strided_slice %115 {offsets = [0, 64], sizes = [4, 64], strides = [1, 1]} : vector<4x128xf32> to vector<4x64xf32>
    %cst_41 = arith.constant dense<0.000000e+00> : vector<4x64xf32>
    %120 = tpu.matmul %89, %11, %cst_41 {dimension_numbers = #tpu.dot_dimension_numbers<[1], [0], [0], [1], [0, 0, 1, 1], [], []>} : vector<4x16xf32>, vector<16x64xf32>, vector<4x64xf32> -> vector<4x64xf32>
    %121 = arith.addf %119, %120 : vector<4x64xf32>
    %122 = vector.extract_strided_slice %118 {offsets = [0, 0], sizes = [4, 16], strides = [1, 1]} : vector<4x64xf32> to vector<4x16xf32>
    %123 = arith.negf %122 : vector<4x16xf32>
    %124 = math.exp %123 : vector<4x16xf32>
    %cst_42 = arith.constant 1.000000e+00 : f32
    %125 = vector.broadcast %cst_42 : f32 to vector<4x16xf32>
    %126 = arith.addf %125, %124 : vector<4x16xf32>
    %127 = arith.divf %125, %126 : vector<4x16xf32>
    %128 = vector.extract_strided_slice %118 {offsets = [0, 16], sizes = [4, 16], strides = [1, 1]} : vector<4x64xf32> to vector<4x16xf32>
    %129 = arith.negf %128 : vector<4x16xf32>
    %130 = math.exp %129 : vector<4x16xf32>
    %cst_43 = arith.constant 1.000000e+00 : f32
    %131 = vector.broadcast %cst_43 : f32 to vector<4x16xf32>
    %132 = arith.addf %131, %130 : vector<4x16xf32>
    %133 = arith.divf %131, %132 : vector<4x16xf32>
    %134 = vector.extract_strided_slice %118 {offsets = [0, 32], sizes = [4, 16], strides = [1, 1]} : vector<4x64xf32> to vector<4x16xf32>
    %135 = math.tanh %134 : vector<4x16xf32>
    %136 = vector.extract_strided_slice %118 {offsets = [0, 48], sizes = [4, 16], strides = [1, 1]} : vector<4x64xf32> to vector<4x16xf32>
    %137 = arith.negf %136 : vector<4x16xf32>
    %138 = math.exp %137 : vector<4x16xf32>
    %cst_44 = arith.constant 1.000000e+00 : f32
    %139 = vector.broadcast %cst_44 : f32 to vector<4x16xf32>
    %140 = arith.addf %139, %138 : vector<4x16xf32>
    %141 = arith.divf %139, %140 : vector<4x16xf32>
    %142 = arith.mulf %133, %86 : vector<4x16xf32>
    %143 = arith.mulf %127, %135 : vector<4x16xf32>
    %144 = arith.addf %142, %143 : vector<4x16xf32>
    %145 = math.tanh %144 : vector<4x16xf32>
    %146 = arith.mulf %141, %145 : vector<4x16xf32>
    %147 = vector.extract_strided_slice %121 {offsets = [0, 0], sizes = [4, 16], strides = [1, 1]} : vector<4x64xf32> to vector<4x16xf32>
    %148 = arith.negf %147 : vector<4x16xf32>
    %149 = math.exp %148 : vector<4x16xf32>
    %cst_45 = arith.constant 1.000000e+00 : f32
    %150 = vector.broadcast %cst_45 : f32 to vector<4x16xf32>
    %151 = arith.addf %150, %149 : vector<4x16xf32>
    %152 = arith.divf %150, %151 : vector<4x16xf32>
    %153 = vector.extract_strided_slice %121 {offsets = [0, 16], sizes = [4, 16], strides = [1, 1]} : vector<4x64xf32> to vector<4x16xf32>
    %154 = arith.negf %153 : vector<4x16xf32>
    %155 = math.exp %154 : vector<4x16xf32>
    %cst_46 = arith.constant 1.000000e+00 : f32
    %156 = vector.broadcast %cst_46 : f32 to vector<4x16xf32>
    %157 = arith.addf %156, %155 : vector<4x16xf32>
    %158 = arith.divf %156, %157 : vector<4x16xf32>
    %159 = vector.extract_strided_slice %121 {offsets = [0, 32], sizes = [4, 16], strides = [1, 1]} : vector<4x64xf32> to vector<4x16xf32>
    %160 = math.tanh %159 : vector<4x16xf32>
    %161 = vector.extract_strided_slice %121 {offsets = [0, 48], sizes = [4, 16], strides = [1, 1]} : vector<4x64xf32> to vector<4x16xf32>
    %162 = arith.negf %161 : vector<4x16xf32>
    %163 = math.exp %162 : vector<4x16xf32>
    %cst_47 = arith.constant 1.000000e+00 : f32
    %164 = vector.broadcast %cst_47 : f32 to vector<4x16xf32>
    %165 = arith.addf %164, %163 : vector<4x16xf32>
    %166 = arith.divf %164, %165 : vector<4x16xf32>
    %167 = arith.mulf %158, %92 : vector<4x16xf32>
    %168 = arith.mulf %152, %160 : vector<4x16xf32>
    %169 = arith.addf %167, %168 : vector<4x16xf32>
    %170 = math.tanh %169 : vector<4x16xf32>
    %171 = arith.mulf %166, %170 : vector<4x16xf32>
    %172 = vector.broadcast %c1_i32 : i32 to vector<4x1xi32>
    %173 = arith.cmpi slt, %172, %12 : vector<4x1xi32>
    %174 = vector.broadcast %109 : i32 to vector<4x1xi32>
    %175 = arith.cmpi slt, %174, %12 : vector<4x1xi32>
    %176 = vector.shape_cast %173 : vector<4x1xi1> to vector<4x1xi1>
    %177 = vector.broadcast %176 : vector<4x1xi1> to vector<4x16xi1>
    %178 = arith.select %177, %146, %83 : vector<4x16xi1>, vector<4x16xf32>
    %179 = vector.shape_cast %173 : vector<4x1xi1> to vector<4x1xi1>
    %180 = vector.broadcast %179 : vector<4x1xi1> to vector<4x16xi1>
    %181 = arith.select %180, %144, %86 : vector<4x16xi1>, vector<4x16xf32>
    %182 = vector.shape_cast %175 : vector<4x1xi1> to vector<4x1xi1>
    %183 = vector.broadcast %182 : vector<4x1xi1> to vector<4x16xi1>
    %184 = arith.select %183, %171, %89 : vector<4x16xi1>, vector<4x16xf32>
    %185 = vector.shape_cast %175 : vector<4x1xi1> to vector<4x1xi1>
    %186 = vector.broadcast %185 : vector<4x1xi1> to vector<4x16xi1>
    %187 = arith.select %186, %169, %92 : vector<4x16xi1>, vector<4x16xf32>
    %cst_48 = arith.constant 0.000000e+00 : f32
    %188 = vector.shape_cast %173 : vector<4x1xi1> to vector<4x1xi1>
    %189 = vector.broadcast %188 : vector<4x1xi1> to vector<4x16xi1>
    %190 = vector.broadcast %cst_48 : f32 to vector<4x16xf32>
    %191 = arith.select %189, %146, %190 : vector<4x16xi1>, vector<4x16xf32>
    %192 = arith.index_cast %c1_i32 : i32 to index
    %c0_49 = arith.constant 0 : index
    %c0_50 = arith.constant 0 : index
    %193 = vector.load %arg5[%192, %c0_49, %c0_50] : memref<8x4x16xf32, #tpu.memory_space<vmem>>, vector<1x4x16xf32>
    %194 = vector.shape_cast %193 : vector<1x4x16xf32> to vector<4x16xf32>
    %195 = vector.shape_cast %191 : vector<4x16xf32> to vector<1x4x16xf32>
    tpu.vector_store %arg5[%192, %c0_49, %c0_50], %195 {strides = array<i32>} : memref<8x4x16xf32, #tpu.memory_space<vmem>>, vector<1x4x16xf32>,
    %cst_51 = arith.constant 0.000000e+00 : f32
    %196 = vector.shape_cast %175 : vector<4x1xi1> to vector<4x1xi1>
    %197 = vector.broadcast %196 : vector<4x1xi1> to vector<4x16xi1>
    %198 = vector.broadcast %cst_51 : f32 to vector<4x16xf32>
    %199 = arith.select %197, %171, %198 : vector<4x16xi1>, vector<4x16xf32>
    %200 = arith.index_cast %109 : i32 to index
    %c0_52 = arith.constant 0 : index
    %c0_53 = arith.constant 0 : index
    %201 = vector.load %arg6[%200, %c0_52, %c0_53] : memref<8x4x16xf32, #tpu.memory_space<vmem>>, vector<1x4x16xf32>
    %202 = vector.shape_cast %201 : vector<1x4x16xf32> to vector<4x16xf32>
    %203 = vector.shape_cast %199 : vector<4x16xf32> to vector<1x4x16xf32>
    tpu.vector_store %arg6[%200, %c0_52, %c0_53], %203 {strides = array<i32>} : memref<8x4x16xf32, #tpu.memory_space<vmem>>, vector<1x4x16xf32>,
    %c2_i32 = arith.constant 2 : i32
    %c7_i32_54 = arith.constant 7 : i32
    %204 = arith.subi %c7_i32_54, %c2_i32 : i32
    %205 = arith.index_cast %c2_i32 : i32 to index
    %c0_55 = arith.constant 0 : index
    %c0_56 = arith.constant 0 : index
    %206 = vector.load %arg7[%205, %c0_55, %c0_56] : memref<8x4x128xf32, #tpu.memory_space<vmem>>, vector<1x4x128xf32>
    %207 = vector.shape_cast %206 : vector<1x4x128xf32> to vector<4x128xf32>
    %208 = arith.index_cast %204 : i32 to index
    %c0_57 = arith.constant 0 : index
    %c0_58 = arith.constant 0 : index
    %209 = vector.load %arg7[%208, %c0_57, %c0_58] : memref<8x4x128xf32, #tpu.memory_space<vmem>>, vector<1x4x128xf32>
    %210 = vector.shape_cast %209 : vector<1x4x128xf32> to vector<4x128xf32>
    %211 = vector.extract_strided_slice %207 {offsets = [0, 0], sizes = [4, 64], strides = [1, 1]} : vector<4x128xf32> to vector<4x64xf32>
    %cst_59 = arith.constant dense<0.000000e+00> : vector<4x64xf32>
    %212 = tpu.matmul %178, %9, %cst_59 {dimension_numbers = #tpu.dot_dimension_numbers<[1], [0], [0], [1], [0, 0, 1, 1], [], []>} : vector<4x16xf32>, vector<16x64xf32>, vector<4x64xf32> -> vector<4x64xf32>
    %213 = arith.addf %211, %212 : vector<4x64xf32>
    %214 = vector.extract_strided_slice %210 {offsets = [0, 64], sizes = [4, 64], strides = [1, 1]} : vector<4x128xf32> to vector<4x64xf32>
    %cst_60 = arith.constant dense<0.000000e+00> : vector<4x64xf32>
    %215 = tpu.matmul %184, %11, %cst_60 {dimension_numbers = #tpu.dot_dimension_numbers<[1], [0], [0], [1], [0, 0, 1, 1], [], []>} : vector<4x16xf32>, vector<16x64xf32>, vector<4x64xf32> -> vector<4x64xf32>
    %216 = arith.addf %214, %215 : vector<4x64xf32>
    %217 = vector.extract_strided_slice %213 {offsets = [0, 0], sizes = [4, 16], strides = [1, 1]} : vector<4x64xf32> to vector<4x16xf32>
    %218 = arith.negf %217 : vector<4x16xf32>
    %219 = math.exp %218 : vector<4x16xf32>
    %cst_61 = arith.constant 1.000000e+00 : f32
    %220 = vector.broadcast %cst_61 : f32 to vector<4x16xf32>
    %221 = arith.addf %220, %219 : vector<4x16xf32>
    %222 = arith.divf %220, %221 : vector<4x16xf32>
    %223 = vector.extract_strided_slice %213 {offsets = [0, 16], sizes = [4, 16], strides = [1, 1]} : vector<4x64xf32> to vector<4x16xf32>
    %224 = arith.negf %223 : vector<4x16xf32>
    %225 = math.exp %224 : vector<4x16xf32>
    %cst_62 = arith.constant 1.000000e+00 : f32
    %226 = vector.broadcast %cst_62 : f32 to vector<4x16xf32>
    %227 = arith.addf %226, %225 : vector<4x16xf32>
    %228 = arith.divf %226, %227 : vector<4x16xf32>
    %229 = vector.extract_strided_slice %213 {offsets = [0, 32], sizes = [4, 16], strides = [1, 1]} : vector<4x64xf32> to vector<4x16xf32>
    %230 = math.tanh %229 : vector<4x16xf32>
    %231 = vector.extract_strided_slice %213 {offsets = [0, 48], sizes = [4, 16], strides = [1, 1]} : vector<4x64xf32> to vector<4x16xf32>
    %232 = arith.negf %231 : vector<4x16xf32>
    %233 = math.exp %232 : vector<4x16xf32>
    %cst_63 = arith.constant 1.000000e+00 : f32
    %234 = vector.broadcast %cst_63 : f32 to vector<4x16xf32>
    %235 = arith.addf %234, %233 : vector<4x16xf32>
    %236 = arith.divf %234, %235 : vector<4x16xf32>
    %237 = arith.mulf %228, %181 : vector<4x16xf32>
    %238 = arith.mulf %222, %230 : vector<4x16xf32>
    %239 = arith.addf %237, %238 : vector<4x16xf32>
    %240 = math.tanh %239 : vector<4x16xf32>
    %241 = arith.mulf %236, %240 : vector<4x16xf32>
    %242 = vector.extract_strided_slice %216 {offsets = [0, 0], sizes = [4, 16], strides = [1, 1]} : vector<4x64xf32> to vector<4x16xf32>
    %243 = arith.negf %242 : vector<4x16xf32>
    %244 = math.exp %243 : vector<4x16xf32>
    %cst_64 = arith.constant 1.000000e+00 : f32
    %245 = vector.broadcast %cst_64 : f32 to vector<4x16xf32>
    %246 = arith.addf %245, %244 : vector<4x16xf32>
    %247 = arith.divf %245, %246 : vector<4x16xf32>
    %248 = vector.extract_strided_slice %216 {offsets = [0, 16], sizes = [4, 16], strides = [1, 1]} : vector<4x64xf32> to vector<4x16xf32>
    %249 = arith.negf %248 : vector<4x16xf32>
    %250 = math.exp %249 : vector<4x16xf32>
    %cst_65 = arith.constant 1.000000e+00 : f32
    %251 = vector.broadcast %cst_65 : f32 to vector<4x16xf32>
    %252 = arith.addf %251, %250 : vector<4x16xf32>
    %253 = arith.divf %251, %252 : vector<4x16xf32>
    %254 = vector.extract_strided_slice %216 {offsets = [0, 32], sizes = [4, 16], strides = [1, 1]} : vector<4x64xf32> to vector<4x16xf32>
    %255 = math.tanh %254 : vector<4x16xf32>
    %256 = vector.extract_strided_slice %216 {offsets = [0, 48], sizes = [4, 16], strides = [1, 1]} : vector<4x64xf32> to vector<4x16xf32>
    %257 = arith.negf %256 : vector<4x16xf32>
    %258 = math.exp %257 : vector<4x16xf32>
    %cst_66 = arith.constant 1.000000e+00 : f32
    %259 = vector.broadcast %cst_66 : f32 to vector<4x16xf32>
    %260 = arith.addf %259, %258 : vector<4x16xf32>
    %261 = arith.divf %259, %260 : vector<4x16xf32>
    %262 = arith.mulf %253, %187 : vector<4x16xf32>
    %263 = arith.mulf %247, %255 : vector<4x16xf32>
    %264 = arith.addf %262, %263 : vector<4x16xf32>
    %265 = math.tanh %264 : vector<4x16xf32>
    %266 = arith.mulf %261, %265 : vector<4x16xf32>
    %267 = vector.broadcast %c2_i32 : i32 to vector<4x1xi32>
    %268 = arith.cmpi slt, %267, %12 : vector<4x1xi32>
    %269 = vector.broadcast %204 : i32 to vector<4x1xi32>
    %270 = arith.cmpi slt, %269, %12 : vector<4x1xi32>
    %271 = vector.shape_cast %268 : vector<4x1xi1> to vector<4x1xi1>
    %272 = vector.broadcast %271 : vector<4x1xi1> to vector<4x16xi1>
    %273 = arith.select %272, %241, %178 : vector<4x16xi1>, vector<4x16xf32>
    %274 = vector.shape_cast %268 : vector<4x1xi1> to vector<4x1xi1>
    %275 = vector.broadcast %274 : vector<4x1xi1> to vector<4x16xi1>
    %276 = arith.select %275, %239, %181 : vector<4x16xi1>, vector<4x16xf32>
    %277 = vector.shape_cast %270 : vector<4x1xi1> to vector<4x1xi1>
    %278 = vector.broadcast %277 : vector<4x1xi1> to vector<4x16xi1>
    %279 = arith.select %278, %266, %184 : vector<4x16xi1>, vector<4x16xf32>
    %280 = vector.shape_cast %270 : vector<4x1xi1> to vector<4x1xi1>
    %281 = vector.broadcast %280 : vector<4x1xi1> to vector<4x16xi1>
    %282 = arith.select %281, %264, %187 : vector<4x16xi1>, vector<4x16xf32>
    %cst_67 = arith.constant 0.000000e+00 : f32
    %283 = vector.shape_cast %268 : vector<4x1xi1> to vector<4x1xi1>
    %284 = vector.broadcast %283 : vector<4x1xi1> to vector<4x16xi1>
    %285 = vector.broadcast %cst_67 : f32 to vector<4x16xf32>
    %286 = arith.select %284, %241, %285 : vector<4x16xi1>, vector<4x16xf32>
    %287 = arith.index_cast %c2_i32 : i32 to index
    %c0_68 = arith.constant 0 : index
    %c0_69 = arith.constant 0 : index
    %288 = vector.load %arg5[%287, %c0_68, %c0_69] : memref<8x4x16xf32, #tpu.memory_space<vmem>>, vector<1x4x16xf32>
    %289 = vector.shape_cast %288 : vector<1x4x16xf32> to vector<4x16xf32>
    %290 = vector.shape_cast %286 : vector<4x16xf32> to vector<1x4x16xf32>
    tpu.vector_store %arg5[%287, %c0_68, %c0_69], %290 {strides = array<i32>} : memref<8x4x16xf32, #tpu.memory_space<vmem>>, vector<1x4x16xf32>,
    %cst_70 = arith.constant 0.000000e+00 : f32
    %291 = vector.shape_cast %270 : vector<4x1xi1> to vector<4x1xi1>
    %292 = vector.broadcast %291 : vector<4x1xi1> to vector<4x16xi1>
    %293 = vector.broadcast %cst_70 : f32 to vector<4x16xf32>
    %294 = arith.select %292, %266, %293 : vector<4x16xi1>, vector<4x16xf32>
    %295 = arith.index_cast %204 : i32 to index
    %c0_71 = arith.constant 0 : index
    %c0_72 = arith.constant 0 : index
    %296 = vector.load %arg6[%295, %c0_71, %c0_72] : memref<8x4x16xf32, #tpu.memory_space<vmem>>, vector<1x4x16xf32>
    %297 = vector.shape_cast %296 : vector<1x4x16xf32> to vector<4x16xf32>
    %298 = vector.shape_cast %294 : vector<4x16xf32> to vector<1x4x16xf32>
    tpu.vector_store %arg6[%295, %c0_71, %c0_72], %298 {strides = array<i32>} : memref<8x4x16xf32, #tpu.memory_space<vmem>>, vector<1x4x16xf32>,
    %c3_i32 = arith.constant 3 : i32
    %c7_i32_73 = arith.constant 7 : i32
    %299 = arith.subi %c7_i32_73, %c3_i32 : i32
    %300 = arith.index_cast %c3_i32 : i32 to index
    %c0_74 = arith.constant 0 : index
    %c0_75 = arith.constant 0 : index
    %301 = vector.load %arg7[%300, %c0_74, %c0_75] : memref<8x4x128xf32, #tpu.memory_space<vmem>>, vector<1x4x128xf32>
    %302 = vector.shape_cast %301 : vector<1x4x128xf32> to vector<4x128xf32>
    %303 = arith.index_cast %299 : i32 to index
    %c0_76 = arith.constant 0 : index
    %c0_77 = arith.constant 0 : index
    %304 = vector.load %arg7[%303, %c0_76, %c0_77] : memref<8x4x128xf32, #tpu.memory_space<vmem>>, vector<1x4x128xf32>
    %305 = vector.shape_cast %304 : vector<1x4x128xf32> to vector<4x128xf32>
    %306 = vector.extract_strided_slice %302 {offsets = [0, 0], sizes = [4, 64], strides = [1, 1]} : vector<4x128xf32> to vector<4x64xf32>
    %cst_78 = arith.constant dense<0.000000e+00> : vector<4x64xf32>
    %307 = tpu.matmul %273, %9, %cst_78 {dimension_numbers = #tpu.dot_dimension_numbers<[1], [0], [0], [1], [0, 0, 1, 1], [], []>} : vector<4x16xf32>, vector<16x64xf32>, vector<4x64xf32> -> vector<4x64xf32>
    %308 = arith.addf %306, %307 : vector<4x64xf32>
    %309 = vector.extract_strided_slice %305 {offsets = [0, 64], sizes = [4, 64], strides = [1, 1]} : vector<4x128xf32> to vector<4x64xf32>
    %cst_79 = arith.constant dense<0.000000e+00> : vector<4x64xf32>
    %310 = tpu.matmul %279, %11, %cst_79 {dimension_numbers = #tpu.dot_dimension_numbers<[1], [0], [0], [1], [0, 0, 1, 1], [], []>} : vector<4x16xf32>, vector<16x64xf32>, vector<4x64xf32> -> vector<4x64xf32>
    %311 = arith.addf %309, %310 : vector<4x64xf32>
    %312 = vector.extract_strided_slice %308 {offsets = [0, 0], sizes = [4, 16], strides = [1, 1]} : vector<4x64xf32> to vector<4x16xf32>
    %313 = arith.negf %312 : vector<4x16xf32>
    %314 = math.exp %313 : vector<4x16xf32>
    %cst_80 = arith.constant 1.000000e+00 : f32
    %315 = vector.broadcast %cst_80 : f32 to vector<4x16xf32>
    %316 = arith.addf %315, %314 : vector<4x16xf32>
    %317 = arith.divf %315, %316 : vector<4x16xf32>
    %318 = vector.extract_strided_slice %308 {offsets = [0, 16], sizes = [4, 16], strides = [1, 1]} : vector<4x64xf32> to vector<4x16xf32>
    %319 = arith.negf %318 : vector<4x16xf32>
    %320 = math.exp %319 : vector<4x16xf32>
    %cst_81 = arith.constant 1.000000e+00 : f32
    %321 = vector.broadcast %cst_81 : f32 to vector<4x16xf32>
    %322 = arith.addf %321, %320 : vector<4x16xf32>
    %323 = arith.divf %321, %322 : vector<4x16xf32>
    %324 = vector.extract_strided_slice %308 {offsets = [0, 32], sizes = [4, 16], strides = [1, 1]} : vector<4x64xf32> to vector<4x16xf32>
    %325 = math.tanh %324 : vector<4x16xf32>
    %326 = vector.extract_strided_slice %308 {offsets = [0, 48], sizes = [4, 16], strides = [1, 1]} : vector<4x64xf32> to vector<4x16xf32>
    %327 = arith.negf %326 : vector<4x16xf32>
    %328 = math.exp %327 : vector<4x16xf32>
    %cst_82 = arith.constant 1.000000e+00 : f32
    %329 = vector.broadcast %cst_82 : f32 to vector<4x16xf32>
    %330 = arith.addf %329, %328 : vector<4x16xf32>
    %331 = arith.divf %329, %330 : vector<4x16xf32>
    %332 = arith.mulf %323, %276 : vector<4x16xf32>
    %333 = arith.mulf %317, %325 : vector<4x16xf32>
    %334 = arith.addf %332, %333 : vector<4x16xf32>
    %335 = math.tanh %334 : vector<4x16xf32>
    %336 = arith.mulf %331, %335 : vector<4x16xf32>
    %337 = vector.extract_strided_slice %311 {offsets = [0, 0], sizes = [4, 16], strides = [1, 1]} : vector<4x64xf32> to vector<4x16xf32>
    %338 = arith.negf %337 : vector<4x16xf32>
    %339 = math.exp %338 : vector<4x16xf32>
    %cst_83 = arith.constant 1.000000e+00 : f32
    %340 = vector.broadcast %cst_83 : f32 to vector<4x16xf32>
    %341 = arith.addf %340, %339 : vector<4x16xf32>
    %342 = arith.divf %340, %341 : vector<4x16xf32>
    %343 = vector.extract_strided_slice %311 {offsets = [0, 16], sizes = [4, 16], strides = [1, 1]} : vector<4x64xf32> to vector<4x16xf32>
    %344 = arith.negf %343 : vector<4x16xf32>
    %345 = math.exp %344 : vector<4x16xf32>
    %cst_84 = arith.constant 1.000000e+00 : f32
    %346 = vector.broadcast %cst_84 : f32 to vector<4x16xf32>
    %347 = arith.addf %346, %345 : vector<4x16xf32>
    %348 = arith.divf %346, %347 : vector<4x16xf32>
    %349 = vector.extract_strided_slice %311 {offsets = [0, 32], sizes = [4, 16], strides = [1, 1]} : vector<4x64xf32> to vector<4x16xf32>
    %350 = math.tanh %349 : vector<4x16xf32>
    %351 = vector.extract_strided_slice %311 {offsets = [0, 48], sizes = [4, 16], strides = [1, 1]} : vector<4x64xf32> to vector<4x16xf32>
    %352 = arith.negf %351 : vector<4x16xf32>
    %353 = math.exp %352 : vector<4x16xf32>
    %cst_85 = arith.constant 1.000000e+00 : f32
    %354 = vector.broadcast %cst_85 : f32 to vector<4x16xf32>
    %355 = arith.addf %354, %353 : vector<4x16xf32>
    %356 = arith.divf %354, %355 : vector<4x16xf32>
    %357 = arith.mulf %348, %282 : vector<4x16xf32>
    %358 = arith.mulf %342, %350 : vector<4x16xf32>
    %359 = arith.addf %357, %358 : vector<4x16xf32>
    %360 = math.tanh %359 : vector<4x16xf32>
    %361 = arith.mulf %356, %360 : vector<4x16xf32>
    %362 = vector.broadcast %c3_i32 : i32 to vector<4x1xi32>
    %363 = arith.cmpi slt, %362, %12 : vector<4x1xi32>
    %364 = vector.broadcast %299 : i32 to vector<4x1xi32>
    %365 = arith.cmpi slt, %364, %12 : vector<4x1xi32>
    %366 = vector.shape_cast %363 : vector<4x1xi1> to vector<4x1xi1>
    %367 = vector.broadcast %366 : vector<4x1xi1> to vector<4x16xi1>
    %368 = arith.select %367, %336, %273 : vector<4x16xi1>, vector<4x16xf32>
    %369 = vector.shape_cast %363 : vector<4x1xi1> to vector<4x1xi1>
    %370 = vector.broadcast %369 : vector<4x1xi1> to vector<4x16xi1>
    %371 = arith.select %370, %334, %276 : vector<4x16xi1>, vector<4x16xf32>
    %372 = vector.shape_cast %365 : vector<4x1xi1> to vector<4x1xi1>
    %373 = vector.broadcast %372 : vector<4x1xi1> to vector<4x16xi1>
    %374 = arith.select %373, %361, %279 : vector<4x16xi1>, vector<4x16xf32>
    %375 = vector.shape_cast %365 : vector<4x1xi1> to vector<4x1xi1>
    %376 = vector.broadcast %375 : vector<4x1xi1> to vector<4x16xi1>
    %377 = arith.select %376, %359, %282 : vector<4x16xi1>, vector<4x16xf32>
    %cst_86 = arith.constant 0.000000e+00 : f32
    %378 = vector.shape_cast %363 : vector<4x1xi1> to vector<4x1xi1>
    %379 = vector.broadcast %378 : vector<4x1xi1> to vector<4x16xi1>
    %380 = vector.broadcast %cst_86 : f32 to vector<4x16xf32>
    %381 = arith.select %379, %336, %380 : vector<4x16xi1>, vector<4x16xf32>
    %382 = arith.index_cast %c3_i32 : i32 to index
    %c0_87 = arith.constant 0 : index
    %c0_88 = arith.constant 0 : index
    %383 = vector.load %arg5[%382, %c0_87, %c0_88] : memref<8x4x16xf32, #tpu.memory_space<vmem>>, vector<1x4x16xf32>
    %384 = vector.shape_cast %383 : vector<1x4x16xf32> to vector<4x16xf32>
    %385 = vector.shape_cast %381 : vector<4x16xf32> to vector<1x4x16xf32>
    tpu.vector_store %arg5[%382, %c0_87, %c0_88], %385 {strides = array<i32>} : memref<8x4x16xf32, #tpu.memory_space<vmem>>, vector<1x4x16xf32>,
    %cst_89 = arith.constant 0.000000e+00 : f32
    %386 = vector.shape_cast %365 : vector<4x1xi1> to vector<4x1xi1>
    %387 = vector.broadcast %386 : vector<4x1xi1> to vector<4x16xi1>
    %388 = vector.broadcast %cst_89 : f32 to vector<4x16xf32>
    %389 = arith.select %387, %361, %388 : vector<4x16xi1>, vector<4x16xf32>
    %390 = arith.index_cast %299 : i32 to index
    %c0_90 = arith.constant 0 : index
    %c0_91 = arith.constant 0 : index
    %391 = vector.load %arg6[%390, %c0_90, %c0_91] : memref<8x4x16xf32, #tpu.memory_space<vmem>>, vector<1x4x16xf32>
    %392 = vector.shape_cast %391 : vector<1x4x16xf32> to vector<4x16xf32>
    %393 = vector.shape_cast %389 : vector<4x16xf32> to vector<1x4x16xf32>
    tpu.vector_store %arg6[%390, %c0_90, %c0_91], %393 {strides = array<i32>} : memref<8x4x16xf32, #tpu.memory_space<vmem>>, vector<1x4x16xf32>,
    %c4_i32 = arith.constant 4 : i32
    %c7_i32_92 = arith.constant 7 : i32
    %394 = arith.subi %c7_i32_92, %c4_i32 : i32
    %395 = arith.index_cast %c4_i32 : i32 to index
    %c0_93 = arith.constant 0 : index
    %c0_94 = arith.constant 0 : index
    %396 = vector.load %arg7[%395, %c0_93, %c0_94] : memref<8x4x128xf32, #tpu.memory_space<vmem>>, vector<1x4x128xf32>
    %397 = vector.shape_cast %396 : vector<1x4x128xf32> to vector<4x128xf32>
    %398 = arith.index_cast %394 : i32 to index
    %c0_95 = arith.constant 0 : index
    %c0_96 = arith.constant 0 : index
    %399 = vector.load %arg7[%398, %c0_95, %c0_96] : memref<8x4x128xf32, #tpu.memory_space<vmem>>, vector<1x4x128xf32>
    %400 = vector.shape_cast %399 : vector<1x4x128xf32> to vector<4x128xf32>
    %401 = vector.extract_strided_slice %397 {offsets = [0, 0], sizes = [4, 64], strides = [1, 1]} : vector<4x128xf32> to vector<4x64xf32>
    %cst_97 = arith.constant dense<0.000000e+00> : vector<4x64xf32>
    %402 = tpu.matmul %368, %9, %cst_97 {dimension_numbers = #tpu.dot_dimension_numbers<[1], [0], [0], [1], [0, 0, 1, 1], [], []>} : vector<4x16xf32>, vector<16x64xf32>, vector<4x64xf32> -> vector<4x64xf32>
    %403 = arith.addf %401, %402 : vector<4x64xf32>
    %404 = vector.extract_strided_slice %400 {offsets = [0, 64], sizes = [4, 64], strides = [1, 1]} : vector<4x128xf32> to vector<4x64xf32>
    %cst_98 = arith.constant dense<0.000000e+00> : vector<4x64xf32>
    %405 = tpu.matmul %374, %11, %cst_98 {dimension_numbers = #tpu.dot_dimension_numbers<[1], [0], [0], [1], [0, 0, 1, 1], [], []>} : vector<4x16xf32>, vector<16x64xf32>, vector<4x64xf32> -> vector<4x64xf32>
    %406 = arith.addf %404, %405 : vector<4x64xf32>
    %407 = vector.extract_strided_slice %403 {offsets = [0, 0], sizes = [4, 16], strides = [1, 1]} : vector<4x64xf32> to vector<4x16xf32>
    %408 = arith.negf %407 : vector<4x16xf32>
    %409 = math.exp %408 : vector<4x16xf32>
    %cst_99 = arith.constant 1.000000e+00 : f32
    %410 = vector.broadcast %cst_99 : f32 to vector<4x16xf32>
    %411 = arith.addf %410, %409 : vector<4x16xf32>
    %412 = arith.divf %410, %411 : vector<4x16xf32>
    %413 = vector.extract_strided_slice %403 {offsets = [0, 16], sizes = [4, 16], strides = [1, 1]} : vector<4x64xf32> to vector<4x16xf32>
    %414 = arith.negf %413 : vector<4x16xf32>
    %415 = math.exp %414 : vector<4x16xf32>
    %cst_100 = arith.constant 1.000000e+00 : f32
    %416 = vector.broadcast %cst_100 : f32 to vector<4x16xf32>
    %417 = arith.addf %416, %415 : vector<4x16xf32>
    %418 = arith.divf %416, %417 : vector<4x16xf32>
    %419 = vector.extract_strided_slice %403 {offsets = [0, 32], sizes = [4, 16], strides = [1, 1]} : vector<4x64xf32> to vector<4x16xf32>
    %420 = math.tanh %419 : vector<4x16xf32>
    %421 = vector.extract_strided_slice %403 {offsets = [0, 48], sizes = [4, 16], strides = [1, 1]} : vector<4x64xf32> to vector<4x16xf32>
    %422 = arith.negf %421 : vector<4x16xf32>
    %423 = math.exp %422 : vector<4x16xf32>
    %cst_101 = arith.constant 1.000000e+00 : f32
    %424 = vector.broadcast %cst_101 : f32 to vector<4x16xf32>
    %425 = arith.addf %424, %423 : vector<4x16xf32>
    %426 = arith.divf %424, %425 : vector<4x16xf32>
    %427 = arith.mulf %418, %371 : vector<4x16xf32>
    %428 = arith.mulf %412, %420 : vector<4x16xf32>
    %429 = arith.addf %427, %428 : vector<4x16xf32>
    %430 = math.tanh %429 : vector<4x16xf32>
    %431 = arith.mulf %426, %430 : vector<4x16xf32>
    %432 = vector.extract_strided_slice %406 {offsets = [0, 0], sizes = [4, 16], strides = [1, 1]} : vector<4x64xf32> to vector<4x16xf32>
    %433 = arith.negf %432 : vector<4x16xf32>
    %434 = math.exp %433 : vector<4x16xf32>
    %cst_102 = arith.constant 1.000000e+00 : f32
    %435 = vector.broadcast %cst_102 : f32 to vector<4x16xf32>
    %436 = arith.addf %435, %434 : vector<4x16xf32>
    %437 = arith.divf %435, %436 : vector<4x16xf32>
    %438 = vector.extract_strided_slice %406 {offsets = [0, 16], sizes = [4, 16], strides = [1, 1]} : vector<4x64xf32> to vector<4x16xf32>
    %439 = arith.negf %438 : vector<4x16xf32>
    %440 = math.exp %439 : vector<4x16xf32>
    %cst_103 = arith.constant 1.000000e+00 : f32
    %441 = vector.broadcast %cst_103 : f32 to vector<4x16xf32>
    %442 = arith.addf %441, %440 : vector<4x16xf32>
    %443 = arith.divf %441, %442 : vector<4x16xf32>
    %444 = vector.extract_strided_slice %406 {offsets = [0, 32], sizes = [4, 16], strides = [1, 1]} : vector<4x64xf32> to vector<4x16xf32>
    %445 = math.tanh %444 : vector<4x16xf32>
    %446 = vector.extract_strided_slice %406 {offsets = [0, 48], sizes = [4, 16], strides = [1, 1]} : vector<4x64xf32> to vector<4x16xf32>
    %447 = arith.negf %446 : vector<4x16xf32>
    %448 = math.exp %447 : vector<4x16xf32>
    %cst_104 = arith.constant 1.000000e+00 : f32
    %449 = vector.broadcast %cst_104 : f32 to vector<4x16xf32>
    %450 = arith.addf %449, %448 : vector<4x16xf32>
    %451 = arith.divf %449, %450 : vector<4x16xf32>
    %452 = arith.mulf %443, %377 : vector<4x16xf32>
    %453 = arith.mulf %437, %445 : vector<4x16xf32>
    %454 = arith.addf %452, %453 : vector<4x16xf32>
    %455 = math.tanh %454 : vector<4x16xf32>
    %456 = arith.mulf %451, %455 : vector<4x16xf32>
    %457 = vector.broadcast %c4_i32 : i32 to vector<4x1xi32>
    %458 = arith.cmpi slt, %457, %12 : vector<4x1xi32>
    %459 = vector.broadcast %394 : i32 to vector<4x1xi32>
    %460 = arith.cmpi slt, %459, %12 : vector<4x1xi32>
    %461 = vector.shape_cast %458 : vector<4x1xi1> to vector<4x1xi1>
    %462 = vector.broadcast %461 : vector<4x1xi1> to vector<4x16xi1>
    %463 = arith.select %462, %431, %368 : vector<4x16xi1>, vector<4x16xf32>
    %464 = vector.shape_cast %458 : vector<4x1xi1> to vector<4x1xi1>
    %465 = vector.broadcast %464 : vector<4x1xi1> to vector<4x16xi1>
    %466 = arith.select %465, %429, %371 : vector<4x16xi1>, vector<4x16xf32>
    %467 = vector.shape_cast %460 : vector<4x1xi1> to vector<4x1xi1>
    %468 = vector.broadcast %467 : vector<4x1xi1> to vector<4x16xi1>
    %469 = arith.select %468, %456, %374 : vector<4x16xi1>, vector<4x16xf32>
    %470 = vector.shape_cast %460 : vector<4x1xi1> to vector<4x1xi1>
    %471 = vector.broadcast %470 : vector<4x1xi1> to vector<4x16xi1>
    %472 = arith.select %471, %454, %377 : vector<4x16xi1>, vector<4x16xf32>
    %cst_105 = arith.constant 0.000000e+00 : f32
    %473 = vector.shape_cast %458 : vector<4x1xi1> to vector<4x1xi1>
    %474 = vector.broadcast %473 : vector<4x1xi1> to vector<4x16xi1>
    %475 = vector.broadcast %cst_105 : f32 to vector<4x16xf32>
    %476 = arith.select %474, %431, %475 : vector<4x16xi1>, vector<4x16xf32>
    %477 = arith.index_cast %c4_i32 : i32 to index
    %c0_106 = arith.constant 0 : index
    %c0_107 = arith.constant 0 : index
    %478 = vector.load %arg5[%477, %c0_106, %c0_107] : memref<8x4x16xf32, #tpu.memory_space<vmem>>, vector<1x4x16xf32>
    %479 = vector.shape_cast %478 : vector<1x4x16xf32> to vector<4x16xf32>
    %480 = vector.shape_cast %476 : vector<4x16xf32> to vector<1x4x16xf32>
    tpu.vector_store %arg5[%477, %c0_106, %c0_107], %480 {strides = array<i32>} : memref<8x4x16xf32, #tpu.memory_space<vmem>>, vector<1x4x16xf32>,
    %cst_108 = arith.constant 0.000000e+00 : f32
    %481 = vector.shape_cast %460 : vector<4x1xi1> to vector<4x1xi1>
    %482 = vector.broadcast %481 : vector<4x1xi1> to vector<4x16xi1>
    %483 = vector.broadcast %cst_108 : f32 to vector<4x16xf32>
    %484 = arith.select %482, %456, %483 : vector<4x16xi1>, vector<4x16xf32>
    %485 = arith.index_cast %394 : i32 to index
    %c0_109 = arith.constant 0 : index
    %c0_110 = arith.constant 0 : index
    %486 = vector.load %arg6[%485, %c0_109, %c0_110] : memref<8x4x16xf32, #tpu.memory_space<vmem>>, vector<1x4x16xf32>
    %487 = vector.shape_cast %486 : vector<1x4x16xf32> to vector<4x16xf32>
    %488 = vector.shape_cast %484 : vector<4x16xf32> to vector<1x4x16xf32>
    tpu.vector_store %arg6[%485, %c0_109, %c0_110], %488 {strides = array<i32>} : memref<8x4x16xf32, #tpu.memory_space<vmem>>, vector<1x4x16xf32>,
    %c5_i32 = arith.constant 5 : i32
    %c7_i32_111 = arith.constant 7 : i32
    %489 = arith.subi %c7_i32_111, %c5_i32 : i32
    %490 = arith.index_cast %c5_i32 : i32 to index
    %c0_112 = arith.constant 0 : index
    %c0_113 = arith.constant 0 : index
    %491 = vector.load %arg7[%490, %c0_112, %c0_113] : memref<8x4x128xf32, #tpu.memory_space<vmem>>, vector<1x4x128xf32>
    %492 = vector.shape_cast %491 : vector<1x4x128xf32> to vector<4x128xf32>
    %493 = arith.index_cast %489 : i32 to index
    %c0_114 = arith.constant 0 : index
    %c0_115 = arith.constant 0 : index
    %494 = vector.load %arg7[%493, %c0_114, %c0_115] : memref<8x4x128xf32, #tpu.memory_space<vmem>>, vector<1x4x128xf32>
    %495 = vector.shape_cast %494 : vector<1x4x128xf32> to vector<4x128xf32>
    %496 = vector.extract_strided_slice %492 {offsets = [0, 0], sizes = [4, 64], strides = [1, 1]} : vector<4x128xf32> to vector<4x64xf32>
    %cst_116 = arith.constant dense<0.000000e+00> : vector<4x64xf32>
    %497 = tpu.matmul %463, %9, %cst_116 {dimension_numbers = #tpu.dot_dimension_numbers<[1], [0], [0], [1], [0, 0, 1, 1], [], []>} : vector<4x16xf32>, vector<16x64xf32>, vector<4x64xf32> -> vector<4x64xf32>
    %498 = arith.addf %496, %497 : vector<4x64xf32>
    %499 = vector.extract_strided_slice %495 {offsets = [0, 64], sizes = [4, 64], strides = [1, 1]} : vector<4x128xf32> to vector<4x64xf32>
    %cst_117 = arith.constant dense<0.000000e+00> : vector<4x64xf32>
    %500 = tpu.matmul %469, %11, %cst_117 {dimension_numbers = #tpu.dot_dimension_numbers<[1], [0], [0], [1], [0, 0, 1, 1], [], []>} : vector<4x16xf32>, vector<16x64xf32>, vector<4x64xf32> -> vector<4x64xf32>
    %501 = arith.addf %499, %500 : vector<4x64xf32>
    %502 = vector.extract_strided_slice %498 {offsets = [0, 0], sizes = [4, 16], strides = [1, 1]} : vector<4x64xf32> to vector<4x16xf32>
    %503 = arith.negf %502 : vector<4x16xf32>
    %504 = math.exp %503 : vector<4x16xf32>
    %cst_118 = arith.constant 1.000000e+00 : f32
    %505 = vector.broadcast %cst_118 : f32 to vector<4x16xf32>
    %506 = arith.addf %505, %504 : vector<4x16xf32>
    %507 = arith.divf %505, %506 : vector<4x16xf32>
    %508 = vector.extract_strided_slice %498 {offsets = [0, 16], sizes = [4, 16], strides = [1, 1]} : vector<4x64xf32> to vector<4x16xf32>
    %509 = arith.negf %508 : vector<4x16xf32>
    %510 = math.exp %509 : vector<4x16xf32>
    %cst_119 = arith.constant 1.000000e+00 : f32
    %511 = vector.broadcast %cst_119 : f32 to vector<4x16xf32>
    %512 = arith.addf %511, %510 : vector<4x16xf32>
    %513 = arith.divf %511, %512 : vector<4x16xf32>
    %514 = vector.extract_strided_slice %498 {offsets = [0, 32], sizes = [4, 16], strides = [1, 1]} : vector<4x64xf32> to vector<4x16xf32>
    %515 = math.tanh %514 : vector<4x16xf32>
    %516 = vector.extract_strided_slice %498 {offsets = [0, 48], sizes = [4, 16], strides = [1, 1]} : vector<4x64xf32> to vector<4x16xf32>
    %517 = arith.negf %516 : vector<4x16xf32>
    %518 = math.exp %517 : vector<4x16xf32>
    %cst_120 = arith.constant 1.000000e+00 : f32
    %519 = vector.broadcast %cst_120 : f32 to vector<4x16xf32>
    %520 = arith.addf %519, %518 : vector<4x16xf32>
    %521 = arith.divf %519, %520 : vector<4x16xf32>
    %522 = arith.mulf %513, %466 : vector<4x16xf32>
    %523 = arith.mulf %507, %515 : vector<4x16xf32>
    %524 = arith.addf %522, %523 : vector<4x16xf32>
    %525 = math.tanh %524 : vector<4x16xf32>
    %526 = arith.mulf %521, %525 : vector<4x16xf32>
    %527 = vector.extract_strided_slice %501 {offsets = [0, 0], sizes = [4, 16], strides = [1, 1]} : vector<4x64xf32> to vector<4x16xf32>
    %528 = arith.negf %527 : vector<4x16xf32>
    %529 = math.exp %528 : vector<4x16xf32>
    %cst_121 = arith.constant 1.000000e+00 : f32
    %530 = vector.broadcast %cst_121 : f32 to vector<4x16xf32>
    %531 = arith.addf %530, %529 : vector<4x16xf32>
    %532 = arith.divf %530, %531 : vector<4x16xf32>
    %533 = vector.extract_strided_slice %501 {offsets = [0, 16], sizes = [4, 16], strides = [1, 1]} : vector<4x64xf32> to vector<4x16xf32>
    %534 = arith.negf %533 : vector<4x16xf32>
    %535 = math.exp %534 : vector<4x16xf32>
    %cst_122 = arith.constant 1.000000e+00 : f32
    %536 = vector.broadcast %cst_122 : f32 to vector<4x16xf32>
    %537 = arith.addf %536, %535 : vector<4x16xf32>
    %538 = arith.divf %536, %537 : vector<4x16xf32>
    %539 = vector.extract_strided_slice %501 {offsets = [0, 32], sizes = [4, 16], strides = [1, 1]} : vector<4x64xf32> to vector<4x16xf32>
    %540 = math.tanh %539 : vector<4x16xf32>
    %541 = vector.extract_strided_slice %501 {offsets = [0, 48], sizes = [4, 16], strides = [1, 1]} : vector<4x64xf32> to vector<4x16xf32>
    %542 = arith.negf %541 : vector<4x16xf32>
    %543 = math.exp %542 : vector<4x16xf32>
    %cst_123 = arith.constant 1.000000e+00 : f32
    %544 = vector.broadcast %cst_123 : f32 to vector<4x16xf32>
    %545 = arith.addf %544, %543 : vector<4x16xf32>
    %546 = arith.divf %544, %545 : vector<4x16xf32>
    %547 = arith.mulf %538, %472 : vector<4x16xf32>
    %548 = arith.mulf %532, %540 : vector<4x16xf32>
    %549 = arith.addf %547, %548 : vector<4x16xf32>
    %550 = math.tanh %549 : vector<4x16xf32>
    %551 = arith.mulf %546, %550 : vector<4x16xf32>
    %552 = vector.broadcast %c5_i32 : i32 to vector<4x1xi32>
    %553 = arith.cmpi slt, %552, %12 : vector<4x1xi32>
    %554 = vector.broadcast %489 : i32 to vector<4x1xi32>
    %555 = arith.cmpi slt, %554, %12 : vector<4x1xi32>
    %556 = vector.shape_cast %553 : vector<4x1xi1> to vector<4x1xi1>
    %557 = vector.broadcast %556 : vector<4x1xi1> to vector<4x16xi1>
    %558 = arith.select %557, %526, %463 : vector<4x16xi1>, vector<4x16xf32>
    %559 = vector.shape_cast %553 : vector<4x1xi1> to vector<4x1xi1>
    %560 = vector.broadcast %559 : vector<4x1xi1> to vector<4x16xi1>
    %561 = arith.select %560, %524, %466 : vector<4x16xi1>, vector<4x16xf32>
    %562 = vector.shape_cast %555 : vector<4x1xi1> to vector<4x1xi1>
    %563 = vector.broadcast %562 : vector<4x1xi1> to vector<4x16xi1>
    %564 = arith.select %563, %551, %469 : vector<4x16xi1>, vector<4x16xf32>
    %565 = vector.shape_cast %555 : vector<4x1xi1> to vector<4x1xi1>
    %566 = vector.broadcast %565 : vector<4x1xi1> to vector<4x16xi1>
    %567 = arith.select %566, %549, %472 : vector<4x16xi1>, vector<4x16xf32>
    %cst_124 = arith.constant 0.000000e+00 : f32
    %568 = vector.shape_cast %553 : vector<4x1xi1> to vector<4x1xi1>
    %569 = vector.broadcast %568 : vector<4x1xi1> to vector<4x16xi1>
    %570 = vector.broadcast %cst_124 : f32 to vector<4x16xf32>
    %571 = arith.select %569, %526, %570 : vector<4x16xi1>, vector<4x16xf32>
    %572 = arith.index_cast %c5_i32 : i32 to index
    %c0_125 = arith.constant 0 : index
    %c0_126 = arith.constant 0 : index
    %573 = vector.load %arg5[%572, %c0_125, %c0_126] : memref<8x4x16xf32, #tpu.memory_space<vmem>>, vector<1x4x16xf32>
    %574 = vector.shape_cast %573 : vector<1x4x16xf32> to vector<4x16xf32>
    %575 = vector.shape_cast %571 : vector<4x16xf32> to vector<1x4x16xf32>
    tpu.vector_store %arg5[%572, %c0_125, %c0_126], %575 {strides = array<i32>} : memref<8x4x16xf32, #tpu.memory_space<vmem>>, vector<1x4x16xf32>,
    %cst_127 = arith.constant 0.000000e+00 : f32
    %576 = vector.shape_cast %555 : vector<4x1xi1> to vector<4x1xi1>
    %577 = vector.broadcast %576 : vector<4x1xi1> to vector<4x16xi1>
    %578 = vector.broadcast %cst_127 : f32 to vector<4x16xf32>
    %579 = arith.select %577, %551, %578 : vector<4x16xi1>, vector<4x16xf32>
    %580 = arith.index_cast %489 : i32 to index
    %c0_128 = arith.constant 0 : index
    %c0_129 = arith.constant 0 : index
    %581 = vector.load %arg6[%580, %c0_128, %c0_129] : memref<8x4x16xf32, #tpu.memory_space<vmem>>, vector<1x4x16xf32>
    %582 = vector.shape_cast %581 : vector<1x4x16xf32> to vector<4x16xf32>
    %583 = vector.shape_cast %579 : vector<4x16xf32> to vector<1x4x16xf32>
    tpu.vector_store %arg6[%580, %c0_128, %c0_129], %583 {strides = array<i32>} : memref<8x4x16xf32, #tpu.memory_space<vmem>>, vector<1x4x16xf32>,
    %c6_i32 = arith.constant 6 : i32
    %c7_i32_130 = arith.constant 7 : i32
    %584 = arith.subi %c7_i32_130, %c6_i32 : i32
    %585 = arith.index_cast %c6_i32 : i32 to index
    %c0_131 = arith.constant 0 : index
    %c0_132 = arith.constant 0 : index
    %586 = vector.load %arg7[%585, %c0_131, %c0_132] : memref<8x4x128xf32, #tpu.memory_space<vmem>>, vector<1x4x128xf32>
    %587 = vector.shape_cast %586 : vector<1x4x128xf32> to vector<4x128xf32>
    %588 = arith.index_cast %584 : i32 to index
    %c0_133 = arith.constant 0 : index
    %c0_134 = arith.constant 0 : index
    %589 = vector.load %arg7[%588, %c0_133, %c0_134] : memref<8x4x128xf32, #tpu.memory_space<vmem>>, vector<1x4x128xf32>
    %590 = vector.shape_cast %589 : vector<1x4x128xf32> to vector<4x128xf32>
    %591 = vector.extract_strided_slice %587 {offsets = [0, 0], sizes = [4, 64], strides = [1, 1]} : vector<4x128xf32> to vector<4x64xf32>
    %cst_135 = arith.constant dense<0.000000e+00> : vector<4x64xf32>
    %592 = tpu.matmul %558, %9, %cst_135 {dimension_numbers = #tpu.dot_dimension_numbers<[1], [0], [0], [1], [0, 0, 1, 1], [], []>} : vector<4x16xf32>, vector<16x64xf32>, vector<4x64xf32> -> vector<4x64xf32>
    %593 = arith.addf %591, %592 : vector<4x64xf32>
    %594 = vector.extract_strided_slice %590 {offsets = [0, 64], sizes = [4, 64], strides = [1, 1]} : vector<4x128xf32> to vector<4x64xf32>
    %cst_136 = arith.constant dense<0.000000e+00> : vector<4x64xf32>
    %595 = tpu.matmul %564, %11, %cst_136 {dimension_numbers = #tpu.dot_dimension_numbers<[1], [0], [0], [1], [0, 0, 1, 1], [], []>} : vector<4x16xf32>, vector<16x64xf32>, vector<4x64xf32> -> vector<4x64xf32>
    %596 = arith.addf %594, %595 : vector<4x64xf32>
    %597 = vector.extract_strided_slice %593 {offsets = [0, 0], sizes = [4, 16], strides = [1, 1]} : vector<4x64xf32> to vector<4x16xf32>
    %598 = arith.negf %597 : vector<4x16xf32>
    %599 = math.exp %598 : vector<4x16xf32>
    %cst_137 = arith.constant 1.000000e+00 : f32
    %600 = vector.broadcast %cst_137 : f32 to vector<4x16xf32>
    %601 = arith.addf %600, %599 : vector<4x16xf32>
    %602 = arith.divf %600, %601 : vector<4x16xf32>
    %603 = vector.extract_strided_slice %593 {offsets = [0, 16], sizes = [4, 16], strides = [1, 1]} : vector<4x64xf32> to vector<4x16xf32>
    %604 = arith.negf %603 : vector<4x16xf32>
    %605 = math.exp %604 : vector<4x16xf32>
    %cst_138 = arith.constant 1.000000e+00 : f32
    %606 = vector.broadcast %cst_138 : f32 to vector<4x16xf32>
    %607 = arith.addf %606, %605 : vector<4x16xf32>
    %608 = arith.divf %606, %607 : vector<4x16xf32>
    %609 = vector.extract_strided_slice %593 {offsets = [0, 32], sizes = [4, 16], strides = [1, 1]} : vector<4x64xf32> to vector<4x16xf32>
    %610 = math.tanh %609 : vector<4x16xf32>
    %611 = vector.extract_strided_slice %593 {offsets = [0, 48], sizes = [4, 16], strides = [1, 1]} : vector<4x64xf32> to vector<4x16xf32>
    %612 = arith.negf %611 : vector<4x16xf32>
    %613 = math.exp %612 : vector<4x16xf32>
    %cst_139 = arith.constant 1.000000e+00 : f32
    %614 = vector.broadcast %cst_139 : f32 to vector<4x16xf32>
    %615 = arith.addf %614, %613 : vector<4x16xf32>
    %616 = arith.divf %614, %615 : vector<4x16xf32>
    %617 = arith.mulf %608, %561 : vector<4x16xf32>
    %618 = arith.mulf %602, %610 : vector<4x16xf32>
    %619 = arith.addf %617, %618 : vector<4x16xf32>
    %620 = math.tanh %619 : vector<4x16xf32>
    %621 = arith.mulf %616, %620 : vector<4x16xf32>
    %622 = vector.extract_strided_slice %596 {offsets = [0, 0], sizes = [4, 16], strides = [1, 1]} : vector<4x64xf32> to vector<4x16xf32>
    %623 = arith.negf %622 : vector<4x16xf32>
    %624 = math.exp %623 : vector<4x16xf32>
    %cst_140 = arith.constant 1.000000e+00 : f32
    %625 = vector.broadcast %cst_140 : f32 to vector<4x16xf32>
    %626 = arith.addf %625, %624 : vector<4x16xf32>
    %627 = arith.divf %625, %626 : vector<4x16xf32>
    %628 = vector.extract_strided_slice %596 {offsets = [0, 16], sizes = [4, 16], strides = [1, 1]} : vector<4x64xf32> to vector<4x16xf32>
    %629 = arith.negf %628 : vector<4x16xf32>
    %630 = math.exp %629 : vector<4x16xf32>
    %cst_141 = arith.constant 1.000000e+00 : f32
    %631 = vector.broadcast %cst_141 : f32 to vector<4x16xf32>
    %632 = arith.addf %631, %630 : vector<4x16xf32>
    %633 = arith.divf %631, %632 : vector<4x16xf32>
    %634 = vector.extract_strided_slice %596 {offsets = [0, 32], sizes = [4, 16], strides = [1, 1]} : vector<4x64xf32> to vector<4x16xf32>
    %635 = math.tanh %634 : vector<4x16xf32>
    %636 = vector.extract_strided_slice %596 {offsets = [0, 48], sizes = [4, 16], strides = [1, 1]} : vector<4x64xf32> to vector<4x16xf32>
    %637 = arith.negf %636 : vector<4x16xf32>
    %638 = math.exp %637 : vector<4x16xf32>
    %cst_142 = arith.constant 1.000000e+00 : f32
    %639 = vector.broadcast %cst_142 : f32 to vector<4x16xf32>
    %640 = arith.addf %639, %638 : vector<4x16xf32>
    %641 = arith.divf %639, %640 : vector<4x16xf32>
    %642 = arith.mulf %633, %567 : vector<4x16xf32>
    %643 = arith.mulf %627, %635 : vector<4x16xf32>
    %644 = arith.addf %642, %643 : vector<4x16xf32>
    %645 = math.tanh %644 : vector<4x16xf32>
    %646 = arith.mulf %641, %645 : vector<4x16xf32>
    %647 = vector.broadcast %c6_i32 : i32 to vector<4x1xi32>
    %648 = arith.cmpi slt, %647, %12 : vector<4x1xi32>
    %649 = vector.broadcast %584 : i32 to vector<4x1xi32>
    %650 = arith.cmpi slt, %649, %12 : vector<4x1xi32>
    %651 = vector.shape_cast %648 : vector<4x1xi1> to vector<4x1xi1>
    %652 = vector.broadcast %651 : vector<4x1xi1> to vector<4x16xi1>
    %653 = arith.select %652, %621, %558 : vector<4x16xi1>, vector<4x16xf32>
    %654 = vector.shape_cast %648 : vector<4x1xi1> to vector<4x1xi1>
    %655 = vector.broadcast %654 : vector<4x1xi1> to vector<4x16xi1>
    %656 = arith.select %655, %619, %561 : vector<4x16xi1>, vector<4x16xf32>
    %657 = vector.shape_cast %650 : vector<4x1xi1> to vector<4x1xi1>
    %658 = vector.broadcast %657 : vector<4x1xi1> to vector<4x16xi1>
    %659 = arith.select %658, %646, %564 : vector<4x16xi1>, vector<4x16xf32>
    %660 = vector.shape_cast %650 : vector<4x1xi1> to vector<4x1xi1>
    %661 = vector.broadcast %660 : vector<4x1xi1> to vector<4x16xi1>
    %662 = arith.select %661, %644, %567 : vector<4x16xi1>, vector<4x16xf32>
    %cst_143 = arith.constant 0.000000e+00 : f32
    %663 = vector.shape_cast %648 : vector<4x1xi1> to vector<4x1xi1>
    %664 = vector.broadcast %663 : vector<4x1xi1> to vector<4x16xi1>
    %665 = vector.broadcast %cst_143 : f32 to vector<4x16xf32>
    %666 = arith.select %664, %621, %665 : vector<4x16xi1>, vector<4x16xf32>
    %667 = arith.index_cast %c6_i32 : i32 to index
    %c0_144 = arith.constant 0 : index
    %c0_145 = arith.constant 0 : index
    %668 = vector.load %arg5[%667, %c0_144, %c0_145] : memref<8x4x16xf32, #tpu.memory_space<vmem>>, vector<1x4x16xf32>
    %669 = vector.shape_cast %668 : vector<1x4x16xf32> to vector<4x16xf32>
    %670 = vector.shape_cast %666 : vector<4x16xf32> to vector<1x4x16xf32>
    tpu.vector_store %arg5[%667, %c0_144, %c0_145], %670 {strides = array<i32>} : memref<8x4x16xf32, #tpu.memory_space<vmem>>, vector<1x4x16xf32>,
    %cst_146 = arith.constant 0.000000e+00 : f32
    %671 = vector.shape_cast %650 : vector<4x1xi1> to vector<4x1xi1>
    %672 = vector.broadcast %671 : vector<4x1xi1> to vector<4x16xi1>
    %673 = vector.broadcast %cst_146 : f32 to vector<4x16xf32>
    %674 = arith.select %672, %646, %673 : vector<4x16xi1>, vector<4x16xf32>
    %675 = arith.index_cast %584 : i32 to index
    %c0_147 = arith.constant 0 : index
    %c0_148 = arith.constant 0 : index
    %676 = vector.load %arg6[%675, %c0_147, %c0_148] : memref<8x4x16xf32, #tpu.memory_space<vmem>>, vector<1x4x16xf32>
    %677 = vector.shape_cast %676 : vector<1x4x16xf32> to vector<4x16xf32>
    %678 = vector.shape_cast %674 : vector<4x16xf32> to vector<1x4x16xf32>
    tpu.vector_store %arg6[%675, %c0_147, %c0_148], %678 {strides = array<i32>} : memref<8x4x16xf32, #tpu.memory_space<vmem>>, vector<1x4x16xf32>,
    %c7_i32_149 = arith.constant 7 : i32
    %c7_i32_150 = arith.constant 7 : i32
    %679 = arith.subi %c7_i32_150, %c7_i32_149 : i32
    %680 = arith.index_cast %c7_i32_149 : i32 to index
    %c0_151 = arith.constant 0 : index
    %c0_152 = arith.constant 0 : index
    %681 = vector.load %arg7[%680, %c0_151, %c0_152] : memref<8x4x128xf32, #tpu.memory_space<vmem>>, vector<1x4x128xf32>
    %682 = vector.shape_cast %681 : vector<1x4x128xf32> to vector<4x128xf32>
    %683 = arith.index_cast %679 : i32 to index
    %c0_153 = arith.constant 0 : index
    %c0_154 = arith.constant 0 : index
    %684 = vector.load %arg7[%683, %c0_153, %c0_154] : memref<8x4x128xf32, #tpu.memory_space<vmem>>, vector<1x4x128xf32>
    %685 = vector.shape_cast %684 : vector<1x4x128xf32> to vector<4x128xf32>
    %686 = vector.extract_strided_slice %682 {offsets = [0, 0], sizes = [4, 64], strides = [1, 1]} : vector<4x128xf32> to vector<4x64xf32>
    %cst_155 = arith.constant dense<0.000000e+00> : vector<4x64xf32>
    %687 = tpu.matmul %653, %9, %cst_155 {dimension_numbers = #tpu.dot_dimension_numbers<[1], [0], [0], [1], [0, 0, 1, 1], [], []>} : vector<4x16xf32>, vector<16x64xf32>, vector<4x64xf32> -> vector<4x64xf32>
    %688 = arith.addf %686, %687 : vector<4x64xf32>
    %689 = vector.extract_strided_slice %685 {offsets = [0, 64], sizes = [4, 64], strides = [1, 1]} : vector<4x128xf32> to vector<4x64xf32>
    %cst_156 = arith.constant dense<0.000000e+00> : vector<4x64xf32>
    %690 = tpu.matmul %659, %11, %cst_156 {dimension_numbers = #tpu.dot_dimension_numbers<[1], [0], [0], [1], [0, 0, 1, 1], [], []>} : vector<4x16xf32>, vector<16x64xf32>, vector<4x64xf32> -> vector<4x64xf32>
    %691 = arith.addf %689, %690 : vector<4x64xf32>
    %692 = vector.extract_strided_slice %688 {offsets = [0, 0], sizes = [4, 16], strides = [1, 1]} : vector<4x64xf32> to vector<4x16xf32>
    %693 = arith.negf %692 : vector<4x16xf32>
    %694 = math.exp %693 : vector<4x16xf32>
    %cst_157 = arith.constant 1.000000e+00 : f32
    %695 = vector.broadcast %cst_157 : f32 to vector<4x16xf32>
    %696 = arith.addf %695, %694 : vector<4x16xf32>
    %697 = arith.divf %695, %696 : vector<4x16xf32>
    %698 = vector.extract_strided_slice %688 {offsets = [0, 16], sizes = [4, 16], strides = [1, 1]} : vector<4x64xf32> to vector<4x16xf32>
    %699 = arith.negf %698 : vector<4x16xf32>
    %700 = math.exp %699 : vector<4x16xf32>
    %cst_158 = arith.constant 1.000000e+00 : f32
    %701 = vector.broadcast %cst_158 : f32 to vector<4x16xf32>
    %702 = arith.addf %701, %700 : vector<4x16xf32>
    %703 = arith.divf %701, %702 : vector<4x16xf32>
    %704 = vector.extract_strided_slice %688 {offsets = [0, 32], sizes = [4, 16], strides = [1, 1]} : vector<4x64xf32> to vector<4x16xf32>
    %705 = math.tanh %704 : vector<4x16xf32>
    %706 = vector.extract_strided_slice %688 {offsets = [0, 48], sizes = [4, 16], strides = [1, 1]} : vector<4x64xf32> to vector<4x16xf32>
    %707 = arith.negf %706 : vector<4x16xf32>
    %708 = math.exp %707 : vector<4x16xf32>
    %cst_159 = arith.constant 1.000000e+00 : f32
    %709 = vector.broadcast %cst_159 : f32 to vector<4x16xf32>
    %710 = arith.addf %709, %708 : vector<4x16xf32>
    %711 = arith.divf %709, %710 : vector<4x16xf32>
    %712 = arith.mulf %703, %656 : vector<4x16xf32>
    %713 = arith.mulf %697, %705 : vector<4x16xf32>
    %714 = arith.addf %712, %713 : vector<4x16xf32>
    %715 = math.tanh %714 : vector<4x16xf32>
    %716 = arith.mulf %711, %715 : vector<4x16xf32>
    %717 = vector.extract_strided_slice %691 {offsets = [0, 0], sizes = [4, 16], strides = [1, 1]} : vector<4x64xf32> to vector<4x16xf32>
    %718 = arith.negf %717 : vector<4x16xf32>
    %719 = math.exp %718 : vector<4x16xf32>
    %cst_160 = arith.constant 1.000000e+00 : f32
    %720 = vector.broadcast %cst_160 : f32 to vector<4x16xf32>
    %721 = arith.addf %720, %719 : vector<4x16xf32>
    %722 = arith.divf %720, %721 : vector<4x16xf32>
    %723 = vector.extract_strided_slice %691 {offsets = [0, 16], sizes = [4, 16], strides = [1, 1]} : vector<4x64xf32> to vector<4x16xf32>
    %724 = arith.negf %723 : vector<4x16xf32>
    %725 = math.exp %724 : vector<4x16xf32>
    %cst_161 = arith.constant 1.000000e+00 : f32
    %726 = vector.broadcast %cst_161 : f32 to vector<4x16xf32>
    %727 = arith.addf %726, %725 : vector<4x16xf32>
    %728 = arith.divf %726, %727 : vector<4x16xf32>
    %729 = vector.extract_strided_slice %691 {offsets = [0, 32], sizes = [4, 16], strides = [1, 1]} : vector<4x64xf32> to vector<4x16xf32>
    %730 = math.tanh %729 : vector<4x16xf32>
    %731 = vector.extract_strided_slice %691 {offsets = [0, 48], sizes = [4, 16], strides = [1, 1]} : vector<4x64xf32> to vector<4x16xf32>
    %732 = arith.negf %731 : vector<4x16xf32>
    %733 = math.exp %732 : vector<4x16xf32>
    %cst_162 = arith.constant 1.000000e+00 : f32
    %734 = vector.broadcast %cst_162 : f32 to vector<4x16xf32>
    %735 = arith.addf %734, %733 : vector<4x16xf32>
    %736 = arith.divf %734, %735 : vector<4x16xf32>
    %737 = arith.mulf %728, %662 : vector<4x16xf32>
    %738 = arith.mulf %722, %730 : vector<4x16xf32>
    %739 = arith.addf %737, %738 : vector<4x16xf32>
    %740 = math.tanh %739 : vector<4x16xf32>
    %741 = arith.mulf %736, %740 : vector<4x16xf32>
    %742 = vector.broadcast %c7_i32_149 : i32 to vector<4x1xi32>
    %743 = arith.cmpi slt, %742, %12 : vector<4x1xi32>
    %744 = vector.broadcast %679 : i32 to vector<4x1xi32>
    %745 = arith.cmpi slt, %744, %12 : vector<4x1xi32>
    %746 = vector.shape_cast %743 : vector<4x1xi1> to vector<4x1xi1>
    %747 = vector.broadcast %746 : vector<4x1xi1> to vector<4x16xi1>
    %748 = arith.select %747, %716, %653 : vector<4x16xi1>, vector<4x16xf32>
    %749 = vector.shape_cast %743 : vector<4x1xi1> to vector<4x1xi1>
    %750 = vector.broadcast %749 : vector<4x1xi1> to vector<4x16xi1>
    %751 = arith.select %750, %714, %656 : vector<4x16xi1>, vector<4x16xf32>
    %752 = vector.shape_cast %745 : vector<4x1xi1> to vector<4x1xi1>
    %753 = vector.broadcast %752 : vector<4x1xi1> to vector<4x16xi1>
    %754 = arith.select %753, %741, %659 : vector<4x16xi1>, vector<4x16xf32>
    %755 = vector.shape_cast %745 : vector<4x1xi1> to vector<4x1xi1>
    %756 = vector.broadcast %755 : vector<4x1xi1> to vector<4x16xi1>
    %757 = arith.select %756, %739, %662 : vector<4x16xi1>, vector<4x16xf32>
    %cst_163 = arith.constant 0.000000e+00 : f32
    %758 = vector.shape_cast %743 : vector<4x1xi1> to vector<4x1xi1>
    %759 = vector.broadcast %758 : vector<4x1xi1> to vector<4x16xi1>
    %760 = vector.broadcast %cst_163 : f32 to vector<4x16xf32>
    %761 = arith.select %759, %716, %760 : vector<4x16xi1>, vector<4x16xf32>
    %762 = arith.index_cast %c7_i32_149 : i32 to index
    %c0_164 = arith.constant 0 : index
    %c0_165 = arith.constant 0 : index
    %763 = vector.load %arg5[%762, %c0_164, %c0_165] : memref<8x4x16xf32, #tpu.memory_space<vmem>>, vector<1x4x16xf32>
    %764 = vector.shape_cast %763 : vector<1x4x16xf32> to vector<4x16xf32>
    %765 = vector.shape_cast %761 : vector<4x16xf32> to vector<1x4x16xf32>
    tpu.vector_store %arg5[%762, %c0_164, %c0_165], %765 {strides = array<i32>} : memref<8x4x16xf32, #tpu.memory_space<vmem>>, vector<1x4x16xf32>,
    %cst_166 = arith.constant 0.000000e+00 : f32
    %766 = vector.shape_cast %745 : vector<4x1xi1> to vector<4x1xi1>
    %767 = vector.broadcast %766 : vector<4x1xi1> to vector<4x16xi1>
    %768 = vector.broadcast %cst_166 : f32 to vector<4x16xf32>
    %769 = arith.select %767, %741, %768 : vector<4x16xi1>, vector<4x16xf32>
    %770 = arith.index_cast %679 : i32 to index
    %c0_167 = arith.constant 0 : index
    %c0_168 = arith.constant 0 : index
    %771 = vector.load %arg6[%770, %c0_167, %c0_168] : memref<8x4x16xf32, #tpu.memory_space<vmem>>, vector<1x4x16xf32>
    %772 = vector.shape_cast %771 : vector<1x4x16xf32> to vector<4x16xf32>
    %773 = vector.shape_cast %769 : vector<4x16xf32> to vector<1x4x16xf32>
    tpu.vector_store %arg6[%770, %c0_167, %c0_168], %773 {strides = array<i32>} : memref<8x4x16xf32, #tpu.memory_space<vmem>>, vector<1x4x16xf32>,
    %c8_i32 = arith.constant 8 : i32
    return
  }
}

module attributes {stable_mosaic.version = 11 : i64} {
  func.func @_bilstm_maxout_head_kernel(%arg0: memref<4x1xi32, #tpu.memory_space<vmem>>, %arg1: memref<8x4x48xf32, #tpu.memory_space<vmem>>, %arg2: memref<48x128xf32, #tpu.memory_space<vmem>>, %arg3: memref<2x16x64xf32, #tpu.memory_space<vmem>>, %arg4: memref<1x128xf32, #tpu.memory_space<vmem>>, %arg5: memref<128x32xf32, #tpu.memory_space<vmem>>, %arg6: memref<1x32xf32, #tpu.memory_space<vmem>>, %arg7: memref<32x3xf32, #tpu.memory_space<vmem>>, %arg8: memref<1x3xf32, #tpu.memory_space<vmem>>, %arg9: memref<2x3xf32, #tpu.memory_space<vmem>>, %arg10: memref<8x4x128xf32, #tpu.memory_space<vmem>>) attributes {dimension_semantics = [], scalar_prefetch = 0 : i64, scratch_operands = 1 : i64, tpu.core_type = #tpu.core_type<tc>} {
    %c0 = arith.constant 0 : index
    %c0_0 = arith.constant 0 : index
    %c0_1 = arith.constant 0 : index
    %0 = vector.load %arg1[%c0, %c0_0, %c0_1] : memref<8x4x48xf32, #tpu.memory_space<vmem>>, vector<8x4x48xf32>
    %c0_2 = arith.constant 0 : index
    %c0_3 = arith.constant 0 : index
    %1 = vector.load %arg2[%c0_2, %c0_3] : memref<48x128xf32, #tpu.memory_space<vmem>>, vector<48x128xf32>
    %cst = arith.constant dense<0.000000e+00> : vector<8x4x128xf32>
    %2 = tpu.matmul %0, %1, %cst {dimension_numbers = #tpu.dot_dimension_numbers<[2], [0], [0, 1], [1], [0, 0, 0, 1, 1, 1], [], []>} : vector<8x4x48xf32>, vector<48x128xf32>, vector<8x4x128xf32> -> vector<8x4x128xf32>
    %c0_4 = arith.constant 0 : index
    %c0_5 = arith.constant 0 : index
    %3 = vector.load %arg4[%c0_4, %c0_5] : memref<1x128xf32, #tpu.memory_space<vmem>>, vector<1x128xf32>
    %4 = vector.shape_cast %3 : vector<1x128xf32> to vector<1x1x128xf32>
    %5 = vector.broadcast %4 : vector<1x1x128xf32> to vector<8x4x128xf32>
    %6 = arith.addf %2, %5 : vector<8x4x128xf32>
    %c0_6 = arith.constant 0 : index
    %c0_7 = arith.constant 0 : index
    %c0_8 = arith.constant 0 : index
    %7 = vector.load %arg10[%c0_6, %c0_7, %c0_8] : memref<8x4x128xf32, #tpu.memory_space<vmem>>, vector<8x4x128xf32>
    tpu.vector_store %arg10[%c0_6, %c0_7, %c0_8], %6 {strides = array<i32>} : memref<8x4x128xf32, #tpu.memory_space<vmem>>, vector<8x4x128xf32>,
    %c0_9 = arith.constant 0 : index
    %c0_10 = arith.constant 0 : index
    %c0_11 = arith.constant 0 : index
    %8 = vector.load %arg3[%c0_9, %c0_10, %c0_11] : memref<2x16x64xf32, #tpu.memory_space<vmem>>, vector<1x16x64xf32>
    %9 = vector.shape_cast %8 : vector<1x16x64xf32> to vector<16x64xf32>
    %c1 = arith.constant 1 : index
    %c0_12 = arith.constant 0 : index
    %c0_13 = arith.constant 0 : index
    %10 = vector.load %arg3[%c1, %c0_12, %c0_13] : memref<2x16x64xf32, #tpu.memory_space<vmem>>, vector<1x16x64xf32>
    %11 = vector.shape_cast %10 : vector<1x16x64xf32> to vector<16x64xf32>
    %c0_14 = arith.constant 0 : index
    %c0_15 = arith.constant 0 : index
    %12 = vector.load %arg0[%c0_14, %c0_15] : memref<4x1xi32, #tpu.memory_space<vmem>>, vector<4x1xi32>
    %cst_16 = arith.constant 0.000000e+00 : f32
    %13 = vector.broadcast %cst_16 : f32 to vector<4x16xf32>
    %cst_17 = arith.constant -1.000000e+30 : f32
    %14 = vector.broadcast %cst_17 : f32 to vector<4x16xf32>
    %c0_i32 = arith.constant 0 : i32
    %c7_i32 = arith.constant 7 : i32
    %15 = arith.subi %c7_i32, %c0_i32 : i32
    %16 = arith.index_cast %c0_i32 : i32 to index
    %c0_18 = arith.constant 0 : index
    %c0_19 = arith.constant 0 : index
    %17 = vector.load %arg10[%16, %c0_18, %c0_19] : memref<8x4x128xf32, #tpu.memory_space<vmem>>, vector<1x4x128xf32>
    %18 = vector.shape_cast %17 : vector<1x4x128xf32> to vector<4x128xf32>
    %19 = arith.index_cast %15 : i32 to index
    %c0_20 = arith.constant 0 : index
    %c0_21 = arith.constant 0 : index
    %20 = vector.load %arg10[%19, %c0_20, %c0_21] : memref<8x4x128xf32, #tpu.memory_space<vmem>>, vector<1x4x128xf32>
    %21 = vector.shape_cast %20 : vector<1x4x128xf32> to vector<4x128xf32>
    %22 = vector.extract_strided_slice %18 {offsets = [0, 0], sizes = [4, 64], strides = [1, 1]} : vector<4x128xf32> to vector<4x64xf32>
    %cst_22 = arith.constant dense<0.000000e+00> : vector<4x64xf32>
    %23 = tpu.matmul %13, %9, %cst_22 {dimension_numbers = #tpu.dot_dimension_numbers<[1], [0], [0], [1], [0, 0, 1, 1], [], []>} : vector<4x16xf32>, vector<16x64xf32>, vector<4x64xf32> -> vector<4x64xf32>
    %24 = arith.addf %22, %23 : vector<4x64xf32>
    %25 = vector.extract_strided_slice %21 {offsets = [0, 64], sizes = [4, 64], strides = [1, 1]} : vector<4x128xf32> to vector<4x64xf32>
    %cst_23 = arith.constant dense<0.000000e+00> : vector<4x64xf32>
    %26 = tpu.matmul %13, %11, %cst_23 {dimension_numbers = #tpu.dot_dimension_numbers<[1], [0], [0], [1], [0, 0, 1, 1], [], []>} : vector<4x16xf32>, vector<16x64xf32>, vector<4x64xf32> -> vector<4x64xf32>
    %27 = arith.addf %25, %26 : vector<4x64xf32>
    %28 = vector.extract_strided_slice %24 {offsets = [0, 0], sizes = [4, 16], strides = [1, 1]} : vector<4x64xf32> to vector<4x16xf32>
    %29 = arith.negf %28 : vector<4x16xf32>
    %30 = math.exp %29 : vector<4x16xf32>
    %cst_24 = arith.constant 1.000000e+00 : f32
    %31 = vector.broadcast %cst_24 : f32 to vector<4x16xf32>
    %32 = arith.addf %31, %30 : vector<4x16xf32>
    %33 = arith.divf %31, %32 : vector<4x16xf32>
    %34 = vector.extract_strided_slice %24 {offsets = [0, 16], sizes = [4, 16], strides = [1, 1]} : vector<4x64xf32> to vector<4x16xf32>
    %35 = arith.negf %34 : vector<4x16xf32>
    %36 = math.exp %35 : vector<4x16xf32>
    %cst_25 = arith.constant 1.000000e+00 : f32
    %37 = vector.broadcast %cst_25 : f32 to vector<4x16xf32>
    %38 = arith.addf %37, %36 : vector<4x16xf32>
    %39 = arith.divf %37, %38 : vector<4x16xf32>
    %40 = vector.extract_strided_slice %24 {offsets = [0, 32], sizes = [4, 16], strides = [1, 1]} : vector<4x64xf32> to vector<4x16xf32>
    %41 = math.tanh %40 : vector<4x16xf32>
    %42 = vector.extract_strided_slice %24 {offsets = [0, 48], sizes = [4, 16], strides = [1, 1]} : vector<4x64xf32> to vector<4x16xf32>
    %43 = arith.negf %42 : vector<4x16xf32>
    %44 = math.exp %43 : vector<4x16xf32>
    %cst_26 = arith.constant 1.000000e+00 : f32
    %45 = vector.broadcast %cst_26 : f32 to vector<4x16xf32>
    %46 = arith.addf %45, %44 : vector<4x16xf32>
    %47 = arith.divf %45, %46 : vector<4x16xf32>
    %48 = arith.mulf %39, %13 : vector<4x16xf32>
    %49 = arith.mulf %33, %41 : vector<4x16xf32>
    %50 = arith.addf %48, %49 : vector<4x16xf32>
    %51 = math.tanh %50 : vector<4x16xf32>
    %52 = arith.mulf %47, %51 : vector<4x16xf32>
    %53 = vector.extract_strided_slice %27 {offsets = [0, 0], sizes = [4, 16], strides = [1, 1]} : vector<4x64xf32> to vector<4x16xf32>
    %54 = arith.negf %53 : vector<4x16xf32>
    %55 = math.exp %54 : vector<4x16xf32>
    %cst_27 = arith.constant 1.000000e+00 : f32
    %56 = vector.broadcast %cst_27 : f32 to vector<4x16xf32>
    %57 = arith.addf %56, %55 : vector<4x16xf32>
    %58 = arith.divf %56, %57 : vector<4x16xf32>
    %59 = vector.extract_strided_slice %27 {offsets = [0, 16], sizes = [4, 16], strides = [1, 1]} : vector<4x64xf32> to vector<4x16xf32>
    %60 = arith.negf %59 : vector<4x16xf32>
    %61 = math.exp %60 : vector<4x16xf32>
    %cst_28 = arith.constant 1.000000e+00 : f32
    %62 = vector.broadcast %cst_28 : f32 to vector<4x16xf32>
    %63 = arith.addf %62, %61 : vector<4x16xf32>
    %64 = arith.divf %62, %63 : vector<4x16xf32>
    %65 = vector.extract_strided_slice %27 {offsets = [0, 32], sizes = [4, 16], strides = [1, 1]} : vector<4x64xf32> to vector<4x16xf32>
    %66 = math.tanh %65 : vector<4x16xf32>
    %67 = vector.extract_strided_slice %27 {offsets = [0, 48], sizes = [4, 16], strides = [1, 1]} : vector<4x64xf32> to vector<4x16xf32>
    %68 = arith.negf %67 : vector<4x16xf32>
    %69 = math.exp %68 : vector<4x16xf32>
    %cst_29 = arith.constant 1.000000e+00 : f32
    %70 = vector.broadcast %cst_29 : f32 to vector<4x16xf32>
    %71 = arith.addf %70, %69 : vector<4x16xf32>
    %72 = arith.divf %70, %71 : vector<4x16xf32>
    %73 = arith.mulf %64, %13 : vector<4x16xf32>
    %74 = arith.mulf %58, %66 : vector<4x16xf32>
    %75 = arith.addf %73, %74 : vector<4x16xf32>
    %76 = math.tanh %75 : vector<4x16xf32>
    %77 = arith.mulf %72, %76 : vector<4x16xf32>
    %78 = vector.broadcast %c0_i32 : i32 to vector<4x1xi32>
    %79 = arith.cmpi slt, %78, %12 : vector<4x1xi32>
    %80 = vector.broadcast %15 : i32 to vector<4x1xi32>
    %81 = arith.cmpi slt, %80, %12 : vector<4x1xi32>
    %82 = vector.shape_cast %79 : vector<4x1xi1> to vector<4x1xi1>
    %83 = vector.broadcast %82 : vector<4x1xi1> to vector<4x16xi1>
    %84 = arith.select %83, %52, %13 : vector<4x16xi1>, vector<4x16xf32>
    %85 = vector.shape_cast %79 : vector<4x1xi1> to vector<4x1xi1>
    %86 = vector.broadcast %85 : vector<4x1xi1> to vector<4x16xi1>
    %87 = arith.select %86, %50, %13 : vector<4x16xi1>, vector<4x16xf32>
    %88 = vector.shape_cast %81 : vector<4x1xi1> to vector<4x1xi1>
    %89 = vector.broadcast %88 : vector<4x1xi1> to vector<4x16xi1>
    %90 = arith.select %89, %77, %13 : vector<4x16xi1>, vector<4x16xf32>
    %91 = vector.shape_cast %81 : vector<4x1xi1> to vector<4x1xi1>
    %92 = vector.broadcast %91 : vector<4x1xi1> to vector<4x16xi1>
    %93 = arith.select %92, %75, %13 : vector<4x16xi1>, vector<4x16xf32>
    %94 = arith.maximumf %14, %52 : vector<4x16xf32>
    %95 = vector.shape_cast %79 : vector<4x1xi1> to vector<4x1xi1>
    %96 = vector.broadcast %95 : vector<4x1xi1> to vector<4x16xi1>
    %97 = arith.select %96, %94, %14 : vector<4x16xi1>, vector<4x16xf32>
    %98 = arith.maximumf %14, %77 : vector<4x16xf32>
    %99 = vector.shape_cast %81 : vector<4x1xi1> to vector<4x1xi1>
    %100 = vector.broadcast %99 : vector<4x1xi1> to vector<4x16xi1>
    %101 = arith.select %100, %98, %14 : vector<4x16xi1>, vector<4x16xf32>
    %c1_i32 = arith.constant 1 : i32
    %c7_i32_30 = arith.constant 7 : i32
    %102 = arith.subi %c7_i32_30, %c1_i32 : i32
    %103 = arith.index_cast %c1_i32 : i32 to index
    %c0_31 = arith.constant 0 : index
    %c0_32 = arith.constant 0 : index
    %104 = vector.load %arg10[%103, %c0_31, %c0_32] : memref<8x4x128xf32, #tpu.memory_space<vmem>>, vector<1x4x128xf32>
    %105 = vector.shape_cast %104 : vector<1x4x128xf32> to vector<4x128xf32>
    %106 = arith.index_cast %102 : i32 to index
    %c0_33 = arith.constant 0 : index
    %c0_34 = arith.constant 0 : index
    %107 = vector.load %arg10[%106, %c0_33, %c0_34] : memref<8x4x128xf32, #tpu.memory_space<vmem>>, vector<1x4x128xf32>
    %108 = vector.shape_cast %107 : vector<1x4x128xf32> to vector<4x128xf32>
    %109 = vector.extract_strided_slice %105 {offsets = [0, 0], sizes = [4, 64], strides = [1, 1]} : vector<4x128xf32> to vector<4x64xf32>
    %cst_35 = arith.constant dense<0.000000e+00> : vector<4x64xf32>
    %110 = tpu.matmul %84, %9, %cst_35 {dimension_numbers = #tpu.dot_dimension_numbers<[1], [0], [0], [1], [0, 0, 1, 1], [], []>} : vector<4x16xf32>, vector<16x64xf32>, vector<4x64xf32> -> vector<4x64xf32>
    %111 = arith.addf %109, %110 : vector<4x64xf32>
    %112 = vector.extract_strided_slice %108 {offsets = [0, 64], sizes = [4, 64], strides = [1, 1]} : vector<4x128xf32> to vector<4x64xf32>
    %cst_36 = arith.constant dense<0.000000e+00> : vector<4x64xf32>
    %113 = tpu.matmul %90, %11, %cst_36 {dimension_numbers = #tpu.dot_dimension_numbers<[1], [0], [0], [1], [0, 0, 1, 1], [], []>} : vector<4x16xf32>, vector<16x64xf32>, vector<4x64xf32> -> vector<4x64xf32>
    %114 = arith.addf %112, %113 : vector<4x64xf32>
    %115 = vector.extract_strided_slice %111 {offsets = [0, 0], sizes = [4, 16], strides = [1, 1]} : vector<4x64xf32> to vector<4x16xf32>
    %116 = arith.negf %115 : vector<4x16xf32>
    %117 = math.exp %116 : vector<4x16xf32>
    %cst_37 = arith.constant 1.000000e+00 : f32
    %118 = vector.broadcast %cst_37 : f32 to vector<4x16xf32>
    %119 = arith.addf %118, %117 : vector<4x16xf32>
    %120 = arith.divf %118, %119 : vector<4x16xf32>
    %121 = vector.extract_strided_slice %111 {offsets = [0, 16], sizes = [4, 16], strides = [1, 1]} : vector<4x64xf32> to vector<4x16xf32>
    %122 = arith.negf %121 : vector<4x16xf32>
    %123 = math.exp %122 : vector<4x16xf32>
    %cst_38 = arith.constant 1.000000e+00 : f32
    %124 = vector.broadcast %cst_38 : f32 to vector<4x16xf32>
    %125 = arith.addf %124, %123 : vector<4x16xf32>
    %126 = arith.divf %124, %125 : vector<4x16xf32>
    %127 = vector.extract_strided_slice %111 {offsets = [0, 32], sizes = [4, 16], strides = [1, 1]} : vector<4x64xf32> to vector<4x16xf32>
    %128 = math.tanh %127 : vector<4x16xf32>
    %129 = vector.extract_strided_slice %111 {offsets = [0, 48], sizes = [4, 16], strides = [1, 1]} : vector<4x64xf32> to vector<4x16xf32>
    %130 = arith.negf %129 : vector<4x16xf32>
    %131 = math.exp %130 : vector<4x16xf32>
    %cst_39 = arith.constant 1.000000e+00 : f32
    %132 = vector.broadcast %cst_39 : f32 to vector<4x16xf32>
    %133 = arith.addf %132, %131 : vector<4x16xf32>
    %134 = arith.divf %132, %133 : vector<4x16xf32>
    %135 = arith.mulf %126, %87 : vector<4x16xf32>
    %136 = arith.mulf %120, %128 : vector<4x16xf32>
    %137 = arith.addf %135, %136 : vector<4x16xf32>
    %138 = math.tanh %137 : vector<4x16xf32>
    %139 = arith.mulf %134, %138 : vector<4x16xf32>
    %140 = vector.extract_strided_slice %114 {offsets = [0, 0], sizes = [4, 16], strides = [1, 1]} : vector<4x64xf32> to vector<4x16xf32>
    %141 = arith.negf %140 : vector<4x16xf32>
    %142 = math.exp %141 : vector<4x16xf32>
    %cst_40 = arith.constant 1.000000e+00 : f32
    %143 = vector.broadcast %cst_40 : f32 to vector<4x16xf32>
    %144 = arith.addf %143, %142 : vector<4x16xf32>
    %145 = arith.divf %143, %144 : vector<4x16xf32>
    %146 = vector.extract_strided_slice %114 {offsets = [0, 16], sizes = [4, 16], strides = [1, 1]} : vector<4x64xf32> to vector<4x16xf32>
    %147 = arith.negf %146 : vector<4x16xf32>
    %148 = math.exp %147 : vector<4x16xf32>
    %cst_41 = arith.constant 1.000000e+00 : f32
    %149 = vector.broadcast %cst_41 : f32 to vector<4x16xf32>
    %150 = arith.addf %149, %148 : vector<4x16xf32>
    %151 = arith.divf %149, %150 : vector<4x16xf32>
    %152 = vector.extract_strided_slice %114 {offsets = [0, 32], sizes = [4, 16], strides = [1, 1]} : vector<4x64xf32> to vector<4x16xf32>
    %153 = math.tanh %152 : vector<4x16xf32>
    %154 = vector.extract_strided_slice %114 {offsets = [0, 48], sizes = [4, 16], strides = [1, 1]} : vector<4x64xf32> to vector<4x16xf32>
    %155 = arith.negf %154 : vector<4x16xf32>
    %156 = math.exp %155 : vector<4x16xf32>
    %cst_42 = arith.constant 1.000000e+00 : f32
    %157 = vector.broadcast %cst_42 : f32 to vector<4x16xf32>
    %158 = arith.addf %157, %156 : vector<4x16xf32>
    %159 = arith.divf %157, %158 : vector<4x16xf32>
    %160 = arith.mulf %151, %93 : vector<4x16xf32>
    %161 = arith.mulf %145, %153 : vector<4x16xf32>
    %162 = arith.addf %160, %161 : vector<4x16xf32>
    %163 = math.tanh %162 : vector<4x16xf32>
    %164 = arith.mulf %159, %163 : vector<4x16xf32>
    %165 = vector.broadcast %c1_i32 : i32 to vector<4x1xi32>
    %166 = arith.cmpi slt, %165, %12 : vector<4x1xi32>
    %167 = vector.broadcast %102 : i32 to vector<4x1xi32>
    %168 = arith.cmpi slt, %167, %12 : vector<4x1xi32>
    %169 = vector.shape_cast %166 : vector<4x1xi1> to vector<4x1xi1>
    %170 = vector.broadcast %169 : vector<4x1xi1> to vector<4x16xi1>
    %171 = arith.select %170, %139, %84 : vector<4x16xi1>, vector<4x16xf32>
    %172 = vector.shape_cast %166 : vector<4x1xi1> to vector<4x1xi1>
    %173 = vector.broadcast %172 : vector<4x1xi1> to vector<4x16xi1>
    %174 = arith.select %173, %137, %87 : vector<4x16xi1>, vector<4x16xf32>
    %175 = vector.shape_cast %168 : vector<4x1xi1> to vector<4x1xi1>
    %176 = vector.broadcast %175 : vector<4x1xi1> to vector<4x16xi1>
    %177 = arith.select %176, %164, %90 : vector<4x16xi1>, vector<4x16xf32>
    %178 = vector.shape_cast %168 : vector<4x1xi1> to vector<4x1xi1>
    %179 = vector.broadcast %178 : vector<4x1xi1> to vector<4x16xi1>
    %180 = arith.select %179, %162, %93 : vector<4x16xi1>, vector<4x16xf32>
    %181 = arith.maximumf %97, %139 : vector<4x16xf32>
    %182 = vector.shape_cast %166 : vector<4x1xi1> to vector<4x1xi1>
    %183 = vector.broadcast %182 : vector<4x1xi1> to vector<4x16xi1>
    %184 = arith.select %183, %181, %97 : vector<4x16xi1>, vector<4x16xf32>
    %185 = arith.maximumf %101, %164 : vector<4x16xf32>
    %186 = vector.shape_cast %168 : vector<4x1xi1> to vector<4x1xi1>
    %187 = vector.broadcast %186 : vector<4x1xi1> to vector<4x16xi1>
    %188 = arith.select %187, %185, %101 : vector<4x16xi1>, vector<4x16xf32>
    %c2_i32 = arith.constant 2 : i32
    %c7_i32_43 = arith.constant 7 : i32
    %189 = arith.subi %c7_i32_43, %c2_i32 : i32
    %190 = arith.index_cast %c2_i32 : i32 to index
    %c0_44 = arith.constant 0 : index
    %c0_45 = arith.constant 0 : index
    %191 = vector.load %arg10[%190, %c0_44, %c0_45] : memref<8x4x128xf32, #tpu.memory_space<vmem>>, vector<1x4x128xf32>
    %192 = vector.shape_cast %191 : vector<1x4x128xf32> to vector<4x128xf32>
    %193 = arith.index_cast %189 : i32 to index
    %c0_46 = arith.constant 0 : index
    %c0_47 = arith.constant 0 : index
    %194 = vector.load %arg10[%193, %c0_46, %c0_47] : memref<8x4x128xf32, #tpu.memory_space<vmem>>, vector<1x4x128xf32>
    %195 = vector.shape_cast %194 : vector<1x4x128xf32> to vector<4x128xf32>
    %196 = vector.extract_strided_slice %192 {offsets = [0, 0], sizes = [4, 64], strides = [1, 1]} : vector<4x128xf32> to vector<4x64xf32>
    %cst_48 = arith.constant dense<0.000000e+00> : vector<4x64xf32>
    %197 = tpu.matmul %171, %9, %cst_48 {dimension_numbers = #tpu.dot_dimension_numbers<[1], [0], [0], [1], [0, 0, 1, 1], [], []>} : vector<4x16xf32>, vector<16x64xf32>, vector<4x64xf32> -> vector<4x64xf32>
    %198 = arith.addf %196, %197 : vector<4x64xf32>
    %199 = vector.extract_strided_slice %195 {offsets = [0, 64], sizes = [4, 64], strides = [1, 1]} : vector<4x128xf32> to vector<4x64xf32>
    %cst_49 = arith.constant dense<0.000000e+00> : vector<4x64xf32>
    %200 = tpu.matmul %177, %11, %cst_49 {dimension_numbers = #tpu.dot_dimension_numbers<[1], [0], [0], [1], [0, 0, 1, 1], [], []>} : vector<4x16xf32>, vector<16x64xf32>, vector<4x64xf32> -> vector<4x64xf32>
    %201 = arith.addf %199, %200 : vector<4x64xf32>
    %202 = vector.extract_strided_slice %198 {offsets = [0, 0], sizes = [4, 16], strides = [1, 1]} : vector<4x64xf32> to vector<4x16xf32>
    %203 = arith.negf %202 : vector<4x16xf32>
    %204 = math.exp %203 : vector<4x16xf32>
    %cst_50 = arith.constant 1.000000e+00 : f32
    %205 = vector.broadcast %cst_50 : f32 to vector<4x16xf32>
    %206 = arith.addf %205, %204 : vector<4x16xf32>
    %207 = arith.divf %205, %206 : vector<4x16xf32>
    %208 = vector.extract_strided_slice %198 {offsets = [0, 16], sizes = [4, 16], strides = [1, 1]} : vector<4x64xf32> to vector<4x16xf32>
    %209 = arith.negf %208 : vector<4x16xf32>
    %210 = math.exp %209 : vector<4x16xf32>
    %cst_51 = arith.constant 1.000000e+00 : f32
    %211 = vector.broadcast %cst_51 : f32 to vector<4x16xf32>
    %212 = arith.addf %211, %210 : vector<4x16xf32>
    %213 = arith.divf %211, %212 : vector<4x16xf32>
    %214 = vector.extract_strided_slice %198 {offsets = [0, 32], sizes = [4, 16], strides = [1, 1]} : vector<4x64xf32> to vector<4x16xf32>
    %215 = math.tanh %214 : vector<4x16xf32>
    %216 = vector.extract_strided_slice %198 {offsets = [0, 48], sizes = [4, 16], strides = [1, 1]} : vector<4x64xf32> to vector<4x16xf32>
    %217 = arith.negf %216 : vector<4x16xf32>
    %218 = math.exp %217 : vector<4x16xf32>
    %cst_52 = arith.constant 1.000000e+00 : f32
    %219 = vector.broadcast %cst_52 : f32 to vector<4x16xf32>
    %220 = arith.addf %219, %218 : vector<4x16xf32>
    %221 = arith.divf %219, %220 : vector<4x16xf32>
    %222 = arith.mulf %213, %174 : vector<4x16xf32>
    %223 = arith.mulf %207, %215 : vector<4x16xf32>
    %224 = arith.addf %222, %223 : vector<4x16xf32>
    %225 = math.tanh %224 : vector<4x16xf32>
    %226 = arith.mulf %221, %225 : vector<4x16xf32>
    %227 = vector.extract_strided_slice %201 {offsets = [0, 0], sizes = [4, 16], strides = [1, 1]} : vector<4x64xf32> to vector<4x16xf32>
    %228 = arith.negf %227 : vector<4x16xf32>
    %229 = math.exp %228 : vector<4x16xf32>
    %cst_53 = arith.constant 1.000000e+00 : f32
    %230 = vector.broadcast %cst_53 : f32 to vector<4x16xf32>
    %231 = arith.addf %230, %229 : vector<4x16xf32>
    %232 = arith.divf %230, %231 : vector<4x16xf32>
    %233 = vector.extract_strided_slice %201 {offsets = [0, 16], sizes = [4, 16], strides = [1, 1]} : vector<4x64xf32> to vector<4x16xf32>
    %234 = arith.negf %233 : vector<4x16xf32>
    %235 = math.exp %234 : vector<4x16xf32>
    %cst_54 = arith.constant 1.000000e+00 : f32
    %236 = vector.broadcast %cst_54 : f32 to vector<4x16xf32>
    %237 = arith.addf %236, %235 : vector<4x16xf32>
    %238 = arith.divf %236, %237 : vector<4x16xf32>
    %239 = vector.extract_strided_slice %201 {offsets = [0, 32], sizes = [4, 16], strides = [1, 1]} : vector<4x64xf32> to vector<4x16xf32>
    %240 = math.tanh %239 : vector<4x16xf32>
    %241 = vector.extract_strided_slice %201 {offsets = [0, 48], sizes = [4, 16], strides = [1, 1]} : vector<4x64xf32> to vector<4x16xf32>
    %242 = arith.negf %241 : vector<4x16xf32>
    %243 = math.exp %242 : vector<4x16xf32>
    %cst_55 = arith.constant 1.000000e+00 : f32
    %244 = vector.broadcast %cst_55 : f32 to vector<4x16xf32>
    %245 = arith.addf %244, %243 : vector<4x16xf32>
    %246 = arith.divf %244, %245 : vector<4x16xf32>
    %247 = arith.mulf %238, %180 : vector<4x16xf32>
    %248 = arith.mulf %232, %240 : vector<4x16xf32>
    %249 = arith.addf %247, %248 : vector<4x16xf32>
    %250 = math.tanh %249 : vector<4x16xf32>
    %251 = arith.mulf %246, %250 : vector<4x16xf32>
    %252 = vector.broadcast %c2_i32 : i32 to vector<4x1xi32>
    %253 = arith.cmpi slt, %252, %12 : vector<4x1xi32>
    %254 = vector.broadcast %189 : i32 to vector<4x1xi32>
    %255 = arith.cmpi slt, %254, %12 : vector<4x1xi32>
    %256 = vector.shape_cast %253 : vector<4x1xi1> to vector<4x1xi1>
    %257 = vector.broadcast %256 : vector<4x1xi1> to vector<4x16xi1>
    %258 = arith.select %257, %226, %171 : vector<4x16xi1>, vector<4x16xf32>
    %259 = vector.shape_cast %253 : vector<4x1xi1> to vector<4x1xi1>
    %260 = vector.broadcast %259 : vector<4x1xi1> to vector<4x16xi1>
    %261 = arith.select %260, %224, %174 : vector<4x16xi1>, vector<4x16xf32>
    %262 = vector.shape_cast %255 : vector<4x1xi1> to vector<4x1xi1>
    %263 = vector.broadcast %262 : vector<4x1xi1> to vector<4x16xi1>
    %264 = arith.select %263, %251, %177 : vector<4x16xi1>, vector<4x16xf32>
    %265 = vector.shape_cast %255 : vector<4x1xi1> to vector<4x1xi1>
    %266 = vector.broadcast %265 : vector<4x1xi1> to vector<4x16xi1>
    %267 = arith.select %266, %249, %180 : vector<4x16xi1>, vector<4x16xf32>
    %268 = arith.maximumf %184, %226 : vector<4x16xf32>
    %269 = vector.shape_cast %253 : vector<4x1xi1> to vector<4x1xi1>
    %270 = vector.broadcast %269 : vector<4x1xi1> to vector<4x16xi1>
    %271 = arith.select %270, %268, %184 : vector<4x16xi1>, vector<4x16xf32>
    %272 = arith.maximumf %188, %251 : vector<4x16xf32>
    %273 = vector.shape_cast %255 : vector<4x1xi1> to vector<4x1xi1>
    %274 = vector.broadcast %273 : vector<4x1xi1> to vector<4x16xi1>
    %275 = arith.select %274, %272, %188 : vector<4x16xi1>, vector<4x16xf32>
    %c3_i32 = arith.constant 3 : i32
    %c7_i32_56 = arith.constant 7 : i32
    %276 = arith.subi %c7_i32_56, %c3_i32 : i32
    %277 = arith.index_cast %c3_i32 : i32 to index
    %c0_57 = arith.constant 0 : index
    %c0_58 = arith.constant 0 : index
    %278 = vector.load %arg10[%277, %c0_57, %c0_58] : memref<8x4x128xf32, #tpu.memory_space<vmem>>, vector<1x4x128xf32>
    %279 = vector.shape_cast %278 : vector<1x4x128xf32> to vector<4x128xf32>
    %280 = arith.index_cast %276 : i32 to index
    %c0_59 = arith.constant 0 : index
    %c0_60 = arith.constant 0 : index
    %281 = vector.load %arg10[%280, %c0_59, %c0_60] : memref<8x4x128xf32, #tpu.memory_space<vmem>>, vector<1x4x128xf32>
    %282 = vector.shape_cast %281 : vector<1x4x128xf32> to vector<4x128xf32>
    %283 = vector.extract_strided_slice %279 {offsets = [0, 0], sizes = [4, 64], strides = [1, 1]} : vector<4x128xf32> to vector<4x64xf32>
    %cst_61 = arith.constant dense<0.000000e+00> : vector<4x64xf32>
    %284 = tpu.matmul %258, %9, %cst_61 {dimension_numbers = #tpu.dot_dimension_numbers<[1], [0], [0], [1], [0, 0, 1, 1], [], []>} : vector<4x16xf32>, vector<16x64xf32>, vector<4x64xf32> -> vector<4x64xf32>
    %285 = arith.addf %283, %284 : vector<4x64xf32>
    %286 = vector.extract_strided_slice %282 {offsets = [0, 64], sizes = [4, 64], strides = [1, 1]} : vector<4x128xf32> to vector<4x64xf32>
    %cst_62 = arith.constant dense<0.000000e+00> : vector<4x64xf32>
    %287 = tpu.matmul %264, %11, %cst_62 {dimension_numbers = #tpu.dot_dimension_numbers<[1], [0], [0], [1], [0, 0, 1, 1], [], []>} : vector<4x16xf32>, vector<16x64xf32>, vector<4x64xf32> -> vector<4x64xf32>
    %288 = arith.addf %286, %287 : vector<4x64xf32>
    %289 = vector.extract_strided_slice %285 {offsets = [0, 0], sizes = [4, 16], strides = [1, 1]} : vector<4x64xf32> to vector<4x16xf32>
    %290 = arith.negf %289 : vector<4x16xf32>
    %291 = math.exp %290 : vector<4x16xf32>
    %cst_63 = arith.constant 1.000000e+00 : f32
    %292 = vector.broadcast %cst_63 : f32 to vector<4x16xf32>
    %293 = arith.addf %292, %291 : vector<4x16xf32>
    %294 = arith.divf %292, %293 : vector<4x16xf32>
    %295 = vector.extract_strided_slice %285 {offsets = [0, 16], sizes = [4, 16], strides = [1, 1]} : vector<4x64xf32> to vector<4x16xf32>
    %296 = arith.negf %295 : vector<4x16xf32>
    %297 = math.exp %296 : vector<4x16xf32>
    %cst_64 = arith.constant 1.000000e+00 : f32
    %298 = vector.broadcast %cst_64 : f32 to vector<4x16xf32>
    %299 = arith.addf %298, %297 : vector<4x16xf32>
    %300 = arith.divf %298, %299 : vector<4x16xf32>
    %301 = vector.extract_strided_slice %285 {offsets = [0, 32], sizes = [4, 16], strides = [1, 1]} : vector<4x64xf32> to vector<4x16xf32>
    %302 = math.tanh %301 : vector<4x16xf32>
    %303 = vector.extract_strided_slice %285 {offsets = [0, 48], sizes = [4, 16], strides = [1, 1]} : vector<4x64xf32> to vector<4x16xf32>
    %304 = arith.negf %303 : vector<4x16xf32>
    %305 = math.exp %304 : vector<4x16xf32>
    %cst_65 = arith.constant 1.000000e+00 : f32
    %306 = vector.broadcast %cst_65 : f32 to vector<4x16xf32>
    %307 = arith.addf %306, %305 : vector<4x16xf32>
    %308 = arith.divf %306, %307 : vector<4x16xf32>
    %309 = arith.mulf %300, %261 : vector<4x16xf32>
    %310 = arith.mulf %294, %302 : vector<4x16xf32>
    %311 = arith.addf %309, %310 : vector<4x16xf32>
    %312 = math.tanh %311 : vector<4x16xf32>
    %313 = arith.mulf %308, %312 : vector<4x16xf32>
    %314 = vector.extract_strided_slice %288 {offsets = [0, 0], sizes = [4, 16], strides = [1, 1]} : vector<4x64xf32> to vector<4x16xf32>
    %315 = arith.negf %314 : vector<4x16xf32>
    %316 = math.exp %315 : vector<4x16xf32>
    %cst_66 = arith.constant 1.000000e+00 : f32
    %317 = vector.broadcast %cst_66 : f32 to vector<4x16xf32>
    %318 = arith.addf %317, %316 : vector<4x16xf32>
    %319 = arith.divf %317, %318 : vector<4x16xf32>
    %320 = vector.extract_strided_slice %288 {offsets = [0, 16], sizes = [4, 16], strides = [1, 1]} : vector<4x64xf32> to vector<4x16xf32>
    %321 = arith.negf %320 : vector<4x16xf32>
    %322 = math.exp %321 : vector<4x16xf32>
    %cst_67 = arith.constant 1.000000e+00 : f32
    %323 = vector.broadcast %cst_67 : f32 to vector<4x16xf32>
    %324 = arith.addf %323, %322 : vector<4x16xf32>
    %325 = arith.divf %323, %324 : vector<4x16xf32>
    %326 = vector.extract_strided_slice %288 {offsets = [0, 32], sizes = [4, 16], strides = [1, 1]} : vector<4x64xf32> to vector<4x16xf32>
    %327 = math.tanh %326 : vector<4x16xf32>
    %328 = vector.extract_strided_slice %288 {offsets = [0, 48], sizes = [4, 16], strides = [1, 1]} : vector<4x64xf32> to vector<4x16xf32>
    %329 = arith.negf %328 : vector<4x16xf32>
    %330 = math.exp %329 : vector<4x16xf32>
    %cst_68 = arith.constant 1.000000e+00 : f32
    %331 = vector.broadcast %cst_68 : f32 to vector<4x16xf32>
    %332 = arith.addf %331, %330 : vector<4x16xf32>
    %333 = arith.divf %331, %332 : vector<4x16xf32>
    %334 = arith.mulf %325, %267 : vector<4x16xf32>
    %335 = arith.mulf %319, %327 : vector<4x16xf32>
    %336 = arith.addf %334, %335 : vector<4x16xf32>
    %337 = math.tanh %336 : vector<4x16xf32>
    %338 = arith.mulf %333, %337 : vector<4x16xf32>
    %339 = vector.broadcast %c3_i32 : i32 to vector<4x1xi32>
    %340 = arith.cmpi slt, %339, %12 : vector<4x1xi32>
    %341 = vector.broadcast %276 : i32 to vector<4x1xi32>
    %342 = arith.cmpi slt, %341, %12 : vector<4x1xi32>
    %343 = vector.shape_cast %340 : vector<4x1xi1> to vector<4x1xi1>
    %344 = vector.broadcast %343 : vector<4x1xi1> to vector<4x16xi1>
    %345 = arith.select %344, %313, %258 : vector<4x16xi1>, vector<4x16xf32>
    %346 = vector.shape_cast %340 : vector<4x1xi1> to vector<4x1xi1>
    %347 = vector.broadcast %346 : vector<4x1xi1> to vector<4x16xi1>
    %348 = arith.select %347, %311, %261 : vector<4x16xi1>, vector<4x16xf32>
    %349 = vector.shape_cast %342 : vector<4x1xi1> to vector<4x1xi1>
    %350 = vector.broadcast %349 : vector<4x1xi1> to vector<4x16xi1>
    %351 = arith.select %350, %338, %264 : vector<4x16xi1>, vector<4x16xf32>
    %352 = vector.shape_cast %342 : vector<4x1xi1> to vector<4x1xi1>
    %353 = vector.broadcast %352 : vector<4x1xi1> to vector<4x16xi1>
    %354 = arith.select %353, %336, %267 : vector<4x16xi1>, vector<4x16xf32>
    %355 = arith.maximumf %271, %313 : vector<4x16xf32>
    %356 = vector.shape_cast %340 : vector<4x1xi1> to vector<4x1xi1>
    %357 = vector.broadcast %356 : vector<4x1xi1> to vector<4x16xi1>
    %358 = arith.select %357, %355, %271 : vector<4x16xi1>, vector<4x16xf32>
    %359 = arith.maximumf %275, %338 : vector<4x16xf32>
    %360 = vector.shape_cast %342 : vector<4x1xi1> to vector<4x1xi1>
    %361 = vector.broadcast %360 : vector<4x1xi1> to vector<4x16xi1>
    %362 = arith.select %361, %359, %275 : vector<4x16xi1>, vector<4x16xf32>
    %c4_i32 = arith.constant 4 : i32
    %c7_i32_69 = arith.constant 7 : i32
    %363 = arith.subi %c7_i32_69, %c4_i32 : i32
    %364 = arith.index_cast %c4_i32 : i32 to index
    %c0_70 = arith.constant 0 : index
    %c0_71 = arith.constant 0 : index
    %365 = vector.load %arg10[%364, %c0_70, %c0_71] : memref<8x4x128xf32, #tpu.memory_space<vmem>>, vector<1x4x128xf32>
    %366 = vector.shape_cast %365 : vector<1x4x128xf32> to vector<4x128xf32>
    %367 = arith.index_cast %363 : i32 to index
    %c0_72 = arith.constant 0 : index
    %c0_73 = arith.constant 0 : index
    %368 = vector.load %arg10[%367, %c0_72, %c0_73] : memref<8x4x128xf32, #tpu.memory_space<vmem>>, vector<1x4x128xf32>
    %369 = vector.shape_cast %368 : vector<1x4x128xf32> to vector<4x128xf32>
    %370 = vector.extract_strided_slice %366 {offsets = [0, 0], sizes = [4, 64], strides = [1, 1]} : vector<4x128xf32> to vector<4x64xf32>
    %cst_74 = arith.constant dense<0.000000e+00> : vector<4x64xf32>
    %371 = tpu.matmul %345, %9, %cst_74 {dimension_numbers = #tpu.dot_dimension_numbers<[1], [0], [0], [1], [0, 0, 1, 1], [], []>} : vector<4x16xf32>, vector<16x64xf32>, vector<4x64xf32> -> vector<4x64xf32>
    %372 = arith.addf %370, %371 : vector<4x64xf32>
    %373 = vector.extract_strided_slice %369 {offsets = [0, 64], sizes = [4, 64], strides = [1, 1]} : vector<4x128xf32> to vector<4x64xf32>
    %cst_75 = arith.constant dense<0.000000e+00> : vector<4x64xf32>
    %374 = tpu.matmul %351, %11, %cst_75 {dimension_numbers = #tpu.dot_dimension_numbers<[1], [0], [0], [1], [0, 0, 1, 1], [], []>} : vector<4x16xf32>, vector<16x64xf32>, vector<4x64xf32> -> vector<4x64xf32>
    %375 = arith.addf %373, %374 : vector<4x64xf32>
    %376 = vector.extract_strided_slice %372 {offsets = [0, 0], sizes = [4, 16], strides = [1, 1]} : vector<4x64xf32> to vector<4x16xf32>
    %377 = arith.negf %376 : vector<4x16xf32>
    %378 = math.exp %377 : vector<4x16xf32>
    %cst_76 = arith.constant 1.000000e+00 : f32
    %379 = vector.broadcast %cst_76 : f32 to vector<4x16xf32>
    %380 = arith.addf %379, %378 : vector<4x16xf32>
    %381 = arith.divf %379, %380 : vector<4x16xf32>
    %382 = vector.extract_strided_slice %372 {offsets = [0, 16], sizes = [4, 16], strides = [1, 1]} : vector<4x64xf32> to vector<4x16xf32>
    %383 = arith.negf %382 : vector<4x16xf32>
    %384 = math.exp %383 : vector<4x16xf32>
    %cst_77 = arith.constant 1.000000e+00 : f32
    %385 = vector.broadcast %cst_77 : f32 to vector<4x16xf32>
    %386 = arith.addf %385, %384 : vector<4x16xf32>
    %387 = arith.divf %385, %386 : vector<4x16xf32>
    %388 = vector.extract_strided_slice %372 {offsets = [0, 32], sizes = [4, 16], strides = [1, 1]} : vector<4x64xf32> to vector<4x16xf32>
    %389 = math.tanh %388 : vector<4x16xf32>
    %390 = vector.extract_strided_slice %372 {offsets = [0, 48], sizes = [4, 16], strides = [1, 1]} : vector<4x64xf32> to vector<4x16xf32>
    %391 = arith.negf %390 : vector<4x16xf32>
    %392 = math.exp %391 : vector<4x16xf32>
    %cst_78 = arith.constant 1.000000e+00 : f32
    %393 = vector.broadcast %cst_78 : f32 to vector<4x16xf32>
    %394 = arith.addf %393, %392 : vector<4x16xf32>
    %395 = arith.divf %393, %394 : vector<4x16xf32>
    %396 = arith.mulf %387, %348 : vector<4x16xf32>
    %397 = arith.mulf %381, %389 : vector<4x16xf32>
    %398 = arith.addf %396, %397 : vector<4x16xf32>
    %399 = math.tanh %398 : vector<4x16xf32>
    %400 = arith.mulf %395, %399 : vector<4x16xf32>
    %401 = vector.extract_strided_slice %375 {offsets = [0, 0], sizes = [4, 16], strides = [1, 1]} : vector<4x64xf32> to vector<4x16xf32>
    %402 = arith.negf %401 : vector<4x16xf32>
    %403 = math.exp %402 : vector<4x16xf32>
    %cst_79 = arith.constant 1.000000e+00 : f32
    %404 = vector.broadcast %cst_79 : f32 to vector<4x16xf32>
    %405 = arith.addf %404, %403 : vector<4x16xf32>
    %406 = arith.divf %404, %405 : vector<4x16xf32>
    %407 = vector.extract_strided_slice %375 {offsets = [0, 16], sizes = [4, 16], strides = [1, 1]} : vector<4x64xf32> to vector<4x16xf32>
    %408 = arith.negf %407 : vector<4x16xf32>
    %409 = math.exp %408 : vector<4x16xf32>
    %cst_80 = arith.constant 1.000000e+00 : f32
    %410 = vector.broadcast %cst_80 : f32 to vector<4x16xf32>
    %411 = arith.addf %410, %409 : vector<4x16xf32>
    %412 = arith.divf %410, %411 : vector<4x16xf32>
    %413 = vector.extract_strided_slice %375 {offsets = [0, 32], sizes = [4, 16], strides = [1, 1]} : vector<4x64xf32> to vector<4x16xf32>
    %414 = math.tanh %413 : vector<4x16xf32>
    %415 = vector.extract_strided_slice %375 {offsets = [0, 48], sizes = [4, 16], strides = [1, 1]} : vector<4x64xf32> to vector<4x16xf32>
    %416 = arith.negf %415 : vector<4x16xf32>
    %417 = math.exp %416 : vector<4x16xf32>
    %cst_81 = arith.constant 1.000000e+00 : f32
    %418 = vector.broadcast %cst_81 : f32 to vector<4x16xf32>
    %419 = arith.addf %418, %417 : vector<4x16xf32>
    %420 = arith.divf %418, %419 : vector<4x16xf32>
    %421 = arith.mulf %412, %354 : vector<4x16xf32>
    %422 = arith.mulf %406, %414 : vector<4x16xf32>
    %423 = arith.addf %421, %422 : vector<4x16xf32>
    %424 = math.tanh %423 : vector<4x16xf32>
    %425 = arith.mulf %420, %424 : vector<4x16xf32>
    %426 = vector.broadcast %c4_i32 : i32 to vector<4x1xi32>
    %427 = arith.cmpi slt, %426, %12 : vector<4x1xi32>
    %428 = vector.broadcast %363 : i32 to vector<4x1xi32>
    %429 = arith.cmpi slt, %428, %12 : vector<4x1xi32>
    %430 = vector.shape_cast %427 : vector<4x1xi1> to vector<4x1xi1>
    %431 = vector.broadcast %430 : vector<4x1xi1> to vector<4x16xi1>
    %432 = arith.select %431, %400, %345 : vector<4x16xi1>, vector<4x16xf32>
    %433 = vector.shape_cast %427 : vector<4x1xi1> to vector<4x1xi1>
    %434 = vector.broadcast %433 : vector<4x1xi1> to vector<4x16xi1>
    %435 = arith.select %434, %398, %348 : vector<4x16xi1>, vector<4x16xf32>
    %436 = vector.shape_cast %429 : vector<4x1xi1> to vector<4x1xi1>
    %437 = vector.broadcast %436 : vector<4x1xi1> to vector<4x16xi1>
    %438 = arith.select %437, %425, %351 : vector<4x16xi1>, vector<4x16xf32>
    %439 = vector.shape_cast %429 : vector<4x1xi1> to vector<4x1xi1>
    %440 = vector.broadcast %439 : vector<4x1xi1> to vector<4x16xi1>
    %441 = arith.select %440, %423, %354 : vector<4x16xi1>, vector<4x16xf32>
    %442 = arith.maximumf %358, %400 : vector<4x16xf32>
    %443 = vector.shape_cast %427 : vector<4x1xi1> to vector<4x1xi1>
    %444 = vector.broadcast %443 : vector<4x1xi1> to vector<4x16xi1>
    %445 = arith.select %444, %442, %358 : vector<4x16xi1>, vector<4x16xf32>
    %446 = arith.maximumf %362, %425 : vector<4x16xf32>
    %447 = vector.shape_cast %429 : vector<4x1xi1> to vector<4x1xi1>
    %448 = vector.broadcast %447 : vector<4x1xi1> to vector<4x16xi1>
    %449 = arith.select %448, %446, %362 : vector<4x16xi1>, vector<4x16xf32>
    %c5_i32 = arith.constant 5 : i32
    %c7_i32_82 = arith.constant 7 : i32
    %450 = arith.subi %c7_i32_82, %c5_i32 : i32
    %451 = arith.index_cast %c5_i32 : i32 to index
    %c0_83 = arith.constant 0 : index
    %c0_84 = arith.constant 0 : index
    %452 = vector.load %arg10[%451, %c0_83, %c0_84] : memref<8x4x128xf32, #tpu.memory_space<vmem>>, vector<1x4x128xf32>
    %453 = vector.shape_cast %452 : vector<1x4x128xf32> to vector<4x128xf32>
    %454 = arith.index_cast %450 : i32 to index
    %c0_85 = arith.constant 0 : index
    %c0_86 = arith.constant 0 : index
    %455 = vector.load %arg10[%454, %c0_85, %c0_86] : memref<8x4x128xf32, #tpu.memory_space<vmem>>, vector<1x4x128xf32>
    %456 = vector.shape_cast %455 : vector<1x4x128xf32> to vector<4x128xf32>
    %457 = vector.extract_strided_slice %453 {offsets = [0, 0], sizes = [4, 64], strides = [1, 1]} : vector<4x128xf32> to vector<4x64xf32>
    %cst_87 = arith.constant dense<0.000000e+00> : vector<4x64xf32>
    %458 = tpu.matmul %432, %9, %cst_87 {dimension_numbers = #tpu.dot_dimension_numbers<[1], [0], [0], [1], [0, 0, 1, 1], [], []>} : vector<4x16xf32>, vector<16x64xf32>, vector<4x64xf32> -> vector<4x64xf32>
    %459 = arith.addf %457, %458 : vector<4x64xf32>
    %460 = vector.extract_strided_slice %456 {offsets = [0, 64], sizes = [4, 64], strides = [1, 1]} : vector<4x128xf32> to vector<4x64xf32>
    %cst_88 = arith.constant dense<0.000000e+00> : vector<4x64xf32>
    %461 = tpu.matmul %438, %11, %cst_88 {dimension_numbers = #tpu.dot_dimension_numbers<[1], [0], [0], [1], [0, 0, 1, 1], [], []>} : vector<4x16xf32>, vector<16x64xf32>, vector<4x64xf32> -> vector<4x64xf32>
    %462 = arith.addf %460, %461 : vector<4x64xf32>
    %463 = vector.extract_strided_slice %459 {offsets = [0, 0], sizes = [4, 16], strides = [1, 1]} : vector<4x64xf32> to vector<4x16xf32>
    %464 = arith.negf %463 : vector<4x16xf32>
    %465 = math.exp %464 : vector<4x16xf32>
    %cst_89 = arith.constant 1.000000e+00 : f32
    %466 = vector.broadcast %cst_89 : f32 to vector<4x16xf32>
    %467 = arith.addf %466, %465 : vector<4x16xf32>
    %468 = arith.divf %466, %467 : vector<4x16xf32>
    %469 = vector.extract_strided_slice %459 {offsets = [0, 16], sizes = [4, 16], strides = [1, 1]} : vector<4x64xf32> to vector<4x16xf32>
    %470 = arith.negf %469 : vector<4x16xf32>
    %471 = math.exp %470 : vector<4x16xf32>
    %cst_90 = arith.constant 1.000000e+00 : f32
    %472 = vector.broadcast %cst_90 : f32 to vector<4x16xf32>
    %473 = arith.addf %472, %471 : vector<4x16xf32>
    %474 = arith.divf %472, %473 : vector<4x16xf32>
    %475 = vector.extract_strided_slice %459 {offsets = [0, 32], sizes = [4, 16], strides = [1, 1]} : vector<4x64xf32> to vector<4x16xf32>
    %476 = math.tanh %475 : vector<4x16xf32>
    %477 = vector.extract_strided_slice %459 {offsets = [0, 48], sizes = [4, 16], strides = [1, 1]} : vector<4x64xf32> to vector<4x16xf32>
    %478 = arith.negf %477 : vector<4x16xf32>
    %479 = math.exp %478 : vector<4x16xf32>
    %cst_91 = arith.constant 1.000000e+00 : f32
    %480 = vector.broadcast %cst_91 : f32 to vector<4x16xf32>
    %481 = arith.addf %480, %479 : vector<4x16xf32>
    %482 = arith.divf %480, %481 : vector<4x16xf32>
    %483 = arith.mulf %474, %435 : vector<4x16xf32>
    %484 = arith.mulf %468, %476 : vector<4x16xf32>
    %485 = arith.addf %483, %484 : vector<4x16xf32>
    %486 = math.tanh %485 : vector<4x16xf32>
    %487 = arith.mulf %482, %486 : vector<4x16xf32>
    %488 = vector.extract_strided_slice %462 {offsets = [0, 0], sizes = [4, 16], strides = [1, 1]} : vector<4x64xf32> to vector<4x16xf32>
    %489 = arith.negf %488 : vector<4x16xf32>
    %490 = math.exp %489 : vector<4x16xf32>
    %cst_92 = arith.constant 1.000000e+00 : f32
    %491 = vector.broadcast %cst_92 : f32 to vector<4x16xf32>
    %492 = arith.addf %491, %490 : vector<4x16xf32>
    %493 = arith.divf %491, %492 : vector<4x16xf32>
    %494 = vector.extract_strided_slice %462 {offsets = [0, 16], sizes = [4, 16], strides = [1, 1]} : vector<4x64xf32> to vector<4x16xf32>
    %495 = arith.negf %494 : vector<4x16xf32>
    %496 = math.exp %495 : vector<4x16xf32>
    %cst_93 = arith.constant 1.000000e+00 : f32
    %497 = vector.broadcast %cst_93 : f32 to vector<4x16xf32>
    %498 = arith.addf %497, %496 : vector<4x16xf32>
    %499 = arith.divf %497, %498 : vector<4x16xf32>
    %500 = vector.extract_strided_slice %462 {offsets = [0, 32], sizes = [4, 16], strides = [1, 1]} : vector<4x64xf32> to vector<4x16xf32>
    %501 = math.tanh %500 : vector<4x16xf32>
    %502 = vector.extract_strided_slice %462 {offsets = [0, 48], sizes = [4, 16], strides = [1, 1]} : vector<4x64xf32> to vector<4x16xf32>
    %503 = arith.negf %502 : vector<4x16xf32>
    %504 = math.exp %503 : vector<4x16xf32>
    %cst_94 = arith.constant 1.000000e+00 : f32
    %505 = vector.broadcast %cst_94 : f32 to vector<4x16xf32>
    %506 = arith.addf %505, %504 : vector<4x16xf32>
    %507 = arith.divf %505, %506 : vector<4x16xf32>
    %508 = arith.mulf %499, %441 : vector<4x16xf32>
    %509 = arith.mulf %493, %501 : vector<4x16xf32>
    %510 = arith.addf %508, %509 : vector<4x16xf32>
    %511 = math.tanh %510 : vector<4x16xf32>
    %512 = arith.mulf %507, %511 : vector<4x16xf32>
    %513 = vector.broadcast %c5_i32 : i32 to vector<4x1xi32>
    %514 = arith.cmpi slt, %513, %12 : vector<4x1xi32>
    %515 = vector.broadcast %450 : i32 to vector<4x1xi32>
    %516 = arith.cmpi slt, %515, %12 : vector<4x1xi32>
    %517 = vector.shape_cast %514 : vector<4x1xi1> to vector<4x1xi1>
    %518 = vector.broadcast %517 : vector<4x1xi1> to vector<4x16xi1>
    %519 = arith.select %518, %487, %432 : vector<4x16xi1>, vector<4x16xf32>
    %520 = vector.shape_cast %514 : vector<4x1xi1> to vector<4x1xi1>
    %521 = vector.broadcast %520 : vector<4x1xi1> to vector<4x16xi1>
    %522 = arith.select %521, %485, %435 : vector<4x16xi1>, vector<4x16xf32>
    %523 = vector.shape_cast %516 : vector<4x1xi1> to vector<4x1xi1>
    %524 = vector.broadcast %523 : vector<4x1xi1> to vector<4x16xi1>
    %525 = arith.select %524, %512, %438 : vector<4x16xi1>, vector<4x16xf32>
    %526 = vector.shape_cast %516 : vector<4x1xi1> to vector<4x1xi1>
    %527 = vector.broadcast %526 : vector<4x1xi1> to vector<4x16xi1>
    %528 = arith.select %527, %510, %441 : vector<4x16xi1>, vector<4x16xf32>
    %529 = arith.maximumf %445, %487 : vector<4x16xf32>
    %530 = vector.shape_cast %514 : vector<4x1xi1> to vector<4x1xi1>
    %531 = vector.broadcast %530 : vector<4x1xi1> to vector<4x16xi1>
    %532 = arith.select %531, %529, %445 : vector<4x16xi1>, vector<4x16xf32>
    %533 = arith.maximumf %449, %512 : vector<4x16xf32>
    %534 = vector.shape_cast %516 : vector<4x1xi1> to vector<4x1xi1>
    %535 = vector.broadcast %534 : vector<4x1xi1> to vector<4x16xi1>
    %536 = arith.select %535, %533, %449 : vector<4x16xi1>, vector<4x16xf32>
    %c6_i32 = arith.constant 6 : i32
    %c7_i32_95 = arith.constant 7 : i32
    %537 = arith.subi %c7_i32_95, %c6_i32 : i32
    %538 = arith.index_cast %c6_i32 : i32 to index
    %c0_96 = arith.constant 0 : index
    %c0_97 = arith.constant 0 : index
    %539 = vector.load %arg10[%538, %c0_96, %c0_97] : memref<8x4x128xf32, #tpu.memory_space<vmem>>, vector<1x4x128xf32>
    %540 = vector.shape_cast %539 : vector<1x4x128xf32> to vector<4x128xf32>
    %541 = arith.index_cast %537 : i32 to index
    %c0_98 = arith.constant 0 : index
    %c0_99 = arith.constant 0 : index
    %542 = vector.load %arg10[%541, %c0_98, %c0_99] : memref<8x4x128xf32, #tpu.memory_space<vmem>>, vector<1x4x128xf32>
    %543 = vector.shape_cast %542 : vector<1x4x128xf32> to vector<4x128xf32>
    %544 = vector.extract_strided_slice %540 {offsets = [0, 0], sizes = [4, 64], strides = [1, 1]} : vector<4x128xf32> to vector<4x64xf32>
    %cst_100 = arith.constant dense<0.000000e+00> : vector<4x64xf32>
    %545 = tpu.matmul %519, %9, %cst_100 {dimension_numbers = #tpu.dot_dimension_numbers<[1], [0], [0], [1], [0, 0, 1, 1], [], []>} : vector<4x16xf32>, vector<16x64xf32>, vector<4x64xf32> -> vector<4x64xf32>
    %546 = arith.addf %544, %545 : vector<4x64xf32>
    %547 = vector.extract_strided_slice %543 {offsets = [0, 64], sizes = [4, 64], strides = [1, 1]} : vector<4x128xf32> to vector<4x64xf32>
    %cst_101 = arith.constant dense<0.000000e+00> : vector<4x64xf32>
    %548 = tpu.matmul %525, %11, %cst_101 {dimension_numbers = #tpu.dot_dimension_numbers<[1], [0], [0], [1], [0, 0, 1, 1], [], []>} : vector<4x16xf32>, vector<16x64xf32>, vector<4x64xf32> -> vector<4x64xf32>
    %549 = arith.addf %547, %548 : vector<4x64xf32>
    %550 = vector.extract_strided_slice %546 {offsets = [0, 0], sizes = [4, 16], strides = [1, 1]} : vector<4x64xf32> to vector<4x16xf32>
    %551 = arith.negf %550 : vector<4x16xf32>
    %552 = math.exp %551 : vector<4x16xf32>
    %cst_102 = arith.constant 1.000000e+00 : f32
    %553 = vector.broadcast %cst_102 : f32 to vector<4x16xf32>
    %554 = arith.addf %553, %552 : vector<4x16xf32>
    %555 = arith.divf %553, %554 : vector<4x16xf32>
    %556 = vector.extract_strided_slice %546 {offsets = [0, 16], sizes = [4, 16], strides = [1, 1]} : vector<4x64xf32> to vector<4x16xf32>
    %557 = arith.negf %556 : vector<4x16xf32>
    %558 = math.exp %557 : vector<4x16xf32>
    %cst_103 = arith.constant 1.000000e+00 : f32
    %559 = vector.broadcast %cst_103 : f32 to vector<4x16xf32>
    %560 = arith.addf %559, %558 : vector<4x16xf32>
    %561 = arith.divf %559, %560 : vector<4x16xf32>
    %562 = vector.extract_strided_slice %546 {offsets = [0, 32], sizes = [4, 16], strides = [1, 1]} : vector<4x64xf32> to vector<4x16xf32>
    %563 = math.tanh %562 : vector<4x16xf32>
    %564 = vector.extract_strided_slice %546 {offsets = [0, 48], sizes = [4, 16], strides = [1, 1]} : vector<4x64xf32> to vector<4x16xf32>
    %565 = arith.negf %564 : vector<4x16xf32>
    %566 = math.exp %565 : vector<4x16xf32>
    %cst_104 = arith.constant 1.000000e+00 : f32
    %567 = vector.broadcast %cst_104 : f32 to vector<4x16xf32>
    %568 = arith.addf %567, %566 : vector<4x16xf32>
    %569 = arith.divf %567, %568 : vector<4x16xf32>
    %570 = arith.mulf %561, %522 : vector<4x16xf32>
    %571 = arith.mulf %555, %563 : vector<4x16xf32>
    %572 = arith.addf %570, %571 : vector<4x16xf32>
    %573 = math.tanh %572 : vector<4x16xf32>
    %574 = arith.mulf %569, %573 : vector<4x16xf32>
    %575 = vector.extract_strided_slice %549 {offsets = [0, 0], sizes = [4, 16], strides = [1, 1]} : vector<4x64xf32> to vector<4x16xf32>
    %576 = arith.negf %575 : vector<4x16xf32>
    %577 = math.exp %576 : vector<4x16xf32>
    %cst_105 = arith.constant 1.000000e+00 : f32
    %578 = vector.broadcast %cst_105 : f32 to vector<4x16xf32>
    %579 = arith.addf %578, %577 : vector<4x16xf32>
    %580 = arith.divf %578, %579 : vector<4x16xf32>
    %581 = vector.extract_strided_slice %549 {offsets = [0, 16], sizes = [4, 16], strides = [1, 1]} : vector<4x64xf32> to vector<4x16xf32>
    %582 = arith.negf %581 : vector<4x16xf32>
    %583 = math.exp %582 : vector<4x16xf32>
    %cst_106 = arith.constant 1.000000e+00 : f32
    %584 = vector.broadcast %cst_106 : f32 to vector<4x16xf32>
    %585 = arith.addf %584, %583 : vector<4x16xf32>
    %586 = arith.divf %584, %585 : vector<4x16xf32>
    %587 = vector.extract_strided_slice %549 {offsets = [0, 32], sizes = [4, 16], strides = [1, 1]} : vector<4x64xf32> to vector<4x16xf32>
    %588 = math.tanh %587 : vector<4x16xf32>
    %589 = vector.extract_strided_slice %549 {offsets = [0, 48], sizes = [4, 16], strides = [1, 1]} : vector<4x64xf32> to vector<4x16xf32>
    %590 = arith.negf %589 : vector<4x16xf32>
    %591 = math.exp %590 : vector<4x16xf32>
    %cst_107 = arith.constant 1.000000e+00 : f32
    %592 = vector.broadcast %cst_107 : f32 to vector<4x16xf32>
    %593 = arith.addf %592, %591 : vector<4x16xf32>
    %594 = arith.divf %592, %593 : vector<4x16xf32>
    %595 = arith.mulf %586, %528 : vector<4x16xf32>
    %596 = arith.mulf %580, %588 : vector<4x16xf32>
    %597 = arith.addf %595, %596 : vector<4x16xf32>
    %598 = math.tanh %597 : vector<4x16xf32>
    %599 = arith.mulf %594, %598 : vector<4x16xf32>
    %600 = vector.broadcast %c6_i32 : i32 to vector<4x1xi32>
    %601 = arith.cmpi slt, %600, %12 : vector<4x1xi32>
    %602 = vector.broadcast %537 : i32 to vector<4x1xi32>
    %603 = arith.cmpi slt, %602, %12 : vector<4x1xi32>
    %604 = vector.shape_cast %601 : vector<4x1xi1> to vector<4x1xi1>
    %605 = vector.broadcast %604 : vector<4x1xi1> to vector<4x16xi1>
    %606 = arith.select %605, %574, %519 : vector<4x16xi1>, vector<4x16xf32>
    %607 = vector.shape_cast %601 : vector<4x1xi1> to vector<4x1xi1>
    %608 = vector.broadcast %607 : vector<4x1xi1> to vector<4x16xi1>
    %609 = arith.select %608, %572, %522 : vector<4x16xi1>, vector<4x16xf32>
    %610 = vector.shape_cast %603 : vector<4x1xi1> to vector<4x1xi1>
    %611 = vector.broadcast %610 : vector<4x1xi1> to vector<4x16xi1>
    %612 = arith.select %611, %599, %525 : vector<4x16xi1>, vector<4x16xf32>
    %613 = vector.shape_cast %603 : vector<4x1xi1> to vector<4x1xi1>
    %614 = vector.broadcast %613 : vector<4x1xi1> to vector<4x16xi1>
    %615 = arith.select %614, %597, %528 : vector<4x16xi1>, vector<4x16xf32>
    %616 = arith.maximumf %532, %574 : vector<4x16xf32>
    %617 = vector.shape_cast %601 : vector<4x1xi1> to vector<4x1xi1>
    %618 = vector.broadcast %617 : vector<4x1xi1> to vector<4x16xi1>
    %619 = arith.select %618, %616, %532 : vector<4x16xi1>, vector<4x16xf32>
    %620 = arith.maximumf %536, %599 : vector<4x16xf32>
    %621 = vector.shape_cast %603 : vector<4x1xi1> to vector<4x1xi1>
    %622 = vector.broadcast %621 : vector<4x1xi1> to vector<4x16xi1>
    %623 = arith.select %622, %620, %536 : vector<4x16xi1>, vector<4x16xf32>
    %c7_i32_108 = arith.constant 7 : i32
    %c7_i32_109 = arith.constant 7 : i32
    %624 = arith.subi %c7_i32_109, %c7_i32_108 : i32
    %625 = arith.index_cast %c7_i32_108 : i32 to index
    %c0_110 = arith.constant 0 : index
    %c0_111 = arith.constant 0 : index
    %626 = vector.load %arg10[%625, %c0_110, %c0_111] : memref<8x4x128xf32, #tpu.memory_space<vmem>>, vector<1x4x128xf32>
    %627 = vector.shape_cast %626 : vector<1x4x128xf32> to vector<4x128xf32>
    %628 = arith.index_cast %624 : i32 to index
    %c0_112 = arith.constant 0 : index
    %c0_113 = arith.constant 0 : index
    %629 = vector.load %arg10[%628, %c0_112, %c0_113] : memref<8x4x128xf32, #tpu.memory_space<vmem>>, vector<1x4x128xf32>
    %630 = vector.shape_cast %629 : vector<1x4x128xf32> to vector<4x128xf32>
    %631 = vector.extract_strided_slice %627 {offsets = [0, 0], sizes = [4, 64], strides = [1, 1]} : vector<4x128xf32> to vector<4x64xf32>
    %cst_114 = arith.constant dense<0.000000e+00> : vector<4x64xf32>
    %632 = tpu.matmul %606, %9, %cst_114 {dimension_numbers = #tpu.dot_dimension_numbers<[1], [0], [0], [1], [0, 0, 1, 1], [], []>} : vector<4x16xf32>, vector<16x64xf32>, vector<4x64xf32> -> vector<4x64xf32>
    %633 = arith.addf %631, %632 : vector<4x64xf32>
    %634 = vector.extract_strided_slice %630 {offsets = [0, 64], sizes = [4, 64], strides = [1, 1]} : vector<4x128xf32> to vector<4x64xf32>
    %cst_115 = arith.constant dense<0.000000e+00> : vector<4x64xf32>
    %635 = tpu.matmul %612, %11, %cst_115 {dimension_numbers = #tpu.dot_dimension_numbers<[1], [0], [0], [1], [0, 0, 1, 1], [], []>} : vector<4x16xf32>, vector<16x64xf32>, vector<4x64xf32> -> vector<4x64xf32>
    %636 = arith.addf %634, %635 : vector<4x64xf32>
    %637 = vector.extract_strided_slice %633 {offsets = [0, 0], sizes = [4, 16], strides = [1, 1]} : vector<4x64xf32> to vector<4x16xf32>
    %638 = arith.negf %637 : vector<4x16xf32>
    %639 = math.exp %638 : vector<4x16xf32>
    %cst_116 = arith.constant 1.000000e+00 : f32
    %640 = vector.broadcast %cst_116 : f32 to vector<4x16xf32>
    %641 = arith.addf %640, %639 : vector<4x16xf32>
    %642 = arith.divf %640, %641 : vector<4x16xf32>
    %643 = vector.extract_strided_slice %633 {offsets = [0, 16], sizes = [4, 16], strides = [1, 1]} : vector<4x64xf32> to vector<4x16xf32>
    %644 = arith.negf %643 : vector<4x16xf32>
    %645 = math.exp %644 : vector<4x16xf32>
    %cst_117 = arith.constant 1.000000e+00 : f32
    %646 = vector.broadcast %cst_117 : f32 to vector<4x16xf32>
    %647 = arith.addf %646, %645 : vector<4x16xf32>
    %648 = arith.divf %646, %647 : vector<4x16xf32>
    %649 = vector.extract_strided_slice %633 {offsets = [0, 32], sizes = [4, 16], strides = [1, 1]} : vector<4x64xf32> to vector<4x16xf32>
    %650 = math.tanh %649 : vector<4x16xf32>
    %651 = vector.extract_strided_slice %633 {offsets = [0, 48], sizes = [4, 16], strides = [1, 1]} : vector<4x64xf32> to vector<4x16xf32>
    %652 = arith.negf %651 : vector<4x16xf32>
    %653 = math.exp %652 : vector<4x16xf32>
    %cst_118 = arith.constant 1.000000e+00 : f32
    %654 = vector.broadcast %cst_118 : f32 to vector<4x16xf32>
    %655 = arith.addf %654, %653 : vector<4x16xf32>
    %656 = arith.divf %654, %655 : vector<4x16xf32>
    %657 = arith.mulf %648, %609 : vector<4x16xf32>
    %658 = arith.mulf %642, %650 : vector<4x16xf32>
    %659 = arith.addf %657, %658 : vector<4x16xf32>
    %660 = math.tanh %659 : vector<4x16xf32>
    %661 = arith.mulf %656, %660 : vector<4x16xf32>
    %662 = vector.extract_strided_slice %636 {offsets = [0, 0], sizes = [4, 16], strides = [1, 1]} : vector<4x64xf32> to vector<4x16xf32>
    %663 = arith.negf %662 : vector<4x16xf32>
    %664 = math.exp %663 : vector<4x16xf32>
    %cst_119 = arith.constant 1.000000e+00 : f32
    %665 = vector.broadcast %cst_119 : f32 to vector<4x16xf32>
    %666 = arith.addf %665, %664 : vector<4x16xf32>
    %667 = arith.divf %665, %666 : vector<4x16xf32>
    %668 = vector.extract_strided_slice %636 {offsets = [0, 16], sizes = [4, 16], strides = [1, 1]} : vector<4x64xf32> to vector<4x16xf32>
    %669 = arith.negf %668 : vector<4x16xf32>
    %670 = math.exp %669 : vector<4x16xf32>
    %cst_120 = arith.constant 1.000000e+00 : f32
    %671 = vector.broadcast %cst_120 : f32 to vector<4x16xf32>
    %672 = arith.addf %671, %670 : vector<4x16xf32>
    %673 = arith.divf %671, %672 : vector<4x16xf32>
    %674 = vector.extract_strided_slice %636 {offsets = [0, 32], sizes = [4, 16], strides = [1, 1]} : vector<4x64xf32> to vector<4x16xf32>
    %675 = math.tanh %674 : vector<4x16xf32>
    %676 = vector.extract_strided_slice %636 {offsets = [0, 48], sizes = [4, 16], strides = [1, 1]} : vector<4x64xf32> to vector<4x16xf32>
    %677 = arith.negf %676 : vector<4x16xf32>
    %678 = math.exp %677 : vector<4x16xf32>
    %cst_121 = arith.constant 1.000000e+00 : f32
    %679 = vector.broadcast %cst_121 : f32 to vector<4x16xf32>
    %680 = arith.addf %679, %678 : vector<4x16xf32>
    %681 = arith.divf %679, %680 : vector<4x16xf32>
    %682 = arith.mulf %673, %615 : vector<4x16xf32>
    %683 = arith.mulf %667, %675 : vector<4x16xf32>
    %684 = arith.addf %682, %683 : vector<4x16xf32>
    %685 = math.tanh %684 : vector<4x16xf32>
    %686 = arith.mulf %681, %685 : vector<4x16xf32>
    %687 = vector.broadcast %c7_i32_108 : i32 to vector<4x1xi32>
    %688 = arith.cmpi slt, %687, %12 : vector<4x1xi32>
    %689 = vector.broadcast %624 : i32 to vector<4x1xi32>
    %690 = arith.cmpi slt, %689, %12 : vector<4x1xi32>
    %691 = vector.shape_cast %688 : vector<4x1xi1> to vector<4x1xi1>
    %692 = vector.broadcast %691 : vector<4x1xi1> to vector<4x16xi1>
    %693 = arith.select %692, %661, %606 : vector<4x16xi1>, vector<4x16xf32>
    %694 = vector.shape_cast %688 : vector<4x1xi1> to vector<4x1xi1>
    %695 = vector.broadcast %694 : vector<4x1xi1> to vector<4x16xi1>
    %696 = arith.select %695, %659, %609 : vector<4x16xi1>, vector<4x16xf32>
    %697 = vector.shape_cast %690 : vector<4x1xi1> to vector<4x1xi1>
    %698 = vector.broadcast %697 : vector<4x1xi1> to vector<4x16xi1>
    %699 = arith.select %698, %686, %612 : vector<4x16xi1>, vector<4x16xf32>
    %700 = vector.shape_cast %690 : vector<4x1xi1> to vector<4x1xi1>
    %701 = vector.broadcast %700 : vector<4x1xi1> to vector<4x16xi1>
    %702 = arith.select %701, %684, %615 : vector<4x16xi1>, vector<4x16xf32>
    %703 = arith.maximumf %619, %661 : vector<4x16xf32>
    %704 = vector.shape_cast %688 : vector<4x1xi1> to vector<4x1xi1>
    %705 = vector.broadcast %704 : vector<4x1xi1> to vector<4x16xi1>
    %706 = arith.select %705, %703, %619 : vector<4x16xi1>, vector<4x16xf32>
    %707 = arith.maximumf %623, %686 : vector<4x16xf32>
    %708 = vector.shape_cast %690 : vector<4x1xi1> to vector<4x1xi1>
    %709 = vector.broadcast %708 : vector<4x1xi1> to vector<4x16xi1>
    %710 = arith.select %709, %707, %623 : vector<4x16xi1>, vector<4x16xf32>
    %c8_i32 = arith.constant 8 : i32
    %711 = tpu.concatenate %706, %710 in 1 : vector<4x16xf32>, vector<4x16xf32> -> vector<4x32xf32>
    %712 = vector.extract_strided_slice %711 {offsets = [0, 0], sizes = [2, 32], strides = [1, 1]} : vector<4x32xf32> to vector<2x32xf32>
    %713 = vector.extract_strided_slice %711 {offsets = [2, 0], sizes = [2, 32], strides = [1, 1]} : vector<4x32xf32> to vector<2x32xf32>
    %714 = arith.subf %712, %713 : vector<2x32xf32>
    %715 = math.absf %714 : vector<2x32xf32>
    %716 = arith.mulf %712, %713 : vector<2x32xf32>
    %717 = tpu.concatenate %712, %713, %715, %716 in 1 : vector<2x32xf32>, vector<2x32xf32>, vector<2x32xf32>, vector<2x32xf32> -> vector<2x128xf32>
    %c0_122 = arith.constant 0 : index
    %c0_123 = arith.constant 0 : index
    %718 = vector.load %arg5[%c0_122, %c0_123] : memref<128x32xf32, #tpu.memory_space<vmem>>, vector<128x32xf32>
    %cst_124 = arith.constant dense<0.000000e+00> : vector<2x32xf32>
    %719 = tpu.matmul %717, %718, %cst_124 {dimension_numbers = #tpu.dot_dimension_numbers<[1], [0], [0], [1], [0, 0, 1, 1], [], []>} : vector<2x128xf32>, vector<128x32xf32>, vector<2x32xf32> -> vector<2x32xf32>
    %c0_125 = arith.constant 0 : index
    %c0_126 = arith.constant 0 : index
    %720 = vector.load %arg6[%c0_125, %c0_126] : memref<1x32xf32, #tpu.memory_space<vmem>>, vector<1x32xf32>
    %721 = vector.broadcast %720 : vector<1x32xf32> to vector<2x32xf32>
    %722 = arith.addf %719, %721 : vector<2x32xf32>
    %cst_127 = arith.constant 0.000000e+00 : f32
    %723 = vector.broadcast %cst_127 : f32 to vector<2x32xf32>
    %724 = arith.maximumf %722, %723 : vector<2x32xf32>
    %c0_128 = arith.constant 0 : index
    %c0_129 = arith.constant 0 : index
    %725 = vector.load %arg7[%c0_128, %c0_129] : memref<32x3xf32, #tpu.memory_space<vmem>>, vector<32x3xf32>
    %cst_130 = arith.constant dense<0.000000e+00> : vector<2x3xf32>
    %726 = tpu.matmul %724, %725, %cst_130 {dimension_numbers = #tpu.dot_dimension_numbers<[1], [0], [0], [1], [0, 0, 1, 1], [], []>} : vector<2x32xf32>, vector<32x3xf32>, vector<2x3xf32> -> vector<2x3xf32>
    %c0_131 = arith.constant 0 : index
    %c0_132 = arith.constant 0 : index
    %727 = vector.load %arg8[%c0_131, %c0_132] : memref<1x3xf32, #tpu.memory_space<vmem>>, vector<1x3xf32>
    %728 = vector.broadcast %727 : vector<1x3xf32> to vector<2x3xf32>
    %729 = arith.addf %726, %728 : vector<2x3xf32>
    %c0_133 = arith.constant 0 : index
    %c0_134 = arith.constant 0 : index
    %730 = vector.load %arg9[%c0_133, %c0_134] : memref<2x3xf32, #tpu.memory_space<vmem>>, vector<2x3xf32>
    tpu.vector_store %arg9[%c0_133, %c0_134], %729 {strides = array<i32>} : memref<2x3xf32, #tpu.memory_space<vmem>>, vector<2x3xf32>,
    return
  }
}

</mosaic_0001>

<llo_original>
// kernel: esim_forward.4
$region0: #{esim_forward.4}
  #allocation0 [shape = 'u32[]', space=smem, size = 0x4, offset = 0x4, fixed_abs, tag = 'smem constant byte address 0x4 - core index']
  #allocation1 [shape = 'u32[144,128]{1,0:T(1,128)}', space=vmem, size = 0x12000, scoped, tag = 'internal scratch']
  #allocation2 [shape = 's32[1]{0}', space=sflag, size = 0x4, scoped, tag = 'scoped memory for esim_forward.4']
  #allocation3 [shape = 'u8[512]{0}', space=smem, size = 0x200, scoped, tag = 'prefetched SMEM operand 0']
  #allocation4 [shape = 'u8[512]{0}', space=smem, size = 0x200, scoped, tag = 'prefetched SMEM operand 1']
  %s0 = inlined_call_operand.vmem [shape: s32[2], index: 0, kind: input, shape index: {}]
  %s1 = inlined_call_operand.vmem [shape: s32[2], index: 1, kind: input, shape index: {}]
  %s2 = inlined_call_operand.vmem [shape: f32[2,8,32], index: 2, kind: input, shape index: {}]
  %s3 = inlined_call_operand.vmem [shape: f32[2,8,32], index: 3, kind: input, shape index: {}]
  %s4 = inlined_call_operand.vmem [shape: f32[2,8,32], index: 4, kind: input, shape index: {}]
  %s5 = inlined_call_operand.vmem [shape: f32[2,8,32], index: 5, kind: input, shape index: {}]
  %s6 = inlined_call_operand.vmem [shape: f32[128,16], index: 6, kind: input, shape index: {}]
  %s7 = inlined_call_operand.vmem [shape: f32[1,16], index: 7, kind: input, shape index: {}]
  %s8 = inlined_call_operand.vmem [shape: f32[2,8,48], index: 8, kind: output, shape index: {0}]
  %s9 = inlined_call_operand.vmem [shape: f32[2,8,48], index: 9, kind: output, shape index: {1}]
  %10 = xla_tuple %s8, %s9
  %s11 = sld [smem:[#allocation0]]
  $region65: #{esim_forward.4} parent=0
    _
  %s13 = ssub.s32 1, %s11
  %s14 = scalar_select 0, %s13, %s11
  %s15 = sshll.u32 %s0, 4
  %s16 = int_to_ptr.vmem [resolvable:$true] %s15
  %18 = dma.vmem_to_smem %s16, 16, [#allocation3], [#allocation2]
  %s19 = sshll.u32 %s1, 4
  %s20 = int_to_ptr.vmem [resolvable:$true] %s19
  %22 = dma.vmem_to_smem %s20, 16, [#allocation4], [#allocation2]
  %23 = dma.done [#allocation2], 32
  %24 = sfence
  loop: start=0, step=1, limit=4
  $region2: #{esim_forward.4} parent=0 // loop_pre_header
    _
  $region3: #{esim_forward.4} parent=0 // loop_header
    %s26 = sphi 0, %s30
    %p27 = scmp.ge.s32.totalorder %s26, 4
    %s36 = sphi 0, %s38
    %s39 = sphi 0, %s36
    %s40 = sphi 0, %s39
    %s56 = sphi 0, %s40
    %s62 = sphi 0, %s64
    %s65 = sphi 0, %s62
    %s66 = sphi 0, %s65
    %s82 = sphi 0, %s66
    %s88 = sphi 0, %s90
    %s91 = sphi 0, %s88
    %s92 = sphi 0, %s91
    %s108 = sphi 0, %s92
    %s114 = sphi 0, %s116
    %s117 = sphi 0, %s114
    %s118 = sphi 0, %s117
    %s134 = sphi 0, %s118
    %s138 = sphi 0, %s138
    %s140 = sphi 0, %s138
    %s141 = sphi 0, %s140
    %s155 = sphi 0, %s141
    %s159 = sphi 0, %s159
    %s161 = sphi 0, %s159
    %s162 = sphi 0, %s161
    %s176 = sphi 0, %s162
    %s182 = sphi 0, %s184
    %s185 = sphi 0, %s182
    %s186 = sphi 0, %s185
    %s202 = sphi 0, %s186
    %s208 = sphi 0, %s210
    %s211 = sphi 0, %s208
    %s212 = sphi 0, %s211
    %s228 = sphi 0, %s212
  $region4: #{esim_forward.4} parent=0 // loop_header_branch
    %29 = sbr.rel (%p27) target = $region8
  $region5: #{esim_forward.4} parent=0 // loop_body
    %s31 = ssub.s32 %s26, 1
    %s32 = ssub.s32 %s26, 2
    %s33 = sadd.s32 %s26, 1
    %s34 = ssub.s32 %s26, %s33
    %p35 = scmp.eq.s32.totalorder %s34, 0
    %s37 = sadd.s32 %s36, 1
    %s38 = scalar_select %p35, %s36, %s37
    %p41 = pneg %p35
    %p42 = scmp.eq.s32.totalorder %s26, 1
    %p43 = por %p41, %p42
    %p44 = scmp.ne.s32.totalorder %s36, %s39
    %p45 = scmp.eq.s32.totalorder %s26, 0
    %p46 = por %p44, %p45
    %p47 = scmp.ne.s32.totalorder %s36, %s39
    %p48 = scmp.eq.s32.totalorder %s31, 1
    %p49 = por %p47, %p48
    %p50 = scmp.ne.s32.totalorder %s39, %s40
    %p51 = scmp.eq.s32.totalorder %s31, 0
    %p52 = por %p50, %p51
    %p53 = scmp.ne.s32.totalorder %s39, %s40
    %p54 = scmp.eq.s32.totalorder %s32, 1
    %p55 = por %p53, %p54
    %p57 = scmp.ne.s32.totalorder %s40, %s56
    %p58 = scmp.eq.s32.totalorder %s32, 0
    %p59 = por %p57, %p58
    %s60 = ssub.s32 %s26, %s33
    %p61 = scmp.eq.s32.totalorder %s60, 0
    %s63 = sadd.s32 %s62, 1
    %s64 = scalar_select %p61, %s62, %s63
    %p67 = pneg %p61
    %p68 = scmp.eq.s32.totalorder %s26, 1
    %p69 = por %p67, %p68
    %p70 = scmp.ne.s32.totalorder %s62, %s65
    %p71 = scmp.eq.s32.totalorder %s26, 0
    %p72 = por %p70, %p71
    %p73 = scmp.ne.s32.totalorder %s62, %s65
    %p74 = scmp.eq.s32.totalorder %s31, 1
    %p75 = por %p73, %p74
    %p76 = scmp.ne.s32.totalorder %s65, %s66
    %p77 = scmp.eq.s32.totalorder %s31, 0
    %p78 = por %p76, %p77
    %p79 = scmp.ne.s32.totalorder %s65, %s66
    %p80 = scmp.eq.s32.totalorder %s32, 1
    %p81 = por %p79, %p80
    %p83 = scmp.ne.s32.totalorder %s66, %s82
    %p84 = scmp.eq.s32.totalorder %s32, 0
    %p85 = por %p83, %p84
    %s86 = ssub.s32 %s26, %s33
    %p87 = scmp.eq.s32.totalorder %s86, 0
    %s89 = sadd.s32 %s88, 1
    %s90 = scalar_select %p87, %s88, %s89
    %p93 = pneg %p87
    %p94 = scmp.eq.s32.totalorder %s26, 1
    %p95 = por %p93, %p94
    %p96 = scmp.ne.s32.totalorder %s88, %s91
    %p97 = scmp.eq.s32.totalorder %s26, 0
    %p98 = por %p96, %p97
    %p99 = scmp.ne.s32.totalorder %s88, %s91
    %p100 = scmp.eq.s32.totalorder %s31, 1
    %p101 = por %p99, %p100
    %p102 = scmp.ne.s32.totalorder %s91, %s92
    %p103 = scmp.eq.s32.totalorder %s31, 0
    %p104 = por %p102, %p103
    %p105 = scmp.ne.s32.totalorder %s91, %s92
    %p106 = scmp.eq.s32.totalorder %s32, 1
    %p107 = por %p105, %p106
    %p109 = scmp.ne.s32.totalorder %s92, %s108
    %p110 = scmp.eq.s32.totalorder %s32, 0
    %p111 = por %p109, %p110
    %s112 = ssub.s32 %s26, %s33
    %p113 = scmp.eq.s32.totalorder %s112, 0
    %s115 = sadd.s32 %s114, 1
    %s116 = scalar_select %p113, %s114, %s115
    %p119 = pneg %p113
    %p120 = scmp.eq.s32.totalorder %s26, 1
    %p121 = por %p119, %p120
    %p122 = scmp.ne.s32.totalorder %s114, %s117
    %p123 = scmp.eq.s32.totalorder %s26, 0
    %p124 = por %p122, %p123
    %p125 = scmp.ne.s32.totalorder %s114, %s117
    %p126 = scmp.eq.s32.totalorder %s31, 1
    %p127 = por %p125, %p126
    %p128 = scmp.ne.s32.totalorder %s117, %s118
    %p129 = scmp.eq.s32.totalorder %s31, 0
    %p130 = por %p128, %p129
    %p131 = scmp.ne.s32.totalorder %s117, %s118
    %p132 = scmp.eq.s32.totalorder %s32, 1
    %p133 = por %p131, %p132
    %p135 = scmp.ne.s32.totalorder %s118, %s134
    %p136 = scmp.eq.s32.totalorder %s32, 0
    %p137 = por %p135, %p136
    %s139 = sadd.s32 %s138, 1
    %p142 = scmp.eq.s32.totalorder %s26, 1
    %p143 = scmp.ne.s32.totalorder %s138, %s140
    %p144 = scmp.eq.s32.totalorder %s26, 0
    %p145 = por %p143, %p144
    %p146 = scmp.ne.s32.totalorder %s138, %s140
    %p147 = scmp.eq.s32.totalorder %s31, 1
    %p148 = por %p146, %p147
    %p149 = scmp.ne.s32.totalorder %s140, %s141
    %p150 = scmp.eq.s32.totalorder %s31, 0
    %p151 = por %p149, %p150
    %p152 = scmp.ne.s32.totalorder %s140, %s141
    %p153 = scmp.eq.s32.totalorder %s32, 1
    %p154 = por %p152, %p153
    %p156 = scmp.ne.s32.totalorder %s141, %s155
    %p157 = scmp.eq.s32.totalorder %s32, 0
    %p158 = por %p156, %p157
    %s160 = sadd.s32 %s159, 1
    %p163 = scmp.eq.s32.totalorder %s26, 1
    %p164 = scmp.ne.s32.totalorder %s159, %s161
    %p165 = scmp.eq.s32.totalorder %s26, 0
    %p166 = por %p164, %p165
    %p167 = scmp.ne.s32.totalorder %s159, %s161
    %p168 = scmp.eq.s32.totalorder %s31, 1
    %p169 = por %p167, %p168
    %p170 = scmp.ne.s32.totalorder %s161, %s162
    %p171 = scmp.eq.s32.totalorder %s31, 0
    %p172 = por %p170, %p171
    %p173 = scmp.ne.s32.totalorder %s161, %s162
    %p174 = scmp.eq.s32.totalorder %s32, 1
    %p175 = por %p173, %p174
    %p177 = scmp.ne.s32.totalorder %s162, %s176
    %p178 = scmp.eq.s32.totalorder %s32, 0
    %p179 = por %p177, %p178
    %s180 = ssub.s32 %s26, %s33
    %p181 = scmp.eq.s32.totalorder %s180, 0
    %s183 = sadd.s32 %s182, 1
    %s184 = scalar_select %p181, %s182, %s183
    %p187 = pneg %p181
    %p188 = scmp.eq.s32.totalorder %s26, 1
    %p189 = por %p187, %p188
    %p190 = scmp.ne.s32.totalorder %s182, %s185
    %p191 = scmp.eq.s32.totalorder %s26, 0
    %p192 = por %p190, %p191
    %p193 = scmp.ne.s32.totalorder %s182, %s185
    %p194 = scmp.eq.s32.totalorder %s31, 1
    %p195 = por %p193, %p194
    %p196 = scmp.ne.s32.totalorder %s185, %s186
    %p197 = scmp.eq.s32.totalorder %s31, 0
    %p198 = por %p196, %p197
    %p199 = scmp.ne.s32.totalorder %s185, %s186
    %p200 = scmp.eq.s32.totalorder %s32, 1
    %p201 = por %p199, %p200
    %p203 = scmp.ne.s32.totalorder %s186, %s202
    %p204 = scmp.eq.s32.totalorder %s32, 0
    %p205 = por %p203, %p204
    %s206 = ssub.s32 %s26, %s33
    %p207 = scmp.eq.s32.totalorder %s206, 0
    %s209 = sadd.s32 %s208, 1
    %s210 = scalar_select %p207, %s208, %s209
    %p213 = pneg %p207
    %p214 = scmp.eq.s32.totalorder %s26, 1
    %p215 = por %p213, %p214
    %p216 = scmp.ne.s32.totalorder %s208, %s211
    %p217 = scmp.eq.s32.totalorder %s26, 0
    %p218 = por %p216, %p217
    %p219 = scmp.ne.s32.totalorder %s208, %s211
    %p220 = scmp.eq.s32.totalorder %s31, 1
    %p221 = por %p219, %p220
    %p222 = scmp.ne.s32.totalorder %s211, %s212
    %p223 = scmp.eq.s32.totalorder %s31, 0
    %p224 = por %p222, %p223
    %p225 = scmp.ne.s32.totalorder %s211, %s212
    %p226 = scmp.eq.s32.totalorder %s32, 1
    %p227 = por %p225, %p226
    %p229 = scmp.ne.s32.totalorder %s212, %s228
    %p230 = scmp.eq.s32.totalorder %s32, 0
    %p231 = por %p229, %p230
    %p232 = scmp.le.s32.totalorder 1, %s26
    %p233 = scmp.lt.s32.totalorder %s26, 3
    %p234 = pnand %p232, %p233
    %p235 = pneg %p234
    // Predicated region
    $region9: #{esim_forward.4} parent=5 // pred_check
      _
    $region10: #{esim_forward.4} parent=5 // pred_check_branch
      %237 = sbr.rel (%p234) target = $region12
    $region11: #{esim_forward.4} parent=5 // pred_region
      %s238 = ssub.s32 %s26, 1
      // Predicated region
      $region13: #{esim_forward.4} parent=11 // pred_check
        %p239 = pneg %p151
      $region14: #{esim_forward.4} parent=11 // pred_check_branch
        %241 = sbr.rel (%p239) target = $region16
      $region15: #{esim_forward.4} parent=11 // pred_region
        _
      $region16: #{esim_forward.4} parent=11 // pred_fallthru
        _
      // Predicated region
      $region17: #{esim_forward.4} parent=11 // pred_check
        %p242 = pneg %p172
      $region18: #{esim_forward.4} parent=11 // pred_check_branch
        %244 = sbr.rel (%p242) target = $region20
      $region19: #{esim_forward.4} parent=11 // pred_region
        _
      $region20: #{esim_forward.4} parent=11 // pred_fallthru
        _
    $region12: #{esim_forward.4} parent=5 // pred_fallthru
      _
    %p245 = scmp.lt.s32.totalorder %s26, 2
    // Predicated region
    $region21: #{esim_forward.4} parent=5 // pred_check
      %p246 = pneg %p245
    $region22: #{esim_forward.4} parent=5 // pred_check_branch
      %248 = sbr.rel (%p246) target = $region24
    $region23: #{esim_forward.4} parent=5 // pred_region
      // Predicated region
      $region25: #{esim_forward.4} parent=23 // pred_check
        %p249 = pneg %p46
      $region26: #{esim_forward.4} parent=23 // pred_check_branch
        %251 = sbr.rel (%p249) target = $region28
      $region27: #{esim_forward.4} parent=23 // pred_region
        %p252 = scmp.lt.s32.totalorder %s26, 1
        %s253 = scalar_select %p252, %s26, 1
        %s254 = smul.addr %s253, 8
        %s255 = scalar_lea.vmem %s2, %s254
      $region28: #{esim_forward.4} parent=23 // pred_fallthru
        _
      // Predicated region
      $region29: #{esim_forward.4} parent=23 // pred_check
        %p256 = pneg %p72
      $region30: #{esim_forward.4} parent=23 // pred_check_branch
        %258 = sbr.rel (%p256) target = $region32
      $region31: #{esim_forward.4} parent=23 // pred_region
        %p259 = scmp.lt.s32.totalorder %s26, 1
        %s260 = scalar_select %p259, %s26, 1
        %s261 = smul.addr %s260, 8
        %s262 = scalar_lea.vmem %s3, %s261
      $region32: #{esim_forward.4} parent=23 // pred_fallthru
        _
      // Predicated region
      $region33: #{esim_forward.4} parent=23 // pred_check
        %p263 = pneg %p98
      $region34: #{esim_forward.4} parent=23 // pred_check_branch
        %265 = sbr.rel (%p263) target = $region36
      $region35: #{esim_forward.4} parent=23 // pred_region
        %p266 = scmp.lt.s32.totalorder %s26, 1
        %s267 = scalar_select %p266, %s26, 1
        %s268 = smul.addr %s267, 8
        %s269 = scalar_lea.vmem %s4, %s268
      $region36: #{esim_forward.4} parent=23 // pred_fallthru
        _
      // Predicated region
      $region37: #{esim_forward.4} parent=23 // pred_check
        %p270 = pneg %p124
      $region38: #{esim_forward.4} parent=23 // pred_check_branch
        %272 = sbr.rel (%p270) target = $region40
      $region39: #{esim_forward.4} parent=23 // pred_region
        %p273 = scmp.lt.s32.totalorder %s26, 1
        %s274 = scalar_select %p273, %s26, 1
        %s275 = smul.addr %s274, 8
        %s276 = scalar_lea.vmem %s5, %s275
      $region40: #{esim_forward.4} parent=23 // pred_fallthru
        _
    $region24: #{esim_forward.4} parent=5 // pred_fallthru
      _
    %p277 = scmp.le.s32.totalorder 1, %s26
    %p278 = scmp.lt.s32.totalorder %s26, 3
    %p279 = pnand %p277, %p278
    %p280 = pneg %p279
    // Predicated region
    $region41: #{esim_forward.4} parent=5 // pred_check
      _
    $region42: #{esim_forward.4} parent=5 // pred_check_branch
      %282 = sbr.rel (%p279) target = $region44
    $region43: #{esim_forward.4} parent=5 // pred_region
      %s283 = ssub.s32 %s26, 1
      %p284 = scmp.lt.s32.totalorder %s31, 1
      %s285 = scalar_select %p284, %s31, 1
      %s286 = smul.addr %s285, 8
      %s287 = scalar_lea.vmem %s2, %s286
      %p288 = pneg %p52
      %p289 = pneg %p49
      %p290 = scmp.lt.s32.totalorder %s31, 1
      %s291 = scalar_select %p290, %s31, 1
      %s292 = smul.addr %s291, 8
      %s293 = scalar_lea.vmem %s3, %s292
      %p294 = pneg %p78
      %p295 = pneg %p75
      %p296 = scmp.lt.s32.totalorder %s31, 1
      %s297 = scalar_select %p296, %s31, 1
      %s298 = smul.addr %s297, 8
      %s299 = scalar_lea.vmem %s4, %s298
      %p300 = pneg %p104
      %p301 = pneg %p101
      %p302 = scmp.lt.s32.totalorder %s31, 1
      %s303 = scalar_select %p302, %s31, 1
      %s304 = smul.addr %s303, 8
      %s305 = scalar_lea.vmem %s5, %s304
      %p306 = pneg %p130
      %p307 = pneg %p127
      %p308 = pneg %p151
      %p309 = pneg %p148
      %p310 = pneg %p172
      %p311 = pneg %p169
      %p312 = pneg %p198
      %p313 = pneg %p195
      %p314 = scmp.lt.s32.totalorder %s31, 1
      %s315 = scalar_select %p314, %s31, 1
      %s316 = smul.addr %s315, 8
      %s317 = scalar_lea.vmem %s8, %s316
      %p318 = pneg %p224
      %p319 = pneg %p221
      %p320 = scmp.lt.s32.totalorder %s31, 1
      %s321 = scalar_select %p320, %s31, 1
      %s322 = smul.addr %s321, 8
      %s323 = scalar_lea.vmem %s9, %s322
      %p324 = scmp.lt.s32.totalorder %s31, 1
      %s325 = scalar_select %p324, %s31, 1
      %s326 = smul.addr %s325, 8
      %s327 = scalar_lea.vmem %s2, %s326
      %p328 = scmp.lt.s32.totalorder %s31, 1
      %s329 = scalar_select %p328, %s31, 1
      %s330 = smul.addr %s329, 8
      %s331 = scalar_lea.vmem %s3, %s330
      %p332 = scmp.lt.s32.totalorder %s31, 1
      %s333 = scalar_select %p332, %s31, 1
      %s334 = smul.addr %s333, 8
      %s335 = scalar_lea.vmem %s4, %s334
      %p336 = scmp.lt.s32.totalorder %s31, 1
      %s337 = scalar_select %p336, %s31, 1
      %s338 = smul.addr %s337, 8
      %s339 = scalar_lea.vmem %s5, %s338
      %p340 = scmp.lt.s32.totalorder %s31, 1
      %s341 = scalar_select %p340, %s31, 1
      %s342 = smul.addr %s341, 8
      %s343 = scalar_lea.vmem %s8, %s342
      %p344 = scmp.lt.s32.totalorder %s31, 1
      %s345 = scalar_select %p344, %s31, 1
      %s346 = smul.addr %s345, 8
      %s347 = scalar_lea.vmem %s9, %s346
      %s348 = sld [smem:[#allocation3 + %s31]]
      %s349 = sld [smem:[#allocation4 + %s31]]
      %v350 = vld [vmem:[%s327] sm:$0xff]
      %v351 = vld [vmem:[%s331] sm:$0xff]
      %vm352 = vcmask 261120
      %v354 = vsel %vm352, %v350, 0
      %v357 = vsel %vm352, %v351, 0
      %359 = vmatprep.subr.mxu0 0.0
      %360 = vmatpush1.xpose.msra.mxu0 %v357
      %361 = vmatprep.subr.mxu0 0.0
      %362 = vmatpush1.xpose.msra.mxu0 0.0
      %363 = vmatprep.subr.mxu0 0.0
      %364 = vmatpush1.xpose.msra.mxu0 0.0
      %365 = vmatprep.subr.mxu0 0.0
      %366 = vmatpush1.xpose.msra.mxu0 0.0
      %367 = vmatprep.subr.mxu0 0.0
      %368 = vmatpush1.xpose.msra.mxu0 0.0
      %369 = vmatprep.subr.mxu0 0.0
      %370 = vmatpush1.xpose.msra.mxu0 0.0
      %371 = vmatprep.subr.mxu0 0.0
      %372 = vmatpush1.xpose.msra.mxu0 0.0
      %373 = vmatprep.subr.mxu0 0.0
      %374 = vmatpush1.xpose.msra.mxu0 0.0
      %375 = vmatprep.subr.mxu0 0.0
      %376 = vmatpush1.xpose.msra.mxu0 0.0
      %377 = vmatprep.subr.mxu0 0.0
      %378 = vmatpush1.xpose.msra.mxu0 0.0
      %379 = vmatprep.subr.mxu0 0.0
      %380 = vmatpush1.xpose.msra.mxu0 0.0
      %381 = vmatprep.subr.mxu0 0.0
      %382 = vmatpush1.xpose.msra.mxu0 0.0
      %383 = vmatprep.subr.mxu0 0.0
      %384 = vmatpush1.xpose.msra.mxu0 0.0
      %385 = vmatprep.subr.mxu0 0.0
      %386 = vmatpush1.xpose.msra.mxu0 0.0
      %387 = vmatprep.subr.mxu0 0.0
      %388 = vmatpush1.xpose.msra.mxu0 0.0
      %389 = vmatprep.subr.mxu0 0.0
      %390 = vmatpush1.xpose.msra.mxu0 0.0
      %391 = vmatprep.subr.mxu0 0.0
      %392 = vmatpush1.xpose.msra.mxu0 0.0
      %393 = vmatprep.subr.mxu0 0.0
      %394 = vmatpush1.xpose.msra.mxu0 0.0
      %395 = vmatprep.subr.mxu0 0.0
      %396 = vmatpush1.xpose.msra.mxu0 0.0
      %397 = vmatprep.subr.mxu0 0.0
      %398 = vmatpush1.xpose.msra.mxu0 0.0
      %399 = vmatprep.subr.mxu0 0.0
      %400 = vmatpush1.xpose.msra.mxu0 0.0
      %401 = vmatprep.subr.mxu0 0.0
      %402 = vmatpush1.xpose.msra.mxu0 0.0
      %403 = vmatprep.subr.mxu0 0.0
      %404 = vmatpush1.xpose.msra.mxu0 0.0
      %405 = vmatprep.subr.mxu0 0.0
      %406 = vmatpush1.xpose.msra.mxu0 0.0
      %407 = vmatprep.subr.mxu0 0.0
      %408 = vmatpush1.xpose.msra.mxu0 0.0
      %409 = vmatprep.subr.mxu0 0.0
      %410 = vmatpush1.xpose.msra.mxu0 0.0
      %411 = vmatprep.subr.mxu0 0.0
      %412 = vmatpush1.xpose.msra.mxu0 0.0
      %413 = vmatprep.subr.mxu0 0.0
      %414 = vmatpush1.xpose.msra.mxu0 0.0
      %415 = vmatprep.subr.mxu0 0.0
      %416 = vmatpush1.xpose.msra.mxu0 0.0
      %417 = vmatprep.subr.mxu0 0.0
      %418 = vmatpush1.xpose.msra.mxu0 0.0
      %419 = vmatprep.subr.mxu0 0.0
      %420 = vmatpush1.xpose.msra.mxu0 0.0
      %421 = vmatprep.subr.mxu0 0.0
      %422 = vmatpush1.xpose.msra.mxu0 0.0
      %423 = vmatprep.mubr.f32.mxu0 0.0
      %424 = vmatmul.mubr.f32.gmra.mrb[0].mxu0 %v354
      %v425 = vpop.f32.mrb[0].mxu0
      %v426 = vadd.f32 0.0, %v425
      %v427 = vpop.f32.mrb[0].mxu0
      %428 = vdwg.mxu0
      %v429 = vlaneseq
      %v430 = vshrl.u32 %v429, 7
      %v431 = vlaneseq
      %v432 = vand.u32 %v431, 127
      %v433 = vstv %s348
      %vm434 = vcmp.lt.s32.totalorder %v430, %v433
      %v435 = vstv %s349
      %vm436 = vcmp.lt.s32.totalorder %v432, %v435
      %vm437 = vmand %vm434, %vm436
      %v438 = vsel %vm437, %v426, -1e+30
      %vm439 = vcmask 64512
      %v440 = vsel %vm439, %v438, -inf
      %441 = vmax.xlane.f32.xlu0 %v440
      %v442 = vpop.xlane.xlu0 %441
      %v443 = vsub.f32 %v438, %v442
      %v444 = vmul.f32 %v443, 1.442695
      %v445 = vpow.pop %v444
      %v446 = vsel %vm437, %v445, 0.0
      %v447 = vsel %vm439, %v446, 0.0
      %448 = vadd.xlane.f32.xlu0 %v447
      %v449 = vpop.xlane.xlu0 %448
      %v450 = vmax.f32 %v449, 1e-30
      %v451 = vrcp.pop %v450
      %v452 = vmul.f32 %v446, %v451
      %v454 = vsel %vm439, %v452, 0
      %456 = vmatprep.subr.mxu0 0.0
      %457 = vmatpush1.msra.mxu0 %v351
      %458 = vmatprep.subr.mxu0 0.0
      %459 = vmatpush1.msra.mxu0 0.0
      %460 = vmatprep.subr.mxu0 0.0
      %461 = vmatpush1.msra.mxu0 0.0
      %462 = vmatprep.subr.mxu0 0.0
      %463 = vmatpush1.msra.mxu0 0.0
      %464 = vmatprep.subr.mxu0 0.0
      %465 = vmatpush1.msra.mxu0 0.0
      %466 = vmatprep.subr.mxu0 0.0
      %467 = vmatpush1.msra.mxu0 0.0
      %468 = vmatprep.subr.mxu0 0.0
      %469 = vmatpush1.msra.mxu0 0.0
      %470 = vmatprep.subr.mxu0 0.0
      %471 = vmatpush1.msra.mxu0 0.0
      %472 = vmatprep.subr.mxu0 0.0
      %473 = vmatpush1.msra.mxu0 0.0
      %474 = vmatprep.subr.mxu0 0.0
      %475 = vmatpush1.msra.mxu0 0.0
      %476 = vmatprep.subr.mxu0 0.0
      %477 = vmatpush1.msra.mxu0 0.0
      %478 = vmatprep.subr.mxu0 0.0
      %479 = vmatpush1.msra.mxu0 0.0
      %480 = vmatprep.subr.mxu0 0.0
      %481 = vmatpush1.msra.mxu0 0.0
      %482 = vmatprep.subr.mxu0 0.0
      %483 = vmatpush1.msra.mxu0 0.0
      %484 = vmatprep.subr.mxu0 0.0
      %485 = vmatpush1.msra.mxu0 0.0
      %486 = vmatprep.subr.mxu0 0.0
      %487 = vmatpush1.msra.mxu0 0.0
      %488 = vmatprep.subr.mxu0 0.0
      %489 = vmatpush1.msra.mxu0 0.0
      %490 = vmatprep.subr.mxu0 0.0
      %491 = vmatpush1.msra.mxu0 0.0
      %492 = vmatprep.subr.mxu0 0.0
      %493 = vmatpush1.msra.mxu0 0.0
      %494 = vmatprep.subr.mxu0 0.0
      %495 = vmatpush1.msra.mxu0 0.0
      %496 = vmatprep.subr.mxu0 0.0
      %497 = vmatpush1.msra.mxu0 0.0
      %498 = vmatprep.subr.mxu0 0.0
      %499 = vmatpush1.msra.mxu0 0.0
      %500 = vmatprep.subr.mxu0 0.0
      %501 = vmatpush1.msra.mxu0 0.0
      %502 = vmatprep.subr.mxu0 0.0
      %503 = vmatpush1.msra.mxu0 0.0
      %504 = vmatprep.subr.mxu0 0.0
      %505 = vmatpush1.msra.mxu0 0.0
      %506 = vmatprep.subr.mxu0 0.0
      %507 = vmatpush1.msra.mxu0 0.0
      %508 = vmatprep.subr.mxu0 0.0
      %509 = vmatpush1.msra.mxu0 0.0
      %510 = vmatprep.subr.mxu0 0.0
      %511 = vmatpush1.msra.mxu0 0.0
      %512 = vmatprep.subr.mxu0 0.0
      %513 = vmatpush1.msra.mxu0 0.0
      %514 = vmatprep.subr.mxu0 0.0
      %515 = vmatpush1.msra.mxu0 0.0
      %516 = vmatprep.subr.mxu0 0.0
      %517 = vmatpush1.msra.mxu0 0.0
      %518 = vmatprep.subr.mxu0 0.0
      %519 = vmatpush1.msra.mxu0 0.0
      %520 = vmatprep.mubr.f32.mxu0 0.0
      %521 = vmatmul.mubr.f32.gmra.mrb[0].mxu0 %v454
      %v522 = vpop.f32.mrb[0].mxu0
      %v523 = vadd.f32 0.0, %v522
      %v524 = vpop.f32.mrb[0].mxu0
      %525 = vdwg.mxu0
      %v526 = vrot.slane %v440, 4
      %v527 = vmax.f32 %v440, %v526
      %v528 = vrot.slane %v527, 2
      %v529 = vmax.f32 %v527, %v528
      %v530 = vrot.slane %v529, 1
      %v531 = vmax.f32 %v529, %v530
      %v532 = vsub.f32 %v438, %v531
      %v533 = vmul.f32 %v532, 1.442695
      %v534 = vpow.pop %v533
      %v535 = vsel %vm437, %v534, 0.0
      %v536 = vsel %vm439, %v535, 0.0
      %v537 = vrot.slane %v536, 4
      %v538 = vadd.f32 %v536, %v537
      %v539 = vrot.slane %v538, 2
      %v540 = vadd.f32 %v538, %v539
      %v541 = vrot.slane %v540, 1
      %v542 = vadd.f32 %v540, %v541
      %v543 = vmax.f32 %v542, 1e-30
      %v544 = vrcp.pop %v543
      %v545 = vmul.f32 %v535, %v544
      %546 = vxpose.xlu0.b32.start [1/16] %v545, 128
      %547 = vxpose.xlu0.b32.cont [2/16] 0.0, 128
      %548 = vxpose.xlu0.b32.cont [3/16] 0.0, 128
      %549 = vxpose.xlu0.b32.cont [4/16] 0.0, 128
      %550 = vxpose.xlu0.b32.cont [5/16] 0.0, 128
      %551 = vxpose.xlu0.b32.cont [6/16] 0.0, 128
      %552 = vxpose.xlu0.b32.cont [7/16] 0.0, 128
      %553 = vxpose.xlu0.b32.cont [8/16] 0.0, 128
      %554 = vxpose.xlu0.b32.cont [9/16] 0.0, 128
      %555 = vxpose.xlu0.b32.cont [10/16] 0.0, 128
      %556 = vxpose.xlu0.b32.cont [11/16] 0.0, 128
      %557 = vxpose.xlu0.b32.cont [12/16] 0.0, 128
      %558 = vxpose.xlu0.b32.cont [13/16] 0.0, 128
      %559 = vxpose.xlu0.b32.cont [14/16] 0.0, 128
      %560 = vxpose.xlu0.b32.cont [15/16] 0.0, 128
      %561 = vxpose.xlu0.b32.end [16/16] 0.0, 128
      %v562 = vpop.trf.xlu0
      %v563 = vpop.trf.xlu0
      %v564 = vpop.trf.xlu0
      %v565 = vpop.trf.xlu0
      %v566 = vpop.trf.xlu0
      %v567 = vpop.trf.xlu0
      %v568 = vpop.trf.xlu0
      %v569 = vpop.trf.xlu0
      %v570 = vpop.trf.xlu0
      %v571 = vpop.trf.xlu0
      %v572 = vpop.trf.xlu0
      %v573 = vpop.trf.xlu0
      %v574 = vpop.trf.xlu0
      %v575 = vpop.trf.xlu0
      %v576 = vpop.trf.xlu0
      %v577 = vpop.trf.xlu0
      %v579 = vsel %vm439, %v562, 0
      %581 = vmatprep.subr.mxu0 0.0
      %582 = vmatpush1.msra.mxu0 %v350
      %583 = vmatprep.subr.mxu0 0.0
      %584 = vmatpush1.msra.mxu0 0.0
      %585 = vmatprep.subr.mxu0 0.0
      %586 = vmatpush1.msra.mxu0 0.0
      %587 = vmatprep.subr.mxu0 0.0
      %588 = vmatpush1.msra.mxu0 0.0
      %589 = vmatprep.subr.mxu0 0.0
      %590 = vmatpush1.msra.mxu0 0.0
      %591 = vmatprep.subr.mxu0 0.0
      %592 = vmatpush1.msra.mxu0 0.0
      %593 = vmatprep.subr.mxu0 0.0
      %594 = vmatpush1.msra.mxu0 0.0
      %595 = vmatprep.subr.mxu0 0.0
      %596 = vmatpush1.msra.mxu0 0.0
      %597 = vmatprep.subr.mxu0 0.0
      %598 = vmatpush1.msra.mxu0 0.0
      %599 = vmatprep.subr.mxu0 0.0
      %600 = vmatpush1.msra.mxu0 0.0
      %601 = vmatprep.subr.mxu0 0.0
      %602 = vmatpush1.msra.mxu0 0.0
      %603 = vmatprep.subr.mxu0 0.0
      %604 = vmatpush1.msra.mxu0 0.0
      %605 = vmatprep.subr.mxu0 0.0
      %606 = vmatpush1.msra.mxu0 0.0
      %607 = vmatprep.subr.mxu0 0.0
      %608 = vmatpush1.msra.mxu0 0.0
      %609 = vmatprep.subr.mxu0 0.0
      %610 = vmatpush1.msra.mxu0 0.0
      %611 = vmatprep.subr.mxu0 0.0
      %612 = vmatpush1.msra.mxu0 0.0
      %613 = vmatprep.subr.mxu0 0.0
      %614 = vmatpush1.msra.mxu0 0.0
      %615 = vmatprep.subr.mxu0 0.0
      %616 = vmatpush1.msra.mxu0 0.0
      %617 = vmatprep.subr.mxu0 0.0
      %618 = vmatpush1.msra.mxu0 0.0
      %619 = vmatprep.subr.mxu0 0.0
      %620 = vmatpush1.msra.mxu0 0.0
      %621 = vmatprep.subr.mxu0 0.0
      %622 = vmatpush1.msra.mxu0 0.0
      %623 = vmatprep.subr.mxu0 0.0
      %624 = vmatpush1.msra.mxu0 0.0
      %625 = vmatprep.subr.mxu0 0.0
      %626 = vmatpush1.msra.mxu0 0.0
      %627 = vmatprep.subr.mxu0 0.0
      %628 = vmatpush1.msra.mxu0 0.0
      %629 = vmatprep.subr.mxu0 0.0
      %630 = vmatpush1.msra.mxu0 0.0
      %631 = vmatprep.subr.mxu0 0.0
      %632 = vmatpush1.msra.mxu0 0.0
      %633 = vmatprep.subr.mxu0 0.0
      %634 = vmatpush1.msra.mxu0 0.0
      %635 = vmatprep.subr.mxu0 0.0
      %636 = vmatpush1.msra.mxu0 0.0
      %637 = vmatprep.subr.mxu0 0.0
      %638 = vmatpush1.msra.mxu0 0.0
      %639 = vmatprep.subr.mxu0 0.0
      %640 = vmatpush1.msra.mxu0 0.0
      %641 = vmatprep.subr.mxu0 0.0
      %642 = vmatpush1.msra.mxu0 0.0
      %643 = vmatprep.subr.mxu0 0.0
      %644 = vmatpush1.msra.mxu0 0.0
      %645 = vmatprep.mubr.f32.mxu0 0.0
      %646 = vmatmul.mubr.f32.gmra.mrb[0].mxu0 %v579
      %v647 = vpop.f32.mrb[0].mxu0
      %v648 = vadd.f32 0.0, %v647
      %v649 = vpop.f32.mrb[0].mxu0
      %650 = vdwg.mxu0
      %v651 = vld [vmem:[%s6] sm:$0xff]
      %v652 = vld [vmem:[%s6 + $0x8] sm:$0xff]
      %v653 = vld [vmem:[%s6 + $0x10] sm:$0xff]
      %v654 = vld [vmem:[%s6 + $0x18] sm:$0xff]
      %v655 = vld [vmem:[%s6 + $0x20] sm:$0xff]
      %v656 = vld [vmem:[%s6 + $0x28] sm:$0xff]
      %v657 = vld [vmem:[%s6 + $0x30] sm:$0xff]
      %v658 = vld [vmem:[%s6 + $0x38] sm:$0xff]
      %v659 = vld [vmem:[%s6 + $0x40] sm:$0xff]
      %v660 = vld [vmem:[%s6 + $0x48] sm:$0xff]
      %v661 = vld [vmem:[%s6 + $0x50] sm:$0xff]
      %v662 = vld [vmem:[%s6 + $0x58] sm:$0xff]
      %v663 = vld [vmem:[%s6 + $0x60] sm:$0xff]
      %v664 = vld [vmem:[%s6 + $0x68] sm:$0xff]
      %v665 = vld [vmem:[%s6 + $0x70] sm:$0xff]
      %v666 = vld [vmem:[%s6 + $0x78] sm:$0xff]
      %v667 = vld [vmem:[%s7] sm:$0x1]
      %v668 = vsub.f32 %v350, %v523
      %v669 = vmul.f32 %v350, %v523
      %671 = vrot.lane.b32.xlu0 %v523, 32
      %v672 = vpop.permute.xlu0 %671
      %675 = vrot.lane.b32.xlu0 %v668, 64
      %v676 = vpop.permute.xlu0 %675
      %679 = vrot.lane.b32.xlu0 %v669, 96
      %v680 = vpop.permute.xlu0 %679
      %v682 = vsel %vm352, %v350, %v672
      %vm683 = vcmask 523264
      %v684 = vsel %vm683, %v682, %v676
      %vm685 = vcmask 785408
      %v686 = vsel %vm685, %v684, %v680
      %v688 = vlaneseq
      %v689 = vshrl.u32 %v688, 7
      %v690 = vsub.s32 0, %v689
      %v691 = vrot.slane %v667, %v690
      %693 = vmatprep.subr.mxu0 0.0
      %694 = vmatpush1.msra.mxu0 %v651
      %695 = vmatprep.subr.mxu0 0.0
      %696 = vmatpush1.msra.mxu0 %v652
      %697 = vmatprep.subr.mxu0 0.0
      %698 = vmatpush1.msra.mxu0 %v653
      %699 = vmatprep.subr.mxu0 0.0
      %700 = vmatpush1.msra.mxu0 %v654
      %701 = vmatprep.subr.mxu0 0.0
      %702 = vmatpush1.msra.mxu0 %v655
      %703 = vmatprep.subr.mxu0 0.0
      %704 = vmatpush1.msra.mxu0 %v656
      %705 = vmatprep.subr.mxu0 0.0
      %706 = vmatpush1.msra.mxu0 %v657
      %707 = vmatprep.subr.mxu0 0.0
      %708 = vmatpush1.msra.mxu0 %v658
      %709 = vmatprep.subr.mxu0 0.0
      %710 = vmatpush1.msra.mxu0 %v659
      %711 = vmatprep.subr.mxu0 0.0
      %712 = vmatpush1.msra.mxu0 %v660
      %713 = vmatprep.subr.mxu0 0.0
      %714 = vmatpush1.msra.mxu0 %v661
      %715 = vmatprep.subr.mxu0 0.0
      %716 = vmatpush1.msra.mxu0 %v662
      %717 = vmatprep.subr.mxu0 0.0
      %718 = vmatpush1.msra.mxu0 %v663
      %719 = vmatprep.subr.mxu0 0.0
      %720 = vmatpush1.msra.mxu0 %v664
      %721 = vmatprep.subr.mxu0 0.0
      %722 = vmatpush1.msra.mxu0 %v665
      %723 = vmatprep.subr.mxu0 0.0
      %724 = vmatpush1.msra.mxu0 %v666
      %725 = vmatprep.subr.mxu0 0.0
      %726 = vmatpush1.msra.mxu0 0.0
      %727 = vmatprep.subr.mxu0 0.0
      %728 = vmatpush1.msra.mxu0 0.0
      %729 = vmatprep.subr.mxu0 0.0
      %730 = vmatpush1.msra.mxu0 0.0
      %731 = vmatprep.subr.mxu0 0.0
      %732 = vmatpush1.msra.mxu0 0.0
      %733 = vmatprep.subr.mxu0 0.0
      %734 = vmatpush1.msra.mxu0 0.0
      %735 = vmatprep.subr.mxu0 0.0
      %736 = vmatpush1.msra.mxu0 0.0
      %737 = vmatprep.subr.mxu0 0.0
      %738 = vmatpush1.msra.mxu0 0.0
      %739 = vmatprep.subr.mxu0 0.0
      %740 = vmatpush1.msra.mxu0 0.0
      %741 = vmatprep.subr.mxu0 0.0
      %742 = vmatpush1.msra.mxu0 0.0
      %743 = vmatprep.subr.mxu0 0.0
      %744 = vmatpush1.msra.mxu0 0.0
      %745 = vmatprep.subr.mxu0 0.0
      %746 = vmatpush1.msra.mxu0 0.0
      %747 = vmatprep.subr.mxu0 0.0
      %748 = vmatpush1.msra.mxu0 0.0
      %749 = vmatprep.subr.mxu0 0.0
      %750 = vmatpush1.msra.mxu0 0.0
      %751 = vmatprep.subr.mxu0 0.0
      %752 = vmatpush1.msra.mxu0 0.0
      %753 = vmatprep.subr.mxu0 0.0
      %754 = vmatpush1.msra.mxu0 0.0
      %755 = vmatprep.subr.mxu0 0.0
      %756 = vmatpush1.msra.mxu0 0.0
      %757 = vmatprep.mubr.f32.mxu0 0.0
      %758 = vmatmul.mubr.f32.gmra.mrb[0].mxu0 %v686
      %v759 = vpop.f32.mrb[0].mxu0
      %v760 = vadd.f32 %v691, %v759
      %v761 = vpop.f32.mrb[0].mxu0
      %762 = vdwg.mxu0
      %v763 = vmax.f32 %v760, 0.0
      %v764 = vsub.f32 %v351, %v648
      %v765 = vmul.f32 %v351, %v648
      %767 = vrot.lane.b32.xlu0 %v648, 32
      %v768 = vpop.permute.xlu0 %767
      %771 = vrot.lane.b32.xlu0 %v764, 64
      %v772 = vpop.permute.xlu0 %771
      %775 = vrot.lane.b32.xlu0 %v765, 96
      %v776 = vpop.permute.xlu0 %775
      %v778 = vsel %vm352, %v351, %v768
      %v779 = vsel %vm683, %v778, %v772
      %v780 = vsel %vm685, %v779, %v776
      %781 = vmatprep.subr.mxu0 0.0
      %782 = vmatpush1.msra.mxu0 %v651
      %783 = vmatprep.subr.mxu0 0.0
      %784 = vmatpush1.msra.mxu0 %v652
      %785 = vmatprep.subr.mxu0 0.0
      %786 = vmatpush1.msra.mxu0 %v653
      %787 = vmatprep.subr.mxu0 0.0
      %788 = vmatpush1.msra.mxu0 %v654
      %789 = vmatprep.subr.mxu0 0.0
      %790 = vmatpush1.msra.mxu0 %v655
      %791 = vmatprep.subr.mxu0 0.0
      %792 = vmatpush1.msra.mxu0 %v656
      %793 = vmatprep.subr.mxu0 0.0
      %794 = vmatpush1.msra.mxu0 %v657
      %795 = vmatprep.subr.mxu0 0.0
      %796 = vmatpush1.msra.mxu0 %v658
      %797 = vmatprep.subr.mxu0 0.0
      %798 = vmatpush1.msra.mxu0 %v659
      %799 = vmatprep.subr.mxu0 0.0
      %800 = vmatpush1.msra.mxu0 %v660
      %801 = vmatprep.subr.mxu0 0.0
      %802 = vmatpush1.msra.mxu0 %v661
      %803 = vmatprep.subr.mxu0 0.0
      %804 = vmatpush1.msra.mxu0 %v662
      %805 = vmatprep.subr.mxu0 0.0
      %806 = vmatpush1.msra.mxu0 %v663
      %807 = vmatprep.subr.mxu0 0.0
      %808 = vmatpush1.msra.mxu0 %v664
      %809 = vmatprep.subr.mxu0 0.0
      %810 = vmatpush1.msra.mxu0 %v665
      %811 = vmatprep.subr.mxu0 0.0
      %812 = vmatpush1.msra.mxu0 %v666
      %813 = vmatprep.subr.mxu0 0.0
      %814 = vmatpush1.msra.mxu0 0.0
      %815 = vmatprep.subr.mxu0 0.0
      %816 = vmatpush1.msra.mxu0 0.0
      %817 = vmatprep.subr.mxu0 0.0
      %818 = vmatpush1.msra.mxu0 0.0
      %819 = vmatprep.subr.mxu0 0.0
      %820 = vmatpush1.msra.mxu0 0.0
      %821 = vmatprep.subr.mxu0 0.0
      %822 = vmatpush1.msra.mxu0 0.0
      %823 = vmatprep.subr.mxu0 0.0
      %824 = vmatpush1.msra.mxu0 0.0
      %825 = vmatprep.subr.mxu0 0.0
      %826 = vmatpush1.msra.mxu0 0.0
      %827 = vmatprep.subr.mxu0 0.0
      %828 = vmatpush1.msra.mxu0 0.0
      %829 = vmatprep.subr.mxu0 0.0
      %830 = vmatpush1.msra.mxu0 0.0
      %831 = vmatprep.subr.mxu0 0.0
      %832 = vmatpush1.msra.mxu0 0.0
      %833 = vmatprep.subr.mxu0 0.0
      %834 = vmatpush1.msra.mxu0 0.0
      %835 = vmatprep.subr.mxu0 0.0
      %836 = vmatpush1.msra.mxu0 0.0
      %837 = vmatprep.subr.mxu0 0.0
      %838 = vmatpush1.msra.mxu0 0.0
      %839 = vmatprep.subr.mxu0 0.0
      %840 = vmatpush1.msra.mxu0 0.0
      %841 = vmatprep.subr.mxu0 0.0
      %842 = vmatpush1.msra.mxu0 0.0
      %843 = vmatprep.subr.mxu0 0.0
      %844 = vmatpush1.msra.mxu0 0.0
      %845 = vmatprep.mubr.f32.mxu0 0.0
      %846 = vmatmul.mubr.f32.gmra.mrb[0].mxu0 %v780
      %v847 = vpop.f32.mrb[0].mxu0
      %v848 = vadd.f32 %v691, %v847
      %v849 = vpop.f32.mrb[0].mxu0
      %850 = vdwg.mxu0
      %v851 = vmax.f32 %v848, 0.0
      %v852 = vld [vmem:[%s335] sm:$0xff]
      %854 = vrot.lane.b32.xlu0 %v852, 16
      %v855 = vpop.permute.xlu0 %854
      %vm857 = vcmask 130048
      %v858 = vsel %vm857, %v763, %v855
      %vm859 = vcmask 392192
      %860 = vst.msk [vmem:[%s343] sm:$0xff] %vm859, %v858
      %v861 = vld [vmem:[%s339] sm:$0xff]
      %863 = vrot.lane.b32.xlu0 %v861, 16
      %v864 = vpop.permute.xlu0 %863
      %v866 = vsel %vm857, %v851, %v864
      %867 = vst.msk [vmem:[%s347] sm:$0xff] %vm859, %v866
      %p868 = scmp.lt.s32.totalorder %s31, 1
      %s869 = scalar_select %p868, %s31, 1
      %s870 = smul.addr %s869, 8
      %s871 = scalar_lea.vmem %s8, %s870
      %p872 = scmp.lt.s32.totalorder %s31, 1
      %s873 = scalar_select %p872, %s31, 1
      %s874 = smul.addr %s873, 8
      %s875 = scalar_lea.vmem %s9, %s874
      // Predicated region
      $region45: #{esim_forward.4} parent=43 // pred_check
        %p876 = pneg %p195
      $region46: #{esim_forward.4} parent=43 // pred_check_branch
        %878 = sbr.rel (%p876) target = $region48
      $region47: #{esim_forward.4} parent=43 // pred_region
        _
      $region48: #{esim_forward.4} parent=43 // pred_fallthru
        _
      // Predicated region
      $region49: #{esim_forward.4} parent=43 // pred_check
        %p879 = pneg %p221
      $region50: #{esim_forward.4} parent=43 // pred_check_branch
        %881 = sbr.rel (%p879) target = $region52
      $region51: #{esim_forward.4} parent=43 // pred_region
        _
      $region52: #{esim_forward.4} parent=43 // pred_fallthru
        _
    $region44: #{esim_forward.4} parent=5 // pred_fallthru
      _
    %p882 = scmp.le.s32.totalorder 2, %s26
    // Predicated region
    $region53: #{esim_forward.4} parent=5 // pred_check
      %p883 = pneg %p882
    $region54: #{esim_forward.4} parent=5 // pred_check_branch
      %885 = sbr.rel (%p883) target = $region56
    $region55: #{esim_forward.4} parent=5 // pred_region
      %s886 = ssub.s32 %s26, 2
      // Predicated region
      $region57: #{esim_forward.4} parent=55 // pred_check
        %p887 = pneg %p201
      $region58: #{esim_forward.4} parent=55 // pred_check_branch
        %889 = sbr.rel (%p887) target = $region60
      $region59: #{esim_forward.4} parent=55 // pred_region
        %p890 = scmp.lt.s32.totalorder %s32, 1
        %s891 = scalar_select %p890, %s32, 1
        %s892 = smul.addr %s891, 8
        %s893 = scalar_lea.vmem %s8, %s892
      $region60: #{esim_forward.4} parent=55 // pred_fallthru
        _
      // Predicated region
      $region61: #{esim_forward.4} parent=55 // pred_check
        %p894 = pneg %p227
      $region62: #{esim_forward.4} parent=55 // pred_check_branch
        %896 = sbr.rel (%p894) target = $region64
      $region63: #{esim_forward.4} parent=55 // pred_region
        %p897 = scmp.lt.s32.totalorder %s32, 1
        %s898 = scalar_select %p897, %s32, 1
        %s899 = smul.addr %s898, 8
        %s900 = scalar_lea.vmem %s9, %s899
      $region64: #{esim_forward.4} parent=55 // pred_fallthru
        _
    $region56: #{esim_forward.4} parent=5 // pred_fallthru
      _
  $region6: #{esim_forward.4} parent=0 // loop_footer
    %s30 = sadd.s32 1, %s26
  $region7: #{esim_forward.4} parent=0 // loop_footer_branch
    %25 = sbr.rel target = $region3
  $region8: #{esim_forward.4} parent=0 // loop_exit
    _

// kernel: esim_forward.3
$region0: #{esim_forward.3}
  #allocation0 [shape = 'u32[]', space=smem, size = 0x4, offset = 0x4, fixed_abs, tag = 'smem constant byte address 0x4 - core index']
  #allocation1 [shape = 'u32[144,128]{1,0:T(1,128)}', space=vmem, size = 0x12000, scoped, tag = 'internal scratch']
  #allocation2 [shape = 'f32[8,4,128]{2,1,0:T(4,128)}', space=vmem, size = 0x4000, scoped, tag = 'scratch operand']
  %s0 = inlined_call_operand.vmem [shape: s32[4,1], index: 0, kind: input, shape index: {}]
  %s1 = inlined_call_operand.vmem [shape: f32[8,4,48], index: 1, kind: input, shape index: {}]
  %s2 = inlined_call_operand.vmem [shape: f32[48,128], index: 2, kind: input, shape index: {}]
  %s3 = inlined_call_operand.vmem [shape: f32[2,16,64], index: 3, kind: input, shape index: {}]
  %s4 = inlined_call_operand.vmem [shape: f32[1,128], index: 4, kind: input, shape index: {}]
  %s5 = inlined_call_operand.vmem [shape: f32[8,4,16], index: 5, kind: output, shape index: {0}]
  %s6 = inlined_call_operand.vmem [shape: f32[8,4,16], index: 6, kind: output, shape index: {1}]
  %7 = xla_tuple %s5, %s6
  %s8 = sld [smem:[#allocation0]]
  $region38: #{esim_forward.3} parent=0
    _
  %s10 = ssub.s32 1, %s8
  %s11 = scalar_select 0, %s10, %s8
  // Predicated region
  $region2: #{esim_forward.3} parent=0 // pred_check
    _
  $region3: #{esim_forward.3} parent=0 // pred_check_branch
    %13 = sbr.rel (0) target = $region5
  $region4: #{esim_forward.3} parent=0 // pred_region
    _
  $region5: #{esim_forward.3} parent=0 // pred_fallthru
    _
  // Predicated region
  $region6: #{esim_forward.3} parent=0 // pred_check
    _
  $region7: #{esim_forward.3} parent=0 // pred_check_branch
    %15 = sbr.rel (0) target = $region9
  $region8: #{esim_forward.3} parent=0 // pred_region
    _
  $region9: #{esim_forward.3} parent=0 // pred_fallthru
    _
  // Predicated region
  $region10: #{esim_forward.3} parent=0 // pred_check
    _
  $region11: #{esim_forward.3} parent=0 // pred_check_branch
    %17 = sbr.rel (0) target = $region13
  $region12: #{esim_forward.3} parent=0 // pred_region
    _
  $region13: #{esim_forward.3} parent=0 // pred_fallthru
    _
  // Predicated region
  $region14: #{esim_forward.3} parent=0 // pred_check
    _
  $region15: #{esim_forward.3} parent=0 // pred_check_branch
    %19 = sbr.rel (0) target = $region17
  $region16: #{esim_forward.3} parent=0 // pred_region
    _
  $region17: #{esim_forward.3} parent=0 // pred_fallthru
    _
  // Predicated region
  $region18: #{esim_forward.3} parent=0 // pred_check
    _
  $region19: #{esim_forward.3} parent=0 // pred_check_branch
    %21 = sbr.rel (0) target = $region21
  $region20: #{esim_forward.3} parent=0 // pred_region
    _
  $region21: #{esim_forward.3} parent=0 // pred_fallthru
    _
  %v22 = vld [vmem:[%s1] sm:$0xf]
  %v23 = vld [vmem:[%s1 + $0x4] sm:$0xf]
  %v24 = vld [vmem:[%s1 + $0x8] sm:$0xf]
  %v25 = vld [vmem:[%s1 + $0xc] sm:$0xf]
  %v26 = vld [vmem:[%s1 + $0x10] sm:$0xf]
  %v27 = vld [vmem:[%s1 + $0x14] sm:$0xf]
  %v28 = vld [vmem:[%s1 + $0x18] sm:$0xf]
  %v29 = vld [vmem:[%s1 + $0x1c] sm:$0xf]
  %v30 = vld [vmem:[%s2] sm:$0xff]
  %v31 = vld [vmem:[%s2 + $0x8] sm:$0xff]
  %v32 = vld [vmem:[%s2 + $0x10] sm:$0xff]
  %v33 = vld [vmem:[%s2 + $0x18] sm:$0xff]
  %v34 = vld [vmem:[%s2 + $0x20] sm:$0xff]
  %v35 = vld [vmem:[%s2 + $0x28] sm:$0xff]
  %v36 = vld [vmem:[%s4] sm:$0x1]
  %v38 = vlaneseq
  %v39 = vshrl.u32 %v38, 7
  %v40 = vsub.s32 0, %v39
  %v41 = vrot.slane %v36, %v40
  %v50 = vcombine.low %v22, %v23
  %v51 = vcombine.low %v24, %v25
  %v52 = vcombine.low %v26, %v27
  %v53 = vcombine.low %v28, %v29
  %v54 = vcombine.low %v41, %v41
  %vm56 = vcmask 392192
  %v57 = vsel %vm56, %v50, 0
  %v59 = vsel %vm56, %v51, 0
  %v61 = vsel %vm56, %v52, 0
  %v63 = vsel %vm56, %v53, 0
  %65 = vmatprep.subr.mxu0 0.0
  %66 = vmatpush1.msra.mxu0 %v30
  %67 = vmatprep.subr.mxu0 0.0
  %68 = vmatpush1.msra.mxu0 %v31
  %69 = vmatprep.subr.mxu0 0.0
  %70 = vmatpush1.msra.mxu0 %v32
  %71 = vmatprep.subr.mxu0 0.0
  %72 = vmatpush1.msra.mxu0 %v33
  %73 = vmatprep.subr.mxu0 0.0
  %74 = vmatpush1.msra.mxu0 %v34
  %75 = vmatprep.subr.mxu0 0.0
  %76 = vmatpush1.msra.mxu0 %v35
  %77 = vmatprep.subr.mxu0 0.0
  %78 = vmatpush1.msra.mxu0 0.0
  %79 = vmatprep.subr.mxu0 0.0
  %80 = vmatpush1.msra.mxu0 0.0
  %81 = vmatprep.subr.mxu0 0.0
  %82 = vmatpush1.msra.mxu0 0.0
  %83 = vmatprep.subr.mxu0 0.0
  %84 = vmatpush1.msra.mxu0 0.0
  %85 = vmatprep.subr.mxu0 0.0
  %86 = vmatpush1.msra.mxu0 0.0
  %87 = vmatprep.subr.mxu0 0.0
  %88 = vmatpush1.msra.mxu0 0.0
  %89 = vmatprep.subr.mxu0 0.0
  %90 = vmatpush1.msra.mxu0 0.0
  %91 = vmatprep.subr.mxu0 0.0
  %92 = vmatpush1.msra.mxu0 0.0
  %93 = vmatprep.subr.mxu0 0.0
  %94 = vmatpush1.msra.mxu0 0.0
  %95 = vmatprep.subr.mxu0 0.0
  %96 = vmatpush1.msra.mxu0 0.0
  %97 = vmatprep.subr.mxu0 0.0
  %98 = vmatpush1.msra.mxu0 0.0
  %99 = vmatprep.subr.mxu0 0.0
  %100 = vmatpush1.msra.mxu0 0.0
  %101 = vmatprep.subr.mxu0 0.0
  %102 = vmatpush1.msra.mxu0 0.0
  %103 = vmatprep.subr.mxu0 0.0
  %104 = vmatpush1.msra.mxu0 0.0
  %105 = vmatprep.subr.mxu0 0.0
  %106 = vmatpush1.msra.mxu0 0.0
  %107 = vmatprep.subr.mxu0 0.0
  %108 = vmatpush1.msra.mxu0 0.0
  %109 = vmatprep.subr.mxu0 0.0
  %110 = vmatpush1.msra.mxu0 0.0
  %111 = vmatprep.subr.mxu0 0.0
  %112 = vmatpush1.msra.mxu0 0.0
  %113 = vmatprep.subr.mxu0 0.0
  %114 = vmatpush1.msra.mxu0 0.0
  %115 = vmatprep.subr.mxu0 0.0
  %116 = vmatpush1.msra.mxu0 0.0
  %117 = vmatprep.subr.mxu0 0.0
  %118 = vmatpush1.msra.mxu0 0.0
  %119 = vmatprep.subr.mxu0 0.0
  %120 = vmatpush1.msra.mxu0 0.0
  %121 = vmatprep.subr.mxu0 0.0
  %122 = vmatpush1.msra.mxu0 0.0
  %123 = vmatprep.subr.mxu0 0.0
  %124 = vmatpush1.msra.mxu0 0.0
  %125 = vmatprep.subr.mxu0 0.0
  %126 = vmatpush1.msra.mxu0 0.0
  %127 = vmatprep.subr.mxu0 0.0
  %128 = vmatpush1.msra.mxu0 0.0
  %129 = vmatprep.mubr.f32.mxu0 0.0
  %130 = vmatmul.mubr.f32.gmra.mrb[0].mxu0 %v57
  %v131 = vpop.f32.mrb[0].mxu0
  %v132 = vadd.f32 %v54, %v131
  %v133 = vpop.f32.mrb[0].mxu0
  %134 = vmatprep.mubr.f32.mxu0 0.0
  %135 = vmatmul.mubr.f32.gmra.mrb[0].mxu0 %v59
  %v136 = vpop.f32.mrb[0].mxu0
  %v137 = vadd.f32 %v54, %v136
  %v138 = vpop.f32.mrb[0].mxu0
  %139 = vmatprep.mubr.f32.mxu0 0.0
  %140 = vmatmul.mubr.f32.gmra.mrb[0].mxu0 %v61
  %v141 = vpop.f32.mrb[0].mxu0
  %v142 = vadd.f32 %v54, %v141
  %v143 = vpop.f32.mrb[0].mxu0
  %144 = vmatprep.mubr.f32.mxu0 0.0
  %145 = vmatmul.mubr.f32.gmra.mrb[0].mxu0 %v63
  %v146 = vpop.f32.mrb[0].mxu0
  %v147 = vadd.f32 %v54, %v146
  %v148 = vpop.f32.mrb[0].mxu0
  %149 = vdwg.mxu0
  %v154 = vcombine.high %v132, %v132
  %v155 = vcombine.high %v137, %v137
  %v156 = vcombine.high %v142, %v142
  %v157 = vcombine.high %v147, %v147
  %162 = vst [vmem:[#allocation2] sm:$0xf] %v132
  %163 = vst [vmem:[#allocation2 + $0x4] sm:$0xf] %v154
  %164 = vst [vmem:[#allocation2 + $0x8] sm:$0xf] %v137
  %165 = vst [vmem:[#allocation2 + $0xc] sm:$0xf] %v155
  %166 = vst [vmem:[#allocation2 + $0x10] sm:$0xf] %v142
  %167 = vst [vmem:[#allocation2 + $0x14] sm:$0xf] %v156
  %168 = vst [vmem:[#allocation2 + $0x18] sm:$0xf] %v147
  %169 = vst [vmem:[#allocation2 + $0x1c] sm:$0xf] %v157
  %v170 = vld [vmem:[%s3] sm:$0xff]
  %v171 = vld [vmem:[%s3 + $0x8] sm:$0xff]
  %s172 = scalar_lea.vmem %s3, 16
  %v173 = vld [vmem:[%s172] sm:$0xff]
  %v174 = vld [vmem:[%s172 + $0x8] sm:$0xff]
  %v175 = vld [vmem:[%s0] sm:$0xf]
  %v176 = vld [vmem:[#allocation2] sm:$0xf]
  %s177 = scalar_lea.vmem [#allocation2], 28
  %v178 = vld [vmem:[%s177] sm:$0xf]
  %vm179 = vcmask 130048
  %v181 = vsel %vm179, 0.0, 0
  %183 = vmatprep.subr.mxu0 0.0
  %184 = vmatpush1.msra.mxu0 %v170
  %185 = vmatprep.subr.mxu0 0.0
  %186 = vmatpush1.msra.mxu0 %v171
  %187 = vmatprep.subr.mxu0 0.0
  %188 = vmatpush1.msra.mxu0 0.0
  %189 = vmatprep.subr.mxu0 0.0
  %190 = vmatpush1.msra.mxu0 0.0
  %191 = vmatprep.subr.mxu0 0.0
  %192 = vmatpush1.msra.mxu0 0.0
  %193 = vmatprep.subr.mxu0 0.0
  %194 = vmatpush1.msra.mxu0 0.0
  %195 = vmatprep.subr.mxu0 0.0
  %196 = vmatpush1.msra.mxu0 0.0
  %197 = vmatprep.subr.mxu0 0.0
  %198 = vmatpush1.msra.mxu0 0.0
  %199 = vmatprep.subr.mxu0 0.0
  %200 = vmatpush1.msra.mxu0 0.0
  %201 = vmatprep.subr.mxu0 0.0
  %202 = vmatpush1.msra.mxu0 0.0
  %203 = vmatprep.subr.mxu0 0.0
  %204 = vmatpush1.msra.mxu0 0.0
  %205 = vmatprep.subr.mxu0 0.0
  %206 = vmatpush1.msra.mxu0 0.0
  %207 = vmatprep.subr.mxu0 0.0
  %208 = vmatpush1.msra.mxu0 0.0
  %209 = vmatprep.subr.mxu0 0.0
  %210 = vmatpush1.msra.mxu0 0.0
  %211 = vmatprep.subr.mxu0 0.0
  %212 = vmatpush1.msra.mxu0 0.0
  %213 = vmatprep.subr.mxu0 0.0
  %214 = vmatpush1.msra.mxu0 0.0
  %215 = vmatprep.subr.mxu0 0.0
  %216 = vmatpush1.msra.mxu0 0.0
  %217 = vmatprep.subr.mxu0 0.0
  %218 = vmatpush1.msra.mxu0 0.0
  %219 = vmatprep.subr.mxu0 0.0
  %220 = vmatpush1.msra.mxu0 0.0
  %221 = vmatprep.subr.mxu0 0.0
  %222 = vmatpush1.msra.mxu0 0.0
  %223 = vmatprep.subr.mxu0 0.0
  %224 = vmatpush1.msra.mxu0 0.0
  %225 = vmatprep.subr.mxu0 0.0
  %226 = vmatpush1.msra.mxu0 0.0
  %227 = vmatprep.subr.mxu0 0.0
  %228 = vmatpush1.msra.mxu0 0.0
  %229 = vmatprep.subr.mxu0 0.0
  %230 = vmatpush1.msra.mxu0 0.0
  %231 = vmatprep.subr.mxu0 0.0
  %232 = vmatpush1.msra.mxu0 0.0
  %233 = vmatprep.subr.mxu0 0.0
  %234 = vmatpush1.msra.mxu0 0.0
  %235 = vmatprep.subr.mxu0 0.0
  %236 = vmatpush1.msra.mxu0 0.0
  %237 = vmatprep.subr.mxu0 0.0
  %238 = vmatpush1.msra.mxu0 0.0
  %239 = vmatprep.subr.mxu0 0.0
  %240 = vmatpush1.msra.mxu0 0.0
  %241 = vmatprep.subr.mxu0 0.0
  %242 = vmatpush1.msra.mxu0 0.0
  %243 = vmatprep.subr.mxu0 0.0
  %244 = vmatpush1.msra.mxu0 0.0
  %245 = vmatprep.subr.mxu0 0.0
  %246 = vmatpush1.msra.mxu0 0.0
  %247 = vmatprep.mubr.f32.mxu0 0.0
  %248 = vmatmul.mubr.f32.gmra.mrb[0].mxu0 %v181
  %v249 = vpop.f32.mrb[0].mxu0
  %v250 = vadd.f32 0.0, %v249
  %v251 = vpop.f32.mrb[0].mxu0
  %252 = vdwg.mxu0
  %v253 = vadd.f32 %v176, %v250
  %254 = vmatprep.subr.mxu0 0.0
  %255 = vmatpush1.msra.mxu0 %v173
  %256 = vmatprep.subr.mxu0 0.0
  %257 = vmatpush1.msra.mxu0 %v174
  %258 = vmatprep.subr.mxu0 0.0
  %259 = vmatpush1.msra.mxu0 0.0
  %260 = vmatprep.subr.mxu0 0.0
  %261 = vmatpush1.msra.mxu0 0.0
  %262 = vmatprep.subr.mxu0 0.0
  %263 = vmatpush1.msra.mxu0 0.0
  %264 = vmatprep.subr.mxu0 0.0
  %265 = vmatpush1.msra.mxu0 0.0
  %266 = vmatprep.subr.mxu0 0.0
  %267 = vmatpush1.msra.mxu0 0.0
  %268 = vmatprep.subr.mxu0 0.0
  %269 = vmatpush1.msra.mxu0 0.0
  %270 = vmatprep.subr.mxu0 0.0
  %271 = vmatpush1.msra.mxu0 0.0
  %272 = vmatprep.subr.mxu0 0.0
  %273 = vmatpush1.msra.mxu0 0.0
  %274 = vmatprep.subr.mxu0 0.0
  %275 = vmatpush1.msra.mxu0 0.0
  %276 = vmatprep.subr.mxu0 0.0
  %277 = vmatpush1.msra.mxu0 0.0
  %278 = vmatprep.subr.mxu0 0.0
  %279 = vmatpush1.msra.mxu0 0.0
  %280 = vmatprep.subr.mxu0 0.0
  %281 = vmatpush1.msra.mxu0 0.0
  %282 = vmatprep.subr.mxu0 0.0
  %283 = vmatpush1.msra.mxu0 0.0
  %284 = vmatprep.subr.mxu0 0.0
  %285 = vmatpush1.msra.mxu0 0.0
  %286 = vmatprep.subr.mxu0 0.0
  %287 = vmatpush1.msra.mxu0 0.0
  %288 = vmatprep.subr.mxu0 0.0
  %289 = vmatpush1.msra.mxu0 0.0
  %290 = vmatprep.subr.mxu0 0.0
  %291 = vmatpush1.msra.mxu0 0.0
  %292 = vmatprep.subr.mxu0 0.0
  %293 = vmatpush1.msra.mxu0 0.0
  %294 = vmatprep.subr.mxu0 0.0
  %295 = vmatpush1.msra.mxu0 0.0
  %296 = vmatprep.subr.mxu0 0.0
  %297 = vmatpush1.msra.mxu0 0.0
  %298 = vmatprep.subr.mxu0 0.0
  %299 = vmatpush1.msra.mxu0 0.0
  %300 = vmatprep.subr.mxu0 0.0
  %301 = vmatpush1.msra.mxu0 0.0
  %302 = vmatprep.subr.mxu0 0.0
  %303 = vmatpush1.msra.mxu0 0.0
  %304 = vmatprep.subr.mxu0 0.0
  %305 = vmatpush1.msra.mxu0 0.0
  %306 = vmatprep.subr.mxu0 0.0
  %307 = vmatpush1.msra.mxu0 0.0
  %308 = vmatprep.subr.mxu0 0.0
  %309 = vmatpush1.msra.mxu0 0.0
  %310 = vmatprep.subr.mxu0 0.0
  %311 = vmatpush1.msra.mxu0 0.0
  %312 = vmatprep.subr.mxu0 0.0
  %313 = vmatpush1.msra.mxu0 0.0
  %314 = vmatprep.subr.mxu0 0.0
  %315 = vmatpush1.msra.mxu0 0.0
  %316 = vmatprep.subr.mxu0 0.0
  %317 = vmatpush1.msra.mxu0 0.0
  %318 = vmatprep.mubr.f32.mxu0 0.0
  %319 = vmatmul.mubr.f32.gmra.mrb[0].mxu0 %v181
  %v320 = vpop.f32.mrb[0].mxu0
  %v321 = vadd.f32 0.0, %v320
  %v322 = vpop.f32.mrb[0].mxu0
  %323 = vdwg.mxu0
  %325 = vrot.lane.b32.xlu0 %v321, 64
  %v326 = vpop.permute.xlu0 %325
  %v328 = vadd.f32 %v178, %v326
  %v329 = vxor.u32 %v253, 2147483648
  %v330 = vmul.f32 %v329, 1.442695
  %v331 = vpow.pop %v330
  %v332 = vadd.f32 %v331, 1.0
  %v333 = vrcp.pop %v332
  %v334 = vmul.f32 1.0, %v333
  %v335 = vtanh.pop %v253
  %v336 = vmul.f32 %v334, 0.0
  %338 = vrot.lane.b32.xlu0 %v335, 96
  %v339 = vpop.permute.xlu0 %338
  %v341 = vmul.f32 %v334, %v339
  %343 = vrot.lane.b32.xlu0 %v341, 16
  %v344 = vpop.permute.xlu0 %343
  %v346 = vadd.f32 %v336, %v344
  %v347 = vtanh.pop %v346
  %349 = vrot.lane.b32.xlu0 %v347, 32
  %v350 = vpop.permute.xlu0 %349
  %v352 = vmul.f32 %v334, %v350
  %v353 = vxor.u32 %v328, 2147483648
  %v354 = vmul.f32 %v353, 1.442695
  %v355 = vpow.pop %v354
  %v356 = vadd.f32 %v355, 1.0
  %v357 = vrcp.pop %v356
  %v358 = vmul.f32 1.0, %v357
  %v359 = vtanh.pop %v328
  %v360 = vmul.f32 %v358, 0.0
  %362 = vrot.lane.b32.xlu0 %v359, 96
  %v363 = vpop.permute.xlu0 %362
  %v365 = vmul.f32 %v358, %v363
  %367 = vrot.lane.b32.xlu0 %v365, 16
  %v368 = vpop.permute.xlu0 %367
  %v370 = vadd.f32 %v360, %v368
  %v371 = vtanh.pop %v370
  %373 = vrot.lane.b32.xlu0 %v371, 32
  %v374 = vpop.permute.xlu0 %373
  %v376 = vmul.f32 %v358, %v374
  %vm377 = vcmp.gt.s32.totalorder %v175, 0
  %vm378 = vcmp.gt.s32.totalorder %v175, 7
  %v379 = vsel %vm377, 1, 0
  %380 = vset.pattern.permute.xlu0 0
  %381 = vperm.xlu0 %380, %v379
  %v382 = vpop.permute.xlu0 %381
  %vm383 = vcmp.eq.s32.totalorder %v382, 1
  %v384 = vsel %vm383, %v352, 0.0
  %v385 = vsel %vm383, %v346, 0.0
  %v386 = vsel %vm378, 1, 0
  %387 = vset.pattern.permute.xlu0 0
  %388 = vperm.xlu0 %387, %v386
  %v389 = vpop.permute.xlu0 %388
  %vm390 = vcmp.eq.s32.totalorder %v389, 1
  %v391 = vsel %vm390, %v376, 0.0
  %v392 = vsel %vm390, %v370, 0.0
  %394 = vrot.lane.b32.xlu0 %v384, 80
  %v395 = vpop.permute.xlu0 %394
  %vm397 = vcmask 125952
  %398 = vst.msk [vmem:[%s5] sm:$0xf] %vm397, %v395
  %400 = vrot.lane.b32.xlu0 %v391, 16
  %v401 = vpop.permute.xlu0 %400
  %s403 = scalar_lea.vmem %s6, 28
  %404 = vst.msk [vmem:[%s403] sm:$0xf] %vm397, %v401
  %s405 = scalar_lea.vmem [#allocation2], 4
  %v406 = vld [vmem:[%s405] sm:$0xf]
  %s407 = scalar_lea.vmem [#allocation2], 24
  %v408 = vld [vmem:[%s407] sm:$0xf]
  %v409 = vsel %vm179, %v395, 0
  %411 = vmatprep.subr.mxu0 0.0
  %412 = vmatpush1.msra.mxu0 %v170
  %413 = vmatprep.subr.mxu0 0.0
  %414 = vmatpush1.msra.mxu0 %v171
  %415 = vmatprep.subr.mxu0 0.0
  %416 = vmatpush1.msra.mxu0 0.0
  %417 = vmatprep.subr.mxu0 0.0
  %418 = vmatpush1.msra.mxu0 0.0
  %419 = vmatprep.subr.mxu0 0.0
  %420 = vmatpush1.msra.mxu0 0.0
  %421 = vmatprep.subr.mxu0 0.0
  %422 = vmatpush1.msra.mxu0 0.0
  %423 = vmatprep.subr.mxu0 0.0
  %424 = vmatpush1.msra.mxu0 0.0
  %425 = vmatprep.subr.mxu0 0.0
  %426 = vmatpush1.msra.mxu0 0.0
  %427 = vmatprep.subr.mxu0 0.0
  %428 = vmatpush1.msra.mxu0 0.0
  %429 = vmatprep.subr.mxu0 0.0
  %430 = vmatpush1.msra.mxu0 0.0
  %431 = vmatprep.subr.mxu0 0.0
  %432 = vmatpush1.msra.mxu0 0.0
  %433 = vmatprep.subr.mxu0 0.0
  %434 = vmatpush1.msra.mxu0 0.0
  %435 = vmatprep.subr.mxu0 0.0
  %436 = vmatpush1.msra.mxu0 0.0
  %437 = vmatprep.subr.mxu0 0.0
  %438 = vmatpush1.msra.mxu0 0.0
  %439 = vmatprep.subr.mxu0 0.0
  %440 = vmatpush1.msra.mxu0 0.0
  %441 = vmatprep.subr.mxu0 0.0
  %442 = vmatpush1.msra.mxu0 0.0
  %443 = vmatprep.subr.mxu0 0.0
  %444 = vmatpush1.msra.mxu0 0.0
  %445 = vmatprep.subr.mxu0 0.0
  %446 = vmatpush1.msra.mxu0 0.0
  %447 = vmatprep.subr.mxu0 0.0
  %448 = vmatpush1.msra.mxu0 0.0
  %449 = vmatprep.subr.mxu0 0.0
  %450 = vmatpush1.msra.mxu0 0.0
  %451 = vmatprep.subr.mxu0 0.0
  %452 = vmatpush1.msra.mxu0 0.0
  %453 = vmatprep.subr.mxu0 0.0
  %454 = vmatpush1.msra.mxu0 0.0
  %455 = vmatprep.subr.mxu0 0.0
  %456 = vmatpush1.msra.mxu0 0.0
  %457 = vmatprep.subr.mxu0 0.0
  %458 = vmatpush1.msra.mxu0 0.0
  %459 = vmatprep.subr.mxu0 0.0
  %460 = vmatpush1.msra.mxu0 0.0
  %461 = vmatprep.subr.mxu0 0.0
  %462 = vmatpush1.msra.mxu0 0.0
  %463 = vmatprep.subr.mxu0 0.0
  %464 = vmatpush1.msra.mxu0 0.0
  %465 = vmatprep.subr.mxu0 0.0
  %466 = vmatpush1.msra.mxu0 0.0
  %467 = vmatprep.subr.mxu0 0.0
  %468 = vmatpush1.msra.mxu0 0.0
  %469 = vmatprep.subr.mxu0 0.0
  %470 = vmatpush1.msra.mxu0 0.0
  %471 = vmatprep.subr.mxu0 0.0
  %472 = vmatpush1.msra.mxu0 0.0
  %473 = vmatprep.subr.mxu0 0.0
  %474 = vmatpush1.msra.mxu0 0.0
  %475 = vmatprep.mubr.f32.mxu0 0.0
  %476 = vmatmul.mubr.f32.gmra.mrb[0].mxu0 %v409
  %v477 = vpop.f32.mrb[0].mxu0
  %v478 = vadd.f32 0.0, %v477
  %v479 = vpop.f32.mrb[0].mxu0
  %480 = vdwg.mxu0
  %v481 = vadd.f32 %v406, %v478
  %v482 = vsel %vm179, %v401, 0
  %484 = vmatprep.subr.mxu0 0.0
  %485 = vmatpush1.msra.mxu0 %v173
  %486 = vmatprep.subr.mxu0 0.0
  %487 = vmatpush1.msra.mxu0 %v174
  %488 = vmatprep.subr.mxu0 0.0
  %489 = vmatpush1.msra.mxu0 0.0
  %490 = vmatprep.subr.mxu0 0.0
  %491 = vmatpush1.msra.mxu0 0.0
  %492 = vmatprep.subr.mxu0 0.0
  %493 = vmatpush1.msra.mxu0 0.0
  %494 = vmatprep.subr.mxu0 0.0
  %495 = vmatpush1.msra.mxu0 0.0
  %496 = vmatprep.subr.mxu0 0.0
  %497 = vmatpush1.msra.mxu0 0.0
  %498 = vmatprep.subr.mxu0 0.0
  %499 = vmatpush1.msra.mxu0 0.0
  %500 = vmatprep.subr.mxu0 0.0
  %501 = vmatpush1.msra.mxu0 0.0
  %502 = vmatprep.subr.mxu0 0.0
  %503 = vmatpush1.msra.mxu0 0.0
  %504 = vmatprep.subr.mxu0 0.0
  %505 = vmatpush1.msra.mxu0 0.0
  %506 = vmatprep.subr.mxu0 0.0
  %507 = vmatpush1.msra.mxu0 0.0
  %508 = vmatprep.subr.mxu0 0.0
  %509 = vmatpush1.msra.mxu0 0.0
  %510 = vmatprep.subr.mxu0 0.0
  %511 = vmatpush1.msra.mxu0 0.0
  %512 = vmatprep.subr.mxu0 0.0
  %513 = vmatpush1.msra.mxu0 0.0
  %514 = vmatprep.subr.mxu0 0.0
  %515 = vmatpush1.msra.mxu0 0.0
  %516 = vmatprep.subr.mxu0 0.0
  %517 = vmatpush1.msra.mxu0 0.0
  %518 = vmatprep.subr.mxu0 0.0
  %519 = vmatpush1.msra.mxu0 0.0
  %520 = vmatprep.subr.mxu0 0.0
  %521 = vmatpush1.msra.mxu0 0.0
  %522 = vmatprep.subr.mxu0 0.0
  %523 = vmatpush1.msra.mxu0 0.0
  %524 = vmatprep.subr.mxu0 0.0
  %525 = vmatpush1.msra.mxu0 0.0
  %526 = vmatprep.subr.mxu0 0.0
  %527 = vmatpush1.msra.mxu0 0.0
  %528 = vmatprep.subr.mxu0 0.0
  %529 = vmatpush1.msra.mxu0 0.0
  %530 = vmatprep.subr.mxu0 0.0
  %531 = vmatpush1.msra.mxu0 0.0
  %532 = vmatprep.subr.mxu0 0.0
  %533 = vmatpush1.msra.mxu0 0.0
  %534 = vmatprep.subr.mxu0 0.0
  %535 = vmatpush1.msra.mxu0 0.0
  %536 = vmatprep.subr.mxu0 0.0
  %537 = vmatpush1.msra.mxu0 0.0
  %538 = vmatprep.subr.mxu0 0.0
  %539 = vmatpush1.msra.mxu0 0.0
  %540 = vmatprep.subr.mxu0 0.0
  %541 = vmatpush1.msra.mxu0 0.0
  %542 = vmatprep.subr.mxu0 0.0
  %543 = vmatpush1.msra.mxu0 0.0
  %544 = vmatprep.subr.mxu0 0.0
  %545 = vmatpush1.msra.mxu0 0.0
  %546 = vmatprep.subr.mxu0 0.0
  %547 = vmatpush1.msra.mxu0 0.0
  %548 = vmatprep.mubr.f32.mxu0 0.0
  %549 = vmatmul.mubr.f32.gmra.mrb[0].mxu0 %v482
  %v550 = vpop.f32.mrb[0].mxu0
  %v551 = vadd.f32 0.0, %v550
  %v552 = vpop.f32.mrb[0].mxu0
  %553 = vdwg.mxu0
  %555 = vrot.lane.b32.xlu0 %v551, 64
  %v556 = vpop.permute.xlu0 %555
  %v558 = vadd.f32 %v408, %v556
  %v559 = vxor.u32 %v481, 2147483648
  %v560 = vmul.f32 %v559, 1.442695
  %v561 = vpow.pop %v560
  %v562 = vadd.f32 %v561, 1.0
  %v563 = vrcp.pop %v562
  %v564 = vmul.f32 1.0, %v563
  %v565 = vtanh.pop %v481
  %v566 = vmul.f32 %v564, %v385
  %568 = vrot.lane.b32.xlu0 %v565, 96
  %v569 = vpop.permute.xlu0 %568
  %v571 = vmul.f32 %v564, %v569
  %573 = vrot.lane.b32.xlu0 %v571, 16
  %v574 = vpop.permute.xlu0 %573
  %v576 = vadd.f32 %v566, %v574
  %v577 = vtanh.pop %v576
  %579 = vrot.lane.b32.xlu0 %v577, 32
  %v580 = vpop.permute.xlu0 %579
  %v582 = vmul.f32 %v564, %v580
  %v583 = vxor.u32 %v558, 2147483648
  %v584 = vmul.f32 %v583, 1.442695
  %v585 = vpow.pop %v584
  %v586 = vadd.f32 %v585, 1.0
  %v587 = vrcp.pop %v586
  %v588 = vmul.f32 1.0, %v587
  %v589 = vtanh.pop %v558
  %v590 = vmul.f32 %v588, %v392
  %592 = vrot.lane.b32.xlu0 %v589, 96
  %v593 = vpop.permute.xlu0 %592
  %v595 = vmul.f32 %v588, %v593
  %597 = vrot.lane.b32.xlu0 %v595, 16
  %v598 = vpop.permute.xlu0 %597
  %v600 = vadd.f32 %v590, %v598
  %v601 = vtanh.pop %v600
  %603 = vrot.lane.b32.xlu0 %v601, 32
  %v604 = vpop.permute.xlu0 %603
  %v606 = vmul.f32 %v588, %v604
  %vm607 = vcmp.gt.s32.totalorder %v175, 1
  %vm608 = vcmp.gt.s32.totalorder %v175, 6
  %v609 = vsel %vm607, 1, 0
  %610 = vset.pattern.permute.xlu0 0
  %611 = vperm.xlu0 %610, %v609
  %v612 = vpop.permute.xlu0 %611
  %vm613 = vcmp.eq.s32.totalorder %v612, 1
  %v614 = vsel %vm613, %v582, %v384
  %v615 = vsel %vm613, %v576, %v385
  %v616 = vsel %vm608, 1, 0
  %617 = vset.pattern.permute.xlu0 0
  %618 = vperm.xlu0 %617, %v616
  %v619 = vpop.permute.xlu0 %618
  %vm620 = vcmp.eq.s32.totalorder %v619, 1
  %v621 = vsel %vm620, %v606, %v391
  %v622 = vsel %vm620, %v600, %v392
  %v623 = vsel %vm613, %v582, 0.0
  %625 = vrot.lane.b32.xlu0 %v623, 80
  %v626 = vpop.permute.xlu0 %625
  %s628 = scalar_lea.vmem %s5, 4
  %629 = vst.msk [vmem:[%s628] sm:$0xf] %vm397, %v626
  %v630 = vsel %vm620, %v606, 0.0
  %632 = vrot.lane.b32.xlu0 %v630, 16
  %v633 = vpop.permute.xlu0 %632
  %s635 = scalar_lea.vmem %s6, 24
  %636 = vst.msk [vmem:[%s635] sm:$0xf] %vm397, %v633
  %s637 = scalar_lea.vmem [#allocation2], 8
  %v638 = vld [vmem:[%s637] sm:$0xf]
  %s639 = scalar_lea.vmem [#allocation2], 20
  %v640 = vld [vmem:[%s639] sm:$0xf]
  %642 = vrot.lane.b32.xlu0 %v614, 80
  %v643 = vpop.permute.xlu0 %642
  %v644 = vsel %vm179, %v643, 0
  %646 = vmatprep.subr.mxu0 0.0
  %647 = vmatpush1.msra.mxu0 %v170
  %648 = vmatprep.subr.mxu0 0.0
  %649 = vmatpush1.msra.mxu0 %v171
  %650 = vmatprep.subr.mxu0 0.0
  %651 = vmatpush1.msra.mxu0 0.0
  %652 = vmatprep.subr.mxu0 0.0
  %653 = vmatpush1.msra.mxu0 0.0
  %654 = vmatprep.subr.mxu0 0.0
  %655 = vmatpush1.msra.mxu0 0.0
  %656 = vmatprep.subr.mxu0 0.0
  %657 = vmatpush1.msra.mxu0 0.0
  %658 = vmatprep.subr.mxu0 0.0
  %659 = vmatpush1.msra.mxu0 0.0
  %660 = vmatprep.subr.mxu0 0.0
  %661 = vmatpush1.msra.mxu0 0.0
  %662 = vmatprep.subr.mxu0 0.0
  %663 = vmatpush1.msra.mxu0 0.0
  %664 = vmatprep.subr.mxu0 0.0
  %665 = vmatpush1.msra.mxu0 0.0
  %666 = vmatprep.subr.mxu0 0.0
  %667 = vmatpush1.msra.mxu0 0.0
  %668 = vmatprep.subr.mxu0 0.0
  %669 = vmatpush1.msra.mxu0 0.0
  %670 = vmatprep.subr.mxu0 0.0
  %671 = vmatpush1.msra.mxu0 0.0
  %672 = vmatprep.subr.mxu0 0.0
  %673 = vmatpush1.msra.mxu0 0.0
  %674 = vmatprep.subr.mxu0 0.0
  %675 = vmatpush1.msra.mxu0 0.0
  %676 = vmatprep.subr.mxu0 0.0
  %677 = vmatpush1.msra.mxu0 0.0
  %678 = vmatprep.subr.mxu0 0.0
  %679 = vmatpush1.msra.mxu0 0.0
  %680 = vmatprep.subr.mxu0 0.0
  %681 = vmatpush1.msra.mxu0 0.0
  %682 = vmatprep.subr.mxu0 0.0
  %683 = vmatpush1.msra.mxu0 0.0
  %684 = vmatprep.subr.mxu0 0.0
  %685 = vmatpush1.msra.mxu0 0.0
  %686 = vmatprep.subr.mxu0 0.0
  %687 = vmatpush1.msra.mxu0 0.0
  %688 = vmatprep.subr.mxu0 0.0
  %689 = vmatpush1.msra.mxu0 0.0
  %690 = vmatprep.subr.mxu0 0.0
  %691 = vmatpush1.msra.mxu0 0.0
  %692 = vmatprep.subr.mxu0 0.0
  %693 = vmatpush1.msra.mxu0 0.0
  %694 = vmatprep.subr.mxu0 0.0
  %695 = vmatpush1.msra.mxu0 0.0
  %696 = vmatprep.subr.mxu0 0.0
  %697 = vmatpush1.msra.mxu0 0.0
  %698 = vmatprep.subr.mxu0 0.0
  %699 = vmatpush1.msra.mxu0 0.0
  %700 = vmatprep.subr.mxu0 0.0
  %701 = vmatpush1.msra.mxu0 0.0
  %702 = vmatprep.subr.mxu0 0.0
  %703 = vmatpush1.msra.mxu0 0.0
  %704 = vmatprep.subr.mxu0 0.0
  %705 = vmatpush1.msra.mxu0 0.0
  %706 = vmatprep.subr.mxu0 0.0
  %707 = vmatpush1.msra.mxu0 0.0
  %708 = vmatprep.subr.mxu0 0.0
  %709 = vmatpush1.msra.mxu0 0.0
  %710 = vmatprep.mubr.f32.mxu0 0.0
  %711 = vmatmul.mubr.f32.gmra.mrb[0].mxu0 %v644
  %v712 = vpop.f32.mrb[0].mxu0
  %v713 = vadd.f32 0.0, %v712
  %v714 = vpop.f32.mrb[0].mxu0
  %715 = vdwg.mxu0
  %v716 = vadd.f32 %v638, %v713
  %718 = vrot.lane.b32.xlu0 %v621, 16
  %v719 = vpop.permute.xlu0 %718
  %v720 = vsel %vm179, %v719, 0
  %722 = vmatprep.subr.mxu0 0.0
  %723 = vmatpush1.msra.mxu0 %v173
  %724 = vmatprep.subr.mxu0 0.0
  %725 = vmatpush1.msra.mxu0 %v174
  %726 = vmatprep.subr.mxu0 0.0
  %727 = vmatpush1.msra.mxu0 0.0
  %728 = vmatprep.subr.mxu0 0.0
  %729 = vmatpush1.msra.mxu0 0.0
  %730 = vmatprep.subr.mxu0 0.0
  %731 = vmatpush1.msra.mxu0 0.0
  %732 = vmatprep.subr.mxu0 0.0
  %733 = vmatpush1.msra.mxu0 0.0
  %734 = vmatprep.subr.mxu0 0.0
  %735 = vmatpush1.msra.mxu0 0.0
  %736 = vmatprep.subr.mxu0 0.0
  %737 = vmatpush1.msra.mxu0 0.0
  %738 = vmatprep.subr.mxu0 0.0
  %739 = vmatpush1.msra.mxu0 0.0
  %740 = vmatprep.subr.mxu0 0.0
  %741 = vmatpush1.msra.mxu0 0.0
  %742 = vmatprep.subr.mxu0 0.0
  %743 = vmatpush1.msra.mxu0 0.0
  %744 = vmatprep.subr.mxu0 0.0
  %745 = vmatpush1.msra.mxu0 0.0
  %746 = vmatprep.subr.mxu0 0.0
  %747 = vmatpush1.msra.mxu0 0.0
  %748 = vmatprep.subr.mxu0 0.0
  %749 = vmatpush1.msra.mxu0 0.0
  %750 = vmatprep.subr.mxu0 0.0
  %751 = vmatpush1.msra.mxu0 0.0
  %752 = vmatprep.subr.mxu0 0.0
  %753 = vmatpush1.msra.mxu0 0.0
  %754 = vmatprep.subr.mxu0 0.0
  %755 = vmatpush1.msra.mxu0 0.0
  %756 = vmatprep.subr.mxu0 0.0
  %757 = vmatpush1.msra.mxu0 0.0
  %758 = vmatprep.subr.mxu0 0.0
  %759 = vmatpush1.msra.mxu0 0.0
  %760 = vmatprep.subr.mxu0 0.0
  %761 = vmatpush1.msra.mxu0 0.0
  %762 = vmatprep.subr.mxu0 0.0
  %763 = vmatpush1.msra.mxu0 0.0
  %764 = vmatprep.subr.mxu0 0.0
  %765 = vmatpush1.msra.mxu0 0.0
  %766 = vmatprep.subr.mxu0 0.0
  %767 = vmatpush1.msra.mxu0 0.0
  %768 = vmatprep.subr.mxu0 0.0
  %769 = vmatpush1.msra.mxu0 0.0
  %770 = vmatprep.subr.mxu0 0.0
  %771 = vmatpush1.msra.mxu0 0.0
  %772 = vmatprep.subr.mxu0 0.0
  %773 = vmatpush1.msra.mxu0 0.0
  %774 = vmatprep.subr.mxu0 0.0
  %775 = vmatpush1.msra.mxu0 0.0
  %776 = vmatprep.subr.mxu0 0.0
  %777 = vmatpush1.msra.mxu0 0.0
  %778 = vmatprep.subr.mxu0 0.0
  %779 = vmatpush1.msra.mxu0 0.0
  %780 = vmatprep.subr.mxu0 0.0
  %781 = vmatpush1.msra.mxu0 0.0
  %782 = vmatprep.subr.mxu0 0.0
  %783 = vmatpush1.msra.mxu0 0.0
  %784 = vmatprep.subr.mxu0 0.0
  %785 = vmatpush1.msra.mxu0 0.0
  %786 = vmatprep.mubr.f32.mxu0 0.0
  %787 = vmatmul.mubr.f32.gmra.mrb[0].mxu0 %v720
  %v788 = vpop.f32.mrb[0].mxu0
  %v789 = vadd.f32 0.0, %v788
  %v790 = vpop.f32.mrb[0].mxu0
  %791 = vdwg.mxu0
  %793 = vrot.lane.b32.xlu0 %v789, 64
  %v794 = vpop.permute.xlu0 %793
  %v796 = vadd.f32 %v640, %v794
  %v797 = vxor.u32 %v716, 2147483648
  %v798 = vmul.f32 %v797, 1.442695
  %v799 = vpow.pop %v798
  %v800 = vadd.f32 %v799, 1.0
  %v801 = vrcp.pop %v800
  %v802 = vmul.f32 1.0, %v801
  %v803 = vtanh.pop %v716
  %v804 = vmul.f32 %v802, %v615
  %806 = vrot.lane.b32.xlu0 %v803, 96
  %v807 = vpop.permute.xlu0 %806
  %v809 = vmul.f32 %v802, %v807
  %811 = vrot.lane.b32.xlu0 %v809, 16
  %v812 = vpop.permute.xlu0 %811
  %v814 = vadd.f32 %v804, %v812
  %v815 = vtanh.pop %v814
  %817 = vrot.lane.b32.xlu0 %v815, 32
  %v818 = vpop.permute.xlu0 %817
  %v820 = vmul.f32 %v802, %v818
  %v821 = vxor.u32 %v796, 2147483648
  %v822 = vmul.f32 %v821, 1.442695
  %v823 = vpow.pop %v822
  %v824 = vadd.f32 %v823, 1.0
  %v825 = vrcp.pop %v824
  %v826 = vmul.f32 1.0, %v825
  %v827 = vtanh.pop %v796
  %v828 = vmul.f32 %v826, %v622
  %830 = vrot.lane.b32.xlu0 %v827, 96
  %v831 = vpop.permute.xlu0 %830
  %v833 = vmul.f32 %v826, %v831
  %835 = vrot.lane.b32.xlu0 %v833, 16
  %v836 = vpop.permute.xlu0 %835
  %v838 = vadd.f32 %v828, %v836
  %v839 = vtanh.pop %v838
  %841 = vrot.lane.b32.xlu0 %v839, 32
  %v842 = vpop.permute.xlu0 %841
  %v844 = vmul.f32 %v826, %v842
  %vm845 = vcmp.gt.s32.totalorder %v175, 2
  %vm846 = vcmp.gt.s32.totalorder %v175, 5
  %v847 = vsel %vm845, 1, 0
  %848 = vset.pattern.permute.xlu0 0
  %849 = vperm.xlu0 %848, %v847
  %v850 = vpop.permute.xlu0 %849
  %vm851 = vcmp.eq.s32.totalorder %v850, 1
  %v852 = vsel %vm851, %v820, %v614
  %v853 = vsel %vm851, %v814, %v615
  %v854 = vsel %vm846, 1, 0
  %855 = vset.pattern.permute.xlu0 0
  %856 = vperm.xlu0 %855, %v854
  %v857 = vpop.permute.xlu0 %856
  %vm858 = vcmp.eq.s32.totalorder %v857, 1
  %v859 = vsel %vm858, %v844, %v621
  %v860 = vsel %vm858, %v838, %v622
  %v861 = vsel %vm851, %v820, 0.0
  %863 = vrot.lane.b32.xlu0 %v861, 80
  %v864 = vpop.permute.xlu0 %863
  %s866 = scalar_lea.vmem %s5, 8
  %867 = vst.msk [vmem:[%s866] sm:$0xf] %vm397, %v864
  %v868 = vsel %vm858, %v844, 0.0
  %870 = vrot.lane.b32.xlu0 %v868, 16
  %v871 = vpop.permute.xlu0 %870
  %s873 = scalar_lea.vmem %s6, 20
  %874 = vst.msk [vmem:[%s873] sm:$0xf] %vm397, %v871
  %s875 = scalar_lea.vmem [#allocation2], 12
  %v876 = vld [vmem:[%s875] sm:$0xf]
  %s877 = scalar_lea.vmem [#allocation2], 16
  %v878 = vld [vmem:[%s877] sm:$0xf]
  %880 = vrot.lane.b32.xlu0 %v852, 80
  %v881 = vpop.permute.xlu0 %880
  %v882 = vsel %vm179, %v881, 0
  %884 = vmatprep.subr.mxu0 0.0
  %885 = vmatpush1.msra.mxu0 %v170
  %886 = vmatprep.subr.mxu0 0.0
  %887 = vmatpush1.msra.mxu0 %v171
  %888 = vmatprep.subr.mxu0 0.0
  %889 = vmatpush1.msra.mxu0 0.0
  %890 = vmatprep.subr.mxu0 0.0
  %891 = vmatpush1.msra.mxu0 0.0
  %892 = vmatprep.subr.mxu0 0.0
  %893 = vmatpush1.msra.mxu0 0.0
  %894 = vmatprep.subr.mxu0 0.0
  %895 = vmatpush1.msra.mxu0 0.0
  %896 = vmatprep.subr.mxu0 0.0
  %897 = vmatpush1.msra.mxu0 0.0
  %898 = vmatprep.subr.mxu0 0.0
  %899 = vmatpush1.msra.mxu0 0.0
  %900 = vmatprep.subr.mxu0 0.0
  %901 = vmatpush1.msra.mxu0 0.0
  %902 = vmatprep.subr.mxu0 0.0
  %903 = vmatpush1.msra.mxu0 0.0
  %904 = vmatprep.subr.mxu0 0.0
  %905 = vmatpush1.msra.mxu0 0.0
  %906 = vmatprep.subr.mxu0 0.0
  %907 = vmatpush1.msra.mxu0 0.0
  %908 = vmatprep.subr.mxu0 0.0
  %909 = vmatpush1.msra.mxu0 0.0
  %910 = vmatprep.subr.mxu0 0.0
  %911 = vmatpush1.msra.mxu0 0.0
  %912 = vmatprep.subr.mxu0 0.0
  %913 = vmatpush1.msra.mxu0 0.0
  %914 = vmatprep.subr.mxu0 0.0
  %915 = vmatpush1.msra.mxu0 0.0
  %916 = vmatprep.subr.mxu0 0.0
  %917 = vmatpush1.msra.mxu0 0.0
  %918 = vmatprep.subr.mxu0 0.0
  %919 = vmatpush1.msra.mxu0 0.0
  %920 = vmatprep.subr.mxu0 0.0
  %921 = vmatpush1.msra.mxu0 0.0
  %922 = vmatprep.subr.mxu0 0.0
  %923 = vmatpush1.msra.mxu0 0.0
  %924 = vmatprep.subr.mxu0 0.0
  %925 = vmatpush1.msra.mxu0 0.0
  %926 = vmatprep.subr.mxu0 0.0
  %927 = vmatpush1.msra.mxu0 0.0
  %928 = vmatprep.subr.mxu0 0.0
  %929 = vmatpush1.msra.mxu0 0.0
  %930 = vmatprep.subr.mxu0 0.0
  %931 = vmatpush1.msra.mxu0 0.0
  %932 = vmatprep.subr.mxu0 0.0
  %933 = vmatpush1.msra.mxu0 0.0
  %934 = vmatprep.subr.mxu0 0.0
  %935 = vmatpush1.msra.mxu0 0.0
  %936 = vmatprep.subr.mxu0 0.0
  %937 = vmatpush1.msra.mxu0 0.0
  %938 = vmatprep.subr.mxu0 0.0
  %939 = vmatpush1.msra.mxu0 0.0
  %940 = vmatprep.subr.mxu0 0.0
  %941 = vmatpush1.msra.mxu0 0.0
  %942 = vmatprep.subr.mxu0 0.0
  %943 = vmatpush1.msra.mxu0 0.0
  %944 = vmatprep.subr.mxu0 0.0
  %945 = vmatpush1.msra.mxu0 0.0
  %946 = vmatprep.subr.mxu0 0.0
  %947 = vmatpush1.msra.mxu0 0.0
  %948 = vmatprep.mubr.f32.mxu0 0.0
  %949 = vmatmul.mubr.f32.gmra.mrb[0].mxu0 %v882
  %v950 = vpop.f32.mrb[0].mxu0
  %v951 = vadd.f32 0.0, %v950
  %v952 = vpop.f32.mrb[0].mxu0
  %953 = vdwg.mxu0
  %v954 = vadd.f32 %v876, %v951
  %956 = vrot.lane.b32.xlu0 %v859, 16
  %v957 = vpop.permute.xlu0 %956
  %v958 = vsel %vm179, %v957, 0
  %960 = vmatprep.subr.mxu0 0.0
  %961 = vmatpush1.msra.mxu0 %v173
  %962 = vmatprep.subr.mxu0 0.0
  %963 = vmatpush1.msra.mxu0 %v174
  %964 = vmatprep.subr.mxu0 0.0
  %965 = vmatpush1.msra.mxu0 0.0
  %966 = vmatprep.subr.mxu0 0.0
  %967 = vmatpush1.msra.mxu0 0.0
  %968 = vmatprep.subr.mxu0 0.0
  %969 = vmatpush1.msra.mxu0 0.0
  %970 = vmatprep.subr.mxu0 0.0
  %971 = vmatpush1.msra.mxu0 0.0
  %972 = vmatprep.subr.mxu0 0.0
  %973 = vmatpush1.msra.mxu0 0.0
  %974 = vmatprep.subr.mxu0 0.0
  %975 = vmatpush1.msra.mxu0 0.0
  %976 = vmatprep.subr.mxu0 0.0
  %977 = vmatpush1.msra.mxu0 0.0
  %978 = vmatprep.subr.mxu0 0.0
  %979 = vmatpush1.msra.mxu0 0.0
  %980 = vmatprep.subr.mxu0 0.0
  %981 = vmatpush1.msra.mxu0 0.0
  %982 = vmatprep.subr.mxu0 0.0
  %983 = vmatpush1.msra.mxu0 0.0
  %984 = vmatprep.subr.mxu0 0.0
  %985 = vmatpush1.msra.mxu0 0.0
  %986 = vmatprep.subr.mxu0 0.0
  %987 = vmatpush1.msra.mxu0 0.0
  %988 = vmatprep.subr.mxu0 0.0
  %989 = vmatpush1.msra.mxu0 0.0
  %990 = vmatprep.subr.mxu0 0.0
  %991 = vmatpush1.msra.mxu0 0.0
  %992 = vmatprep.subr.mxu0 0.0
  %993 = vmatpush1.msra.mxu0 0.0
  %994 = vmatprep.subr.mxu0 0.0
  %995 = vmatpush1.msra.mxu0 0.0
  %996 = vmatprep.subr.mxu0 0.0
  %997 = vmatpush1.msra.mxu0 0.0
  %998 = vmatprep.subr.mxu0 0.0
  %999 = vmatpush1.msra.mxu0 0.0
  %1000 = vmatprep.subr.mxu0 0.0
  %1001 = vmatpush1.msra.mxu0 0.0
  %1002 = vmatprep.subr.mxu0 0.0
  %1003 = vmatpush1.msra.mxu0 0.0
  %1004 = vmatprep.subr.mxu0 0.0
  %1005 = vmatpush1.msra.mxu0 0.0
  %1006 = vmatprep.subr.mxu0 0.0
  %1007 = vmatpush1.msra.mxu0 0.0
  %1008 = vmatprep.subr.mxu0 0.0
  %1009 = vmatpush1.msra.mxu0 0.0
  %1010 = vmatprep.subr.mxu0 0.0
  %1011 = vmatpush1.msra.mxu0 0.0
  %1012 = vmatprep.subr.mxu0 0.0
  %1013 = vmatpush1.msra.mxu0 0.0
  %1014 = vmatprep.subr.mxu0 0.0
  %1015 = vmatpush1.msra.mxu0 0.0
  %1016 = vmatprep.subr.mxu0 0.0
  %1017 = vmatpush1.msra.mxu0 0.0
  %1018 = vmatprep.subr.mxu0 0.0
  %1019 = vmatpush1.msra.mxu0 0.0
  %1020 = vmatprep.subr.mxu0 0.0
  %1021 = vmatpush1.msra.mxu0 0.0
  %1022 = vmatprep.subr.mxu0 0.0
  %1023 = vmatpush1.msra.mxu0 0.0
  %1024 = vmatprep.mubr.f32.mxu0 0.0
  %1025 = vmatmul.mubr.f32.gmra.mrb[0].mxu0 %v958
  %v1026 = vpop.f32.mrb[0].mxu0
  %v1027 = vadd.f32 0.0, %v1026
  %v1028 = vpop.f32.mrb[0].mxu0
  %1029 = vdwg.mxu0
  %1031 = vrot.lane.b32.xlu0 %v1027, 64
  %v1032 = vpop.permute.xlu0 %1031
  %v1034 = vadd.f32 %v878, %v1032
  %v1035 = vxor.u32 %v954, 2147483648
  %v1036 = vmul.f32 %v1035, 1.442695
  %v1037 = vpow.pop %v1036
  %v1038 = vadd.f32 %v1037, 1.0
  %v1039 = vrcp.pop %v1038
  %v1040 = vmul.f32 1.0, %v1039
  %v1041 = vtanh.pop %v954
  %v1042 = vmul.f32 %v1040, %v853
  %1044 = vrot.lane.b32.xlu0 %v1041, 96
  %v1045 = vpop.permute.xlu0 %1044
  %v1047 = vmul.f32 %v1040, %v1045
  %1049 = vrot.lane.b32.xlu0 %v1047, 16
  %v1050 = vpop.permute.xlu0 %1049
  %v1052 = vadd.f32 %v1042, %v1050
  %v1053 = vtanh.pop %v1052
  %1055 = vrot.lane.b32.xlu0 %v1053, 32
  %v1056 = vpop.permute.xlu0 %1055
  %v1058 = vmul.f32 %v1040, %v1056
  %v1059 = vxor.u32 %v1034, 2147483648
  %v1060 = vmul.f32 %v1059, 1.442695
  %v1061 = vpow.pop %v1060
  %v1062 = vadd.f32 %v1061, 1.0
  %v1063 = vrcp.pop %v1062
  %v1064 = vmul.f32 1.0, %v1063
  %v1065 = vtanh.pop %v1034
  %v1066 = vmul.f32 %v1064, %v860
  %1068 = vrot.lane.b32.xlu0 %v1065, 96
  %v1069 = vpop.permute.xlu0 %1068
  %v1071 = vmul.f32 %v1064, %v1069
  %1073 = vrot.lane.b32.xlu0 %v1071, 16
  %v1074 = vpop.permute.xlu0 %1073
  %v1076 = vadd.f32 %v1066, %v1074
  %v1077 = vtanh.pop %v1076
  %1079 = vrot.lane.b32.xlu0 %v1077, 32
  %v1080 = vpop.permute.xlu0 %1079
  %v1082 = vmul.f32 %v1064, %v1080
  %vm1083 = vcmp.gt.s32.totalorder %v175, 3
  %vm1084 = vcmp.gt.s32.totalorder %v175, 4
  %v1085 = vsel %vm1083, 1, 0
  %1086 = vset.pattern.permute.xlu0 0
  %1087 = vperm.xlu0 %1086, %v1085
  %v1088 = vpop.permute.xlu0 %1087
  %vm1089 = vcmp.eq.s32.totalorder %v1088, 1
  %v1090 = vsel %vm1089, %v1058, %v852
  %v1091 = vsel %vm1089, %v1052, %v853
  %v1092 = vsel %vm1084, 1, 0
  %1093 = vset.pattern.permute.xlu0 0
  %1094 = vperm.xlu0 %1093, %v1092
  %v1095 = vpop.permute.xlu0 %1094
  %vm1096 = vcmp.eq.s32.totalorder %v1095, 1
  %v1097 = vsel %vm1096, %v1082, %v859
  %v1098 = vsel %vm1096, %v1076, %v860
  %v1099 = vsel %vm1089, %v1058, 0.0
  %1101 = vrot.lane.b32.xlu0 %v1099, 80
  %v1102 = vpop.permute.xlu0 %1101
  %s1104 = scalar_lea.vmem %s5, 12
  %1105 = vst.msk [vmem:[%s1104] sm:$0xf] %vm397, %v1102
  %v1106 = vsel %vm1096, %v1082, 0.0
  %1108 = vrot.lane.b32.xlu0 %v1106, 16
  %v1109 = vpop.permute.xlu0 %1108
  %s1111 = scalar_lea.vmem %s6, 16
  %1112 = vst.msk [vmem:[%s1111] sm:$0xf] %vm397, %v1109
  %v1113 = vld [vmem:[%s877] sm:$0xf]
  %v1114 = vld [vmem:[%s875] sm:$0xf]
  %1116 = vrot.lane.b32.xlu0 %v1090, 80
  %v1117 = vpop.permute.xlu0 %1116
  %v1118 = vsel %vm179, %v1117, 0
  %1120 = vmatprep.subr.mxu0 0.0
  %1121 = vmatpush1.msra.mxu0 %v170
  %1122 = vmatprep.subr.mxu0 0.0
  %1123 = vmatpush1.msra.mxu0 %v171
  %1124 = vmatprep.subr.mxu0 0.0
  %1125 = vmatpush1.msra.mxu0 0.0
  %1126 = vmatprep.subr.mxu0 0.0
  %1127 = vmatpush1.msra.mxu0 0.0
  %1128 = vmatprep.subr.mxu0 0.0
  %1129 = vmatpush1.msra.mxu0 0.0
  %1130 = vmatprep.subr.mxu0 0.0
  %1131 = vmatpush1.msra.mxu0 0.0
  %1132 = vmatprep.subr.mxu0 0.0
  %1133 = vmatpush1.msra.mxu0 0.0
  %1134 = vmatprep.subr.mxu0 0.0
  %1135 = vmatpush1.msra.mxu0 0.0
  %1136 = vmatprep.subr.mxu0 0.0
  %1137 = vmatpush1.msra.mxu0 0.0
  %1138 = vmatprep.subr.mxu0 0.0
  %1139 = vmatpush1.msra.mxu0 0.0
  %1140 = vmatprep.subr.mxu0 0.0
  %1141 = vmatpush1.msra.mxu0 0.0
  %1142 = vmatprep.subr.mxu0 0.0
  %1143 = vmatpush1.msra.mxu0 0.0
  %1144 = vmatprep.subr.mxu0 0.0
  %1145 = vmatpush1.msra.mxu0 0.0
  %1146 = vmatprep.subr.mxu0 0.0
  %1147 = vmatpush1.msra.mxu0 0.0
  %1148 = vmatprep.subr.mxu0 0.0
  %1149 = vmatpush1.msra.mxu0 0.0
  %1150 = vmatprep.subr.mxu0 0.0
  %1151 = vmatpush1.msra.mxu0 0.0
  %1152 = vmatprep.subr.mxu0 0.0
  %1153 = vmatpush1.msra.mxu0 0.0
  %1154 = vmatprep.subr.mxu0 0.0
  %1155 = vmatpush1.msra.mxu0 0.0
  %1156 = vmatprep.subr.mxu0 0.0
  %1157 = vmatpush1.msra.mxu0 0.0
  %1158 = vmatprep.subr.mxu0 0.0
  %1159 = vmatpush1.msra.mxu0 0.0
  %1160 = vmatprep.subr.mxu0 0.0
  %1161 = vmatpush1.msra.mxu0 0.0
  %1162 = vmatprep.subr.mxu0 0.0
  %1163 = vmatpush1.msra.mxu0 0.0
  %1164 = vmatprep.subr.mxu0 0.0
  %1165 = vmatpush1.msra.mxu0 0.0
  %1166 = vmatprep.subr.mxu0 0.0
  %1167 = vmatpush1.msra.mxu0 0.0
  %1168 = vmatprep.subr.mxu0 0.0
  %1169 = vmatpush1.msra.mxu0 0.0
  %1170 = vmatprep.subr.mxu0 0.0
  %1171 = vmatpush1.msra.mxu0 0.0
  %1172 = vmatprep.subr.mxu0 0.0
  %1173 = vmatpush1.msra.mxu0 0.0
  %1174 = vmatprep.subr.mxu0 0.0
  %1175 = vmatpush1.msra.mxu0 0.0
  %1176 = vmatprep.subr.mxu0 0.0
  %1177 = vmatpush1.msra.mxu0 0.0
  %1178 = vmatprep.subr.mxu0 0.0
  %1179 = vmatpush1.msra.mxu0 0.0
  %1180 = vmatprep.subr.mxu0 0.0
  %1181 = vmatpush1.msra.mxu0 0.0
  %1182 = vmatprep.subr.mxu0 0.0
  %1183 = vmatpush1.msra.mxu0 0.0
  %1184 = vmatprep.mubr.f32.mxu0 0.0
  %1185 = vmatmul.mubr.f32.gmra.mrb[0].mxu0 %v1118
  %v1186 = vpop.f32.mrb[0].mxu0
  %v1187 = vadd.f32 0.0, %v1186
  %v1188 = vpop.f32.mrb[0].mxu0
  %1189 = vdwg.mxu0
  %v1190 = vadd.f32 %v1113, %v1187
  %1192 = vrot.lane.b32.xlu0 %v1097, 16
  %v1193 = vpop.permute.xlu0 %1192
  %v1194 = vsel %vm179, %v1193, 0
  %1196 = vmatprep.subr.mxu0 0.0
  %1197 = vmatpush1.msra.mxu0 %v173
  %1198 = vmatprep.subr.mxu0 0.0
  %1199 = vmatpush1.msra.mxu0 %v174
  %1200 = vmatprep.subr.mxu0 0.0
  %1201 = vmatpush1.msra.mxu0 0.0
  %1202 = vmatprep.subr.mxu0 0.0
  %1203 = vmatpush1.msra.mxu0 0.0
  %1204 = vmatprep.subr.mxu0 0.0
  %1205 = vmatpush1.msra.mxu0 0.0
  %1206 = vmatprep.subr.mxu0 0.0
  %1207 = vmatpush1.msra.mxu0 0.0
  %1208 = vmatprep.subr.mxu0 0.0
  %1209 = vmatpush1.msra.mxu0 0.0
  %1210 = vmatprep.subr.mxu0 0.0
  %1211 = vmatpush1.msra.mxu0 0.0
  %1212 = vmatprep.subr.mxu0 0.0
  %1213 = vmatpush1.msra.mxu0 0.0
  %1214 = vmatprep.subr.mxu0 0.0
  %1215 = vmatpush1.msra.mxu0 0.0
  %1216 = vmatprep.subr.mxu0 0.0
  %1217 = vmatpush1.msra.mxu0 0.0
  %1218 = vmatprep.subr.mxu0 0.0
  %1219 = vmatpush1.msra.mxu0 0.0
  %1220 = vmatprep.subr.mxu0 0.0
  %1221 = vmatpush1.msra.mxu0 0.0
  %1222 = vmatprep.subr.mxu0 0.0
  %1223 = vmatpush1.msra.mxu0 0.0
  %1224 = vmatprep.subr.mxu0 0.0
  %1225 = vmatpush1.msra.mxu0 0.0
  %1226 = vmatprep.subr.mxu0 0.0
  %1227 = vmatpush1.msra.mxu0 0.0
  %1228 = vmatprep.subr.mxu0 0.0
  %1229 = vmatpush1.msra.mxu0 0.0
  %1230 = vmatprep.subr.mxu0 0.0
  %1231 = vmatpush1.msra.mxu0 0.0
  %1232 = vmatprep.subr.mxu0 0.0
  %1233 = vmatpush1.msra.mxu0 0.0
  %1234 = vmatprep.subr.mxu0 0.0
  %1235 = vmatpush1.msra.mxu0 0.0
  %1236 = vmatprep.subr.mxu0 0.0
  %1237 = vmatpush1.msra.mxu0 0.0
  %1238 = vmatprep.subr.mxu0 0.0
  %1239 = vmatpush1.msra.mxu0 0.0
  %1240 = vmatprep.subr.mxu0 0.0
  %1241 = vmatpush1.msra.mxu0 0.0
  %1242 = vmatprep.subr.mxu0 0.0
  %1243 = vmatpush1.msra.mxu0 0.0
  %1244 = vmatprep.subr.mxu0 0.0
  %1245 = vmatpush1.msra.mxu0 0.0
  %1246 = vmatprep.subr.mxu0 0.0
  %1247 = vmatpush1.msra.mxu0 0.0
  %1248 = vmatprep.subr.mxu0 0.0
  %1249 = vmatpush1.msra.mxu0 0.0
  %1250 = vmatprep.subr.mxu0 0.0
  %1251 = vmatpush1.msra.mxu0 0.0
  %1252 = vmatprep.subr.mxu0 0.0
  %1253 = vmatpush1.msra.mxu0 0.0
  %1254 = vmatprep.subr.mxu0 0.0
  %1255 = vmatpush1.msra.mxu0 0.0
  %1256 = vmatprep.subr.mxu0 0.0
  %1257 = vmatpush1.msra.mxu0 0.0
  %1258 = vmatprep.subr.mxu0 0.0
  %1259 = vmatpush1.msra.mxu0 0.0
  %1260 = vmatprep.mubr.f32.mxu0 0.0
  %1261 = vmatmul.mubr.f32.gmra.mrb[0].mxu0 %v1194
  %v1262 = vpop.f32.mrb[0].mxu0
  %v1263 = vadd.f32 0.0, %v1262
  %v1264 = vpop.f32.mrb[0].mxu0
  %1265 = vdwg.mxu0
  %1267 = vrot.lane.b32.xlu0 %v1263, 64
  %v1268 = vpop.permute.xlu0 %1267
  %v1270 = vadd.f32 %v1114, %v1268
  %v1271 = vxor.u32 %v1190, 2147483648
  %v1272 = vmul.f32 %v1271, 1.442695
  %v1273 = vpow.pop %v1272
  %v1274 = vadd.f32 %v1273, 1.0
  %v1275 = vrcp.pop %v1274
  %v1276 = vmul.f32 1.0, %v1275
  %v1277 = vtanh.pop %v1190
  %v1278 = vmul.f32 %v1276, %v1091
  %1280 = vrot.lane.b32.xlu0 %v1277, 96
  %v1281 = vpop.permute.xlu0 %1280
  %v1283 = vmul.f32 %v1276, %v1281
  %1285 = vrot.lane.b32.xlu0 %v1283, 16
  %v1286 = vpop.permute.xlu0 %1285
  %v1288 = vadd.f32 %v1278, %v1286
  %v1289 = vtanh.pop %v1288
  %1291 = vrot.lane.b32.xlu0 %v1289, 32
  %v1292 = vpop.permute.xlu0 %1291
  %v1294 = vmul.f32 %v1276, %v1292
  %v1295 = vxor.u32 %v1270, 2147483648
  %v1296 = vmul.f32 %v1295, 1.442695
  %v1297 = vpow.pop %v1296
  %v1298 = vadd.f32 %v1297, 1.0
  %v1299 = vrcp.pop %v1298
  %v1300 = vmul.f32 1.0, %v1299
  %v1301 = vtanh.pop %v1270
  %v1302 = vmul.f32 %v1300, %v1098
  %1304 = vrot.lane.b32.xlu0 %v1301, 96
  %v1305 = vpop.permute.xlu0 %1304
  %v1307 = vmul.f32 %v1300, %v1305
  %1309 = vrot.lane.b32.xlu0 %v1307, 16
  %v1310 = vpop.permute.xlu0 %1309
  %v1312 = vadd.f32 %v1302, %v1310
  %v1313 = vtanh.pop %v1312
  %1315 = vrot.lane.b32.xlu0 %v1313, 32
  %v1316 = vpop.permute.xlu0 %1315
  %v1318 = vmul.f32 %v1300, %v1316
  %v1319 = vsel %vm1096, %v1294, %v1090
  %v1320 = vsel %vm1096, %v1288, %v1091
  %v1321 = vsel %vm1089, %v1318, %v1097
  %v1322 = vsel %vm1089, %v1312, %v1098
  %v1323 = vsel %vm1096, %v1294, 0.0
  %1325 = vrot.lane.b32.xlu0 %v1323, 80
  %v1326 = vpop.permute.xlu0 %1325
  %s1328 = scalar_lea.vmem %s5, 16
  %1329 = vst.msk [vmem:[%s1328] sm:$0xf] %vm397, %v1326
  %v1330 = vsel %vm1089, %v1318, 0.0
  %1332 = vrot.lane.b32.xlu0 %v1330, 16
  %v1333 = vpop.permute.xlu0 %1332
  %s1335 = scalar_lea.vmem %s6, 12
  %1336 = vst.msk [vmem:[%s1335] sm:$0xf] %vm397, %v1333
  %v1337 = vld [vmem:[%s639] sm:$0xf]
  %v1338 = vld [vmem:[%s637] sm:$0xf]
  %1340 = vrot.lane.b32.xlu0 %v1319, 80
  %v1341 = vpop.permute.xlu0 %1340
  %v1342 = vsel %vm179, %v1341, 0
  %1344 = vmatprep.subr.mxu0 0.0
  %1345 = vmatpush1.msra.mxu0 %v170
  %1346 = vmatprep.subr.mxu0 0.0
  %1347 = vmatpush1.msra.mxu0 %v171
  %1348 = vmatprep.subr.mxu0 0.0
  %1349 = vmatpush1.msra.mxu0 0.0
  %1350 = vmatprep.subr.mxu0 0.0
  %1351 = vmatpush1.msra.mxu0 0.0
  %1352 = vmatprep.subr.mxu0 0.0
  %1353 = vmatpush1.msra.mxu0 0.0
  %1354 = vmatprep.subr.mxu0 0.0
  %1355 = vmatpush1.msra.mxu0 0.0
  %1356 = vmatprep.subr.mxu0 0.0
  %1357 = vmatpush1.msra.mxu0 0.0
  %1358 = vmatprep.subr.mxu0 0.0
  %1359 = vmatpush1.msra.mxu0 0.0
  %1360 = vmatprep.subr.mxu0 0.0
  %1361 = vmatpush1.msra.mxu0 0.0
  %1362 = vmatprep.subr.mxu0 0.0
  %1363 = vmatpush1.msra.mxu0 0.0
  %1364 = vmatprep.subr.mxu0 0.0
  %1365 = vmatpush1.msra.mxu0 0.0
  %1366 = vmatprep.subr.mxu0 0.0
  %1367 = vmatpush1.msra.mxu0 0.0
  %1368 = vmatprep.subr.mxu0 0.0
  %1369 = vmatpush1.msra.mxu0 0.0
  %1370 = vmatprep.subr.mxu0 0.0
  %1371 = vmatpush1.msra.mxu0 0.0
  %1372 = vmatprep.subr.mxu0 0.0
  %1373 = vmatpush1.msra.mxu0 0.0
  %1374 = vmatprep.subr.mxu0 0.0
  %1375 = vmatpush1.msra.mxu0 0.0
  %1376 = vmatprep.subr.mxu0 0.0
  %1377 = vmatpush1.msra.mxu0 0.0
  %1378 = vmatprep.subr.mxu0 0.0
  %1379 = vmatpush1.msra.mxu0 0.0
  %1380 = vmatprep.subr.mxu0 0.0
  %1381 = vmatpush1.msra.mxu0 0.0
  %1382 = vmatprep.subr.mxu0 0.0
  %1383 = vmatpush1.msra.mxu0 0.0
  %1384 = vmatprep.subr.mxu0 0.0
  %1385 = vmatpush1.msra.mxu0 0.0
  %1386 = vmatprep.subr.mxu0 0.0
  %1387 = vmatpush1.msra.mxu0 0.0
  %1388 = vmatprep.subr.mxu0 0.0
  %1389 = vmatpush1.msra.mxu0 0.0
  %1390 = vmatprep.subr.mxu0 0.0
  %1391 = vmatpush1.msra.mxu0 0.0
  %1392 = vmatprep.subr.mxu0 0.0
  %1393 = vmatpush1.msra.mxu0 0.0
  %1394 = vmatprep.subr.mxu0 0.0
  %1395 = vmatpush1.msra.mxu0 0.0
  %1396 = vmatprep.subr.mxu0 0.0
  %1397 = vmatpush1.msra.mxu0 0.0
  %1398 = vmatprep.subr.mxu0 0.0
  %1399 = vmatpush1.msra.mxu0 0.0
  %1400 = vmatprep.subr.mxu0 0.0
  %1401 = vmatpush1.msra.mxu0 0.0
  %1402 = vmatprep.subr.mxu0 0.0
  %1403 = vmatpush1.msra.mxu0 0.0
  %1404 = vmatprep.subr.mxu0 0.0
  %1405 = vmatpush1.msra.mxu0 0.0
  %1406 = vmatprep.subr.mxu0 0.0
  %1407 = vmatpush1.msra.mxu0 0.0
  %1408 = vmatprep.mubr.f32.mxu0 0.0
  %1409 = vmatmul.mubr.f32.gmra.mrb[0].mxu0 %v1342
  %v1410 = vpop.f32.mrb[0].mxu0
  %v1411 = vadd.f32 0.0, %v1410
  %v1412 = vpop.f32.mrb[0].mxu0
  %1413 = vdwg.mxu0
  %v1414 = vadd.f32 %v1337, %v1411
  %1416 = vrot.lane.b32.xlu0 %v1321, 16
  %v1417 = vpop.permute.xlu0 %1416
  %v1418 = vsel %vm179, %v1417, 0
  %1420 = vmatprep.subr.mxu0 0.0
  %1421 = vmatpush1.msra.mxu0 %v173
  %1422 = vmatprep.subr.mxu0 0.0
  %1423 = vmatpush1.msra.mxu0 %v174
  %1424 = vmatprep.subr.mxu0 0.0
  %1425 = vmatpush1.msra.mxu0 0.0
  %1426 = vmatprep.subr.mxu0 0.0
  %1427 = vmatpush1.msra.mxu0 0.0
  %1428 = vmatprep.subr.mxu0 0.0
  %1429 = vmatpush1.msra.mxu0 0.0
  %1430 = vmatprep.subr.mxu0 0.0
  %1431 = vmatpush1.msra.mxu0 0.0
  %1432 = vmatprep.subr.mxu0 0.0
  %1433 = vmatpush1.msra.mxu0 0.0
  %1434 = vmatprep.subr.mxu0 0.0
  %1435 = vmatpush1.msra.mxu0 0.0
  %1436 = vmatprep.subr.mxu0 0.0
  %1437 = vmatpush1.msra.mxu0 0.0
  %1438 = vmatprep.subr.mxu0 0.0
  %1439 = vmatpush1.msra.mxu0 0.0
  %1440 = vmatprep.subr.mxu0 0.0
  %1441 = vmatpush1.msra.mxu0 0.0
  %1442 = vmatprep.subr.mxu0 0.0
  %1443 = vmatpush1.msra.mxu0 0.0
  %1444 = vmatprep.subr.mxu0 0.0
  %1445 = vmatpush1.msra.mxu0 0.0
  %1446 = vmatprep.subr.mxu0 0.0
  %1447 = vmatpush1.msra.mxu0 0.0
  %1448 = vmatprep.subr.mxu0 0.0
  %1449 = vmatpush1.msra.mxu0 0.0
  %1450 = vmatprep.subr.mxu0 0.0
  %1451 = vmatpush1.msra.mxu0 0.0
  %1452 = vmatprep.subr.mxu0 0.0
  %1453 = vmatpush1.msra.mxu0 0.0
  %1454 = vmatprep.subr.mxu0 0.0
  %1455 = vmatpush1.msra.mxu0 0.0
  %1456 = vmatprep.subr.mxu0 0.0
  %1457 = vmatpush1.msra.mxu0 0.0
  %1458 = vmatprep.subr.mxu0 0.0
  %1459 = vmatpush1.msra.mxu0 0.0
  %1460 = vmatprep.subr.mxu0 0.0
  %1461 = vmatpush1.msra.mxu0 0.0
  %1462 = vmatprep.subr.mxu0 0.0
  %1463 = vmatpush1.msra.mxu0 0.0
  %1464 = vmatprep.subr.mxu0 0.0
  %1465 = vmatpush1.msra.mxu0 0.0
  %1466 = vmatprep.subr.mxu0 0.0
  %1467 = vmatpush1.msra.mxu0 0.0
  %1468 = vmatprep.subr.mxu0 0.0
  %1469 = vmatpush1.msra.mxu0 0.0
  %1470 = vmatprep.subr.mxu0 0.0
  %1471 = vmatpush1.msra.mxu0 0.0
  %1472 = vmatprep.subr.mxu0 0.0
  %1473 = vmatpush1.msra.mxu0 0.0
  %1474 = vmatprep.subr.mxu0 0.0
  %1475 = vmatpush1.msra.mxu0 0.0
  %1476 = vmatprep.subr.mxu0 0.0
  %1477 = vmatpush1.msra.mxu0 0.0
  %1478 = vmatprep.subr.mxu0 0.0
  %1479 = vmatpush1.msra.mxu0 0.0
  %1480 = vmatprep.subr.mxu0 0.0
  %1481 = vmatpush1.msra.mxu0 0.0
  %1482 = vmatprep.subr.mxu0 0.0
  %1483 = vmatpush1.msra.mxu0 0.0
  %1484 = vmatprep.mubr.f32.mxu0 0.0
  %1485 = vmatmul.mubr.f32.gmra.mrb[0].mxu0 %v1418
  %v1486 = vpop.f32.mrb[0].mxu0
  %v1487 = vadd.f32 0.0, %v1486
  %v1488 = vpop.f32.mrb[0].mxu0
  %1489 = vdwg.mxu0
  %1491 = vrot.lane.b32.xlu0 %v1487, 64
  %v1492 = vpop.permute.xlu0 %1491
  %v1494 = vadd.f32 %v1338, %v1492
  %v1495 = vxor.u32 %v1414, 2147483648
  %v1496 = vmul.f32 %v1495, 1.442695
  %v1497 = vpow.pop %v1496
  %v1498 = vadd.f32 %v1497, 1.0
  %v1499 = vrcp.pop %v1498
  %v1500 = vmul.f32 1.0, %v1499
  %v1501 = vtanh.pop %v1414
  %v1502 = vmul.f32 %v1500, %v1320
  %1504 = vrot.lane.b32.xlu0 %v1501, 96
  %v1505 = vpop.permute.xlu0 %1504
  %v1507 = vmul.f32 %v1500, %v1505
  %1509 = vrot.lane.b32.xlu0 %v1507, 16
  %v1510 = vpop.permute.xlu0 %1509
  %v1512 = vadd.f32 %v1502, %v1510
  %v1513 = vtanh.pop %v1512
  %1515 = vrot.lane.b32.xlu0 %v1513, 32
  %v1516 = vpop.permute.xlu0 %1515
  %v1518 = vmul.f32 %v1500, %v1516
  %v1519 = vxor.u32 %v1494, 2147483648
  %v1520 = vmul.f32 %v1519, 1.442695
  %v1521 = vpow.pop %v1520
  %v1522 = vadd.f32 %v1521, 1.0
  %v1523 = vrcp.pop %v1522
  %v1524 = vmul.f32 1.0, %v1523
  %v1525 = vtanh.pop %v1494
  %v1526 = vmul.f32 %v1524, %v1322
  %1528 = vrot.lane.b32.xlu0 %v1525, 96
  %v1529 = vpop.permute.xlu0 %1528
  %v1531 = vmul.f32 %v1524, %v1529
  %1533 = vrot.lane.b32.xlu0 %v1531, 16
  %v1534 = vpop.permute.xlu0 %1533
  %v1536 = vadd.f32 %v1526, %v1534
  %v1537 = vtanh.pop %v1536
  %1539 = vrot.lane.b32.xlu0 %v1537, 32
  %v1540 = vpop.permute.xlu0 %1539
  %v1542 = vmul.f32 %v1524, %v1540
  %v1543 = vsel %vm858, %v1518, %v1319
  %v1544 = vsel %vm858, %v1512, %v1320
  %v1545 = vsel %vm851, %v1542, %v1321
  %v1546 = vsel %vm851, %v1536, %v1322
  %v1547 = vsel %vm858, %v1518, 0.0
  %1549 = vrot.lane.b32.xlu0 %v1547, 80
  %v1550 = vpop.permute.xlu0 %1549
  %s1552 = scalar_lea.vmem %s5, 20
  %1553 = vst.msk [vmem:[%s1552] sm:$0xf] %vm397, %v1550
  %v1554 = vsel %vm851, %v1542, 0.0
  %1556 = vrot.lane.b32.xlu0 %v1554, 16
  %v1557 = vpop.permute.xlu0 %1556
  %s1559 = scalar_lea.vmem %s6, 8
  %1560 = vst.msk [vmem:[%s1559] sm:$0xf] %vm397, %v1557
  %v1561 = vld [vmem:[%s407] sm:$0xf]
  %v1562 = vld [vmem:[%s405] sm:$0xf]
  %1564 = vrot.lane.b32.xlu0 %v1543, 80
  %v1565 = vpop.permute.xlu0 %1564
  %v1566 = vsel %vm179, %v1565, 0
  %1568 = vmatprep.subr.mxu0 0.0
  %1569 = vmatpush1.msra.mxu0 %v170
  %1570 = vmatprep.subr.mxu0 0.0
  %1571 = vmatpush1.msra.mxu0 %v171
  %1572 = vmatprep.subr.mxu0 0.0
  %1573 = vmatpush1.msra.mxu0 0.0
  %1574 = vmatprep.subr.mxu0 0.0
  %1575 = vmatpush1.msra.mxu0 0.0
  %1576 = vmatprep.subr.mxu0 0.0
  %1577 = vmatpush1.msra.mxu0 0.0
  %1578 = vmatprep.subr.mxu0 0.0
  %1579 = vmatpush1.msra.mxu0 0.0
  %1580 = vmatprep.subr.mxu0 0.0
  %1581 = vmatpush1.msra.mxu0 0.0
  %1582 = vmatprep.subr.mxu0 0.0
  %1583 = vmatpush1.msra.mxu0 0.0
  %1584 = vmatprep.subr.mxu0 0.0
  %1585 = vmatpush1.msra.mxu0 0.0
  %1586 = vmatprep.subr.mxu0 0.0
  %1587 = vmatpush1.msra.mxu0 0.0
  %1588 = vmatprep.subr.mxu0 0.0
  %1589 = vmatpush1.msra.mxu0 0.0
  %1590 = vmatprep.subr.mxu0 0.0
  %1591 = vmatpush1.msra.mxu0 0.0
  %1592 = vmatprep.subr.mxu0 0.0
  %1593 = vmatpush1.msra.mxu0 0.0
  %1594 = vmatprep.subr.mxu0 0.0
  %1595 = vmatpush1.msra.mxu0 0.0
  %1596 = vmatprep.subr.mxu0 0.0
  %1597 = vmatpush1.msra.mxu0 0.0
  %1598 = vmatprep.subr.mxu0 0.0
  %1599 = vmatpush1.msra.mxu0 0.0
  %1600 = vmatprep.subr.mxu0 0.0
  %1601 = vmatpush1.msra.mxu0 0.0
  %1602 = vmatprep.subr.mxu0 0.0
  %1603 = vmatpush1.msra.mxu0 0.0
  %1604 = vmatprep.subr.mxu0 0.0
  %1605 = vmatpush1.msra.mxu0 0.0
  %1606 = vmatprep.subr.mxu0 0.0
  %1607 = vmatpush1.msra.mxu0 0.0
  %1608 = vmatprep.subr.mxu0 0.0
  %1609 = vmatpush1.msra.mxu0 0.0
  %1610 = vmatprep.subr.mxu0 0.0
  %1611 = vmatpush1.msra.mxu0 0.0
  %1612 = vmatprep.subr.mxu0 0.0
  %1613 = vmatpush1.msra.mxu0 0.0
  %1614 = vmatprep.subr.mxu0 0.0
  %1615 = vmatpush1.msra.mxu0 0.0
  %1616 = vmatprep.subr.mxu0 0.0
  %1617 = vmatpush1.msra.mxu0 0.0
  %1618 = vmatprep.subr.mxu0 0.0
  %1619 = vmatpush1.msra.mxu0 0.0
  %1620 = vmatprep.subr.mxu0 0.0
  %1621 = vmatpush1.msra.mxu0 0.0
  %1622 = vmatprep.subr.mxu0 0.0
  %1623 = vmatpush1.msra.mxu0 0.0
  %1624 = vmatprep.subr.mxu0 0.0
  %1625 = vmatpush1.msra.mxu0 0.0
  %1626 = vmatprep.subr.mxu0 0.0
  %1627 = vmatpush1.msra.mxu0 0.0
  %1628 = vmatprep.subr.mxu0 0.0
  %1629 = vmatpush1.msra.mxu0 0.0
  %1630 = vmatprep.subr.mxu0 0.0
  %1631 = vmatpush1.msra.mxu0 0.0
  %1632 = vmatprep.mubr.f32.mxu0 0.0
  %1633 = vmatmul.mubr.f32.gmra.mrb[0].mxu0 %v1566
  %v1634 = vpop.f32.mrb[0].mxu0
  %v1635 = vadd.f32 0.0, %v1634
  %v1636 = vpop.f32.mrb[0].mxu0
  %1637 = vdwg.mxu0
  %v1638 = vadd.f32 %v1561, %v1635
  %1640 = vrot.lane.b32.xlu0 %v1545, 16
  %v1641 = vpop.permute.xlu0 %1640
  %v1642 = vsel %vm179, %v1641, 0
  %1644 = vmatprep.subr.mxu0 0.0
  %1645 = vmatpush1.msra.mxu0 %v173
  %1646 = vmatprep.subr.mxu0 0.0
  %1647 = vmatpush1.msra.mxu0 %v174
  %1648 = vmatprep.subr.mxu0 0.0
  %1649 = vmatpush1.msra.mxu0 0.0
  %1650 = vmatprep.subr.mxu0 0.0
  %1651 = vmatpush1.msra.mxu0 0.0
  %1652 = vmatprep.subr.mxu0 0.0
  %1653 = vmatpush1.msra.mxu0 0.0
  %1654 = vmatprep.subr.mxu0 0.0
  %1655 = vmatpush1.msra.mxu0 0.0
  %1656 = vmatprep.subr.mxu0 0.0
  %1657 = vmatpush1.msra.mxu0 0.0
  %1658 = vmatprep.subr.mxu0 0.0
  %1659 = vmatpush1.msra.mxu0 0.0
  %1660 = vmatprep.subr.mxu0 0.0
  %1661 = vmatpush1.msra.mxu0 0.0
  %1662 = vmatprep.subr.mxu0 0.0
  %1663 = vmatpush1.msra.mxu0 0.0
  %1664 = vmatprep.subr.mxu0 0.0
  %1665 = vmatpush1.msra.mxu0 0.0
  %1666 = vmatprep.subr.mxu0 0.0
  %1667 = vmatpush1.msra.mxu0 0.0
  %1668 = vmatprep.subr.mxu0 0.0
  %1669 = vmatpush1.msra.mxu0 0.0
  %1670 = vmatprep.subr.mxu0 0.0
  %1671 = vmatpush1.msra.mxu0 0.0
  %1672 = vmatprep.subr.mxu0 0.0
  %1673 = vmatpush1.msra.mxu0 0.0
  %1674 = vmatprep.subr.mxu0 0.0
  %1675 = vmatpush1.msra.mxu0 0.0
  %1676 = vmatprep.subr.mxu0 0.0
  %1677 = vmatpush1.msra.mxu0 0.0
  %1678 = vmatprep.subr.mxu0 0.0
  %1679 = vmatpush1.msra.mxu0 0.0
  %1680 = vmatprep.subr.mxu0 0.0
  %1681 = vmatpush1.msra.mxu0 0.0
  %1682 = vmatprep.subr.mxu0 0.0
  %1683 = vmatpush1.msra.mxu0 0.0
  %1684 = vmatprep.subr.mxu0 0.0
  %1685 = vmatpush1.msra.mxu0 0.0
  %1686 = vmatprep.subr.mxu0 0.0
  %1687 = vmatpush1.msra.mxu0 0.0
  %1688 = vmatprep.subr.mxu0 0.0
  %1689 = vmatpush1.msra.mxu0 0.0
  %1690 = vmatprep.subr.mxu0 0.0
  %1691 = vmatpush1.msra.mxu0 0.0
  %1692 = vmatprep.subr.mxu0 0.0
  %1693 = vmatpush1.msra.mxu0 0.0
  %1694 = vmatprep.subr.mxu0 0.0
  %1695 = vmatpush1.msra.mxu0 0.0
  %1696 = vmatprep.subr.mxu0 0.0
  %1697 = vmatpush1.msra.mxu0 0.0
  %1698 = vmatprep.subr.mxu0 0.0
  %1699 = vmatpush1.msra.mxu0 0.0
  %1700 = vmatprep.subr.mxu0 0.0
  %1701 = vmatpush1.msra.mxu0 0.0
  %1702 = vmatprep.subr.mxu0 0.0
  %1703 = vmatpush1.msra.mxu0 0.0
  %1704 = vmatprep.subr.mxu0 0.0
  %1705 = vmatpush1.msra.mxu0 0.0
  %1706 = vmatprep.subr.mxu0 0.0
  %1707 = vmatpush1.msra.mxu0 0.0
  %1708 = vmatprep.mubr.f32.mxu0 0.0
  %1709 = vmatmul.mubr.f32.gmra.mrb[0].mxu0 %v1642
  %v1710 = vpop.f32.mrb[0].mxu0
  %v1711 = vadd.f32 0.0, %v1710
  %v1712 = vpop.f32.mrb[0].mxu0
  %1713 = vdwg.mxu0
  %1715 = vrot.lane.b32.xlu0 %v1711, 64
  %v1716 = vpop.permute.xlu0 %1715
  %v1718 = vadd.f32 %v1562, %v1716
  %v1719 = vxor.u32 %v1638, 2147483648
  %v1720 = vmul.f32 %v1719, 1.442695
  %v1721 = vpow.pop %v1720
  %v1722 = vadd.f32 %v1721, 1.0
  %v1723 = vrcp.pop %v1722
  %v1724 = vmul.f32 1.0, %v1723
  %v1725 = vtanh.pop %v1638
  %v1726 = vmul.f32 %v1724, %v1544
  %1728 = vrot.lane.b32.xlu0 %v1725, 96
  %v1729 = vpop.permute.xlu0 %1728
  %v1731 = vmul.f32 %v1724, %v1729
  %1733 = vrot.lane.b32.xlu0 %v1731, 16
  %v1734 = vpop.permute.xlu0 %1733
  %v1736 = vadd.f32 %v1726, %v1734
  %v1737 = vtanh.pop %v1736
  %1739 = vrot.lane.b32.xlu0 %v1737, 32
  %v1740 = vpop.permute.xlu0 %1739
  %v1742 = vmul.f32 %v1724, %v1740
  %v1743 = vxor.u32 %v1718, 2147483648
  %v1744 = vmul.f32 %v1743, 1.442695
  %v1745 = vpow.pop %v1744
  %v1746 = vadd.f32 %v1745, 1.0
  %v1747 = vrcp.pop %v1746
  %v1748 = vmul.f32 1.0, %v1747
  %v1749 = vtanh.pop %v1718
  %v1750 = vmul.f32 %v1748, %v1546
  %1752 = vrot.lane.b32.xlu0 %v1749, 96
  %v1753 = vpop.permute.xlu0 %1752
  %v1755 = vmul.f32 %v1748, %v1753
  %1757 = vrot.lane.b32.xlu0 %v1755, 16
  %v1758 = vpop.permute.xlu0 %1757
  %v1760 = vadd.f32 %v1750, %v1758
  %v1761 = vtanh.pop %v1760
  %1763 = vrot.lane.b32.xlu0 %v1761, 32
  %v1764 = vpop.permute.xlu0 %1763
  %v1766 = vmul.f32 %v1748, %v1764
  %v1767 = vsel %vm620, %v1742, %v1543
  %v1768 = vsel %vm620, %v1736, %v1544
  %v1769 = vsel %vm613, %v1766, %v1545
  %v1770 = vsel %vm613, %v1760, %v1546
  %v1771 = vsel %vm620, %v1742, 0.0
  %1773 = vrot.lane.b32.xlu0 %v1771, 80
  %v1774 = vpop.permute.xlu0 %1773
  %s1776 = scalar_lea.vmem %s5, 24
  %1777 = vst.msk [vmem:[%s1776] sm:$0xf] %vm397, %v1774
  %v1778 = vsel %vm613, %v1766, 0.0
  %1780 = vrot.lane.b32.xlu0 %v1778, 16
  %v1781 = vpop.permute.xlu0 %1780
  %s1783 = scalar_lea.vmem %s6, 4
  %1784 = vst.msk [vmem:[%s1783] sm:$0xf] %vm397, %v1781
  %v1785 = vld [vmem:[%s177] sm:$0xf]
  %v1786 = vld [vmem:[#allocation2] sm:$0xf]
  %1788 = vrot.lane.b32.xlu0 %v1767, 80
  %v1789 = vpop.permute.xlu0 %1788
  %v1790 = vsel %vm179, %v1789, 0
  %1792 = vmatprep.subr.mxu0 0.0
  %1793 = vmatpush1.msra.mxu0 %v170
  %1794 = vmatprep.subr.mxu0 0.0
  %1795 = vmatpush1.msra.mxu0 %v171
  %1796 = vmatprep.subr.mxu0 0.0
  %1797 = vmatpush1.msra.mxu0 0.0
  %1798 = vmatprep.subr.mxu0 0.0
  %1799 = vmatpush1.msra.mxu0 0.0
  %1800 = vmatprep.subr.mxu0 0.0
  %1801 = vmatpush1.msra.mxu0 0.0
  %1802 = vmatprep.subr.mxu0 0.0
  %1803 = vmatpush1.msra.mxu0 0.0
  %1804 = vmatprep.subr.mxu0 0.0
  %1805 = vmatpush1.msra.mxu0 0.0
  %1806 = vmatprep.subr.mxu0 0.0
  %1807 = vmatpush1.msra.mxu0 0.0
  %1808 = vmatprep.subr.mxu0 0.0
  %1809 = vmatpush1.msra.mxu0 0.0
  %1810 = vmatprep.subr.mxu0 0.0
  %1811 = vmatpush1.msra.mxu0 0.0
  %1812 = vmatprep.subr.mxu0 0.0
  %1813 = vmatpush1.msra.mxu0 0.0
  %1814 = vmatprep.subr.mxu0 0.0
  %1815 = vmatpush1.msra.mxu0 0.0
  %1816 = vmatprep.subr.mxu0 0.0
  %1817 = vmatpush1.msra.mxu0 0.0
  %1818 = vmatprep.subr.mxu0 0.0
  %1819 = vmatpush1.msra.mxu0 0.0
  %1820 = vmatprep.subr.mxu0 0.0
  %1821 = vmatpush1.msra.mxu0 0.0
  %1822 = vmatprep.subr.mxu0 0.0
  %1823 = vmatpush1.msra.mxu0 0.0
  %1824 = vmatprep.subr.mxu0 0.0
  %1825 = vmatpush1.msra.mxu0 0.0
  %1826 = vmatprep.subr.mxu0 0.0
  %1827 = vmatpush1.msra.mxu0 0.0
  %1828 = vmatprep.subr.mxu0 0.0
  %1829 = vmatpush1.msra.mxu0 0.0
  %1830 = vmatprep.subr.mxu0 0.0
  %1831 = vmatpush1.msra.mxu0 0.0
  %1832 = vmatprep.subr.mxu0 0.0
  %1833 = vmatpush1.msra.mxu0 0.0
  %1834 = vmatprep.subr.mxu0 0.0
  %1835 = vmatpush1.msra.mxu0 0.0
  %1836 = vmatprep.subr.mxu0 0.0
  %1837 = vmatpush1.msra.mxu0 0.0
  %1838 = vmatprep.subr.mxu0 0.0
  %1839 = vmatpush1.msra.mxu0 0.0
  %1840 = vmatprep.subr.mxu0 0.0
  %1841 = vmatpush1.msra.mxu0 0.0
  %1842 = vmatprep.subr.mxu0 0.0
  %1843 = vmatpush1.msra.mxu0 0.0
  %1844 = vmatprep.subr.mxu0 0.0
  %1845 = vmatpush1.msra.mxu0 0.0
  %1846 = vmatprep.subr.mxu0 0.0
  %1847 = vmatpush1.msra.mxu0 0.0
  %1848 = vmatprep.subr.mxu0 0.0
  %1849 = vmatpush1.msra.mxu0 0.0
  %1850 = vmatprep.subr.mxu0 0.0
  %1851 = vmatpush1.msra.mxu0 0.0
  %1852 = vmatprep.subr.mxu0 0.0
  %1853 = vmatpush1.msra.mxu0 0.0
  %1854 = vmatprep.subr.mxu0 0.0
  %1855 = vmatpush1.msra.mxu0 0.0
  %1856 = vmatprep.mubr.f32.mxu0 0.0
  %1857 = vmatmul.mubr.f32.gmra.mrb[0].mxu0 %v1790
  %v1858 = vpop.f32.mrb[0].mxu0
  %v1859 = vadd.f32 0.0, %v1858
  %v1860 = vpop.f32.mrb[0].mxu0
  %1861 = vdwg.mxu0
  %v1862 = vadd.f32 %v1785, %v1859
  %1864 = vrot.lane.b32.xlu0 %v1769, 16
  %v1865 = vpop.permute.xlu0 %1864
  %v1866 = vsel %vm179, %v1865, 0
  %1868 = vmatprep.subr.mxu0 0.0
  %1869 = vmatpush1.msra.mxu0 %v173
  %1870 = vmatprep.subr.mxu0 0.0
  %1871 = vmatpush1.msra.mxu0 %v174
  %1872 = vmatprep.subr.mxu0 0.0
  %1873 = vmatpush1.msra.mxu0 0.0
  %1874 = vmatprep.subr.mxu0 0.0
  %1875 = vmatpush1.msra.mxu0 0.0
  %1876 = vmatprep.subr.mxu0 0.0
  %1877 = vmatpush1.msra.mxu0 0.0
  %1878 = vmatprep.subr.mxu0 0.0
  %1879 = vmatpush1.msra.mxu0 0.0
  %1880 = vmatprep.subr.mxu0 0.0
  %1881 = vmatpush1.msra.mxu0 0.0
  %1882 = vmatprep.subr.mxu0 0.0
  %1883 = vmatpush1.msra.mxu0 0.0
  %1884 = vmatprep.subr.mxu0 0.0
  %1885 = vmatpush1.msra.mxu0 0.0
  %1886 = vmatprep.subr.mxu0 0.0
  %1887 = vmatpush1.msra.mxu0 0.0
  %1888 = vmatprep.subr.mxu0 0.0
  %1889 = vmatpush1.msra.mxu0 0.0
  %1890 = vmatprep.subr.mxu0 0.0
  %1891 = vmatpush1.msra.mxu0 0.0
  %1892 = vmatprep.subr.mxu0 0.0
  %1893 = vmatpush1.msra.mxu0 0.0
  %1894 = vmatprep.subr.mxu0 0.0
  %1895 = vmatpush1.msra.mxu0 0.0
  %1896 = vmatprep.subr.mxu0 0.0
  %1897 = vmatpush1.msra.mxu0 0.0
  %1898 = vmatprep.subr.mxu0 0.0
  %1899 = vmatpush1.msra.mxu0 0.0
  %1900 = vmatprep.subr.mxu0 0.0
  %1901 = vmatpush1.msra.mxu0 0.0
  %1902 = vmatprep.subr.mxu0 0.0
  %1903 = vmatpush1.msra.mxu0 0.0
  %1904 = vmatprep.subr.mxu0 0.0
  %1905 = vmatpush1.msra.mxu0 0.0
  %1906 = vmatprep.subr.mxu0 0.0
  %1907 = vmatpush1.msra.mxu0 0.0
  %1908 = vmatprep.subr.mxu0 0.0
  %1909 = vmatpush1.msra.mxu0 0.0
  %1910 = vmatprep.subr.mxu0 0.0
  %1911 = vmatpush1.msra.mxu0 0.0
  %1912 = vmatprep.subr.mxu0 0.0
  %1913 = vmatpush1.msra.mxu0 0.0
  %1914 = vmatprep.subr.mxu0 0.0
  %1915 = vmatpush1.msra.mxu0 0.0
  %1916 = vmatprep.subr.mxu0 0.0
  %1917 = vmatpush1.msra.mxu0 0.0
  %1918 = vmatprep.subr.mxu0 0.0
  %1919 = vmatpush1.msra.mxu0 0.0
  %1920 = vmatprep.subr.mxu0 0.0
  %1921 = vmatpush1.msra.mxu0 0.0
  %1922 = vmatprep.subr.mxu0 0.0
  %1923 = vmatpush1.msra.mxu0 0.0
  %1924 = vmatprep.subr.mxu0 0.0
  %1925 = vmatpush1.msra.mxu0 0.0
  %1926 = vmatprep.subr.mxu0 0.0
  %1927 = vmatpush1.msra.mxu0 0.0
  %1928 = vmatprep.subr.mxu0 0.0
  %1929 = vmatpush1.msra.mxu0 0.0
  %1930 = vmatprep.subr.mxu0 0.0
  %1931 = vmatpush1.msra.mxu0 0.0
  %1932 = vmatprep.mubr.f32.mxu0 0.0
  %1933 = vmatmul.mubr.f32.gmra.mrb[0].mxu0 %v1866
  %v1934 = vpop.f32.mrb[0].mxu0
  %v1935 = vadd.f32 0.0, %v1934
  %v1936 = vpop.f32.mrb[0].mxu0
  %1937 = vdwg.mxu0
  %1939 = vrot.lane.b32.xlu0 %v1935, 64
  %v1940 = vpop.permute.xlu0 %1939
  %v1942 = vadd.f32 %v1786, %v1940
  %v1943 = vxor.u32 %v1862, 2147483648
  %v1944 = vmul.f32 %v1943, 1.442695
  %v1945 = vpow.pop %v1944
  %v1946 = vadd.f32 %v1945, 1.0
  %v1947 = vrcp.pop %v1946
  %v1948 = vmul.f32 1.0, %v1947
  %v1949 = vtanh.pop %v1862
  %v1950 = vmul.f32 %v1948, %v1768
  %1952 = vrot.lane.b32.xlu0 %v1949, 96
  %v1953 = vpop.permute.xlu0 %1952
  %v1955 = vmul.f32 %v1948, %v1953
  %1957 = vrot.lane.b32.xlu0 %v1955, 16
  %v1958 = vpop.permute.xlu0 %1957
  %v1960 = vadd.f32 %v1950, %v1958
  %v1961 = vtanh.pop %v1960
  %1963 = vrot.lane.b32.xlu0 %v1961, 32
  %v1964 = vpop.permute.xlu0 %1963
  %v1966 = vmul.f32 %v1948, %v1964
  %v1967 = vxor.u32 %v1942, 2147483648
  %v1968 = vmul.f32 %v1967, 1.442695
  %v1969 = vpow.pop %v1968
  %v1970 = vadd.f32 %v1969, 1.0
  %v1971 = vrcp.pop %v1970
  %v1972 = vmul.f32 1.0, %v1971
  %v1973 = vtanh.pop %v1942
  %v1974 = vmul.f32 %v1972, %v1770
  %1976 = vrot.lane.b32.xlu0 %v1973, 96
  %v1977 = vpop.permute.xlu0 %1976
  %v1979 = vmul.f32 %v1972, %v1977
  %1981 = vrot.lane.b32.xlu0 %v1979, 16
  %v1982 = vpop.permute.xlu0 %1981
  %v1984 = vadd.f32 %v1974, %v1982
  %v1985 = vtanh.pop %v1984
  %1987 = vrot.lane.b32.xlu0 %v1985, 32
  %v1988 = vpop.permute.xlu0 %1987
  %v1990 = vmul.f32 %v1972, %v1988
  %v1991 = vsel %vm390, %v1966, 0.0
  %1993 = vrot.lane.b32.xlu0 %v1991, 80
  %v1994 = vpop.permute.xlu0 %1993
  %s1996 = scalar_lea.vmem %s5, 28
  %1997 = vst.msk [vmem:[%s1996] sm:$0xf] %vm397, %v1994
  %v1998 = vsel %vm383, %v1990, 0.0
  %2000 = vrot.lane.b32.xlu0 %v1998, 16
  %v2001 = vpop.permute.xlu0 %2000
  %2003 = vst.msk [vmem:[%s6] sm:$0xf] %vm397, %v2001
  // Predicated region
  $region22: #{esim_forward.3} parent=0 // pred_check
    _
  $region23: #{esim_forward.3} parent=0 // pred_check_branch
    %2005 = sbr.rel (0) target = $region25
  $region24: #{esim_forward.3} parent=0 // pred_region
    _
  $region25: #{esim_forward.3} parent=0 // pred_fallthru
    _
  // Predicated region
  $region26: #{esim_forward.3} parent=0 // pred_check
    _
  $region27: #{esim_forward.3} parent=0 // pred_check_branch
    %2007 = sbr.rel (0) target = $region29
  $region28: #{esim_forward.3} parent=0 // pred_region
    _
  $region29: #{esim_forward.3} parent=0 // pred_fallthru
    _
  // Predicated region
  $region30: #{esim_forward.3} parent=0 // pred_check
    _
  $region31: #{esim_forward.3} parent=0 // pred_check_branch
    %2009 = sbr.rel (0) target = $region33
  $region32: #{esim_forward.3} parent=0 // pred_region
    _
  $region33: #{esim_forward.3} parent=0 // pred_fallthru
    _
  // Predicated region
  $region34: #{esim_forward.3} parent=0 // pred_check
    _
  $region35: #{esim_forward.3} parent=0 // pred_check_branch
    %2011 = sbr.rel (0) target = $region37
  $region36: #{esim_forward.3} parent=0 // pred_region
    _
  $region37: #{esim_forward.3} parent=0 // pred_fallthru
    _

// kernel: esim_forward.5
$region0: #{esim_forward.5}
  #allocation0 [shape = 'u32[]', space=smem, size = 0x4, offset = 0x4, fixed_abs, tag = 'smem constant byte address 0x4 - core index']
  #allocation1 [shape = 'u32[144,128]{1,0:T(1,128)}', space=vmem, size = 0x12000, scoped, tag = 'internal scratch']
  #allocation2 [shape = 'f32[8,4,128]{2,1,0:T(4,128)}', space=vmem, size = 0x4000, scoped, tag = 'scratch operand']
  %s0 = inlined_call_operand.vmem [shape: s32[4,1], index: 0, kind: input, shape index: {}]
  %s1 = inlined_call_operand.vmem [shape: f32[8,4,48], index: 1, kind: input, shape index: {}]
  %s2 = inlined_call_operand.vmem [shape: f32[48,128], index: 2, kind: input, shape index: {}]
  %s3 = inlined_call_operand.vmem [shape: f32[2,16,64], index: 3, kind: input, shape index: {}]
  %s4 = inlined_call_operand.vmem [shape: f32[1,128], index: 4, kind: input, shape index: {}]
  %s5 = inlined_call_operand.vmem [shape: f32[128,32], index: 5, kind: input, shape index: {}]
  %s6 = inlined_call_operand.vmem [shape: f32[1,32], index: 6, kind: input, shape index: {}]
  %s7 = inlined_call_operand.vmem [shape: f32[32,3], index: 7, kind: input, shape index: {}]
  %s8 = inlined_call_operand.vmem [shape: f32[1,3], index: 8, kind: input, shape index: {}]
  %s9 = inlined_call_operand.hbm [shape: f32[2,3], index: 9, kind: output, shape index: {}]
  %s10 = sld [smem:[#allocation0]]
  $region46: #{esim_forward.5} parent=0
    _
  %s12 = ssub.s32 1, %s10
  %s13 = scalar_select 0, %s12, %s10
  $region1: #{esim_forward.5} parent=0
    #allocation3 [shape = 'u8[1024]{0}', space=vmem, size = 0x400, scoped, tag = 'output window, operand 0, single buffered']
    #allocation4 [shape = 's32[1]{0}', space=sflag, size = 0x4, scoped, tag = 'scoped memory for esim_forward.5']
    %14 = vsyncpa [#allocation4], 0
    // Predicated region
    $region2: #{esim_forward.5} parent=1 // pred_check
      _
    $region3: #{esim_forward.5} parent=1 // pred_check_branch
      %16 = sbr.rel (0) target = $region5
    $region4: #{esim_forward.5} parent=1 // pred_region
      _
    $region5: #{esim_forward.5} parent=1 // pred_fallthru
      _
    // Predicated region
    $region6: #{esim_forward.5} parent=1 // pred_check
      _
    $region7: #{esim_forward.5} parent=1 // pred_check_branch
      %18 = sbr.rel (0) target = $region9
    $region8: #{esim_forward.5} parent=1 // pred_region
      _
    $region9: #{esim_forward.5} parent=1 // pred_fallthru
      _
    // Predicated region
    $region10: #{esim_forward.5} parent=1 // pred_check
      _
    $region11: #{esim_forward.5} parent=1 // pred_check_branch
      %20 = sbr.rel (0) target = $region13
    $region12: #{esim_forward.5} parent=1 // pred_region
      _
    $region13: #{esim_forward.5} parent=1 // pred_fallthru
      _
    // Predicated region
    $region14: #{esim_forward.5} parent=1 // pred_check
      _
    $region15: #{esim_forward.5} parent=1 // pred_check_branch
      %22 = sbr.rel (0) target = $region17
    $region16: #{esim_forward.5} parent=1 // pred_region
      _
    $region17: #{esim_forward.5} parent=1 // pred_fallthru
      _
    // Predicated region
    $region18: #{esim_forward.5} parent=1 // pred_check
      _
    $region19: #{esim_forward.5} parent=1 // pred_check_branch
      %24 = sbr.rel (0) target = $region21
    $region20: #{esim_forward.5} parent=1 // pred_region
      _
    $region21: #{esim_forward.5} parent=1 // pred_fallthru
      _
    // Predicated region
    $region22: #{esim_forward.5} parent=1 // pred_check
      _
    $region23: #{esim_forward.5} parent=1 // pred_check_branch
      %26 = sbr.rel (0) target = $region25
    $region24: #{esim_forward.5} parent=1 // pred_region
      _
    $region25: #{esim_forward.5} parent=1 // pred_fallthru
      _
    // Predicated region
    $region26: #{esim_forward.5} parent=1 // pred_check
      _
    $region27: #{esim_forward.5} parent=1 // pred_check_branch
      %28 = sbr.rel (0) target = $region29
    $region28: #{esim_forward.5} parent=1 // pred_region
      _
    $region29: #{esim_forward.5} parent=1 // pred_fallthru
      _
    // Predicated region
    $region30: #{esim_forward.5} parent=1 // pred_check
      _
    $region31: #{esim_forward.5} parent=1 // pred_check_branch
      %30 = sbr.rel (0) target = $region33
    $region32: #{esim_forward.5} parent=1 // pred_region
      _
    $region33: #{esim_forward.5} parent=1 // pred_fallthru
      _
    // Predicated region
    $region34: #{esim_forward.5} parent=1 // pred_check
      _
    $region35: #{esim_forward.5} parent=1 // pred_check_branch
      %32 = sbr.rel (0) target = $region37
    $region36: #{esim_forward.5} parent=1 // pred_region
      _
    $region37: #{esim_forward.5} parent=1 // pred_fallthru
      _
    %v33 = vld [vmem:[%s1] sm:$0xf]
    %v34 = vld [vmem:[%s1 + $0x4] sm:$0xf]
    %v35 = vld [vmem:[%s1 + $0x8] sm:$0xf]
    %v36 = vld [vmem:[%s1 + $0xc] sm:$0xf]
    %v37 = vld [vmem:[%s1 + $0x10] sm:$0xf]
    %v38 = vld [vmem:[%s1 + $0x14] sm:$0xf]
    %v39 = vld [vmem:[%s1 + $0x18] sm:$0xf]
    %v40 = vld [vmem:[%s1 + $0x1c] sm:$0xf]
    %v41 = vld [vmem:[%s2] sm:$0xff]
    %v42 = vld [vmem:[%s2 + $0x8] sm:$0xff]
    %v43 = vld [vmem:[%s2 + $0x10] sm:$0xff]
    %v44 = vld [vmem:[%s2 + $0x18] sm:$0xff]
    %v45 = vld [vmem:[%s2 + $0x20] sm:$0xff]
    %v46 = vld [vmem:[%s2 + $0x28] sm:$0xff]
    %v47 = vld [vmem:[%s4] sm:$0x1]
    %v49 = vlaneseq
    %v50 = vshrl.u32 %v49, 7
    %v51 = vsub.s32 0, %v50
    %v52 = vrot.slane %v47, %v51
    %v61 = vcombine.low %v33, %v34
    %v62 = vcombine.low %v35, %v36
    %v63 = vcombine.low %v37, %v38
    %v64 = vcombine.low %v39, %v40
    %v65 = vcombine.low %v52, %v52
    %vm67 = vcmask 392192
    %v68 = vsel %vm67, %v61, 0
    %v70 = vsel %vm67, %v62, 0
    %v72 = vsel %vm67, %v63, 0
    %v74 = vsel %vm67, %v64, 0
    %76 = vmatprep.subr.mxu0 0.0
    %77 = vmatpush1.msra.mxu0 %v41
    %78 = vmatprep.subr.mxu0 0.0
    %79 = vmatpush1.msra.mxu0 %v42
    %80 = vmatprep.subr.mxu0 0.0
    %81 = vmatpush1.msra.mxu0 %v43
    %82 = vmatprep.subr.mxu0 0.0
    %83 = vmatpush1.msra.mxu0 %v44
    %84 = vmatprep.subr.mxu0 0.0
    %85 = vmatpush1.msra.mxu0 %v45
    %86 = vmatprep.subr.mxu0 0.0
    %87 = vmatpush1.msra.mxu0 %v46
    %88 = vmatprep.subr.mxu0 0.0
    %89 = vmatpush1.msra.mxu0 0.0
    %90 = vmatprep.subr.mxu0 0.0
    %91 = vmatpush1.msra.mxu0 0.0
    %92 = vmatprep.subr.mxu0 0.0
    %93 = vmatpush1.msra.mxu0 0.0
    %94 = vmatprep.subr.mxu0 0.0
    %95 = vmatpush1.msra.mxu0 0.0
    %96 = vmatprep.subr.mxu0 0.0
    %97 = vmatpush1.msra.mxu0 0.0
    %98 = vmatprep.subr.mxu0 0.0
    %99 = vmatpush1.msra.mxu0 0.0
    %100 = vmatprep.subr.mxu0 0.0
    %101 = vmatpush1.msra.mxu0 0.0
    %102 = vmatprep.subr.mxu0 0.0
    %103 = vmatpush1.msra.mxu0 0.0
    %104 = vmatprep.subr.mxu0 0.0
    %105 = vmatpush1.msra.mxu0 0.0
    %106 = vmatprep.subr.mxu0 0.0
    %107 = vmatpush1.msra.mxu0 0.0
    %108 = vmatprep.subr.mxu0 0.0
    %109 = vmatpush1.msra.mxu0 0.0
    %110 = vmatprep.subr.mxu0 0.0
    %111 = vmatpush1.msra.mxu0 0.0
    %112 = vmatprep.subr.mxu0 0.0
    %113 = vmatpush1.msra.mxu0 0.0
    %114 = vmatprep.subr.mxu0 0.0
    %115 = vmatpush1.msra.mxu0 0.0
    %116 = vmatprep.subr.mxu0 0.0
    %117 = vmatpush1.msra.mxu0 0.0
    %118 = vmatprep.subr.mxu0 0.0
    %119 = vmatpush1.msra.mxu0 0.0
    %120 = vmatprep.subr.mxu0 0.0
    %121 = vmatpush1.msra.mxu0 0.0
    %122 = vmatprep.subr.mxu0 0.0
    %123 = vmatpush1.msra.mxu0 0.0
    %124 = vmatprep.subr.mxu0 0.0
    %125 = vmatpush1.msra.mxu0 0.0
    %126 = vmatprep.subr.mxu0 0.0
    %127 = vmatpush1.msra.mxu0 0.0
    %128 = vmatprep.subr.mxu0 0.0
    %129 = vmatpush1.msra.mxu0 0.0
    %130 = vmatprep.subr.mxu0 0.0
    %131 = vmatpush1.msra.mxu0 0.0
    %132 = vmatprep.subr.mxu0 0.0
    %133 = vmatpush1.msra.mxu0 0.0
    %134 = vmatprep.subr.mxu0 0.0
    %135 = vmatpush1.msra.mxu0 0.0
    %136 = vmatprep.subr.mxu0 0.0
    %137 = vmatpush1.msra.mxu0 0.0
    %138 = vmatprep.subr.mxu0 0.0
    %139 = vmatpush1.msra.mxu0 0.0
    %140 = vmatprep.mubr.f32.mxu0 0.0
    %141 = vmatmul.mubr.f32.gmra.mrb[0].mxu0 %v68
    %v142 = vpop.f32.mrb[0].mxu0
    %v143 = vadd.f32 %v65, %v142
    %v144 = vpop.f32.mrb[0].mxu0
    %145 = vmatprep.mubr.f32.mxu0 0.0
    %146 = vmatmul.mubr.f32.gmra.mrb[0].mxu0 %v70
    %v147 = vpop.f32.mrb[0].mxu0
    %v148 = vadd.f32 %v65, %v147
    %v149 = vpop.f32.mrb[0].mxu0
    %150 = vmatprep.mubr.f32.mxu0 0.0
    %151 = vmatmul.mubr.f32.gmra.mrb[0].mxu0 %v72
    %v152 = vpop.f32.mrb[0].mxu0
    %v153 = vadd.f32 %v65, %v152
    %v154 = vpop.f32.mrb[0].mxu0
    %155 = vmatprep.mubr.f32.mxu0 0.0
    %156 = vmatmul.mubr.f32.gmra.mrb[0].mxu0 %v74
    %v157 = vpop.f32.mrb[0].mxu0
    %v158 = vadd.f32 %v65, %v157
    %v159 = vpop.f32.mrb[0].mxu0
    %160 = vdwg.mxu0
    %v165 = vcombine.high %v143, %v143
    %v166 = vcombine.high %v148, %v148
    %v167 = vcombine.high %v153, %v153
    %v168 = vcombine.high %v158, %v158
    %173 = vst [vmem:[#allocation2] sm:$0xf] %v143
    %174 = vst [vmem:[#allocation2 + $0x4] sm:$0xf] %v165
    %175 = vst [vmem:[#allocation2 + $0x8] sm:$0xf] %v148
    %176 = vst [vmem:[#allocation2 + $0xc] sm:$0xf] %v166
    %177 = vst [vmem:[#allocation2 + $0x10] sm:$0xf] %v153
    %178 = vst [vmem:[#allocation2 + $0x14] sm:$0xf] %v167
    %179 = vst [vmem:[#allocation2 + $0x18] sm:$0xf] %v158
    %180 = vst [vmem:[#allocation2 + $0x1c] sm:$0xf] %v168
    %v181 = vld [vmem:[%s3] sm:$0xff]
    %v182 = vld [vmem:[%s3 + $0x8] sm:$0xff]
    %s183 = scalar_lea.vmem %s3, 16
    %v184 = vld [vmem:[%s183] sm:$0xff]
    %v185 = vld [vmem:[%s183 + $0x8] sm:$0xff]
    %v186 = vld [vmem:[%s0] sm:$0xf]
    %v187 = vld [vmem:[#allocation2] sm:$0xf]
    %s188 = scalar_lea.vmem [#allocation2], 28
    %v189 = vld [vmem:[%s188] sm:$0xf]
    %vm190 = vcmask 130048
    %v192 = vsel %vm190, 0.0, 0
    %194 = vmatprep.subr.mxu0 0.0
    %195 = vmatpush1.msra.mxu0 %v181
    %196 = vmatprep.subr.mxu0 0.0
    %197 = vmatpush1.msra.mxu0 %v182
    %198 = vmatprep.subr.mxu0 0.0
    %199 = vmatpush1.msra.mxu0 0.0
    %200 = vmatprep.subr.mxu0 0.0
    %201 = vmatpush1.msra.mxu0 0.0
    %202 = vmatprep.subr.mxu0 0.0
    %203 = vmatpush1.msra.mxu0 0.0
    %204 = vmatprep.subr.mxu0 0.0
    %205 = vmatpush1.msra.mxu0 0.0
    %206 = vmatprep.subr.mxu0 0.0
    %207 = vmatpush1.msra.mxu0 0.0
    %208 = vmatprep.subr.mxu0 0.0
    %209 = vmatpush1.msra.mxu0 0.0
    %210 = vmatprep.subr.mxu0 0.0
    %211 = vmatpush1.msra.mxu0 0.0
    %212 = vmatprep.subr.mxu0 0.0
    %213 = vmatpush1.msra.mxu0 0.0
    %214 = vmatprep.subr.mxu0 0.0
    %215 = vmatpush1.msra.mxu0 0.0
    %216 = vmatprep.subr.mxu0 0.0
    %217 = vmatpush1.msra.mxu0 0.0
    %218 = vmatprep.subr.mxu0 0.0
    %219 = vmatpush1.msra.mxu0 0.0
    %220 = vmatprep.subr.mxu0 0.0
    %221 = vmatpush1.msra.mxu0 0.0
    %222 = vmatprep.subr.mxu0 0.0
    %223 = vmatpush1.msra.mxu0 0.0
    %224 = vmatprep.subr.mxu0 0.0
    %225 = vmatpush1.msra.mxu0 0.0
    %226 = vmatprep.subr.mxu0 0.0
    %227 = vmatpush1.msra.mxu0 0.0
    %228 = vmatprep.subr.mxu0 0.0
    %229 = vmatpush1.msra.mxu0 0.0
    %230 = vmatprep.subr.mxu0 0.0
    %231 = vmatpush1.msra.mxu0 0.0
    %232 = vmatprep.subr.mxu0 0.0
    %233 = vmatpush1.msra.mxu0 0.0
    %234 = vmatprep.subr.mxu0 0.0
    %235 = vmatpush1.msra.mxu0 0.0
    %236 = vmatprep.subr.mxu0 0.0
    %237 = vmatpush1.msra.mxu0 0.0
    %238 = vmatprep.subr.mxu0 0.0
    %239 = vmatpush1.msra.mxu0 0.0
    %240 = vmatprep.subr.mxu0 0.0
    %241 = vmatpush1.msra.mxu0 0.0
    %242 = vmatprep.subr.mxu0 0.0
    %243 = vmatpush1.msra.mxu0 0.0
    %244 = vmatprep.subr.mxu0 0.0
    %245 = vmatpush1.msra.mxu0 0.0
    %246 = vmatprep.subr.mxu0 0.0
    %247 = vmatpush1.msra.mxu0 0.0
    %248 = vmatprep.subr.mxu0 0.0
    %249 = vmatpush1.msra.mxu0 0.0
    %250 = vmatprep.subr.mxu0 0.0
    %251 = vmatpush1.msra.mxu0 0.0
    %252 = vmatprep.subr.mxu0 0.0
    %253 = vmatpush1.msra.mxu0 0.0
    %254 = vmatprep.subr.mxu0 0.0
    %255 = vmatpush1.msra.mxu0 0.0
    %256 = vmatprep.subr.mxu0 0.0
    %257 = vmatpush1.msra.mxu0 0.0
    %258 = vmatprep.mubr.f32.mxu0 0.0
    %259 = vmatmul.mubr.f32.gmra.mrb[0].mxu0 %v192
    %v260 = vpop.f32.mrb[0].mxu0
    %v261 = vadd.f32 0.0, %v260
    %v262 = vpop.f32.mrb[0].mxu0
    %263 = vdwg.mxu0
    %v264 = vadd.f32 %v187, %v261
    %265 = vmatprep.subr.mxu0 0.0
    %266 = vmatpush1.msra.mxu0 %v184
    %267 = vmatprep.subr.mxu0 0.0
    %268 = vmatpush1.msra.mxu0 %v185
    %269 = vmatprep.subr.mxu0 0.0
    %270 = vmatpush1.msra.mxu0 0.0
    %271 = vmatprep.subr.mxu0 0.0
    %272 = vmatpush1.msra.mxu0 0.0
    %273 = vmatprep.subr.mxu0 0.0
    %274 = vmatpush1.msra.mxu0 0.0
    %275 = vmatprep.subr.mxu0 0.0
    %276 = vmatpush1.msra.mxu0 0.0
    %277 = vmatprep.subr.mxu0 0.0
    %278 = vmatpush1.msra.mxu0 0.0
    %279 = vmatprep.subr.mxu0 0.0
    %280 = vmatpush1.msra.mxu0 0.0
    %281 = vmatprep.subr.mxu0 0.0
    %282 = vmatpush1.msra.mxu0 0.0
    %283 = vmatprep.subr.mxu0 0.0
    %284 = vmatpush1.msra.mxu0 0.0
    %285 = vmatprep.subr.mxu0 0.0
    %286 = vmatpush1.msra.mxu0 0.0
    %287 = vmatprep.subr.mxu0 0.0
    %288 = vmatpush1.msra.mxu0 0.0
    %289 = vmatprep.subr.mxu0 0.0
    %290 = vmatpush1.msra.mxu0 0.0
    %291 = vmatprep.subr.mxu0 0.0
    %292 = vmatpush1.msra.mxu0 0.0
    %293 = vmatprep.subr.mxu0 0.0
    %294 = vmatpush1.msra.mxu0 0.0
    %295 = vmatprep.subr.mxu0 0.0
    %296 = vmatpush1.msra.mxu0 0.0
    %297 = vmatprep.subr.mxu0 0.0
    %298 = vmatpush1.msra.mxu0 0.0
    %299 = vmatprep.subr.mxu0 0.0
    %300 = vmatpush1.msra.mxu0 0.0
    %301 = vmatprep.subr.mxu0 0.0
    %302 = vmatpush1.msra.mxu0 0.0
    %303 = vmatprep.subr.mxu0 0.0
    %304 = vmatpush1.msra.mxu0 0.0
    %305 = vmatprep.subr.mxu0 0.0
    %306 = vmatpush1.msra.mxu0 0.0
    %307 = vmatprep.subr.mxu0 0.0
    %308 = vmatpush1.msra.mxu0 0.0
    %309 = vmatprep.subr.mxu0 0.0
    %310 = vmatpush1.msra.mxu0 0.0
    %311 = vmatprep.subr.mxu0 0.0
    %312 = vmatpush1.msra.mxu0 0.0
    %313 = vmatprep.subr.mxu0 0.0
    %314 = vmatpush1.msra.mxu0 0.0
    %315 = vmatprep.subr.mxu0 0.0
    %316 = vmatpush1.msra.mxu0 0.0
    %317 = vmatprep.subr.mxu0 0.0
    %318 = vmatpush1.msra.mxu0 0.0
    %319 = vmatprep.subr.mxu0 0.0
    %320 = vmatpush1.msra.mxu0 0.0
    %321 = vmatprep.subr.mxu0 0.0
    %322 = vmatpush1.msra.mxu0 0.0
    %323 = vmatprep.subr.mxu0 0.0
    %324 = vmatpush1.msra.mxu0 0.0
    %325 = vmatprep.subr.mxu0 0.0
    %326 = vmatpush1.msra.mxu0 0.0
    %327 = vmatprep.subr.mxu0 0.0
    %328 = vmatpush1.msra.mxu0 0.0
    %329 = vmatprep.mubr.f32.mxu0 0.0
    %330 = vmatmul.mubr.f32.gmra.mrb[0].mxu0 %v192
    %v331 = vpop.f32.mrb[0].mxu0
    %v332 = vadd.f32 0.0, %v331
    %v333 = vpop.f32.mrb[0].mxu0
    %334 = vdwg.mxu0
    %336 = vrot.lane.b32.xlu0 %v332, 64
    %v337 = vpop.permute.xlu0 %336
    %v339 = vadd.f32 %v189, %v337
    %v340 = vxor.u32 %v264, 2147483648
    %v341 = vmul.f32 %v340, 1.442695
    %v342 = vpow.pop %v341
    %v343 = vadd.f32 %v342, 1.0
    %v344 = vrcp.pop %v343
    %v345 = vmul.f32 1.0, %v344
    %v346 = vtanh.pop %v264
    %v347 = vmul.f32 %v345, 0.0
    %349 = vrot.lane.b32.xlu0 %v346, 96
    %v350 = vpop.permute.xlu0 %349
    %v352 = vmul.f32 %v345, %v350
    %354 = vrot.lane.b32.xlu0 %v352, 16
    %v355 = vpop.permute.xlu0 %354
    %v357 = vadd.f32 %v347, %v355
    %v358 = vtanh.pop %v357
    %360 = vrot.lane.b32.xlu0 %v358, 32
    %v361 = vpop.permute.xlu0 %360
    %v363 = vmul.f32 %v345, %v361
    %v364 = vxor.u32 %v339, 2147483648
    %v365 = vmul.f32 %v364, 1.442695
    %v366 = vpow.pop %v365
    %v367 = vadd.f32 %v366, 1.0
    %v368 = vrcp.pop %v367
    %v369 = vmul.f32 1.0, %v368
    %v370 = vtanh.pop %v339
    %v371 = vmul.f32 %v369, 0.0
    %373 = vrot.lane.b32.xlu0 %v370, 96
    %v374 = vpop.permute.xlu0 %373
    %v376 = vmul.f32 %v369, %v374
    %378 = vrot.lane.b32.xlu0 %v376, 16
    %v379 = vpop.permute.xlu0 %378
    %v381 = vadd.f32 %v371, %v379
    %v382 = vtanh.pop %v381
    %384 = vrot.lane.b32.xlu0 %v382, 32
    %v385 = vpop.permute.xlu0 %384
    %v387 = vmul.f32 %v369, %v385
    %vm388 = vcmp.gt.s32.totalorder %v186, 0
    %vm389 = vcmp.gt.s32.totalorder %v186, 7
    %v390 = vsel %vm388, 1, 0
    %391 = vset.pattern.permute.xlu0 0
    %392 = vperm.xlu0 %391, %v390
    %v393 = vpop.permute.xlu0 %392
    %vm394 = vcmp.eq.s32.totalorder %v393, 1
    %v395 = vsel %vm394, %v363, 0.0
    %v396 = vsel %vm394, %v357, 0.0
    %v397 = vsel %vm389, 1, 0
    %398 = vset.pattern.permute.xlu0 0
    %399 = vperm.xlu0 %398, %v397
    %v400 = vpop.permute.xlu0 %399
    %vm401 = vcmp.eq.s32.totalorder %v400, 1
    %v402 = vsel %vm401, %v387, 0.0
    %v403 = vsel %vm401, %v381, 0.0
    %v404 = vmax.f32 %v363, -1e+30
    %v405 = vsel %vm394, %v404, -1e+30
    %v406 = vmax.f32 %v387, -1e+30
    %v407 = vsel %vm401, %v406, -1e+30
    %s408 = scalar_lea.vmem [#allocation2], 4
    %v409 = vld [vmem:[%s408] sm:$0xf]
    %s410 = scalar_lea.vmem [#allocation2], 24
    %v411 = vld [vmem:[%s410] sm:$0xf]
    %413 = vrot.lane.b32.xlu0 %v395, 80
    %v414 = vpop.permute.xlu0 %413
    %v415 = vsel %vm190, %v414, 0
    %417 = vmatprep.subr.mxu0 0.0
    %418 = vmatpush1.msra.mxu0 %v181
    %419 = vmatprep.subr.mxu0 0.0
    %420 = vmatpush1.msra.mxu0 %v182
    %421 = vmatprep.subr.mxu0 0.0
    %422 = vmatpush1.msra.mxu0 0.0
    %423 = vmatprep.subr.mxu0 0.0
    %424 = vmatpush1.msra.mxu0 0.0
    %425 = vmatprep.subr.mxu0 0.0
    %426 = vmatpush1.msra.mxu0 0.0
    %427 = vmatprep.subr.mxu0 0.0
    %428 = vmatpush1.msra.mxu0 0.0
    %429 = vmatprep.subr.mxu0 0.0
    %430 = vmatpush1.msra.mxu0 0.0
    %431 = vmatprep.subr.mxu0 0.0
    %432 = vmatpush1.msra.mxu0 0.0
    %433 = vmatprep.subr.mxu0 0.0
    %434 = vmatpush1.msra.mxu0 0.0
    %435 = vmatprep.subr.mxu0 0.0
    %436 = vmatpush1.msra.mxu0 0.0
    %437 = vmatprep.subr.mxu0 0.0
    %438 = vmatpush1.msra.mxu0 0.0
    %439 = vmatprep.subr.mxu0 0.0
    %440 = vmatpush1.msra.mxu0 0.0
    %441 = vmatprep.subr.mxu0 0.0
    %442 = vmatpush1.msra.mxu0 0.0
    %443 = vmatprep.subr.mxu0 0.0
    %444 = vmatpush1.msra.mxu0 0.0
    %445 = vmatprep.subr.mxu0 0.0
    %446 = vmatpush1.msra.mxu0 0.0
    %447 = vmatprep.subr.mxu0 0.0
    %448 = vmatpush1.msra.mxu0 0.0
    %449 = vmatprep.subr.mxu0 0.0
    %450 = vmatpush1.msra.mxu0 0.0
    %451 = vmatprep.subr.mxu0 0.0
    %452 = vmatpush1.msra.mxu0 0.0
    %453 = vmatprep.subr.mxu0 0.0
    %454 = vmatpush1.msra.mxu0 0.0
    %455 = vmatprep.subr.mxu0 0.0
    %456 = vmatpush1.msra.mxu0 0.0
    %457 = vmatprep.subr.mxu0 0.0
    %458 = vmatpush1.msra.mxu0 0.0
    %459 = vmatprep.subr.mxu0 0.0
    %460 = vmatpush1.msra.mxu0 0.0
    %461 = vmatprep.subr.mxu0 0.0
    %462 = vmatpush1.msra.mxu0 0.0
    %463 = vmatprep.subr.mxu0 0.0
    %464 = vmatpush1.msra.mxu0 0.0
    %465 = vmatprep.subr.mxu0 0.0
    %466 = vmatpush1.msra.mxu0 0.0
    %467 = vmatprep.subr.mxu0 0.0
    %468 = vmatpush1.msra.mxu0 0.0
    %469 = vmatprep.subr.mxu0 0.0
    %470 = vmatpush1.msra.mxu0 0.0
    %471 = vmatprep.subr.mxu0 0.0
    %472 = vmatpush1.msra.mxu0 0.0
    %473 = vmatprep.subr.mxu0 0.0
    %474 = vmatpush1.msra.mxu0 0.0
    %475 = vmatprep.subr.mxu0 0.0
    %476 = vmatpush1.msra.mxu0 0.0
    %477 = vmatprep.subr.mxu0 0.0
    %478 = vmatpush1.msra.mxu0 0.0
    %479 = vmatprep.subr.mxu0 0.0
    %480 = vmatpush1.msra.mxu0 0.0
    %481 = vmatprep.mubr.f32.mxu0 0.0
    %482 = vmatmul.mubr.f32.gmra.mrb[0].mxu0 %v415
    %v483 = vpop.f32.mrb[0].mxu0
    %v484 = vadd.f32 0.0, %v483
    %v485 = vpop.f32.mrb[0].mxu0
    %486 = vdwg.mxu0
    %v487 = vadd.f32 %v409, %v484
    %489 = vrot.lane.b32.xlu0 %v402, 16
    %v490 = vpop.permute.xlu0 %489
    %v491 = vsel %vm190, %v490, 0
    %493 = vmatprep.subr.mxu0 0.0
    %494 = vmatpush1.msra.mxu0 %v184
    %495 = vmatprep.subr.mxu0 0.0
    %496 = vmatpush1.msra.mxu0 %v185
    %497 = vmatprep.subr.mxu0 0.0
    %498 = vmatpush1.msra.mxu0 0.0
    %499 = vmatprep.subr.mxu0 0.0
    %500 = vmatpush1.msra.mxu0 0.0
    %501 = vmatprep.subr.mxu0 0.0
    %502 = vmatpush1.msra.mxu0 0.0
    %503 = vmatprep.subr.mxu0 0.0
    %504 = vmatpush1.msra.mxu0 0.0
    %505 = vmatprep.subr.mxu0 0.0
    %506 = vmatpush1.msra.mxu0 0.0
    %507 = vmatprep.subr.mxu0 0.0
    %508 = vmatpush1.msra.mxu0 0.0
    %509 = vmatprep.subr.mxu0 0.0
    %510 = vmatpush1.msra.mxu0 0.0
    %511 = vmatprep.subr.mxu0 0.0
    %512 = vmatpush1.msra.mxu0 0.0
    %513 = vmatprep.subr.mxu0 0.0
    %514 = vmatpush1.msra.mxu0 0.0
    %515 = vmatprep.subr.mxu0 0.0
    %516 = vmatpush1.msra.mxu0 0.0
    %517 = vmatprep.subr.mxu0 0.0
    %518 = vmatpush1.msra.mxu0 0.0
    %519 = vmatprep.subr.mxu0 0.0
    %520 = vmatpush1.msra.mxu0 0.0
    %521 = vmatprep.subr.mxu0 0.0
    %522 = vmatpush1.msra.mxu0 0.0
    %523 = vmatprep.subr.mxu0 0.0
    %524 = vmatpush1.msra.mxu0 0.0
    %525 = vmatprep.subr.mxu0 0.0
    %526 = vmatpush1.msra.mxu0 0.0
    %527 = vmatprep.subr.mxu0 0.0
    %528 = vmatpush1.msra.mxu0 0.0
    %529 = vmatprep.subr.mxu0 0.0
    %530 = vmatpush1.msra.mxu0 0.0
    %531 = vmatprep.subr.mxu0 0.0
    %532 = vmatpush1.msra.mxu0 0.0
    %533 = vmatprep.subr.mxu0 0.0
    %534 = vmatpush1.msra.mxu0 0.0
    %535 = vmatprep.subr.mxu0 0.0
    %536 = vmatpush1.msra.mxu0 0.0
    %537 = vmatprep.subr.mxu0 0.0
    %538 = vmatpush1.msra.mxu0 0.0
    %539 = vmatprep.subr.mxu0 0.0
    %540 = vmatpush1.msra.mxu0 0.0
    %541 = vmatprep.subr.mxu0 0.0
    %542 = vmatpush1.msra.mxu0 0.0
    %543 = vmatprep.subr.mxu0 0.0
    %544 = vmatpush1.msra.mxu0 0.0
    %545 = vmatprep.subr.mxu0 0.0
    %546 = vmatpush1.msra.mxu0 0.0
    %547 = vmatprep.subr.mxu0 0.0
    %548 = vmatpush1.msra.mxu0 0.0
    %549 = vmatprep.subr.mxu0 0.0
    %550 = vmatpush1.msra.mxu0 0.0
    %551 = vmatprep.subr.mxu0 0.0
    %552 = vmatpush1.msra.mxu0 0.0
    %553 = vmatprep.subr.mxu0 0.0
    %554 = vmatpush1.msra.mxu0 0.0
    %555 = vmatprep.subr.mxu0 0.0
    %556 = vmatpush1.msra.mxu0 0.0
    %557 = vmatprep.mubr.f32.mxu0 0.0
    %558 = vmatmul.mubr.f32.gmra.mrb[0].mxu0 %v491
    %v559 = vpop.f32.mrb[0].mxu0
    %v560 = vadd.f32 0.0, %v559
    %v561 = vpop.f32.mrb[0].mxu0
    %562 = vdwg.mxu0
    %564 = vrot.lane.b32.xlu0 %v560, 64
    %v565 = vpop.permute.xlu0 %564
    %v567 = vadd.f32 %v411, %v565
    %v568 = vxor.u32 %v487, 2147483648
    %v569 = vmul.f32 %v568, 1.442695
    %v570 = vpow.pop %v569
    %v571 = vadd.f32 %v570, 1.0
    %v572 = vrcp.pop %v571
    %v573 = vmul.f32 1.0, %v572
    %v574 = vtanh.pop %v487
    %v575 = vmul.f32 %v573, %v396
    %577 = vrot.lane.b32.xlu0 %v574, 96
    %v578 = vpop.permute.xlu0 %577
    %v580 = vmul.f32 %v573, %v578
    %582 = vrot.lane.b32.xlu0 %v580, 16
    %v583 = vpop.permute.xlu0 %582
    %v585 = vadd.f32 %v575, %v583
    %v586 = vtanh.pop %v585
    %588 = vrot.lane.b32.xlu0 %v586, 32
    %v589 = vpop.permute.xlu0 %588
    %v591 = vmul.f32 %v573, %v589
    %v592 = vxor.u32 %v567, 2147483648
    %v593 = vmul.f32 %v592, 1.442695
    %v594 = vpow.pop %v593
    %v595 = vadd.f32 %v594, 1.0
    %v596 = vrcp.pop %v595
    %v597 = vmul.f32 1.0, %v596
    %v598 = vtanh.pop %v567
    %v599 = vmul.f32 %v597, %v403
    %601 = vrot.lane.b32.xlu0 %v598, 96
    %v602 = vpop.permute.xlu0 %601
    %v604 = vmul.f32 %v597, %v602
    %606 = vrot.lane.b32.xlu0 %v604, 16
    %v607 = vpop.permute.xlu0 %606
    %v609 = vadd.f32 %v599, %v607
    %v610 = vtanh.pop %v609
    %612 = vrot.lane.b32.xlu0 %v610, 32
    %v613 = vpop.permute.xlu0 %612
    %v615 = vmul.f32 %v597, %v613
    %vm616 = vcmp.gt.s32.totalorder %v186, 1
    %vm617 = vcmp.gt.s32.totalorder %v186, 6
    %v618 = vsel %vm616, 1, 0
    %619 = vset.pattern.permute.xlu0 0
    %620 = vperm.xlu0 %619, %v618
    %v621 = vpop.permute.xlu0 %620
    %vm622 = vcmp.eq.s32.totalorder %v621, 1
    %v623 = vsel %vm622, %v591, %v395
    %v624 = vsel %vm622, %v585, %v396
    %v625 = vsel %vm617, 1, 0
    %626 = vset.pattern.permute.xlu0 0
    %627 = vperm.xlu0 %626, %v625
    %v628 = vpop.permute.xlu0 %627
    %vm629 = vcmp.eq.s32.totalorder %v628, 1
    %v630 = vsel %vm629, %v615, %v402
    %v631 = vsel %vm629, %v609, %v403
    %v632 = vmax.f32 %v405, %v591
    %v633 = vsel %vm622, %v632, %v405
    %v634 = vmax.f32 %v407, %v615
    %v635 = vsel %vm629, %v634, %v407
    %s636 = scalar_lea.vmem [#allocation2], 8
    %v637 = vld [vmem:[%s636] sm:$0xf]
    %s638 = scalar_lea.vmem [#allocation2], 20
    %v639 = vld [vmem:[%s638] sm:$0xf]
    %641 = vrot.lane.b32.xlu0 %v623, 80
    %v642 = vpop.permute.xlu0 %641
    %v643 = vsel %vm190, %v642, 0
    %645 = vmatprep.subr.mxu0 0.0
    %646 = vmatpush1.msra.mxu0 %v181
    %647 = vmatprep.subr.mxu0 0.0
    %648 = vmatpush1.msra.mxu0 %v182
    %649 = vmatprep.subr.mxu0 0.0
    %650 = vmatpush1.msra.mxu0 0.0
    %651 = vmatprep.subr.mxu0 0.0
    %652 = vmatpush1.msra.mxu0 0.0
    %653 = vmatprep.subr.mxu0 0.0
    %654 = vmatpush1.msra.mxu0 0.0
    %655 = vmatprep.subr.mxu0 0.0
    %656 = vmatpush1.msra.mxu0 0.0
    %657 = vmatprep.subr.mxu0 0.0
    %658 = vmatpush1.msra.mxu0 0.0
    %659 = vmatprep.subr.mxu0 0.0
    %660 = vmatpush1.msra.mxu0 0.0
    %661 = vmatprep.subr.mxu0 0.0
    %662 = vmatpush1.msra.mxu0 0.0
    %663 = vmatprep.subr.mxu0 0.0
    %664 = vmatpush1.msra.mxu0 0.0
    %665 = vmatprep.subr.mxu0 0.0
    %666 = vmatpush1.msra.mxu0 0.0
    %667 = vmatprep.subr.mxu0 0.0
    %668 = vmatpush1.msra.mxu0 0.0
    %669 = vmatprep.subr.mxu0 0.0
    %670 = vmatpush1.msra.mxu0 0.0
    %671 = vmatprep.subr.mxu0 0.0
    %672 = vmatpush1.msra.mxu0 0.0
    %673 = vmatprep.subr.mxu0 0.0
    %674 = vmatpush1.msra.mxu0 0.0
    %675 = vmatprep.subr.mxu0 0.0
    %676 = vmatpush1.msra.mxu0 0.0
    %677 = vmatprep.subr.mxu0 0.0
    %678 = vmatpush1.msra.mxu0 0.0
    %679 = vmatprep.subr.mxu0 0.0
    %680 = vmatpush1.msra.mxu0 0.0
    %681 = vmatprep.subr.mxu0 0.0
    %682 = vmatpush1.msra.mxu0 0.0
    %683 = vmatprep.subr.mxu0 0.0
    %684 = vmatpush1.msra.mxu0 0.0
    %685 = vmatprep.subr.mxu0 0.0
    %686 = vmatpush1.msra.mxu0 0.0
    %687 = vmatprep.subr.mxu0 0.0
    %688 = vmatpush1.msra.mxu0 0.0
    %689 = vmatprep.subr.mxu0 0.0
    %690 = vmatpush1.msra.mxu0 0.0
    %691 = vmatprep.subr.mxu0 0.0
    %692 = vmatpush1.msra.mxu0 0.0
    %693 = vmatprep.subr.mxu0 0.0
    %694 = vmatpush1.msra.mxu0 0.0
    %695 = vmatprep.subr.mxu0 0.0
    %696 = vmatpush1.msra.mxu0 0.0
    %697 = vmatprep.subr.mxu0 0.0
    %698 = vmatpush1.msra.mxu0 0.0
    %699 = vmatprep.subr.mxu0 0.0
    %700 = vmatpush1.msra.mxu0 0.0
    %701 = vmatprep.subr.mxu0 0.0
    %702 = vmatpush1.msra.mxu0 0.0
    %703 = vmatprep.subr.mxu0 0.0
    %704 = vmatpush1.msra.mxu0 0.0
    %705 = vmatprep.subr.mxu0 0.0
    %706 = vmatpush1.msra.mxu0 0.0
    %707 = vmatprep.subr.mxu0 0.0
    %708 = vmatpush1.msra.mxu0 0.0
    %709 = vmatprep.mubr.f32.mxu0 0.0
    %710 = vmatmul.mubr.f32.gmra.mrb[0].mxu0 %v643
    %v711 = vpop.f32.mrb[0].mxu0
    %v712 = vadd.f32 0.0, %v711
    %v713 = vpop.f32.mrb[0].mxu0
    %714 = vdwg.mxu0
    %v715 = vadd.f32 %v637, %v712
    %717 = vrot.lane.b32.xlu0 %v630, 16
    %v718 = vpop.permute.xlu0 %717
    %v719 = vsel %vm190, %v718, 0
    %721 = vmatprep.subr.mxu0 0.0
    %722 = vmatpush1.msra.mxu0 %v184
    %723 = vmatprep.subr.mxu0 0.0
    %724 = vmatpush1.msra.mxu0 %v185
    %725 = vmatprep.subr.mxu0 0.0
    %726 = vmatpush1.msra.mxu0 0.0
    %727 = vmatprep.subr.mxu0 0.0
    %728 = vmatpush1.msra.mxu0 0.0
    %729 = vmatprep.subr.mxu0 0.0
    %730 = vmatpush1.msra.mxu0 0.0
    %731 = vmatprep.subr.mxu0 0.0
    %732 = vmatpush1.msra.mxu0 0.0
    %733 = vmatprep.subr.mxu0 0.0
    %734 = vmatpush1.msra.mxu0 0.0
    %735 = vmatprep.subr.mxu0 0.0
    %736 = vmatpush1.msra.mxu0 0.0
    %737 = vmatprep.subr.mxu0 0.0
    %738 = vmatpush1.msra.mxu0 0.0
    %739 = vmatprep.subr.mxu0 0.0
    %740 = vmatpush1.msra.mxu0 0.0
    %741 = vmatprep.subr.mxu0 0.0
    %742 = vmatpush1.msra.mxu0 0.0
    %743 = vmatprep.subr.mxu0 0.0
    %744 = vmatpush1.msra.mxu0 0.0
    %745 = vmatprep.subr.mxu0 0.0
    %746 = vmatpush1.msra.mxu0 0.0
    %747 = vmatprep.subr.mxu0 0.0
    %748 = vmatpush1.msra.mxu0 0.0
    %749 = vmatprep.subr.mxu0 0.0
    %750 = vmatpush1.msra.mxu0 0.0
    %751 = vmatprep.subr.mxu0 0.0
    %752 = vmatpush1.msra.mxu0 0.0
    %753 = vmatprep.subr.mxu0 0.0
    %754 = vmatpush1.msra.mxu0 0.0
    %755 = vmatprep.subr.mxu0 0.0
    %756 = vmatpush1.msra.mxu0 0.0
    %757 = vmatprep.subr.mxu0 0.0
    %758 = vmatpush1.msra.mxu0 0.0
    %759 = vmatprep.subr.mxu0 0.0
    %760 = vmatpush1.msra.mxu0 0.0
    %761 = vmatprep.subr.mxu0 0.0
    %762 = vmatpush1.msra.mxu0 0.0
    %763 = vmatprep.subr.mxu0 0.0
    %764 = vmatpush1.msra.mxu0 0.0
    %765 = vmatprep.subr.mxu0 0.0
    %766 = vmatpush1.msra.mxu0 0.0
    %767 = vmatprep.subr.mxu0 0.0
    %768 = vmatpush1.msra.mxu0 0.0
    %769 = vmatprep.subr.mxu0 0.0
    %770 = vmatpush1.msra.mxu0 0.0
    %771 = vmatprep.subr.mxu0 0.0
    %772 = vmatpush1.msra.mxu0 0.0
    %773 = vmatprep.subr.mxu0 0.0
    %774 = vmatpush1.msra.mxu0 0.0
    %775 = vmatprep.subr.mxu0 0.0
    %776 = vmatpush1.msra.mxu0 0.0
    %777 = vmatprep.subr.mxu0 0.0
    %778 = vmatpush1.msra.mxu0 0.0
    %779 = vmatprep.subr.mxu0 0.0
    %780 = vmatpush1.msra.mxu0 0.0
    %781 = vmatprep.subr.mxu0 0.0
    %782 = vmatpush1.msra.mxu0 0.0
    %783 = vmatprep.subr.mxu0 0.0
    %784 = vmatpush1.msra.mxu0 0.0
    %785 = vmatprep.mubr.f32.mxu0 0.0
    %786 = vmatmul.mubr.f32.gmra.mrb[0].mxu0 %v719
    %v787 = vpop.f32.mrb[0].mxu0
    %v788 = vadd.f32 0.0, %v787
    %v789 = vpop.f32.mrb[0].mxu0
    %790 = vdwg.mxu0
    %792 = vrot.lane.b32.xlu0 %v788, 64
    %v793 = vpop.permute.xlu0 %792
    %v795 = vadd.f32 %v639, %v793
    %v796 = vxor.u32 %v715, 2147483648
    %v797 = vmul.f32 %v796, 1.442695
    %v798 = vpow.pop %v797
    %v799 = vadd.f32 %v798, 1.0
    %v800 = vrcp.pop %v799
    %v801 = vmul.f32 1.0, %v800
    %v802 = vtanh.pop %v715
    %v803 = vmul.f32 %v801, %v624
    %805 = vrot.lane.b32.xlu0 %v802, 96
    %v806 = vpop.permute.xlu0 %805
    %v808 = vmul.f32 %v801, %v806
    %810 = vrot.lane.b32.xlu0 %v808, 16
    %v811 = vpop.permute.xlu0 %810
    %v813 = vadd.f32 %v803, %v811
    %v814 = vtanh.pop %v813
    %816 = vrot.lane.b32.xlu0 %v814, 32
    %v817 = vpop.permute.xlu0 %816
    %v819 = vmul.f32 %v801, %v817
    %v820 = vxor.u32 %v795, 2147483648
    %v821 = vmul.f32 %v820, 1.442695
    %v822 = vpow.pop %v821
    %v823 = vadd.f32 %v822, 1.0
    %v824 = vrcp.pop %v823
    %v825 = vmul.f32 1.0, %v824
    %v826 = vtanh.pop %v795
    %v827 = vmul.f32 %v825, %v631
    %829 = vrot.lane.b32.xlu0 %v826, 96
    %v830 = vpop.permute.xlu0 %829
    %v832 = vmul.f32 %v825, %v830
    %834 = vrot.lane.b32.xlu0 %v832, 16
    %v835 = vpop.permute.xlu0 %834
    %v837 = vadd.f32 %v827, %v835
    %v838 = vtanh.pop %v837
    %840 = vrot.lane.b32.xlu0 %v838, 32
    %v841 = vpop.permute.xlu0 %840
    %v843 = vmul.f32 %v825, %v841
    %vm844 = vcmp.gt.s32.totalorder %v186, 2
    %vm845 = vcmp.gt.s32.totalorder %v186, 5
    %v846 = vsel %vm844, 1, 0
    %847 = vset.pattern.permute.xlu0 0
    %848 = vperm.xlu0 %847, %v846
    %v849 = vpop.permute.xlu0 %848
    %vm850 = vcmp.eq.s32.totalorder %v849, 1
    %v851 = vsel %vm850, %v819, %v623
    %v852 = vsel %vm850, %v813, %v624
    %v853 = vsel %vm845, 1, 0
    %854 = vset.pattern.permute.xlu0 0
    %855 = vperm.xlu0 %854, %v853
    %v856 = vpop.permute.xlu0 %855
    %vm857 = vcmp.eq.s32.totalorder %v856, 1
    %v858 = vsel %vm857, %v843, %v630
    %v859 = vsel %vm857, %v837, %v631
    %v860 = vmax.f32 %v633, %v819
    %v861 = vsel %vm850, %v860, %v633
    %v862 = vmax.f32 %v635, %v843
    %v863 = vsel %vm857, %v862, %v635
    %s864 = scalar_lea.vmem [#allocation2], 12
    %v865 = vld [vmem:[%s864] sm:$0xf]
    %s866 = scalar_lea.vmem [#allocation2], 16
    %v867 = vld [vmem:[%s866] sm:$0xf]
    %869 = vrot.lane.b32.xlu0 %v851, 80
    %v870 = vpop.permute.xlu0 %869
    %v871 = vsel %vm190, %v870, 0
    %873 = vmatprep.subr.mxu0 0.0
    %874 = vmatpush1.msra.mxu0 %v181
    %875 = vmatprep.subr.mxu0 0.0
    %876 = vmatpush1.msra.mxu0 %v182
    %877 = vmatprep.subr.mxu0 0.0
    %878 = vmatpush1.msra.mxu0 0.0
    %879 = vmatprep.subr.mxu0 0.0
    %880 = vmatpush1.msra.mxu0 0.0
    %881 = vmatprep.subr.mxu0 0.0
    %882 = vmatpush1.msra.mxu0 0.0
    %883 = vmatprep.subr.mxu0 0.0
    %884 = vmatpush1.msra.mxu0 0.0
    %885 = vmatprep.subr.mxu0 0.0
    %886 = vmatpush1.msra.mxu0 0.0
    %887 = vmatprep.subr.mxu0 0.0
    %888 = vmatpush1.msra.mxu0 0.0
    %889 = vmatprep.subr.mxu0 0.0
    %890 = vmatpush1.msra.mxu0 0.0
    %891 = vmatprep.subr.mxu0 0.0
    %892 = vmatpush1.msra.mxu0 0.0
    %893 = vmatprep.subr.mxu0 0.0
    %894 = vmatpush1.msra.mxu0 0.0
    %895 = vmatprep.subr.mxu0 0.0
    %896 = vmatpush1.msra.mxu0 0.0
    %897 = vmatprep.subr.mxu0 0.0
    %898 = vmatpush1.msra.mxu0 0.0
    %899 = vmatprep.subr.mxu0 0.0
    %900 = vmatpush1.msra.mxu0 0.0
    %901 = vmatprep.subr.mxu0 0.0
    %902 = vmatpush1.msra.mxu0 0.0
    %903 = vmatprep.subr.mxu0 0.0
    %904 = vmatpush1.msra.mxu0 0.0
    %905 = vmatprep.subr.mxu0 0.0
    %906 = vmatpush1.msra.mxu0 0.0
    %907 = vmatprep.subr.mxu0 0.0
    %908 = vmatpush1.msra.mxu0 0.0
    %909 = vmatprep.subr.mxu0 0.0
    %910 = vmatpush1.msra.mxu0 0.0
    %911 = vmatprep.subr.mxu0 0.0
    %912 = vmatpush1.msra.mxu0 0.0
    %913 = vmatprep.subr.mxu0 0.0
    %914 = vmatpush1.msra.mxu0 0.0
    %915 = vmatprep.subr.mxu0 0.0
    %916 = vmatpush1.msra.mxu0 0.0
    %917 = vmatprep.subr.mxu0 0.0
    %918 = vmatpush1.msra.mxu0 0.0
    %919 = vmatprep.subr.mxu0 0.0
    %920 = vmatpush1.msra.mxu0 0.0
    %921 = vmatprep.subr.mxu0 0.0
    %922 = vmatpush1.msra.mxu0 0.0
    %923 = vmatprep.subr.mxu0 0.0
    %924 = vmatpush1.msra.mxu0 0.0
    %925 = vmatprep.subr.mxu0 0.0
    %926 = vmatpush1.msra.mxu0 0.0
    %927 = vmatprep.subr.mxu0 0.0
    %928 = vmatpush1.msra.mxu0 0.0
    %929 = vmatprep.subr.mxu0 0.0
    %930 = vmatpush1.msra.mxu0 0.0
    %931 = vmatprep.subr.mxu0 0.0
    %932 = vmatpush1.msra.mxu0 0.0
    %933 = vmatprep.subr.mxu0 0.0
    %934 = vmatpush1.msra.mxu0 0.0
    %935 = vmatprep.subr.mxu0 0.0
    %936 = vmatpush1.msra.mxu0 0.0
    %937 = vmatprep.mubr.f32.mxu0 0.0
    %938 = vmatmul.mubr.f32.gmra.mrb[0].mxu0 %v871
    %v939 = vpop.f32.mrb[0].mxu0
    %v940 = vadd.f32 0.0, %v939
    %v941 = vpop.f32.mrb[0].mxu0
    %942 = vdwg.mxu0
    %v943 = vadd.f32 %v865, %v940
    %945 = vrot.lane.b32.xlu0 %v858, 16
    %v946 = vpop.permute.xlu0 %945
    %v947 = vsel %vm190, %v946, 0
    %949 = vmatprep.subr.mxu0 0.0
    %950 = vmatpush1.msra.mxu0 %v184
    %951 = vmatprep.subr.mxu0 0.0
    %952 = vmatpush1.msra.mxu0 %v185
    %953 = vmatprep.subr.mxu0 0.0
    %954 = vmatpush1.msra.mxu0 0.0
    %955 = vmatprep.subr.mxu0 0.0
    %956 = vmatpush1.msra.mxu0 0.0
    %957 = vmatprep.subr.mxu0 0.0
    %958 = vmatpush1.msra.mxu0 0.0
    %959 = vmatprep.subr.mxu0 0.0
    %960 = vmatpush1.msra.mxu0 0.0
    %961 = vmatprep.subr.mxu0 0.0
    %962 = vmatpush1.msra.mxu0 0.0
    %963 = vmatprep.subr.mxu0 0.0
    %964 = vmatpush1.msra.mxu0 0.0
    %965 = vmatprep.subr.mxu0 0.0
    %966 = vmatpush1.msra.mxu0 0.0
    %967 = vmatprep.subr.mxu0 0.0
    %968 = vmatpush1.msra.mxu0 0.0
    %969 = vmatprep.subr.mxu0 0.0
    %970 = vmatpush1.msra.mxu0 0.0
    %971 = vmatprep.subr.mxu0 0.0
    %972 = vmatpush1.msra.mxu0 0.0
    %973 = vmatprep.subr.mxu0 0.0
    %974 = vmatpush1.msra.mxu0 0.0
    %975 = vmatprep.subr.mxu0 0.0
    %976 = vmatpush1.msra.mxu0 0.0
    %977 = vmatprep.subr.mxu0 0.0
    %978 = vmatpush1.msra.mxu0 0.0
    %979 = vmatprep.subr.mxu0 0.0
    %980 = vmatpush1.msra.mxu0 0.0
    %981 = vmatprep.subr.mxu0 0.0
    %982 = vmatpush1.msra.mxu0 0.0
    %983 = vmatprep.subr.mxu0 0.0
    %984 = vmatpush1.msra.mxu0 0.0
    %985 = vmatprep.subr.mxu0 0.0
    %986 = vmatpush1.msra.mxu0 0.0
    %987 = vmatprep.subr.mxu0 0.0
    %988 = vmatpush1.msra.mxu0 0.0
    %989 = vmatprep.subr.mxu0 0.0
    %990 = vmatpush1.msra.mxu0 0.0
    %991 = vmatprep.subr.mxu0 0.0
    %992 = vmatpush1.msra.mxu0 0.0
    %993 = vmatprep.subr.mxu0 0.0
    %994 = vmatpush1.msra.mxu0 0.0
    %995 = vmatprep.subr.mxu0 0.0
    %996 = vmatpush1.msra.mxu0 0.0
    %997 = vmatprep.subr.mxu0 0.0
    %998 = vmatpush1.msra.mxu0 0.0
    %999 = vmatprep.subr.mxu0 0.0
    %1000 = vmatpush1.msra.mxu0 0.0
    %1001 = vmatprep.subr.mxu0 0.0
    %1002 = vmatpush1.msra.mxu0 0.0
    %1003 = vmatprep.subr.mxu0 0.0
    %1004 = vmatpush1.msra.mxu0 0.0
    %1005 = vmatprep.subr.mxu0 0.0
    %1006 = vmatpush1.msra.mxu0 0.0
    %1007 = vmatprep.subr.mxu0 0.0
    %1008 = vmatpush1.msra.mxu0 0.0
    %1009 = vmatprep.subr.mxu0 0.0
    %1010 = vmatpush1.msra.mxu0 0.0
    %1011 = vmatprep.subr.mxu0 0.0
    %1012 = vmatpush1.msra.mxu0 0.0
    %1013 = vmatprep.mubr.f32.mxu0 0.0
    %1014 = vmatmul.mubr.f32.gmra.mrb[0].mxu0 %v947
    %v1015 = vpop.f32.mrb[0].mxu0
    %v1016 = vadd.f32 0.0, %v1015
    %v1017 = vpop.f32.mrb[0].mxu0
    %1018 = vdwg.mxu0
    %1020 = vrot.lane.b32.xlu0 %v1016, 64
    %v1021 = vpop.permute.xlu0 %1020
    %v1023 = vadd.f32 %v867, %v1021
    %v1024 = vxor.u32 %v943, 2147483648
    %v1025 = vmul.f32 %v1024, 1.442695
    %v1026 = vpow.pop %v1025
    %v1027 = vadd.f32 %v1026, 1.0
    %v1028 = vrcp.pop %v1027
    %v1029 = vmul.f32 1.0, %v1028
    %v1030 = vtanh.pop %v943
    %v1031 = vmul.f32 %v1029, %v852
    %1033 = vrot.lane.b32.xlu0 %v1030, 96
    %v1034 = vpop.permute.xlu0 %1033
    %v1036 = vmul.f32 %v1029, %v1034
    %1038 = vrot.lane.b32.xlu0 %v1036, 16
    %v1039 = vpop.permute.xlu0 %1038
    %v1041 = vadd.f32 %v1031, %v1039
    %v1042 = vtanh.pop %v1041
    %1044 = vrot.lane.b32.xlu0 %v1042, 32
    %v1045 = vpop.permute.xlu0 %1044
    %v1047 = vmul.f32 %v1029, %v1045
    %v1048 = vxor.u32 %v1023, 2147483648
    %v1049 = vmul.f32 %v1048, 1.442695
    %v1050 = vpow.pop %v1049
    %v1051 = vadd.f32 %v1050, 1.0
    %v1052 = vrcp.pop %v1051
    %v1053 = vmul.f32 1.0, %v1052
    %v1054 = vtanh.pop %v1023
    %v1055 = vmul.f32 %v1053, %v859
    %1057 = vrot.lane.b32.xlu0 %v1054, 96
    %v1058 = vpop.permute.xlu0 %1057
    %v1060 = vmul.f32 %v1053, %v1058
    %1062 = vrot.lane.b32.xlu0 %v1060, 16
    %v1063 = vpop.permute.xlu0 %1062
    %v1065 = vadd.f32 %v1055, %v1063
    %v1066 = vtanh.pop %v1065
    %1068 = vrot.lane.b32.xlu0 %v1066, 32
    %v1069 = vpop.permute.xlu0 %1068
    %v1071 = vmul.f32 %v1053, %v1069
    %vm1072 = vcmp.gt.s32.totalorder %v186, 3
    %vm1073 = vcmp.gt.s32.totalorder %v186, 4
    %v1074 = vsel %vm1072, 1, 0
    %1075 = vset.pattern.permute.xlu0 0
    %1076 = vperm.xlu0 %1075, %v1074
    %v1077 = vpop.permute.xlu0 %1076
    %vm1078 = vcmp.eq.s32.totalorder %v1077, 1
    %v1079 = vsel %vm1078, %v1047, %v851
    %v1080 = vsel %vm1078, %v1041, %v852
    %v1081 = vsel %vm1073, 1, 0
    %1082 = vset.pattern.permute.xlu0 0
    %1083 = vperm.xlu0 %1082, %v1081
    %v1084 = vpop.permute.xlu0 %1083
    %vm1085 = vcmp.eq.s32.totalorder %v1084, 1
    %v1086 = vsel %vm1085, %v1071, %v858
    %v1087 = vsel %vm1085, %v1065, %v859
    %v1088 = vmax.f32 %v861, %v1047
    %v1089 = vsel %vm1078, %v1088, %v861
    %v1090 = vmax.f32 %v863, %v1071
    %v1091 = vsel %vm1085, %v1090, %v863
    %1093 = vrot.lane.b32.xlu0 %v1079, 80
    %v1094 = vpop.permute.xlu0 %1093
    %v1095 = vsel %vm190, %v1094, 0
    %1097 = vmatprep.subr.mxu0 0.0
    %1098 = vmatpush1.msra.mxu0 %v181
    %1099 = vmatprep.subr.mxu0 0.0
    %1100 = vmatpush1.msra.mxu0 %v182
    %1101 = vmatprep.subr.mxu0 0.0
    %1102 = vmatpush1.msra.mxu0 0.0
    %1103 = vmatprep.subr.mxu0 0.0
    %1104 = vmatpush1.msra.mxu0 0.0
    %1105 = vmatprep.subr.mxu0 0.0
    %1106 = vmatpush1.msra.mxu0 0.0
    %1107 = vmatprep.subr.mxu0 0.0
    %1108 = vmatpush1.msra.mxu0 0.0
    %1109 = vmatprep.subr.mxu0 0.0
    %1110 = vmatpush1.msra.mxu0 0.0
    %1111 = vmatprep.subr.mxu0 0.0
    %1112 = vmatpush1.msra.mxu0 0.0
    %1113 = vmatprep.subr.mxu0 0.0
    %1114 = vmatpush1.msra.mxu0 0.0
    %1115 = vmatprep.subr.mxu0 0.0
    %1116 = vmatpush1.msra.mxu0 0.0
    %1117 = vmatprep.subr.mxu0 0.0
    %1118 = vmatpush1.msra.mxu0 0.0
    %1119 = vmatprep.subr.mxu0 0.0
    %1120 = vmatpush1.msra.mxu0 0.0
    %1121 = vmatprep.subr.mxu0 0.0
    %1122 = vmatpush1.msra.mxu0 0.0
    %1123 = vmatprep.subr.mxu0 0.0
    %1124 = vmatpush1.msra.mxu0 0.0
    %1125 = vmatprep.subr.mxu0 0.0
    %1126 = vmatpush1.msra.mxu0 0.0
    %1127 = vmatprep.subr.mxu0 0.0
    %1128 = vmatpush1.msra.mxu0 0.0
    %1129 = vmatprep.subr.mxu0 0.0
    %1130 = vmatpush1.msra.mxu0 0.0
    %1131 = vmatprep.subr.mxu0 0.0
    %1132 = vmatpush1.msra.mxu0 0.0
    %1133 = vmatprep.subr.mxu0 0.0
    %1134 = vmatpush1.msra.mxu0 0.0
    %1135 = vmatprep.subr.mxu0 0.0
    %1136 = vmatpush1.msra.mxu0 0.0
    %1137 = vmatprep.subr.mxu0 0.0
    %1138 = vmatpush1.msra.mxu0 0.0
    %1139 = vmatprep.subr.mxu0 0.0
    %1140 = vmatpush1.msra.mxu0 0.0
    %1141 = vmatprep.subr.mxu0 0.0
    %1142 = vmatpush1.msra.mxu0 0.0
    %1143 = vmatprep.subr.mxu0 0.0
    %1144 = vmatpush1.msra.mxu0 0.0
    %1145 = vmatprep.subr.mxu0 0.0
    %1146 = vmatpush1.msra.mxu0 0.0
    %1147 = vmatprep.subr.mxu0 0.0
    %1148 = vmatpush1.msra.mxu0 0.0
    %1149 = vmatprep.subr.mxu0 0.0
    %1150 = vmatpush1.msra.mxu0 0.0
    %1151 = vmatprep.subr.mxu0 0.0
    %1152 = vmatpush1.msra.mxu0 0.0
    %1153 = vmatprep.subr.mxu0 0.0
    %1154 = vmatpush1.msra.mxu0 0.0
    %1155 = vmatprep.subr.mxu0 0.0
    %1156 = vmatpush1.msra.mxu0 0.0
    %1157 = vmatprep.subr.mxu0 0.0
    %1158 = vmatpush1.msra.mxu0 0.0
    %1159 = vmatprep.subr.mxu0 0.0
    %1160 = vmatpush1.msra.mxu0 0.0
    %1161 = vmatprep.mubr.f32.mxu0 0.0
    %1162 = vmatmul.mubr.f32.gmra.mrb[0].mxu0 %v1095
    %v1163 = vpop.f32.mrb[0].mxu0
    %v1164 = vadd.f32 0.0, %v1163
    %v1165 = vpop.f32.mrb[0].mxu0
    %1166 = vdwg.mxu0
    %v1167 = vadd.f32 %v867, %v1164
    %1169 = vrot.lane.b32.xlu0 %v1086, 16
    %v1170 = vpop.permute.xlu0 %1169
    %v1171 = vsel %vm190, %v1170, 0
    %1173 = vmatprep.subr.mxu0 0.0
    %1174 = vmatpush1.msra.mxu0 %v184
    %1175 = vmatprep.subr.mxu0 0.0
    %1176 = vmatpush1.msra.mxu0 %v185
    %1177 = vmatprep.subr.mxu0 0.0
    %1178 = vmatpush1.msra.mxu0 0.0
    %1179 = vmatprep.subr.mxu0 0.0
    %1180 = vmatpush1.msra.mxu0 0.0
    %1181 = vmatprep.subr.mxu0 0.0
    %1182 = vmatpush1.msra.mxu0 0.0
    %1183 = vmatprep.subr.mxu0 0.0
    %1184 = vmatpush1.msra.mxu0 0.0
    %1185 = vmatprep.subr.mxu0 0.0
    %1186 = vmatpush1.msra.mxu0 0.0
    %1187 = vmatprep.subr.mxu0 0.0
    %1188 = vmatpush1.msra.mxu0 0.0
    %1189 = vmatprep.subr.mxu0 0.0
    %1190 = vmatpush1.msra.mxu0 0.0
    %1191 = vmatprep.subr.mxu0 0.0
    %1192 = vmatpush1.msra.mxu0 0.0
    %1193 = vmatprep.subr.mxu0 0.0
    %1194 = vmatpush1.msra.mxu0 0.0
    %1195 = vmatprep.subr.mxu0 0.0
    %1196 = vmatpush1.msra.mxu0 0.0
    %1197 = vmatprep.subr.mxu0 0.0
    %1198 = vmatpush1.msra.mxu0 0.0
    %1199 = vmatprep.subr.mxu0 0.0
    %1200 = vmatpush1.msra.mxu0 0.0
    %1201 = vmatprep.subr.mxu0 0.0
    %1202 = vmatpush1.msra.mxu0 0.0
    %1203 = vmatprep.subr.mxu0 0.0
    %1204 = vmatpush1.msra.mxu0 0.0
    %1205 = vmatprep.subr.mxu0 0.0
    %1206 = vmatpush1.msra.mxu0 0.0
    %1207 = vmatprep.subr.mxu0 0.0
    %1208 = vmatpush1.msra.mxu0 0.0
    %1209 = vmatprep.subr.mxu0 0.0
    %1210 = vmatpush1.msra.mxu0 0.0
    %1211 = vmatprep.subr.mxu0 0.0
    %1212 = vmatpush1.msra.mxu0 0.0
    %1213 = vmatprep.subr.mxu0 0.0
    %1214 = vmatpush1.msra.mxu0 0.0
    %1215 = vmatprep.subr.mxu0 0.0
    %1216 = vmatpush1.msra.mxu0 0.0
    %1217 = vmatprep.subr.mxu0 0.0
    %1218 = vmatpush1.msra.mxu0 0.0
    %1219 = vmatprep.subr.mxu0 0.0
    %1220 = vmatpush1.msra.mxu0 0.0
    %1221 = vmatprep.subr.mxu0 0.0
    %1222 = vmatpush1.msra.mxu0 0.0
    %1223 = vmatprep.subr.mxu0 0.0
    %1224 = vmatpush1.msra.mxu0 0.0
    %1225 = vmatprep.subr.mxu0 0.0
    %1226 = vmatpush1.msra.mxu0 0.0
    %1227 = vmatprep.subr.mxu0 0.0
    %1228 = vmatpush1.msra.mxu0 0.0
    %1229 = vmatprep.subr.mxu0 0.0
    %1230 = vmatpush1.msra.mxu0 0.0
    %1231 = vmatprep.subr.mxu0 0.0
    %1232 = vmatpush1.msra.mxu0 0.0
    %1233 = vmatprep.subr.mxu0 0.0
    %1234 = vmatpush1.msra.mxu0 0.0
    %1235 = vmatprep.subr.mxu0 0.0
    %1236 = vmatpush1.msra.mxu0 0.0
    %1237 = vmatprep.mubr.f32.mxu0 0.0
    %1238 = vmatmul.mubr.f32.gmra.mrb[0].mxu0 %v1171
    %v1239 = vpop.f32.mrb[0].mxu0
    %v1240 = vadd.f32 0.0, %v1239
    %v1241 = vpop.f32.mrb[0].mxu0
    %1242 = vdwg.mxu0
    %1244 = vrot.lane.b32.xlu0 %v1240, 64
    %v1245 = vpop.permute.xlu0 %1244
    %v1247 = vadd.f32 %v865, %v1245
    %v1248 = vxor.u32 %v1167, 2147483648
    %v1249 = vmul.f32 %v1248, 1.442695
    %v1250 = vpow.pop %v1249
    %v1251 = vadd.f32 %v1250, 1.0
    %v1252 = vrcp.pop %v1251
    %v1253 = vmul.f32 1.0, %v1252
    %v1254 = vtanh.pop %v1167
    %v1255 = vmul.f32 %v1253, %v1080
    %1257 = vrot.lane.b32.xlu0 %v1254, 96
    %v1258 = vpop.permute.xlu0 %1257
    %v1260 = vmul.f32 %v1253, %v1258
    %1262 = vrot.lane.b32.xlu0 %v1260, 16
    %v1263 = vpop.permute.xlu0 %1262
    %v1265 = vadd.f32 %v1255, %v1263
    %v1266 = vtanh.pop %v1265
    %1268 = vrot.lane.b32.xlu0 %v1266, 32
    %v1269 = vpop.permute.xlu0 %1268
    %v1271 = vmul.f32 %v1253, %v1269
    %v1272 = vxor.u32 %v1247, 2147483648
    %v1273 = vmul.f32 %v1272, 1.442695
    %v1274 = vpow.pop %v1273
    %v1275 = vadd.f32 %v1274, 1.0
    %v1276 = vrcp.pop %v1275
    %v1277 = vmul.f32 1.0, %v1276
    %v1278 = vtanh.pop %v1247
    %v1279 = vmul.f32 %v1277, %v1087
    %1281 = vrot.lane.b32.xlu0 %v1278, 96
    %v1282 = vpop.permute.xlu0 %1281
    %v1284 = vmul.f32 %v1277, %v1282
    %1286 = vrot.lane.b32.xlu0 %v1284, 16
    %v1287 = vpop.permute.xlu0 %1286
    %v1289 = vadd.f32 %v1279, %v1287
    %v1290 = vtanh.pop %v1289
    %1292 = vrot.lane.b32.xlu0 %v1290, 32
    %v1293 = vpop.permute.xlu0 %1292
    %v1295 = vmul.f32 %v1277, %v1293
    %v1296 = vsel %vm1085, %v1271, %v1079
    %v1297 = vsel %vm1085, %v1265, %v1080
    %v1298 = vsel %vm1078, %v1295, %v1086
    %v1299 = vsel %vm1078, %v1289, %v1087
    %v1300 = vmax.f32 %v1089, %v1271
    %v1301 = vsel %vm1085, %v1300, %v1089
    %v1302 = vmax.f32 %v1091, %v1295
    %v1303 = vsel %vm1078, %v1302, %v1091
    %1305 = vrot.lane.b32.xlu0 %v1296, 80
    %v1306 = vpop.permute.xlu0 %1305
    %v1307 = vsel %vm190, %v1306, 0
    %1309 = vmatprep.subr.mxu0 0.0
    %1310 = vmatpush1.msra.mxu0 %v181
    %1311 = vmatprep.subr.mxu0 0.0
    %1312 = vmatpush1.msra.mxu0 %v182
    %1313 = vmatprep.subr.mxu0 0.0
    %1314 = vmatpush1.msra.mxu0 0.0
    %1315 = vmatprep.subr.mxu0 0.0
    %1316 = vmatpush1.msra.mxu0 0.0
    %1317 = vmatprep.subr.mxu0 0.0
    %1318 = vmatpush1.msra.mxu0 0.0
    %1319 = vmatprep.subr.mxu0 0.0
    %1320 = vmatpush1.msra.mxu0 0.0
    %1321 = vmatprep.subr.mxu0 0.0
    %1322 = vmatpush1.msra.mxu0 0.0
    %1323 = vmatprep.subr.mxu0 0.0
    %1324 = vmatpush1.msra.mxu0 0.0
    %1325 = vmatprep.subr.mxu0 0.0
    %1326 = vmatpush1.msra.mxu0 0.0
    %1327 = vmatprep.subr.mxu0 0.0
    %1328 = vmatpush1.msra.mxu0 0.0
    %1329 = vmatprep.subr.mxu0 0.0
    %1330 = vmatpush1.msra.mxu0 0.0
    %1331 = vmatprep.subr.mxu0 0.0
    %1332 = vmatpush1.msra.mxu0 0.0
    %1333 = vmatprep.subr.mxu0 0.0
    %1334 = vmatpush1.msra.mxu0 0.0
    %1335 = vmatprep.subr.mxu0 0.0
    %1336 = vmatpush1.msra.mxu0 0.0
    %1337 = vmatprep.subr.mxu0 0.0
    %1338 = vmatpush1.msra.mxu0 0.0
    %1339 = vmatprep.subr.mxu0 0.0
    %1340 = vmatpush1.msra.mxu0 0.0
    %1341 = vmatprep.subr.mxu0 0.0
    %1342 = vmatpush1.msra.mxu0 0.0
    %1343 = vmatprep.subr.mxu0 0.0
    %1344 = vmatpush1.msra.mxu0 0.0
    %1345 = vmatprep.subr.mxu0 0.0
    %1346 = vmatpush1.msra.mxu0 0.0
    %1347 = vmatprep.subr.mxu0 0.0
    %1348 = vmatpush1.msra.mxu0 0.0
    %1349 = vmatprep.subr.mxu0 0.0
    %1350 = vmatpush1.msra.mxu0 0.0
    %1351 = vmatprep.subr.mxu0 0.0
    %1352 = vmatpush1.msra.mxu0 0.0
    %1353 = vmatprep.subr.mxu0 0.0
    %1354 = vmatpush1.msra.mxu0 0.0
    %1355 = vmatprep.subr.mxu0 0.0
    %1356 = vmatpush1.msra.mxu0 0.0
    %1357 = vmatprep.subr.mxu0 0.0
    %1358 = vmatpush1.msra.mxu0 0.0
    %1359 = vmatprep.subr.mxu0 0.0
    %1360 = vmatpush1.msra.mxu0 0.0
    %1361 = vmatprep.subr.mxu0 0.0
    %1362 = vmatpush1.msra.mxu0 0.0
    %1363 = vmatprep.subr.mxu0 0.0
    %1364 = vmatpush1.msra.mxu0 0.0
    %1365 = vmatprep.subr.mxu0 0.0
    %1366 = vmatpush1.msra.mxu0 0.0
    %1367 = vmatprep.subr.mxu0 0.0
    %1368 = vmatpush1.msra.mxu0 0.0
    %1369 = vmatprep.subr.mxu0 0.0
    %1370 = vmatpush1.msra.mxu0 0.0
    %1371 = vmatprep.subr.mxu0 0.0
    %1372 = vmatpush1.msra.mxu0 0.0
    %1373 = vmatprep.mubr.f32.mxu0 0.0
    %1374 = vmatmul.mubr.f32.gmra.mrb[0].mxu0 %v1307
    %v1375 = vpop.f32.mrb[0].mxu0
    %v1376 = vadd.f32 0.0, %v1375
    %v1377 = vpop.f32.mrb[0].mxu0
    %1378 = vdwg.mxu0
    %v1379 = vadd.f32 %v639, %v1376
    %1381 = vrot.lane.b32.xlu0 %v1298, 16
    %v1382 = vpop.permute.xlu0 %1381
    %v1383 = vsel %vm190, %v1382, 0
    %1385 = vmatprep.subr.mxu0 0.0
    %1386 = vmatpush1.msra.mxu0 %v184
    %1387 = vmatprep.subr.mxu0 0.0
    %1388 = vmatpush1.msra.mxu0 %v185
    %1389 = vmatprep.subr.mxu0 0.0
    %1390 = vmatpush1.msra.mxu0 0.0
    %1391 = vmatprep.subr.mxu0 0.0
    %1392 = vmatpush1.msra.mxu0 0.0
    %1393 = vmatprep.subr.mxu0 0.0
    %1394 = vmatpush1.msra.mxu0 0.0
    %1395 = vmatprep.subr.mxu0 0.0
    %1396 = vmatpush1.msra.mxu0 0.0
    %1397 = vmatprep.subr.mxu0 0.0
    %1398 = vmatpush1.msra.mxu0 0.0
    %1399 = vmatprep.subr.mxu0 0.0
    %1400 = vmatpush1.msra.mxu0 0.0
    %1401 = vmatprep.subr.mxu0 0.0
    %1402 = vmatpush1.msra.mxu0 0.0
    %1403 = vmatprep.subr.mxu0 0.0
    %1404 = vmatpush1.msra.mxu0 0.0
    %1405 = vmatprep.subr.mxu0 0.0
    %1406 = vmatpush1.msra.mxu0 0.0
    %1407 = vmatprep.subr.mxu0 0.0
    %1408 = vmatpush1.msra.mxu0 0.0
    %1409 = vmatprep.subr.mxu0 0.0
    %1410 = vmatpush1.msra.mxu0 0.0
    %1411 = vmatprep.subr.mxu0 0.0
    %1412 = vmatpush1.msra.mxu0 0.0
    %1413 = vmatprep.subr.mxu0 0.0
    %1414 = vmatpush1.msra.mxu0 0.0
    %1415 = vmatprep.subr.mxu0 0.0
    %1416 = vmatpush1.msra.mxu0 0.0
    %1417 = vmatprep.subr.mxu0 0.0
    %1418 = vmatpush1.msra.mxu0 0.0
    %1419 = vmatprep.subr.mxu0 0.0
    %1420 = vmatpush1.msra.mxu0 0.0
    %1421 = vmatprep.subr.mxu0 0.0
    %1422 = vmatpush1.msra.mxu0 0.0
    %1423 = vmatprep.subr.mxu0 0.0
    %1424 = vmatpush1.msra.mxu0 0.0
    %1425 = vmatprep.subr.mxu0 0.0
    %1426 = vmatpush1.msra.mxu0 0.0
    %1427 = vmatprep.subr.mxu0 0.0
    %1428 = vmatpush1.msra.mxu0 0.0
    %1429 = vmatprep.subr.mxu0 0.0
    %1430 = vmatpush1.msra.mxu0 0.0
    %1431 = vmatprep.subr.mxu0 0.0
    %1432 = vmatpush1.msra.mxu0 0.0
    %1433 = vmatprep.subr.mxu0 0.0
    %1434 = vmatpush1.msra.mxu0 0.0
    %1435 = vmatprep.subr.mxu0 0.0
    %1436 = vmatpush1.msra.mxu0 0.0
    %1437 = vmatprep.subr.mxu0 0.0
    %1438 = vmatpush1.msra.mxu0 0.0
    %1439 = vmatprep.subr.mxu0 0.0
    %1440 = vmatpush1.msra.mxu0 0.0
    %1441 = vmatprep.subr.mxu0 0.0
    %1442 = vmatpush1.msra.mxu0 0.0
    %1443 = vmatprep.subr.mxu0 0.0
    %1444 = vmatpush1.msra.mxu0 0.0
    %1445 = vmatprep.subr.mxu0 0.0
    %1446 = vmatpush1.msra.mxu0 0.0
    %1447 = vmatprep.subr.mxu0 0.0
    %1448 = vmatpush1.msra.mxu0 0.0
    %1449 = vmatprep.mubr.f32.mxu0 0.0
    %1450 = vmatmul.mubr.f32.gmra.mrb[0].mxu0 %v1383
    %v1451 = vpop.f32.mrb[0].mxu0
    %v1452 = vadd.f32 0.0, %v1451
    %v1453 = vpop.f32.mrb[0].mxu0
    %1454 = vdwg.mxu0
    %1456 = vrot.lane.b32.xlu0 %v1452, 64
    %v1457 = vpop.permute.xlu0 %1456
    %v1459 = vadd.f32 %v637, %v1457
    %v1460 = vxor.u32 %v1379, 2147483648
    %v1461 = vmul.f32 %v1460, 1.442695
    %v1462 = vpow.pop %v1461
    %v1463 = vadd.f32 %v1462, 1.0
    %v1464 = vrcp.pop %v1463
    %v1465 = vmul.f32 1.0, %v1464
    %v1466 = vtanh.pop %v1379
    %v1467 = vmul.f32 %v1465, %v1297
    %1469 = vrot.lane.b32.xlu0 %v1466, 96
    %v1470 = vpop.permute.xlu0 %1469
    %v1472 = vmul.f32 %v1465, %v1470
    %1474 = vrot.lane.b32.xlu0 %v1472, 16
    %v1475 = vpop.permute.xlu0 %1474
    %v1477 = vadd.f32 %v1467, %v1475
    %v1478 = vtanh.pop %v1477
    %1480 = vrot.lane.b32.xlu0 %v1478, 32
    %v1481 = vpop.permute.xlu0 %1480
    %v1483 = vmul.f32 %v1465, %v1481
    %v1484 = vxor.u32 %v1459, 2147483648
    %v1485 = vmul.f32 %v1484, 1.442695
    %v1486 = vpow.pop %v1485
    %v1487 = vadd.f32 %v1486, 1.0
    %v1488 = vrcp.pop %v1487
    %v1489 = vmul.f32 1.0, %v1488
    %v1490 = vtanh.pop %v1459
    %v1491 = vmul.f32 %v1489, %v1299
    %1493 = vrot.lane.b32.xlu0 %v1490, 96
    %v1494 = vpop.permute.xlu0 %1493
    %v1496 = vmul.f32 %v1489, %v1494
    %1498 = vrot.lane.b32.xlu0 %v1496, 16
    %v1499 = vpop.permute.xlu0 %1498
    %v1501 = vadd.f32 %v1491, %v1499
    %v1502 = vtanh.pop %v1501
    %1504 = vrot.lane.b32.xlu0 %v1502, 32
    %v1505 = vpop.permute.xlu0 %1504
    %v1507 = vmul.f32 %v1489, %v1505
    %v1508 = vsel %vm857, %v1483, %v1296
    %v1509 = vsel %vm857, %v1477, %v1297
    %v1510 = vsel %vm850, %v1507, %v1298
    %v1511 = vsel %vm850, %v1501, %v1299
    %v1512 = vmax.f32 %v1301, %v1483
    %v1513 = vsel %vm857, %v1512, %v1301
    %v1514 = vmax.f32 %v1303, %v1507
    %v1515 = vsel %vm850, %v1514, %v1303
    %1517 = vrot.lane.b32.xlu0 %v1508, 80
    %v1518 = vpop.permute.xlu0 %1517
    %v1519 = vsel %vm190, %v1518, 0
    %1521 = vmatprep.subr.mxu0 0.0
    %1522 = vmatpush1.msra.mxu0 %v181
    %1523 = vmatprep.subr.mxu0 0.0
    %1524 = vmatpush1.msra.mxu0 %v182
    %1525 = vmatprep.subr.mxu0 0.0
    %1526 = vmatpush1.msra.mxu0 0.0
    %1527 = vmatprep.subr.mxu0 0.0
    %1528 = vmatpush1.msra.mxu0 0.0
    %1529 = vmatprep.subr.mxu0 0.0
    %1530 = vmatpush1.msra.mxu0 0.0
    %1531 = vmatprep.subr.mxu0 0.0
    %1532 = vmatpush1.msra.mxu0 0.0
    %1533 = vmatprep.subr.mxu0 0.0
    %1534 = vmatpush1.msra.mxu0 0.0
    %1535 = vmatprep.subr.mxu0 0.0
    %1536 = vmatpush1.msra.mxu0 0.0
    %1537 = vmatprep.subr.mxu0 0.0
    %1538 = vmatpush1.msra.mxu0 0.0
    %1539 = vmatprep.subr.mxu0 0.0
    %1540 = vmatpush1.msra.mxu0 0.0
    %1541 = vmatprep.subr.mxu0 0.0
    %1542 = vmatpush1.msra.mxu0 0.0
    %1543 = vmatprep.subr.mxu0 0.0
    %1544 = vmatpush1.msra.mxu0 0.0
    %1545 = vmatprep.subr.mxu0 0.0
    %1546 = vmatpush1.msra.mxu0 0.0
    %1547 = vmatprep.subr.mxu0 0.0
    %1548 = vmatpush1.msra.mxu0 0.0
    %1549 = vmatprep.subr.mxu0 0.0
    %1550 = vmatpush1.msra.mxu0 0.0
    %1551 = vmatprep.subr.mxu0 0.0
    %1552 = vmatpush1.msra.mxu0 0.0
    %1553 = vmatprep.subr.mxu0 0.0
    %1554 = vmatpush1.msra.mxu0 0.0
    %1555 = vmatprep.subr.mxu0 0.0
    %1556 = vmatpush1.msra.mxu0 0.0
    %1557 = vmatprep.subr.mxu0 0.0
    %1558 = vmatpush1.msra.mxu0 0.0
    %1559 = vmatprep.subr.mxu0 0.0
    %1560 = vmatpush1.msra.mxu0 0.0
    %1561 = vmatprep.subr.mxu0 0.0
    %1562 = vmatpush1.msra.mxu0 0.0
    %1563 = vmatprep.subr.mxu0 0.0
    %1564 = vmatpush1.msra.mxu0 0.0
    %1565 = vmatprep.subr.mxu0 0.0
    %1566 = vmatpush1.msra.mxu0 0.0
    %1567 = vmatprep.subr.mxu0 0.0
    %1568 = vmatpush1.msra.mxu0 0.0
    %1569 = vmatprep.subr.mxu0 0.0
    %1570 = vmatpush1.msra.mxu0 0.0
    %1571 = vmatprep.subr.mxu0 0.0
    %1572 = vmatpush1.msra.mxu0 0.0
    %1573 = vmatprep.subr.mxu0 0.0
    %1574 = vmatpush1.msra.mxu0 0.0
    %1575 = vmatprep.subr.mxu0 0.0
    %1576 = vmatpush1.msra.mxu0 0.0
    %1577 = vmatprep.subr.mxu0 0.0
    %1578 = vmatpush1.msra.mxu0 0.0
    %1579 = vmatprep.subr.mxu0 0.0
    %1580 = vmatpush1.msra.mxu0 0.0
    %1581 = vmatprep.subr.mxu0 0.0
    %1582 = vmatpush1.msra.mxu0 0.0
    %1583 = vmatprep.subr.mxu0 0.0
    %1584 = vmatpush1.msra.mxu0 0.0
    %1585 = vmatprep.mubr.f32.mxu0 0.0
    %1586 = vmatmul.mubr.f32.gmra.mrb[0].mxu0 %v1519
    %v1587 = vpop.f32.mrb[0].mxu0
    %v1588 = vadd.f32 0.0, %v1587
    %v1589 = vpop.f32.mrb[0].mxu0
    %1590 = vdwg.mxu0
    %v1591 = vadd.f32 %v411, %v1588
    %1593 = vrot.lane.b32.xlu0 %v1510, 16
    %v1594 = vpop.permute.xlu0 %1593
    %v1595 = vsel %vm190, %v1594, 0
    %1597 = vmatprep.subr.mxu0 0.0
    %1598 = vmatpush1.msra.mxu0 %v184
    %1599 = vmatprep.subr.mxu0 0.0
    %1600 = vmatpush1.msra.mxu0 %v185
    %1601 = vmatprep.subr.mxu0 0.0
    %1602 = vmatpush1.msra.mxu0 0.0
    %1603 = vmatprep.subr.mxu0 0.0
    %1604 = vmatpush1.msra.mxu0 0.0
    %1605 = vmatprep.subr.mxu0 0.0
    %1606 = vmatpush1.msra.mxu0 0.0
    %1607 = vmatprep.subr.mxu0 0.0
    %1608 = vmatpush1.msra.mxu0 0.0
    %1609 = vmatprep.subr.mxu0 0.0
    %1610 = vmatpush1.msra.mxu0 0.0
    %1611 = vmatprep.subr.mxu0 0.0
    %1612 = vmatpush1.msra.mxu0 0.0
    %1613 = vmatprep.subr.mxu0 0.0
    %1614 = vmatpush1.msra.mxu0 0.0
    %1615 = vmatprep.subr.mxu0 0.0
    %1616 = vmatpush1.msra.mxu0 0.0
    %1617 = vmatprep.subr.mxu0 0.0
    %1618 = vmatpush1.msra.mxu0 0.0
    %1619 = vmatprep.subr.mxu0 0.0
    %1620 = vmatpush1.msra.mxu0 0.0
    %1621 = vmatprep.subr.mxu0 0.0
    %1622 = vmatpush1.msra.mxu0 0.0
    %1623 = vmatprep.subr.mxu0 0.0
    %1624 = vmatpush1.msra.mxu0 0.0
    %1625 = vmatprep.subr.mxu0 0.0
    %1626 = vmatpush1.msra.mxu0 0.0
    %1627 = vmatprep.subr.mxu0 0.0
    %1628 = vmatpush1.msra.mxu0 0.0
    %1629 = vmatprep.subr.mxu0 0.0
    %1630 = vmatpush1.msra.mxu0 0.0
    %1631 = vmatprep.subr.mxu0 0.0
    %1632 = vmatpush1.msra.mxu0 0.0
    %1633 = vmatprep.subr.mxu0 0.0
    %1634 = vmatpush1.msra.mxu0 0.0
    %1635 = vmatprep.subr.mxu0 0.0
    %1636 = vmatpush1.msra.mxu0 0.0
    %1637 = vmatprep.subr.mxu0 0.0
    %1638 = vmatpush1.msra.mxu0 0.0
    %1639 = vmatprep.subr.mxu0 0.0
    %1640 = vmatpush1.msra.mxu0 0.0
    %1641 = vmatprep.subr.mxu0 0.0
    %1642 = vmatpush1.msra.mxu0 0.0
    %1643 = vmatprep.subr.mxu0 0.0
    %1644 = vmatpush1.msra.mxu0 0.0
    %1645 = vmatprep.subr.mxu0 0.0
    %1646 = vmatpush1.msra.mxu0 0.0
    %1647 = vmatprep.subr.mxu0 0.0
    %1648 = vmatpush1.msra.mxu0 0.0
    %1649 = vmatprep.subr.mxu0 0.0
    %1650 = vmatpush1.msra.mxu0 0.0
    %1651 = vmatprep.subr.mxu0 0.0
    %1652 = vmatpush1.msra.mxu0 0.0
    %1653 = vmatprep.subr.mxu0 0.0
    %1654 = vmatpush1.msra.mxu0 0.0
    %1655 = vmatprep.subr.mxu0 0.0
    %1656 = vmatpush1.msra.mxu0 0.0
    %1657 = vmatprep.subr.mxu0 0.0
    %1658 = vmatpush1.msra.mxu0 0.0
    %1659 = vmatprep.subr.mxu0 0.0
    %1660 = vmatpush1.msra.mxu0 0.0
    %1661 = vmatprep.mubr.f32.mxu0 0.0
    %1662 = vmatmul.mubr.f32.gmra.mrb[0].mxu0 %v1595
    %v1663 = vpop.f32.mrb[0].mxu0
    %v1664 = vadd.f32 0.0, %v1663
    %v1665 = vpop.f32.mrb[0].mxu0
    %1666 = vdwg.mxu0
    %1668 = vrot.lane.b32.xlu0 %v1664, 64
    %v1669 = vpop.permute.xlu0 %1668
    %v1671 = vadd.f32 %v409, %v1669
    %v1672 = vxor.u32 %v1591, 2147483648
    %v1673 = vmul.f32 %v1672, 1.442695
    %v1674 = vpow.pop %v1673
    %v1675 = vadd.f32 %v1674, 1.0
    %v1676 = vrcp.pop %v1675
    %v1677 = vmul.f32 1.0, %v1676
    %v1678 = vtanh.pop %v1591
    %v1679 = vmul.f32 %v1677, %v1509
    %1681 = vrot.lane.b32.xlu0 %v1678, 96
    %v1682 = vpop.permute.xlu0 %1681
    %v1684 = vmul.f32 %v1677, %v1682
    %1686 = vrot.lane.b32.xlu0 %v1684, 16
    %v1687 = vpop.permute.xlu0 %1686
    %v1689 = vadd.f32 %v1679, %v1687
    %v1690 = vtanh.pop %v1689
    %1692 = vrot.lane.b32.xlu0 %v1690, 32
    %v1693 = vpop.permute.xlu0 %1692
    %v1695 = vmul.f32 %v1677, %v1693
    %v1696 = vxor.u32 %v1671, 2147483648
    %v1697 = vmul.f32 %v1696, 1.442695
    %v1698 = vpow.pop %v1697
    %v1699 = vadd.f32 %v1698, 1.0
    %v1700 = vrcp.pop %v1699
    %v1701 = vmul.f32 1.0, %v1700
    %v1702 = vtanh.pop %v1671
    %v1703 = vmul.f32 %v1701, %v1511
    %1705 = vrot.lane.b32.xlu0 %v1702, 96
    %v1706 = vpop.permute.xlu0 %1705
    %v1708 = vmul.f32 %v1701, %v1706
    %1710 = vrot.lane.b32.xlu0 %v1708, 16
    %v1711 = vpop.permute.xlu0 %1710
    %v1713 = vadd.f32 %v1703, %v1711
    %v1714 = vtanh.pop %v1713
    %1716 = vrot.lane.b32.xlu0 %v1714, 32
    %v1717 = vpop.permute.xlu0 %1716
    %v1719 = vmul.f32 %v1701, %v1717
    %v1720 = vsel %vm629, %v1695, %v1508
    %v1721 = vsel %vm629, %v1689, %v1509
    %v1722 = vsel %vm622, %v1719, %v1510
    %v1723 = vsel %vm622, %v1713, %v1511
    %v1724 = vmax.f32 %v1513, %v1695
    %v1725 = vsel %vm629, %v1724, %v1513
    %v1726 = vmax.f32 %v1515, %v1719
    %v1727 = vsel %vm622, %v1726, %v1515
    %1729 = vrot.lane.b32.xlu0 %v1720, 80
    %v1730 = vpop.permute.xlu0 %1729
    %v1731 = vsel %vm190, %v1730, 0
    %1733 = vmatprep.subr.mxu0 0.0
    %1734 = vmatpush1.msra.mxu0 %v181
    %1735 = vmatprep.subr.mxu0 0.0
    %1736 = vmatpush1.msra.mxu0 %v182
    %1737 = vmatprep.subr.mxu0 0.0
    %1738 = vmatpush1.msra.mxu0 0.0
    %1739 = vmatprep.subr.mxu0 0.0
    %1740 = vmatpush1.msra.mxu0 0.0
    %1741 = vmatprep.subr.mxu0 0.0
    %1742 = vmatpush1.msra.mxu0 0.0
    %1743 = vmatprep.subr.mxu0 0.0
    %1744 = vmatpush1.msra.mxu0 0.0
    %1745 = vmatprep.subr.mxu0 0.0
    %1746 = vmatpush1.msra.mxu0 0.0
    %1747 = vmatprep.subr.mxu0 0.0
    %1748 = vmatpush1.msra.mxu0 0.0
    %1749 = vmatprep.subr.mxu0 0.0
    %1750 = vmatpush1.msra.mxu0 0.0
    %1751 = vmatprep.subr.mxu0 0.0
    %1752 = vmatpush1.msra.mxu0 0.0
    %1753 = vmatprep.subr.mxu0 0.0
    %1754 = vmatpush1.msra.mxu0 0.0
    %1755 = vmatprep.subr.mxu0 0.0
    %1756 = vmatpush1.msra.mxu0 0.0
    %1757 = vmatprep.subr.mxu0 0.0
    %1758 = vmatpush1.msra.mxu0 0.0
    %1759 = vmatprep.subr.mxu0 0.0
    %1760 = vmatpush1.msra.mxu0 0.0
    %1761 = vmatprep.subr.mxu0 0.0
    %1762 = vmatpush1.msra.mxu0 0.0
    %1763 = vmatprep.subr.mxu0 0.0
    %1764 = vmatpush1.msra.mxu0 0.0
    %1765 = vmatprep.subr.mxu0 0.0
    %1766 = vmatpush1.msra.mxu0 0.0
    %1767 = vmatprep.subr.mxu0 0.0
    %1768 = vmatpush1.msra.mxu0 0.0
    %1769 = vmatprep.subr.mxu0 0.0
    %1770 = vmatpush1.msra.mxu0 0.0
    %1771 = vmatprep.subr.mxu0 0.0
    %1772 = vmatpush1.msra.mxu0 0.0
    %1773 = vmatprep.subr.mxu0 0.0
    %1774 = vmatpush1.msra.mxu0 0.0
    %1775 = vmatprep.subr.mxu0 0.0
    %1776 = vmatpush1.msra.mxu0 0.0
    %1777 = vmatprep.subr.mxu0 0.0
    %1778 = vmatpush1.msra.mxu0 0.0
    %1779 = vmatprep.subr.mxu0 0.0
    %1780 = vmatpush1.msra.mxu0 0.0
    %1781 = vmatprep.subr.mxu0 0.0
    %1782 = vmatpush1.msra.mxu0 0.0
    %1783 = vmatprep.subr.mxu0 0.0
    %1784 = vmatpush1.msra.mxu0 0.0
    %1785 = vmatprep.subr.mxu0 0.0
    %1786 = vmatpush1.msra.mxu0 0.0
    %1787 = vmatprep.subr.mxu0 0.0
    %1788 = vmatpush1.msra.mxu0 0.0
    %1789 = vmatprep.subr.mxu0 0.0
    %1790 = vmatpush1.msra.mxu0 0.0
    %1791 = vmatprep.subr.mxu0 0.0
    %1792 = vmatpush1.msra.mxu0 0.0
    %1793 = vmatprep.subr.mxu0 0.0
    %1794 = vmatpush1.msra.mxu0 0.0
    %1795 = vmatprep.subr.mxu0 0.0
    %1796 = vmatpush1.msra.mxu0 0.0
    %1797 = vmatprep.mubr.f32.mxu0 0.0
    %1798 = vmatmul.mubr.f32.gmra.mrb[0].mxu0 %v1731
    %v1799 = vpop.f32.mrb[0].mxu0
    %v1800 = vadd.f32 0.0, %v1799
    %v1801 = vpop.f32.mrb[0].mxu0
    %1802 = vdwg.mxu0
    %v1803 = vadd.f32 %v189, %v1800
    %1805 = vrot.lane.b32.xlu0 %v1722, 16
    %v1806 = vpop.permute.xlu0 %1805
    %v1807 = vsel %vm190, %v1806, 0
    %1809 = vmatprep.subr.mxu0 0.0
    %1810 = vmatpush1.msra.mxu0 %v184
    %1811 = vmatprep.subr.mxu0 0.0
    %1812 = vmatpush1.msra.mxu0 %v185
    %1813 = vmatprep.subr.mxu0 0.0
    %1814 = vmatpush1.msra.mxu0 0.0
    %1815 = vmatprep.subr.mxu0 0.0
    %1816 = vmatpush1.msra.mxu0 0.0
    %1817 = vmatprep.subr.mxu0 0.0
    %1818 = vmatpush1.msra.mxu0 0.0
    %1819 = vmatprep.subr.mxu0 0.0
    %1820 = vmatpush1.msra.mxu0 0.0
    %1821 = vmatprep.subr.mxu0 0.0
    %1822 = vmatpush1.msra.mxu0 0.0
    %1823 = vmatprep.subr.mxu0 0.0
    %1824 = vmatpush1.msra.mxu0 0.0
    %1825 = vmatprep.subr.mxu0 0.0
    %1826 = vmatpush1.msra.mxu0 0.0
    %1827 = vmatprep.subr.mxu0 0.0
    %1828 = vmatpush1.msra.mxu0 0.0
    %1829 = vmatprep.subr.mxu0 0.0
    %1830 = vmatpush1.msra.mxu0 0.0
    %1831 = vmatprep.subr.mxu0 0.0
    %1832 = vmatpush1.msra.mxu0 0.0
    %1833 = vmatprep.subr.mxu0 0.0
    %1834 = vmatpush1.msra.mxu0 0.0
    %1835 = vmatprep.subr.mxu0 0.0
    %1836 = vmatpush1.msra.mxu0 0.0
    %1837 = vmatprep.subr.mxu0 0.0
    %1838 = vmatpush1.msra.mxu0 0.0
    %1839 = vmatprep.subr.mxu0 0.0
    %1840 = vmatpush1.msra.mxu0 0.0
    %1841 = vmatprep.subr.mxu0 0.0
    %1842 = vmatpush1.msra.mxu0 0.0
    %1843 = vmatprep.subr.mxu0 0.0
    %1844 = vmatpush1.msra.mxu0 0.0
    %1845 = vmatprep.subr.mxu0 0.0
    %1846 = vmatpush1.msra.mxu0 0.0
    %1847 = vmatprep.subr.mxu0 0.0
    %1848 = vmatpush1.msra.mxu0 0.0
    %1849 = vmatprep.subr.mxu0 0.0
    %1850 = vmatpush1.msra.mxu0 0.0
    %1851 = vmatprep.subr.mxu0 0.0
    %1852 = vmatpush1.msra.mxu0 0.0
    %1853 = vmatprep.subr.mxu0 0.0
    %1854 = vmatpush1.msra.mxu0 0.0
    %1855 = vmatprep.subr.mxu0 0.0
    %1856 = vmatpush1.msra.mxu0 0.0
    %1857 = vmatprep.subr.mxu0 0.0
    %1858 = vmatpush1.msra.mxu0 0.0
    %1859 = vmatprep.subr.mxu0 0.0
    %1860 = vmatpush1.msra.mxu0 0.0
    %1861 = vmatprep.subr.mxu0 0.0
    %1862 = vmatpush1.msra.mxu0 0.0
    %1863 = vmatprep.subr.mxu0 0.0
    %1864 = vmatpush1.msra.mxu0 0.0
    %1865 = vmatprep.subr.mxu0 0.0
    %1866 = vmatpush1.msra.mxu0 0.0
    %1867 = vmatprep.subr.mxu0 0.0
    %1868 = vmatpush1.msra.mxu0 0.0
    %1869 = vmatprep.subr.mxu0 0.0
    %1870 = vmatpush1.msra.mxu0 0.0
    %1871 = vmatprep.subr.mxu0 0.0
    %1872 = vmatpush1.msra.mxu0 0.0
    %1873 = vmatprep.mubr.f32.mxu0 0.0
    %1874 = vmatmul.mubr.f32.gmra.mrb[0].mxu0 %v1807
    %v1875 = vpop.f32.mrb[0].mxu0
    %v1876 = vadd.f32 0.0, %v1875
    %v1877 = vpop.f32.mrb[0].mxu0
    %1878 = vdwg.mxu0
    %1880 = vrot.lane.b32.xlu0 %v1876, 64
    %v1881 = vpop.permute.xlu0 %1880
    %v1883 = vadd.f32 %v187, %v1881
    %v1884 = vxor.u32 %v1803, 2147483648
    %v1885 = vmul.f32 %v1884, 1.442695
    %v1886 = vpow.pop %v1885
    %v1887 = vadd.f32 %v1886, 1.0
    %v1888 = vrcp.pop %v1887
    %v1889 = vmul.f32 1.0, %v1888
    %v1890 = vtanh.pop %v1803
    %v1891 = vmul.f32 %v1889, %v1721
    %1893 = vrot.lane.b32.xlu0 %v1890, 96
    %v1894 = vpop.permute.xlu0 %1893
    %v1896 = vmul.f32 %v1889, %v1894
    %1898 = vrot.lane.b32.xlu0 %v1896, 16
    %v1899 = vpop.permute.xlu0 %1898
    %v1901 = vadd.f32 %v1891, %v1899
    %v1902 = vtanh.pop %v1901
    %1904 = vrot.lane.b32.xlu0 %v1902, 32
    %v1905 = vpop.permute.xlu0 %1904
    %v1907 = vmul.f32 %v1889, %v1905
    %v1908 = vxor.u32 %v1883, 2147483648
    %v1909 = vmul.f32 %v1908, 1.442695
    %v1910 = vpow.pop %v1909
    %v1911 = vadd.f32 %v1910, 1.0
    %v1912 = vrcp.pop %v1911
    %v1913 = vmul.f32 1.0, %v1912
    %v1914 = vtanh.pop %v1883
    %v1915 = vmul.f32 %v1913, %v1723
    %1917 = vrot.lane.b32.xlu0 %v1914, 96
    %v1918 = vpop.permute.xlu0 %1917
    %v1920 = vmul.f32 %v1913, %v1918
    %1922 = vrot.lane.b32.xlu0 %v1920, 16
    %v1923 = vpop.permute.xlu0 %1922
    %v1925 = vadd.f32 %v1915, %v1923
    %v1926 = vtanh.pop %v1925
    %1928 = vrot.lane.b32.xlu0 %v1926, 32
    %v1929 = vpop.permute.xlu0 %1928
    %v1931 = vmul.f32 %v1913, %v1929
    %v1932 = vmax.f32 %v1725, %v1907
    %v1933 = vsel %vm401, %v1932, %v1725
    %v1934 = vmax.f32 %v1727, %v1931
    %v1935 = vsel %vm394, %v1934, %v1727
    %1937 = vrot.lane.b32.xlu0 %v1933, 80
    %v1938 = vpop.permute.xlu0 %1937
    %1941 = vrot.lane.b32.xlu0 %v1935, 32
    %v1942 = vpop.permute.xlu0 %1941
    %v1944 = vsel %vm190, %v1938, %v1942
    %v1946 = vrot.slane %v1944, 2
    %v1948 = vsub.f32 %v1944, %v1946
    %v1949 = vand.u32 2147483647, %v1948
    %v1950 = vmul.f32 %v1944, %v1946
    %1951 = vrot.lane.b32.xlu0 %v1946, 32
    %v1952 = vpop.permute.xlu0 %1951
    %1955 = vrot.lane.b32.xlu0 %v1949, 64
    %v1956 = vpop.permute.xlu0 %1955
    %1959 = vrot.lane.b32.xlu0 %v1950, 96
    %v1960 = vpop.permute.xlu0 %1959
    %vm1962 = vcmask 261120
    %v1963 = vsel %vm1962, %v1944, %v1952
    %vm1964 = vcmask 523264
    %v1965 = vsel %vm1964, %v1963, %v1956
    %vm1966 = vcmask 785408
    %v1967 = vsel %vm1966, %v1965, %v1960
    %v1968 = vld [vmem:[%s5] sm:$0xff]
    %v1969 = vld [vmem:[%s5 + $0x8] sm:$0xff]
    %v1970 = vld [vmem:[%s5 + $0x10] sm:$0xff]
    %v1971 = vld [vmem:[%s5 + $0x18] sm:$0xff]
    %v1972 = vld [vmem:[%s5 + $0x20] sm:$0xff]
    %v1973 = vld [vmem:[%s5 + $0x28] sm:$0xff]
    %v1974 = vld [vmem:[%s5 + $0x30] sm:$0xff]
    %v1975 = vld [vmem:[%s5 + $0x38] sm:$0xff]
    %v1976 = vld [vmem:[%s5 + $0x40] sm:$0xff]
    %v1977 = vld [vmem:[%s5 + $0x48] sm:$0xff]
    %v1978 = vld [vmem:[%s5 + $0x50] sm:$0xff]
    %v1979 = vld [vmem:[%s5 + $0x58] sm:$0xff]
    %v1980 = vld [vmem:[%s5 + $0x60] sm:$0xff]
    %v1981 = vld [vmem:[%s5 + $0x68] sm:$0xff]
    %v1982 = vld [vmem:[%s5 + $0x70] sm:$0xff]
    %v1983 = vld [vmem:[%s5 + $0x78] sm:$0xff]
    %v1984 = vld [vmem:[%s6] sm:$0x1]
    %v1986 = vlaneseq
    %v1987 = vshrl.u32 %v1986, 7
    %v1988 = vsub.s32 0, %v1987
    %v1989 = vrot.slane %v1984, %v1988
    %1991 = vmatprep.subr.mxu0 0.0
    %1992 = vmatpush1.msra.mxu0 %v1968
    %1993 = vmatprep.subr.mxu0 0.0
    %1994 = vmatpush1.msra.mxu0 %v1969
    %1995 = vmatprep.subr.mxu0 0.0
    %1996 = vmatpush1.msra.mxu0 %v1970
    %1997 = vmatprep.subr.mxu0 0.0
    %1998 = vmatpush1.msra.mxu0 %v1971
    %1999 = vmatprep.subr.mxu0 0.0
    %2000 = vmatpush1.msra.mxu0 %v1972
    %2001 = vmatprep.subr.mxu0 0.0
    %2002 = vmatpush1.msra.mxu0 %v1973
    %2003 = vmatprep.subr.mxu0 0.0
    %2004 = vmatpush1.msra.mxu0 %v1974
    %2005 = vmatprep.subr.mxu0 0.0
    %2006 = vmatpush1.msra.mxu0 %v1975
    %2007 = vmatprep.subr.mxu0 0.0
    %2008 = vmatpush1.msra.mxu0 %v1976
    %2009 = vmatprep.subr.mxu0 0.0
    %2010 = vmatpush1.msra.mxu0 %v1977
    %2011 = vmatprep.subr.mxu0 0.0
    %2012 = vmatpush1.msra.mxu0 %v1978
    %2013 = vmatprep.subr.mxu0 0.0
    %2014 = vmatpush1.msra.mxu0 %v1979
    %2015 = vmatprep.subr.mxu0 0.0
    %2016 = vmatpush1.msra.mxu0 %v1980
    %2017 = vmatprep.subr.mxu0 0.0
    %2018 = vmatpush1.msra.mxu0 %v1981
    %2019 = vmatprep.subr.mxu0 0.0
    %2020 = vmatpush1.msra.mxu0 %v1982
    %2021 = vmatprep.subr.mxu0 0.0
    %2022 = vmatpush1.msra.mxu0 %v1983
    %2023 = vmatprep.subr.mxu0 0.0
    %2024 = vmatpush1.msra.mxu0 0.0
    %2025 = vmatprep.subr.mxu0 0.0
    %2026 = vmatpush1.msra.mxu0 0.0
    %2027 = vmatprep.subr.mxu0 0.0
    %2028 = vmatpush1.msra.mxu0 0.0
    %2029 = vmatprep.subr.mxu0 0.0
    %2030 = vmatpush1.msra.mxu0 0.0
    %2031 = vmatprep.subr.mxu0 0.0
    %2032 = vmatpush1.msra.mxu0 0.0
    %2033 = vmatprep.subr.mxu0 0.0
    %2034 = vmatpush1.msra.mxu0 0.0
    %2035 = vmatprep.subr.mxu0 0.0
    %2036 = vmatpush1.msra.mxu0 0.0
    %2037 = vmatprep.subr.mxu0 0.0
    %2038 = vmatpush1.msra.mxu0 0.0
    %2039 = vmatprep.subr.mxu0 0.0
    %2040 = vmatpush1.msra.mxu0 0.0
    %2041 = vmatprep.subr.mxu0 0.0
    %2042 = vmatpush1.msra.mxu0 0.0
    %2043 = vmatprep.subr.mxu0 0.0
    %2044 = vmatpush1.msra.mxu0 0.0
    %2045 = vmatprep.subr.mxu0 0.0
    %2046 = vmatpush1.msra.mxu0 0.0
    %2047 = vmatprep.subr.mxu0 0.0
    %2048 = vmatpush1.msra.mxu0 0.0
    %2049 = vmatprep.subr.mxu0 0.0
    %2050 = vmatpush1.msra.mxu0 0.0
    %2051 = vmatprep.subr.mxu0 0.0
    %2052 = vmatpush1.msra.mxu0 0.0
    %2053 = vmatprep.subr.mxu0 0.0
    %2054 = vmatpush1.msra.mxu0 0.0
    %2055 = vmatprep.mubr.f32.mxu0 0.0
    %2056 = vmatmul.mubr.f32.gmra.mrb[0].mxu0 %v1967
    %v2057 = vpop.f32.mrb[0].mxu0
    %v2058 = vadd.f32 %v1989, %v2057
    %v2059 = vpop.f32.mrb[0].mxu0
    %2060 = vdwg.mxu0
    %v2061 = vmax.f32 %v2058, 0.0
    %v2062 = vld [vmem:[%s7] sm:$0xff]
    %v2063 = vld [vmem:[%s7 + $0x8] sm:$0xff]
    %v2064 = vld [vmem:[%s7 + $0x10] sm:$0xff]
    %v2065 = vld [vmem:[%s7 + $0x18] sm:$0xff]
    %v2066 = vld [vmem:[%s8] sm:$0x1]
    %v2068 = vlaneseq
    %v2069 = vshrl.u32 %v2068, 7
    %v2070 = vsub.s32 0, %v2069
    %v2071 = vrot.slane %v2066, %v2070
    %v2074 = vsel %vm1962, %v2061, 0
    %2076 = vmatprep.subr.mxu0 0.0
    %2077 = vmatpush1.msra.mxu0 %v2062
    %2078 = vmatprep.subr.mxu0 0.0
    %2079 = vmatpush1.msra.mxu0 %v2063
    %2080 = vmatprep.subr.mxu0 0.0
    %2081 = vmatpush1.msra.mxu0 %v2064
    %2082 = vmatprep.subr.mxu0 0.0
    %2083 = vmatpush1.msra.mxu0 %v2065
    %2084 = vmatprep.subr.mxu0 0.0
    %2085 = vmatpush1.msra.mxu0 0.0
    %2086 = vmatprep.subr.mxu0 0.0
    %2087 = vmatpush1.msra.mxu0 0.0
    %2088 = vmatprep.subr.mxu0 0.0
    %2089 = vmatpush1.msra.mxu0 0.0
    %2090 = vmatprep.subr.mxu0 0.0
    %2091 = vmatpush1.msra.mxu0 0.0
    %2092 = vmatprep.subr.mxu0 0.0
    %2093 = vmatpush1.msra.mxu0 0.0
    %2094 = vmatprep.subr.mxu0 0.0
    %2095 = vmatpush1.msra.mxu0 0.0
    %2096 = vmatprep.subr.mxu0 0.0
    %2097 = vmatpush1.msra.mxu0 0.0
    %2098 = vmatprep.subr.mxu0 0.0
    %2099 = vmatpush1.msra.mxu0 0.0
    %2100 = vmatprep.subr.mxu0 0.0
    %2101 = vmatpush1.msra.mxu0 0.0
    %2102 = vmatprep.subr.mxu0 0.0
    %2103 = vmatpush1.msra.mxu0 0.0
    %2104 = vmatprep.subr.mxu0 0.0
    %2105 = vmatpush1.msra.mxu0 0.0
    %2106 = vmatprep.subr.mxu0 0.0
    %2107 = vmatpush1.msra.mxu0 0.0
    %2108 = vmatprep.subr.mxu0 0.0
    %2109 = vmatpush1.msra.mxu0 0.0
    %2110 = vmatprep.subr.mxu0 0.0
    %2111 = vmatpush1.msra.mxu0 0.0
    %2112 = vmatprep.subr.mxu0 0.0
    %2113 = vmatpush1.msra.mxu0 0.0
    %2114 = vmatprep.subr.mxu0 0.0
    %2115 = vmatpush1.msra.mxu0 0.0
    %2116 = vmatprep.subr.mxu0 0.0
    %2117 = vmatpush1.msra.mxu0 0.0
    %2118 = vmatprep.subr.mxu0 0.0
    %2119 = vmatpush1.msra.mxu0 0.0
    %2120 = vmatprep.subr.mxu0 0.0
    %2121 = vmatpush1.msra.mxu0 0.0
    %2122 = vmatprep.subr.mxu0 0.0
    %2123 = vmatpush1.msra.mxu0 0.0
    %2124 = vmatprep.subr.mxu0 0.0
    %2125 = vmatpush1.msra.mxu0 0.0
    %2126 = vmatprep.subr.mxu0 0.0
    %2127 = vmatpush1.msra.mxu0 0.0
    %2128 = vmatprep.subr.mxu0 0.0
    %2129 = vmatpush1.msra.mxu0 0.0
    %2130 = vmatprep.subr.mxu0 0.0
    %2131 = vmatpush1.msra.mxu0 0.0
    %2132 = vmatprep.subr.mxu0 0.0
    %2133 = vmatpush1.msra.mxu0 0.0
    %2134 = vmatprep.subr.mxu0 0.0
    %2135 = vmatpush1.msra.mxu0 0.0
    %2136 = vmatprep.subr.mxu0 0.0
    %2137 = vmatpush1.msra.mxu0 0.0
    %2138 = vmatprep.subr.mxu0 0.0
    %2139 = vmatpush1.msra.mxu0 0.0
    %2140 = vmatprep.mubr.f32.mxu0 0.0
    %2141 = vmatmul.mubr.f32.gmra.mrb[0].mxu0 %v2074
    %v2142 = vpop.f32.mrb[0].mxu0
    %v2143 = vadd.f32 %v2071, %v2142
    %v2144 = vpop.f32.mrb[0].mxu0
    %2145 = vdwg.mxu0
    %vm2146 = vcmask 17408
    %2147 = vst.msk [vmem:[#allocation3] sm:$0x3] %vm2146, %v2143
    // Predicated region
    $region38: #{esim_forward.5} parent=1 // pred_check
      _
    $region39: #{esim_forward.5} parent=1 // pred_check_branch
      %2149 = sbr.rel (0) target = $region41
    $region40: #{esim_forward.5} parent=1 // pred_region
      %s2151 = ssub.s32 32, 32
      %2152 = vsyncadd [#allocation4], %s2151
      %s2154 = sshll.u32 [#allocation3], 4
      %s2155 = int_to_ptr.vmem [resolvable:$true] %s2154
      %2157 = dma.vmem_to_hbm [thread:$0]  %s2155, 32, %s9, [#allocation4]
    $region41: #{esim_forward.5} parent=1 // pred_fallthru
      _
    // Predicated region
    $region42: #{esim_forward.5} parent=1 // pred_check
      _
    $region43: #{esim_forward.5} parent=1 // pred_check_branch
      %2159 = sbr.rel (0) target = $region45
    $region44: #{esim_forward.5} parent=1 // pred_region
      %2160 = dma.done [#allocation4], 32
    $region45: #{esim_forward.5} parent=1 // pred_fallthru
      _
    %2161 = vsyncpa [#allocation4], 1

</llo_original>
